<compile_context>
chip_gen: v5e
topology: v5e:2x2
jax: 0.10.0
libtpu: 0.0.40
codegen_flags: <defaults>
</compile_context>

<pallas_src>
import jax
import jax.numpy as jnp
from jax.experimental import pallas as pl
from jax.experimental.pallas import tpu as pltpu

ALPHA = 0.2  # LeakyReLU alpha from the module: max(alpha*x, x)


def _lrelu(x):
    return jnp.maximum(ALPHA * x, x)


# --------------------------------------------------------------------------
# Kernel 1: LSTM recurrence (input projection already folded into gates_x).
#   gx_ref  : (T, N, 4U) f32, = x @ W_ih^T + (b_ih + b_hh), gate order (i, f, o, g)
#             with the g-gate columns pre-scaled by 2 (tanh-via-sigmoid trick).
#   whh_ref : (U, 4U)    f32, same reorder/scale.
#   out_ref : (N, U)     f32, last hidden state.
# --------------------------------------------------------------------------
def lstm_kernel(gx_ref, whh_ref, out_ref):
    T = gx_ref.shape[0]
    N = gx_ref.shape[1]
    U = whh_ref.shape[0]

    h0 = jnp.zeros((N, U), jnp.float32)
    c0 = jnp.zeros((N, U), jnp.float32)

    def step(t, carry):
        h, c = carry
        gates = gx_ref[t] + jnp.dot(h, whh_ref[...],
                                    preferred_element_type=jnp.float32)   # (N, 4U)
        # One lane-full sigmoid over the whole gate slab; g = tanh(a) = 2*sigma(2a)-1
        # (the g-gate weights/bias were pre-scaled by 2 in the wrapper).
        sig = jax.nn.sigmoid(gates)
        i = sig[:, 0 * U:1 * U]
        f = sig[:, 1 * U:2 * U]
        o = sig[:, 2 * U:3 * U]
        g = 2.0 * sig[:, 3 * U:4 * U] - 1.0
        c_new = f * c + i * g
        h_new = o * jnp.tanh(c_new)
        return h_new, c_new

    # Short sequences: full unroll for LLO visibility; cap unroll for longer T.
    unroll = T if T <= 8 else 4
    h, _ = jax.lax.fori_loop(0, T, step, (h0, c0), unroll=unroll)
    out_ref[...] = h


def lstm_last_hidden(gates_x, whh_r):
    T, N, G = gates_x.shape
    U = whh_r.shape[0]
    # f32 bytes: gates_x + W_hh + h/c/out headroom.
    est = 4 * (T * N * G + U * G + 4 * N * U)
    vmem_limit = int(min(96 * 1024 * 1024, max(32 * 1024 * 1024, 2 * est)))
    # TODO(synk): stream gates_x with a T-grid once T*N*4U*4B approaches the VMEM limit.
    return pl.pallas_call(
        lstm_kernel,
        out_shape=jax.ShapeDtypeStruct((N, U), jnp.float32),
        compiler_params=pltpu.CompilerParams(vmem_limit_bytes=vmem_limit),
    )(gates_x, whh_r)


# --------------------------------------------------------------------------
# Kernel 2: relation-weighted propagation + prediction head, tiled over column
# blocks of the (padded) ticker axis - the reduction axis of proped = wm @ emb.
#   emb_ref    : (Np, U)     padded seq_emb, resident across all blocks
#   rowb_ref   : (Np, 1)     lrelu(emb@w2+b2)+lrelu(emb@w3+b3) (hoisted, block-invariant)
#   head4_ref  : (Np, 1)     emb @ w4[:U] + b4 (hoisted dense4-left)
#   rel_ref    : (R, Np, TJ) bf16 lane-dense relation column block
#   mask_ref   : (Np, TJ)    bf16 rel_mask column block (-1e9 for padded rows/cols)
#   w1_ref     : (R,)  SMEM  dense1 weight
#   b1_ref     : (1,)  SMEM  dense1 bias
#   w4p_ref    : (U, 1)      w4[U:]
#   pred_ref   : (Np, 1)     output, written on the last block
#   proped_sc  : (Np, U)     VMEM accumulator for wm @ emb
# --------------------------------------------------------------------------
def graph_kernel(emb_ref, rowb_ref, head4_ref, rel_ref, mask_ref,
                 w1_ref, b1_ref, w4p_ref, pred_ref, proped_sc):
    j = pl.program_id(0)
    nj = pl.num_programs(0)
    tj = mask_ref.shape[1]
    R = rel_ref.shape[0]

    @pl.when(j == 0)
    def _():
        proped_sc[...] = jnp.zeros_like(proped_sc)

    # dense1 over the relation block: per-r loads interleave with the VPU FMA chain.
    acc = w1_ref[0] * rel_ref[0].astype(jnp.float32)
    for r in range(1, R):
        acc = acc + w1_ref[r] * rel_ref[r].astype(jnp.float32)
    rel_w = _lrelu(acc + b1_ref[0])                                    # (Np, TJ)

    logits = mask_ref[...].astype(jnp.float32) + rowb_ref[...] + rel_w  # (Np, TJ)

    # softmax over dim=0 (rows); every column is complete inside a block.
    m = jnp.max(logits, axis=0, keepdims=True)
    e = jnp.exp(logits - m)
    wm = e / jnp.sum(e, axis=0, keepdims=True)                         # exact reciprocal

    # proped += wm[:, block] @ emb[block, :]
    col0 = pl.multiple_of(j * tj, tj)
    emb_blk = emb_ref[pl.ds(col0, tj), :]                              # (TJ, U)
    proped_sc[...] += jnp.dot(wm, emb_blk, preferred_element_type=jnp.float32)

    # pred tail only on the last block (no dead per-block matmul).
    @pl.when(j == nj - 1)
    def _():
        pred_ref[...] = _lrelu(head4_ref[...]
                               + jnp.dot(proped_sc[...], w4p_ref[...],
                                         preferred_element_type=jnp.float32))


def _round_up(n, m):
    return ((n + m - 1) // m) * m


def _pick_col_block(n_pad, r, u, *, rel_bytes, mask_bytes,
                    budget_bytes, max_block=1024):
    """Largest 128-multiple tj (dividing n_pad, <= max_block) whose double-buffered
    stream + f32 temporaries fit the VMEM byte budget."""
    best = 128
    tj = 128
    while tj <= min(max_block, n_pad):
        if n_pad % tj == 0:
            stream = 2 * (r * rel_bytes + mask_bytes) * n_pad * tj     # double-buffered rel+mask
            temps = 4 * n_pad * tj * 4                                 # acc/rel_w/logits/exp f32
            resident = 4 * n_pad * (2 * u + 3)                         # emb, proped, biases, pred
            if stream + temps + resident <= budget_bytes:
                best = tj
        tj *= 2
    return best


def prepare_relation(relation_nnr, rel_mask_nn, *, pad_to=128,
                     rel_dtype=jnp.bfloat16, mask_dtype=jnp.bfloat16):
    """One-time layout prep (relation/mask are static across forward calls):
    pre-transpose to lane-dense (R, Np, Np), pad tickers to a 128-multiple
    (mask padding = -1e9 so padded rows vanish in the column softmax), cast to bf16."""
    n = relation_nnr.shape[0]
    n_pad = _round_up(n, pad_to)
    rel = jnp.transpose(relation_nnr, (2, 0, 1))                        # (R, N, N)
    rel = jnp.pad(rel, ((0, 0), (0, n_pad - n), (0, n_pad - n)))
    mask = jnp.pad(rel_mask_nn.astype(jnp.float32),
                   ((0, n_pad - n), (0, n_pad - n)), constant_values=-1e9)
    return rel.astype(rel_dtype), mask.astype(mask_dtype)


# --------------------------------------------------------------------------
# Wrapper: ReRaLSTM.forward
# --------------------------------------------------------------------------
def rera_forward(x_ntd, rel_rnn, rel_mask_p, params, *, col_block=None,
                 vmem_budget_bytes=24 * 1024 * 1024):
    (wih_t, whh_t, b_lstm, w1, b1, w2, b2, w3, b3, w4, b4) = params
    N, T, D = x_ntd.shape
    U = whh_t.shape[0]
    R, Np, Np2 = rel_rnn.shape
    assert Np == Np2 and Np % 128 == 0 and Np >= N

    # ---- LSTM ----
    # Reorder gate columns (i, f, g, o) -> (i, f, o, g) and pre-scale the g-columns
    # by 2: one lane-full sigmoid covers all gates (g = 2*sigma(2a)-1 = tanh(a)).
    def reorder_scale(w):
        i, f, g, o = jnp.split(w, 4, axis=-1)
        return jnp.concatenate([i, f, o, 2.0 * g], axis=-1)

    wih_r, whh_r, b_r = reorder_scale(wih_t), reorder_scale(whh_t), reorder_scale(b_lstm)

    # Hoisted input projection: one big (N*T, D) @ (D, 4U) MXU matmul (XLA pre-pass),
    # emitted time-major so the recurrence kernel reads gx[t] as a lane-dense (N, 4U).
    gates_x = jnp.einsum('ntd,dg->tng', x_ntd, wih_r) + b_r             # (T, N, 4U)
    seq_emb = lstm_last_hidden(gates_x, whh_r)                          # (N, U)

    # ---- relation graph ----
    emb_p = jnp.pad(seq_emb, ((0, Np - N), (0, 0)))                     # (Np, U)

    # Block-invariant row bias and dense4-left term hoisted to the XLA wrapper
    # (tiny (Np,U)@(U,1) matmuls, computed once per forward instead of per block).
    row_bias = _lrelu(emb_p @ w2 + b2) + _lrelu(emb_p @ w3 + b3)        # (Np, 1)
    head4 = emb_p @ w4[:U] + b4                                         # (Np, 1)
    w4p = w4[U:]                                                        # (U, 1)
    w1_s = w1.astype(jnp.float32)                                       # (R,) -> SMEM
    b1_s = jnp.reshape(b1, (1,)).astype(jnp.float32)                    # (1,) -> SMEM

    rel_bytes = jnp.dtype(rel_rnn.dtype).itemsize
    mask_bytes = jnp.dtype(rel_mask_p.dtype).itemsize
    if col_block is None:
        tj = _pick_col_block(Np, R, U, rel_bytes=rel_bytes, mask_bytes=mask_bytes,
                             budget_bytes=vmem_budget_bytes)
    else:
        tj = int(col_block)
    assert Np % tj == 0 and tj % 128 == 0, f"bad column block {tj} for Np={Np}"

    est = (2 * (R * rel_bytes + mask_bytes) * Np * tj
           + 4 * Np * tj * 4 + 4 * Np * (2 * U + 3))
    vmem_limit = int(min(96 * 1024 * 1024, max(32 * 1024 * 1024, 3 * est // 2)))

    grid = (Np // tj,)

    pred_p = pl.pallas_call(
        graph_kernel,
        out_shape=jax.ShapeDtypeStruct((Np, 1), jnp.float32),
        grid_spec=pltpu.PrefetchScalarGridSpec(
            num_scalar_prefetch=0,
            grid=grid,
            in_specs=[
                pl.BlockSpec((Np, U), lambda j: (0, 0)),                # emb (resident)
                pl.BlockSpec((Np, 1), lambda j: (0, 0)),                # row_bias
                pl.BlockSpec((Np, 1), lambda j: (0, 0)),                # head4 (emb@w4h + b4)
                pl.BlockSpec((R, Np, tj), lambda j: (0, 0, j)),         # relation column block
                pl.BlockSpec((Np, tj), lambda j: (0, j)),               # rel_mask column block
                pl.BlockSpec(memory_space=pltpu.MemorySpace.SMEM),      # w1
                pl.BlockSpec(memory_space=pltpu.MemorySpace.SMEM),      # b1
                pl.BlockSpec((U, 1), lambda j: (0, 0)),                 # w4p
            ],
            out_specs=pl.BlockSpec((Np, 1), lambda j: (0, 0)),
            scratch_shapes=[
                pltpu.VMEM((Np, U), jnp.float32),                       # proped accumulator
            ],
        ),
        compiler_params=pltpu.CompilerParams(
            # column-block axis is a reduction axis for proped -> 'arbitrary'.
            # TODO(synk): v7x two-TensorCore split of this axis (per-TC proped
            # partials + tiny (Np,U) reduce) would ~double stream bandwidth.
            dimension_semantics=("arbitrary",),
            vmem_limit_bytes=vmem_limit,
        ),
    )(emb_p, row_bias, head4, rel_rnn, rel_mask_p, w1_s, b1_s, w4p)

    return pred_p[:N], seq_emb


# --------------------------------------------------------------------------
# Pure-JAX reference matching the PyTorch module (for verification).
# --------------------------------------------------------------------------
def rera_forward_ref(x_ntd, relation, rel_mask, params):
    (wih_t, whh_t, b_lstm, w1, b1, w2, b2, w3, b3, w4, b4) = params
    N, T, D = x_ntd.shape
    U = whh_t.shape[0]

    def step(carry, x_t):
        h, c = carry
        gates = x_t @ wih_t + h @ whh_t + b_lstm
        i = jax.nn.sigmoid(gates[:, :U])
        f = jax.nn.sigmoid(gates[:, U:2 * U])
        g = jnp.tanh(gates[:, 2 * U:3 * U])
        o = jax.nn.sigmoid(gates[:, 3 * U:])
        c = f * c + i * g
        h = o * jnp.tanh(c)
        return (h, c), None

    (h, _), _ = jax.lax.scan(
        step,
        (jnp.zeros((N, U), jnp.float32), jnp.zeros((N, U), jnp.float32)),
        jnp.transpose(x_ntd, (1, 0, 2)))
    emb = h

    rel_w = _lrelu(jnp.einsum('ijr,r->ij', relation, w1) + b1)
    head = _lrelu(emb @ w2 + b2)
    tail = _lrelu(emb @ w3 + b3)
    weight = head + tail + rel_w
    wm = jax.nn.softmax(rel_mask + weight, axis=0)
    proped = wm @ emb
    concat = jnp.concatenate([emb, proped], axis=1)
    pred = _lrelu(concat @ w4 + b4)
    return pred, emb


# --------------------------------------------------------------------------
if __name__ == "__main__":
    # Small shapes consistent with the module's forward():
    N = 200   # tickers; NOT a multiple of 128 -> exercises the padding path (Np = 256)
    T = 8     # params['seq']
    D = 5     # input_dim (EOD features + factors)
    U = 32    # hidden_dim = params['unit']
    R = 4     # relation-encoding depth

    key = jax.random.PRNGKey(0)
    ks = jax.random.split(key, 16)

    x = jax.random.normal(ks[0], (N, T, D), jnp.float32)
    relation = jax.random.normal(ks[1], (N, N, R), jnp.float32)
    # rel_mask: 0 where a relation exists, large negative otherwise (as in the paper).
    rel_mask = jnp.where(jax.random.uniform(ks[2], (N, N)) > 0.3,
                         0.0, -1e9).astype(jnp.float32)

    s = 0.1
    wih_t = s * jax.random.normal(ks[3], (D, 4 * U), jnp.float32)    # W_ih^T (i,f,g,o)
    whh_t = s * jax.random.normal(ks[4], (U, 4 * U), jnp.float32)    # W_hh^T (i,f,g,o)
    b_lstm = s * jax.random.normal(ks[5], (1, 4 * U), jnp.float32)   # b_ih + b_hh
    w1 = s * jax.random.normal(ks[6], (R,), jnp.float32)             # dense1: R -> 1
    b1 = s * jax.random.normal(ks[7], (), jnp.float32)
    w2 = s * jax.random.normal(ks[8], (U, 1), jnp.float32)           # dense2: U -> 1
    b2 = s * jax.random.normal(ks[9], (), jnp.float32)
    w3 = s * jax.random.normal(ks[10], (U, 1), jnp.float32)          # dense3: U -> 1
    b3 = s * jax.random.normal(ks[11], (), jnp.float32)
    w4 = s * jax.random.normal(ks[12], (2 * U, 1), jnp.float32)      # dense4: 2U -> 1
    b4 = s * jax.random.normal(ks[13], (), jnp.float32)

    params = (wih_t, whh_t, b_lstm, w1, b1, w2, b2, w3, b3, w4, b4)

    # Relation encoding / mask are static across forward calls in the training loop:
    # prepare once (pre-transposed lane-dense, padded, bf16).
    rel_rnn, rel_mask_p = prepare_relation(relation, rel_mask)

    fwd = jax.jit(rera_forward, static_argnames=("col_block", "vmem_budget_bytes"))
    pred, seq_emb = fwd(x, rel_rnn, rel_mask_p, params, col_block=128)
    jax.block_until_ready((pred, seq_emb))

    # Reference consumes the same bf16-stored relation/mask values (cropped, in f32).
    rel_for_ref = jnp.transpose(rel_rnn.astype(jnp.float32)[:, :N, :N], (1, 2, 0))
    mask_for_ref = rel_mask_p.astype(jnp.float32)[:N, :N]
    pred_gold, emb_gold = jax.jit(rera_forward_ref)(x, rel_for_ref, mask_for_ref, params)
    jax.block_until_ready((pred_gold, emb_gold))

    assert pred.shape == (N, 1)
    emb_err = float(jnp.max(jnp.abs(seq_emb - emb_gold)))
    pred_err = float(jnp.max(jnp.abs(pred - pred_gold)))
    assert emb_err < 1e-4, f"seq_emb mismatch: max abs err = {emb_err}"
    assert pred_err < 5e-4, f"pred mismatch: max abs err = {pred_err}"

    print("KERNEL_OK")
</pallas_src>

<mosaic_0001>
module attributes {stable_mosaic.version = 11 : i64} {
  func.func @lstm_kernel(%arg0: memref<8x200x128xf32, #tpu.memory_space<vmem>>, %arg1: memref<32x128xf32, #tpu.memory_space<vmem>>, %arg2: memref<200x32xf32, #tpu.memory_space<vmem>>) attributes {dimension_semantics = [], scalar_prefetch = 0 : i64, scratch_operands = 0 : i64, tpu.core_type = #tpu.core_type<tc>} {
    %cst = arith.constant 0.000000e+00 : f32
    %0 = vector.broadcast %cst : f32 to vector<200x32xf32>
    %cst_0 = arith.constant 0.000000e+00 : f32
    %1 = vector.broadcast %cst_0 : f32 to vector<200x32xf32>
    %c0_i32 = arith.constant 0 : i32
    %2 = arith.index_cast %c0_i32 : i32 to index
    %c0 = arith.constant 0 : index
    %c0_1 = arith.constant 0 : index
    %3 = vector.load %arg0[%2, %c0, %c0_1] : memref<8x200x128xf32, #tpu.memory_space<vmem>>, vector<1x200x128xf32>
    %4 = vector.shape_cast %3 : vector<1x200x128xf32> to vector<200x128xf32>
    %c0_2 = arith.constant 0 : index
    %c0_3 = arith.constant 0 : index
    %5 = vector.load %arg1[%c0_2, %c0_3] : memref<32x128xf32, #tpu.memory_space<vmem>>, vector<32x128xf32>
    %cst_4 = arith.constant dense<0.000000e+00> : vector<200x128xf32>
    %6 = tpu.matmul %0, %5, %cst_4 {dimension_numbers = #tpu.dot_dimension_numbers<[1], [0], [0], [1], [0, 0, 1, 1], [], []>} : vector<200x32xf32>, vector<32x128xf32>, vector<200x128xf32> -> vector<200x128xf32>
    %7 = arith.addf %4, %6 : vector<200x128xf32>
    %8 = arith.negf %7 : vector<200x128xf32>
    %9 = math.exp %8 : vector<200x128xf32>
    %cst_5 = arith.constant 1.000000e+00 : f32
    %10 = vector.broadcast %cst_5 : f32 to vector<200x128xf32>
    %11 = arith.addf %10, %9 : vector<200x128xf32>
    %12 = arith.divf %10, %11 : vector<200x128xf32>
    %13 = vector.extract_strided_slice %12 {offsets = [0, 0], sizes = [200, 32], strides = [1, 1]} : vector<200x128xf32> to vector<200x32xf32>
    %14 = vector.extract_strided_slice %12 {offsets = [0, 32], sizes = [200, 32], strides = [1, 1]} : vector<200x128xf32> to vector<200x32xf32>
    %15 = vector.extract_strided_slice %12 {offsets = [0, 64], sizes = [200, 32], strides = [1, 1]} : vector<200x128xf32> to vector<200x32xf32>
    %16 = vector.extract_strided_slice %12 {offsets = [0, 96], sizes = [200, 32], strides = [1, 1]} : vector<200x128xf32> to vector<200x32xf32>
    %cst_6 = arith.constant 2.000000e+00 : f32
    %17 = vector.broadcast %cst_6 : f32 to vector<200x32xf32>
    %18 = arith.mulf %17, %16 : vector<200x32xf32>
    %cst_7 = arith.constant 1.000000e+00 : f32
    %19 = vector.broadcast %cst_7 : f32 to vector<200x32xf32>
    %20 = arith.subf %18, %19 : vector<200x32xf32>
    %21 = arith.mulf %14, %1 : vector<200x32xf32>
    %22 = arith.mulf %13, %20 : vector<200x32xf32>
    %23 = arith.addf %21, %22 : vector<200x32xf32>
    %24 = math.tanh %23 : vector<200x32xf32>
    %25 = arith.mulf %15, %24 : vector<200x32xf32>
    %c1_i32 = arith.constant 1 : i32
    %26 = arith.index_cast %c1_i32 : i32 to index
    %c0_8 = arith.constant 0 : index
    %c0_9 = arith.constant 0 : index
    %27 = vector.load %arg0[%26, %c0_8, %c0_9] : memref<8x200x128xf32, #tpu.memory_space<vmem>>, vector<1x200x128xf32>
    %28 = vector.shape_cast %27 : vector<1x200x128xf32> to vector<200x128xf32>
    %c0_10 = arith.constant 0 : index
    %c0_11 = arith.constant 0 : index
    %29 = vector.load %arg1[%c0_10, %c0_11] : memref<32x128xf32, #tpu.memory_space<vmem>>, vector<32x128xf32>
    %cst_12 = arith.constant dense<0.000000e+00> : vector<200x128xf32>
    %30 = tpu.matmul %25, %29, %cst_12 {dimension_numbers = #tpu.dot_dimension_numbers<[1], [0], [0], [1], [0, 0, 1, 1], [], []>} : vector<200x32xf32>, vector<32x128xf32>, vector<200x128xf32> -> vector<200x128xf32>
    %31 = arith.addf %28, %30 : vector<200x128xf32>
    %32 = arith.negf %31 : vector<200x128xf32>
    %33 = math.exp %32 : vector<200x128xf32>
    %cst_13 = arith.constant 1.000000e+00 : f32
    %34 = vector.broadcast %cst_13 : f32 to vector<200x128xf32>
    %35 = arith.addf %34, %33 : vector<200x128xf32>
    %36 = arith.divf %34, %35 : vector<200x128xf32>
    %37 = vector.extract_strided_slice %36 {offsets = [0, 0], sizes = [200, 32], strides = [1, 1]} : vector<200x128xf32> to vector<200x32xf32>
    %38 = vector.extract_strided_slice %36 {offsets = [0, 32], sizes = [200, 32], strides = [1, 1]} : vector<200x128xf32> to vector<200x32xf32>
    %39 = vector.extract_strided_slice %36 {offsets = [0, 64], sizes = [200, 32], strides = [1, 1]} : vector<200x128xf32> to vector<200x32xf32>
    %40 = vector.extract_strided_slice %36 {offsets = [0, 96], sizes = [200, 32], strides = [1, 1]} : vector<200x128xf32> to vector<200x32xf32>
    %cst_14 = arith.constant 2.000000e+00 : f32
    %41 = vector.broadcast %cst_14 : f32 to vector<200x32xf32>
    %42 = arith.mulf %41, %40 : vector<200x32xf32>
    %cst_15 = arith.constant 1.000000e+00 : f32
    %43 = vector.broadcast %cst_15 : f32 to vector<200x32xf32>
    %44 = arith.subf %42, %43 : vector<200x32xf32>
    %45 = arith.mulf %38, %23 : vector<200x32xf32>
    %46 = arith.mulf %37, %44 : vector<200x32xf32>
    %47 = arith.addf %45, %46 : vector<200x32xf32>
    %48 = math.tanh %47 : vector<200x32xf32>
    %49 = arith.mulf %39, %48 : vector<200x32xf32>
    %c2_i32 = arith.constant 2 : i32
    %50 = arith.index_cast %c2_i32 : i32 to index
    %c0_16 = arith.constant 0 : index
    %c0_17 = arith.constant 0 : index
    %51 = vector.load %arg0[%50, %c0_16, %c0_17] : memref<8x200x128xf32, #tpu.memory_space<vmem>>, vector<1x200x128xf32>
    %52 = vector.shape_cast %51 : vector<1x200x128xf32> to vector<200x128xf32>
    %c0_18 = arith.constant 0 : index
    %c0_19 = arith.constant 0 : index
    %53 = vector.load %arg1[%c0_18, %c0_19] : memref<32x128xf32, #tpu.memory_space<vmem>>, vector<32x128xf32>
    %cst_20 = arith.constant dense<0.000000e+00> : vector<200x128xf32>
    %54 = tpu.matmul %49, %53, %cst_20 {dimension_numbers = #tpu.dot_dimension_numbers<[1], [0], [0], [1], [0, 0, 1, 1], [], []>} : vector<200x32xf32>, vector<32x128xf32>, vector<200x128xf32> -> vector<200x128xf32>
    %55 = arith.addf %52, %54 : vector<200x128xf32>
    %56 = arith.negf %55 : vector<200x128xf32>
    %57 = math.exp %56 : vector<200x128xf32>
    %cst_21 = arith.constant 1.000000e+00 : f32
    %58 = vector.broadcast %cst_21 : f32 to vector<200x128xf32>
    %59 = arith.addf %58, %57 : vector<200x128xf32>
    %60 = arith.divf %58, %59 : vector<200x128xf32>
    %61 = vector.extract_strided_slice %60 {offsets = [0, 0], sizes = [200, 32], strides = [1, 1]} : vector<200x128xf32> to vector<200x32xf32>
    %62 = vector.extract_strided_slice %60 {offsets = [0, 32], sizes = [200, 32], strides = [1, 1]} : vector<200x128xf32> to vector<200x32xf32>
    %63 = vector.extract_strided_slice %60 {offsets = [0, 64], sizes = [200, 32], strides = [1, 1]} : vector<200x128xf32> to vector<200x32xf32>
    %64 = vector.extract_strided_slice %60 {offsets = [0, 96], sizes = [200, 32], strides = [1, 1]} : vector<200x128xf32> to vector<200x32xf32>
    %cst_22 = arith.constant 2.000000e+00 : f32
    %65 = vector.broadcast %cst_22 : f32 to vector<200x32xf32>
    %66 = arith.mulf %65, %64 : vector<200x32xf32>
    %cst_23 = arith.constant 1.000000e+00 : f32
    %67 = vector.broadcast %cst_23 : f32 to vector<200x32xf32>
    %68 = arith.subf %66, %67 : vector<200x32xf32>
    %69 = arith.mulf %62, %47 : vector<200x32xf32>
    %70 = arith.mulf %61, %68 : vector<200x32xf32>
    %71 = arith.addf %69, %70 : vector<200x32xf32>
    %72 = math.tanh %71 : vector<200x32xf32>
    %73 = arith.mulf %63, %72 : vector<200x32xf32>
    %c3_i32 = arith.constant 3 : i32
    %74 = arith.index_cast %c3_i32 : i32 to index
    %c0_24 = arith.constant 0 : index
    %c0_25 = arith.constant 0 : index
    %75 = vector.load %arg0[%74, %c0_24, %c0_25] : memref<8x200x128xf32, #tpu.memory_space<vmem>>, vector<1x200x128xf32>
    %76 = vector.shape_cast %75 : vector<1x200x128xf32> to vector<200x128xf32>
    %c0_26 = arith.constant 0 : index
    %c0_27 = arith.constant 0 : index
    %77 = vector.load %arg1[%c0_26, %c0_27] : memref<32x128xf32, #tpu.memory_space<vmem>>, vector<32x128xf32>
    %cst_28 = arith.constant dense<0.000000e+00> : vector<200x128xf32>
    %78 = tpu.matmul %73, %77, %cst_28 {dimension_numbers = #tpu.dot_dimension_numbers<[1], [0], [0], [1], [0, 0, 1, 1], [], []>} : vector<200x32xf32>, vector<32x128xf32>, vector<200x128xf32> -> vector<200x128xf32>
    %79 = arith.addf %76, %78 : vector<200x128xf32>
    %80 = arith.negf %79 : vector<200x128xf32>
    %81 = math.exp %80 : vector<200x128xf32>
    %cst_29 = arith.constant 1.000000e+00 : f32
    %82 = vector.broadcast %cst_29 : f32 to vector<200x128xf32>
    %83 = arith.addf %82, %81 : vector<200x128xf32>
    %84 = arith.divf %82, %83 : vector<200x128xf32>
    %85 = vector.extract_strided_slice %84 {offsets = [0, 0], sizes = [200, 32], strides = [1, 1]} : vector<200x128xf32> to vector<200x32xf32>
    %86 = vector.extract_strided_slice %84 {offsets = [0, 32], sizes = [200, 32], strides = [1, 1]} : vector<200x128xf32> to vector<200x32xf32>
    %87 = vector.extract_strided_slice %84 {offsets = [0, 64], sizes = [200, 32], strides = [1, 1]} : vector<200x128xf32> to vector<200x32xf32>
    %88 = vector.extract_strided_slice %84 {offsets = [0, 96], sizes = [200, 32], strides = [1, 1]} : vector<200x128xf32> to vector<200x32xf32>
    %cst_30 = arith.constant 2.000000e+00 : f32
    %89 = vector.broadcast %cst_30 : f32 to vector<200x32xf32>
    %90 = arith.mulf %89, %88 : vector<200x32xf32>
    %cst_31 = arith.constant 1.000000e+00 : f32
    %91 = vector.broadcast %cst_31 : f32 to vector<200x32xf32>
    %92 = arith.subf %90, %91 : vector<200x32xf32>
    %93 = arith.mulf %86, %71 : vector<200x32xf32>
    %94 = arith.mulf %85, %92 : vector<200x32xf32>
    %95 = arith.addf %93, %94 : vector<200x32xf32>
    %96 = math.tanh %95 : vector<200x32xf32>
    %97 = arith.mulf %87, %96 : vector<200x32xf32>
    %c4_i32 = arith.constant 4 : i32
    %98 = arith.index_cast %c4_i32 : i32 to index
    %c0_32 = arith.constant 0 : index
    %c0_33 = arith.constant 0 : index
    %99 = vector.load %arg0[%98, %c0_32, %c0_33] : memref<8x200x128xf32, #tpu.memory_space<vmem>>, vector<1x200x128xf32>
    %100 = vector.shape_cast %99 : vector<1x200x128xf32> to vector<200x128xf32>
    %c0_34 = arith.constant 0 : index
    %c0_35 = arith.constant 0 : index
    %101 = vector.load %arg1[%c0_34, %c0_35] : memref<32x128xf32, #tpu.memory_space<vmem>>, vector<32x128xf32>
    %cst_36 = arith.constant dense<0.000000e+00> : vector<200x128xf32>
    %102 = tpu.matmul %97, %101, %cst_36 {dimension_numbers = #tpu.dot_dimension_numbers<[1], [0], [0], [1], [0, 0, 1, 1], [], []>} : vector<200x32xf32>, vector<32x128xf32>, vector<200x128xf32> -> vector<200x128xf32>
    %103 = arith.addf %100, %102 : vector<200x128xf32>
    %104 = arith.negf %103 : vector<200x128xf32>
    %105 = math.exp %104 : vector<200x128xf32>
    %cst_37 = arith.constant 1.000000e+00 : f32
    %106 = vector.broadcast %cst_37 : f32 to vector<200x128xf32>
    %107 = arith.addf %106, %105 : vector<200x128xf32>
    %108 = arith.divf %106, %107 : vector<200x128xf32>
    %109 = vector.extract_strided_slice %108 {offsets = [0, 0], sizes = [200, 32], strides = [1, 1]} : vector<200x128xf32> to vector<200x32xf32>
    %110 = vector.extract_strided_slice %108 {offsets = [0, 32], sizes = [200, 32], strides = [1, 1]} : vector<200x128xf32> to vector<200x32xf32>
    %111 = vector.extract_strided_slice %108 {offsets = [0, 64], sizes = [200, 32], strides = [1, 1]} : vector<200x128xf32> to vector<200x32xf32>
    %112 = vector.extract_strided_slice %108 {offsets = [0, 96], sizes = [200, 32], strides = [1, 1]} : vector<200x128xf32> to vector<200x32xf32>
    %cst_38 = arith.constant 2.000000e+00 : f32
    %113 = vector.broadcast %cst_38 : f32 to vector<200x32xf32>
    %114 = arith.mulf %113, %112 : vector<200x32xf32>
    %cst_39 = arith.constant 1.000000e+00 : f32
    %115 = vector.broadcast %cst_39 : f32 to vector<200x32xf32>
    %116 = arith.subf %114, %115 : vector<200x32xf32>
    %117 = arith.mulf %110, %95 : vector<200x32xf32>
    %118 = arith.mulf %109, %116 : vector<200x32xf32>
    %119 = arith.addf %117, %118 : vector<200x32xf32>
    %120 = math.tanh %119 : vector<200x32xf32>
    %121 = arith.mulf %111, %120 : vector<200x32xf32>
    %c5_i32 = arith.constant 5 : i32
    %122 = arith.index_cast %c5_i32 : i32 to index
    %c0_40 = arith.constant 0 : index
    %c0_41 = arith.constant 0 : index
    %123 = vector.load %arg0[%122, %c0_40, %c0_41] : memref<8x200x128xf32, #tpu.memory_space<vmem>>, vector<1x200x128xf32>
    %124 = vector.shape_cast %123 : vector<1x200x128xf32> to vector<200x128xf32>
    %c0_42 = arith.constant 0 : index
    %c0_43 = arith.constant 0 : index
    %125 = vector.load %arg1[%c0_42, %c0_43] : memref<32x128xf32, #tpu.memory_space<vmem>>, vector<32x128xf32>
    %cst_44 = arith.constant dense<0.000000e+00> : vector<200x128xf32>
    %126 = tpu.matmul %121, %125, %cst_44 {dimension_numbers = #tpu.dot_dimension_numbers<[1], [0], [0], [1], [0, 0, 1, 1], [], []>} : vector<200x32xf32>, vector<32x128xf32>, vector<200x128xf32> -> vector<200x128xf32>
    %127 = arith.addf %124, %126 : vector<200x128xf32>
    %128 = arith.negf %127 : vector<200x128xf32>
    %129 = math.exp %128 : vector<200x128xf32>
    %cst_45 = arith.constant 1.000000e+00 : f32
    %130 = vector.broadcast %cst_45 : f32 to vector<200x128xf32>
    %131 = arith.addf %130, %129 : vector<200x128xf32>
    %132 = arith.divf %130, %131 : vector<200x128xf32>
    %133 = vector.extract_strided_slice %132 {offsets = [0, 0], sizes = [200, 32], strides = [1, 1]} : vector<200x128xf32> to vector<200x32xf32>
    %134 = vector.extract_strided_slice %132 {offsets = [0, 32], sizes = [200, 32], strides = [1, 1]} : vector<200x128xf32> to vector<200x32xf32>
    %135 = vector.extract_strided_slice %132 {offsets = [0, 64], sizes = [200, 32], strides = [1, 1]} : vector<200x128xf32> to vector<200x32xf32>
    %136 = vector.extract_strided_slice %132 {offsets = [0, 96], sizes = [200, 32], strides = [1, 1]} : vector<200x128xf32> to vector<200x32xf32>
    %cst_46 = arith.constant 2.000000e+00 : f32
    %137 = vector.broadcast %cst_46 : f32 to vector<200x32xf32>
    %138 = arith.mulf %137, %136 : vector<200x32xf32>
    %cst_47 = arith.constant 1.000000e+00 : f32
    %139 = vector.broadcast %cst_47 : f32 to vector<200x32xf32>
    %140 = arith.subf %138, %139 : vector<200x32xf32>
    %141 = arith.mulf %134, %119 : vector<200x32xf32>
    %142 = arith.mulf %133, %140 : vector<200x32xf32>
    %143 = arith.addf %141, %142 : vector<200x32xf32>
    %144 = math.tanh %143 : vector<200x32xf32>
    %145 = arith.mulf %135, %144 : vector<200x32xf32>
    %c6_i32 = arith.constant 6 : i32
    %146 = arith.index_cast %c6_i32 : i32 to index
    %c0_48 = arith.constant 0 : index
    %c0_49 = arith.constant 0 : index
    %147 = vector.load %arg0[%146, %c0_48, %c0_49] : memref<8x200x128xf32, #tpu.memory_space<vmem>>, vector<1x200x128xf32>
    %148 = vector.shape_cast %147 : vector<1x200x128xf32> to vector<200x128xf32>
    %c0_50 = arith.constant 0 : index
    %c0_51 = arith.constant 0 : index
    %149 = vector.load %arg1[%c0_50, %c0_51] : memref<32x128xf32, #tpu.memory_space<vmem>>, vector<32x128xf32>
    %cst_52 = arith.constant dense<0.000000e+00> : vector<200x128xf32>
    %150 = tpu.matmul %145, %149, %cst_52 {dimension_numbers = #tpu.dot_dimension_numbers<[1], [0], [0], [1], [0, 0, 1, 1], [], []>} : vector<200x32xf32>, vector<32x128xf32>, vector<200x128xf32> -> vector<200x128xf32>
    %151 = arith.addf %148, %150 : vector<200x128xf32>
    %152 = arith.negf %151 : vector<200x128xf32>
    %153 = math.exp %152 : vector<200x128xf32>
    %cst_53 = arith.constant 1.000000e+00 : f32
    %154 = vector.broadcast %cst_53 : f32 to vector<200x128xf32>
    %155 = arith.addf %154, %153 : vector<200x128xf32>
    %156 = arith.divf %154, %155 : vector<200x128xf32>
    %157 = vector.extract_strided_slice %156 {offsets = [0, 0], sizes = [200, 32], strides = [1, 1]} : vector<200x128xf32> to vector<200x32xf32>
    %158 = vector.extract_strided_slice %156 {offsets = [0, 32], sizes = [200, 32], strides = [1, 1]} : vector<200x128xf32> to vector<200x32xf32>
    %159 = vector.extract_strided_slice %156 {offsets = [0, 64], sizes = [200, 32], strides = [1, 1]} : vector<200x128xf32> to vector<200x32xf32>
    %160 = vector.extract_strided_slice %156 {offsets = [0, 96], sizes = [200, 32], strides = [1, 1]} : vector<200x128xf32> to vector<200x32xf32>
    %cst_54 = arith.constant 2.000000e+00 : f32
    %161 = vector.broadcast %cst_54 : f32 to vector<200x32xf32>
    %162 = arith.mulf %161, %160 : vector<200x32xf32>
    %cst_55 = arith.constant 1.000000e+00 : f32
    %163 = vector.broadcast %cst_55 : f32 to vector<200x32xf32>
    %164 = arith.subf %162, %163 : vector<200x32xf32>
    %165 = arith.mulf %158, %143 : vector<200x32xf32>
    %166 = arith.mulf %157, %164 : vector<200x32xf32>
    %167 = arith.addf %165, %166 : vector<200x32xf32>
    %168 = math.tanh %167 : vector<200x32xf32>
    %169 = arith.mulf %159, %168 : vector<200x32xf32>
    %c7_i32 = arith.constant 7 : i32
    %170 = arith.index_cast %c7_i32 : i32 to index
    %c0_56 = arith.constant 0 : index
    %c0_57 = arith.constant 0 : index
    %171 = vector.load %arg0[%170, %c0_56, %c0_57] : memref<8x200x128xf32, #tpu.memory_space<vmem>>, vector<1x200x128xf32>
    %172 = vector.shape_cast %171 : vector<1x200x128xf32> to vector<200x128xf32>
    %c0_58 = arith.constant 0 : index
    %c0_59 = arith.constant 0 : index
    %173 = vector.load %arg1[%c0_58, %c0_59] : memref<32x128xf32, #tpu.memory_space<vmem>>, vector<32x128xf32>
    %cst_60 = arith.constant dense<0.000000e+00> : vector<200x128xf32>
    %174 = tpu.matmul %169, %173, %cst_60 {dimension_numbers = #tpu.dot_dimension_numbers<[1], [0], [0], [1], [0, 0, 1, 1], [], []>} : vector<200x32xf32>, vector<32x128xf32>, vector<200x128xf32> -> vector<200x128xf32>
    %175 = arith.addf %172, %174 : vector<200x128xf32>
    %176 = arith.negf %175 : vector<200x128xf32>
    %177 = math.exp %176 : vector<200x128xf32>
    %cst_61 = arith.constant 1.000000e+00 : f32
    %178 = vector.broadcast %cst_61 : f32 to vector<200x128xf32>
    %179 = arith.addf %178, %177 : vector<200x128xf32>
    %180 = arith.divf %178, %179 : vector<200x128xf32>
    %181 = vector.extract_strided_slice %180 {offsets = [0, 0], sizes = [200, 32], strides = [1, 1]} : vector<200x128xf32> to vector<200x32xf32>
    %182 = vector.extract_strided_slice %180 {offsets = [0, 32], sizes = [200, 32], strides = [1, 1]} : vector<200x128xf32> to vector<200x32xf32>
    %183 = vector.extract_strided_slice %180 {offsets = [0, 64], sizes = [200, 32], strides = [1, 1]} : vector<200x128xf32> to vector<200x32xf32>
    %184 = vector.extract_strided_slice %180 {offsets = [0, 96], sizes = [200, 32], strides = [1, 1]} : vector<200x128xf32> to vector<200x32xf32>
    %cst_62 = arith.constant 2.000000e+00 : f32
    %185 = vector.broadcast %cst_62 : f32 to vector<200x32xf32>
    %186 = arith.mulf %185, %184 : vector<200x32xf32>
    %cst_63 = arith.constant 1.000000e+00 : f32
    %187 = vector.broadcast %cst_63 : f32 to vector<200x32xf32>
    %188 = arith.subf %186, %187 : vector<200x32xf32>
    %189 = arith.mulf %182, %167 : vector<200x32xf32>
    %190 = arith.mulf %181, %188 : vector<200x32xf32>
    %191 = arith.addf %189, %190 : vector<200x32xf32>
    %192 = math.tanh %191 : vector<200x32xf32>
    %193 = arith.mulf %183, %192 : vector<200x32xf32>
    %c8_i32 = arith.constant 8 : i32
    %c0_64 = arith.constant 0 : index
    %c0_65 = arith.constant 0 : index
    %194 = vector.load %arg2[%c0_64, %c0_65] : memref<200x32xf32, #tpu.memory_space<vmem>>, vector<200x32xf32>
    tpu.vector_store %arg2[%c0_64, %c0_65], %193 {strides = array<i32>} : memref<200x32xf32, #tpu.memory_space<vmem>>, vector<200x32xf32>,
    return
  }
}

module attributes {stable_mosaic.version = 11 : i64} {
  func.func @graph_kernel(%arg0: i32, %arg1: memref<256x32xf32, #tpu.memory_space<vmem>>, %arg2: memref<256x1xf32, #tpu.memory_space<vmem>>, %arg3: memref<256x1xf32, #tpu.memory_space<vmem>>, %arg4: memref<4x256x128xbf16, #tpu.memory_space<vmem>>, %arg5: memref<256x128xbf16, #tpu.memory_space<vmem>>, %arg6: memref<4xf32, #tpu.memory_space<smem>>, %arg7: memref<1xf32, #tpu.memory_space<smem>>, %arg8: memref<32x1xf32, #tpu.memory_space<vmem>>, %arg9: memref<256x1xf32, #tpu.memory_space<vmem>>, %arg10: memref<256x32xf32, #tpu.memory_space<vmem>>) attributes {dimension_semantics = [#tpu.dimension_semantics<arbitrary>], iteration_bounds = array<i64: 2>, scalar_prefetch = 0 : i64, scratch_operands = 1 : i64, tpu.core_type = #tpu.core_type<tc>, window_params = [{pipeline_mode = #tpu.pipeline_mode<synchronous>, transform_indices = @transform_0, window_bounds = array<i64: 256, 32>}, {pipeline_mode = #tpu.pipeline_mode<synchronous>, transform_indices = @transform_1, window_bounds = array<i64: 256, 1>}, {pipeline_mode = #tpu.pipeline_mode<synchronous>, transform_indices = @transform_2, window_bounds = array<i64: 256, 1>}, {transform_indices = @transform_3, window_bounds = array<i64: 4, 256, 128>}, {transform_indices = @transform_4, window_bounds = array<i64: 256, 128>}, {transform_indices = @transform_5, window_bounds = array<i64: 4>}, {transform_indices = @transform_6, window_bounds = array<i64: 1>}, {pipeline_mode = #tpu.pipeline_mode<synchronous>, transform_indices = @transform_7, window_bounds = array<i64: 32, 1>}, {pipeline_mode = #tpu.pipeline_mode<synchronous>, transform_indices = @transform_8, window_bounds = array<i64: 256, 1>}]} {
    %c0_i32 = arith.constant 0 : i32
    %0 = arith.cmpi eq, %arg0, %c0_i32 : i32
    %1 = arith.extui %0 : i1 to i32
    %c0_i32_0 = arith.constant 0 : i32
    %2 = arith.cmpi ne, %1, %c0_i32_0 : i32
    scf.if %2 {
      %cst_27 = arith.constant 0.000000e+00 : f32
      %62 = vector.broadcast %cst_27 : f32 to vector<256x32xf32>
      %c0_28 = arith.constant 0 : index
      %c0_29 = arith.constant 0 : index
      %63 = vector.load %arg10[%c0_28, %c0_29] : memref<256x32xf32, #tpu.memory_space<vmem>>, vector<256x32xf32>
      tpu.vector_store %arg10[%c0_28, %c0_29], %62 {strides = array<i32>} : memref<256x32xf32, #tpu.memory_space<vmem>>, vector<256x32xf32>,
    } else {
    }
    %c0 = arith.constant 0 : index
    %3 = memref.load %arg6[%c0] : memref<4xf32, #tpu.memory_space<smem>>
    %c0_1 = arith.constant 0 : index
    %c0_2 = arith.constant 0 : index
    %c0_3 = arith.constant 0 : index
    %4 = vector.load %arg4[%c0_1, %c0_2, %c0_3] : memref<4x256x128xbf16, #tpu.memory_space<vmem>>, vector<1x256x128xbf16>
    %5 = vector.shape_cast %4 : vector<1x256x128xbf16> to vector<256x128xbf16>
    %6 = arith.extf %5 : vector<256x128xbf16> to vector<256x128xf32>
    %7 = vector.broadcast %3 : f32 to vector<256x128xf32>
    %8 = arith.mulf %7, %6 : vector<256x128xf32>
    %c1 = arith.constant 1 : index
    %9 = memref.load %arg6[%c1] : memref<4xf32, #tpu.memory_space<smem>>
    %c1_4 = arith.constant 1 : index
    %c0_5 = arith.constant 0 : index
    %c0_6 = arith.constant 0 : index
    %10 = vector.load %arg4[%c1_4, %c0_5, %c0_6] : memref<4x256x128xbf16, #tpu.memory_space<vmem>>, vector<1x256x128xbf16>
    %11 = vector.shape_cast %10 : vector<1x256x128xbf16> to vector<256x128xbf16>
    %12 = arith.extf %11 : vector<256x128xbf16> to vector<256x128xf32>
    %13 = vector.broadcast %9 : f32 to vector<256x128xf32>
    %14 = arith.mulf %13, %12 : vector<256x128xf32>
    %15 = arith.addf %8, %14 : vector<256x128xf32>
    %c2 = arith.constant 2 : index
    %16 = memref.load %arg6[%c2] : memref<4xf32, #tpu.memory_space<smem>>
    %c2_7 = arith.constant 2 : index
    %c0_8 = arith.constant 0 : index
    %c0_9 = arith.constant 0 : index
    %17 = vector.load %arg4[%c2_7, %c0_8, %c0_9] : memref<4x256x128xbf16, #tpu.memory_space<vmem>>, vector<1x256x128xbf16>
    %18 = vector.shape_cast %17 : vector<1x256x128xbf16> to vector<256x128xbf16>
    %19 = arith.extf %18 : vector<256x128xbf16> to vector<256x128xf32>
    %20 = vector.broadcast %16 : f32 to vector<256x128xf32>
    %21 = arith.mulf %20, %19 : vector<256x128xf32>
    %22 = arith.addf %15, %21 : vector<256x128xf32>
    %c3 = arith.constant 3 : index
    %23 = memref.load %arg6[%c3] : memref<4xf32, #tpu.memory_space<smem>>
    %c3_10 = arith.constant 3 : index
    %c0_11 = arith.constant 0 : index
    %c0_12 = arith.constant 0 : index
    %24 = vector.load %arg4[%c3_10, %c0_11, %c0_12] : memref<4x256x128xbf16, #tpu.memory_space<vmem>>, vector<1x256x128xbf16>
    %25 = vector.shape_cast %24 : vector<1x256x128xbf16> to vector<256x128xbf16>
    %26 = arith.extf %25 : vector<256x128xbf16> to vector<256x128xf32>
    %27 = vector.broadcast %23 : f32 to vector<256x128xf32>
    %28 = arith.mulf %27, %26 : vector<256x128xf32>
    %29 = arith.addf %22, %28 : vector<256x128xf32>
    %c0_13 = arith.constant 0 : index
    %30 = memref.load %arg7[%c0_13] : memref<1xf32, #tpu.memory_space<smem>>
    %31 = vector.broadcast %30 : f32 to vector<256x128xf32>
    %32 = arith.addf %29, %31 : vector<256x128xf32>
    %cst = arith.constant 2.000000e-01 : f32
    %33 = vector.broadcast %cst : f32 to vector<256x128xf32>
    %34 = arith.mulf %33, %32 : vector<256x128xf32>
    %35 = arith.maximumf %34, %32 : vector<256x128xf32>
    %c0_14 = arith.constant 0 : index
    %c0_15 = arith.constant 0 : index
    %36 = vector.load %arg5[%c0_14, %c0_15] : memref<256x128xbf16, #tpu.memory_space<vmem>>, vector<256x128xbf16>
    %37 = arith.extf %36 : vector<256x128xbf16> to vector<256x128xf32>
    %c0_16 = arith.constant 0 : index
    %c0_17 = arith.constant 0 : index
    %38 = vector.load %arg2[%c0_16, %c0_17] : memref<256x1xf32, #tpu.memory_space<vmem>>, vector<256x1xf32>
    %39 = vector.broadcast %38 : vector<256x1xf32> to vector<256x128xf32>
    %40 = arith.addf %37, %39 : vector<256x128xf32>
    %41 = arith.addf %40, %35 : vector<256x128xf32>
    %cst_18 = arith.constant dense<0xFF800000> : vector<128xf32>
    %42 = vector.multi_reduction <maximumf>, %41, %cst_18 [0] : vector<256x128xf32> to vector<128xf32>
    %43 = vector.shape_cast %42 : vector<128xf32> to vector<1x128xf32>
    %44 = vector.broadcast %43 : vector<1x128xf32> to vector<256x128xf32>
    %45 = arith.subf %41, %44 : vector<256x128xf32>
    %46 = math.exp %45 : vector<256x128xf32>
    %cst_19 = arith.constant dense<0.000000e+00> : vector<128xf32>
    %47 = vector.multi_reduction <add>, %46, %cst_19 [0] : vector<256x128xf32> to vector<128xf32>
    %48 = vector.shape_cast %47 : vector<128xf32> to vector<1x128xf32>
    %49 = vector.broadcast %48 : vector<1x128xf32> to vector<256x128xf32>
    %50 = arith.divf %46, %49 : vector<256x128xf32>
    %c128_i32 = arith.constant 128 : i32
    %51 = arith.muli %arg0, %c128_i32 : i32
    %52 = tpu.assume_multiple %51, 128 : i32
    %53 = arith.index_cast %52 : i32 to index
    %c0_20 = arith.constant 0 : index
    %54 = vector.load %arg1[%53, %c0_20] : memref<256x32xf32, #tpu.memory_space<vmem>>, vector<128x32xf32>
    %c0_21 = arith.constant 0 : index
    %c0_22 = arith.constant 0 : index
    %55 = vector.load %arg10[%c0_21, %c0_22] : memref<256x32xf32, #tpu.memory_space<vmem>>, vector<256x32xf32>
    %cst_23 = arith.constant dense<0.000000e+00> : vector<256x32xf32>
    %56 = tpu.matmul %50, %54, %cst_23 {dimension_numbers = #tpu.dot_dimension_numbers<[1], [0], [0], [1], [0, 0, 1, 1], [], []>} : vector<256x128xf32>, vector<128x32xf32>, vector<256x32xf32> -> vector<256x32xf32>
    %57 = arith.addf %55, %56 : vector<256x32xf32>
    %c0_24 = arith.constant 0 : index
    %c0_25 = arith.constant 0 : index
    %58 = vector.load %arg10[%c0_24, %c0_25] : memref<256x32xf32, #tpu.memory_space<vmem>>, vector<256x32xf32>
    tpu.vector_store %arg10[%c0_24, %c0_25], %57 {strides = array<i32>} : memref<256x32xf32, #tpu.memory_space<vmem>>, vector<256x32xf32>,
    %c1_i32 = arith.constant 1 : i32
    %59 = arith.cmpi eq, %arg0, %c1_i32 : i32
    %60 = arith.extui %59 : i1 to i32
    %c0_i32_26 = arith.constant 0 : i32
    %61 = arith.cmpi ne, %60, %c0_i32_26 : i32
    scf.if %61 {
      %c0_27 = arith.constant 0 : index
      %c0_28 = arith.constant 0 : index
      %62 = vector.load %arg3[%c0_27, %c0_28] : memref<256x1xf32, #tpu.memory_space<vmem>>, vector<256x1xf32>
      %c0_29 = arith.constant 0 : index
      %c0_30 = arith.constant 0 : index
      %63 = vector.load %arg10[%c0_29, %c0_30] : memref<256x32xf32, #tpu.memory_space<vmem>>, vector<256x32xf32>
      %c0_31 = arith.constant 0 : index
      %c0_32 = arith.constant 0 : index
      %64 = vector.load %arg8[%c0_31, %c0_32] : memref<32x1xf32, #tpu.memory_space<vmem>>, vector<32x1xf32>
      %cst_33 = arith.constant dense<0.000000e+00> : vector<256x1xf32>
      %65 = tpu.matmul %63, %64, %cst_33 {dimension_numbers = #tpu.dot_dimension_numbers<[1], [0], [0], [1], [0, 0, 1, 1], [], []>} : vector<256x32xf32>, vector<32x1xf32>, vector<256x1xf32> -> vector<256x1xf32>
      %66 = arith.addf %62, %65 : vector<256x1xf32>
      %cst_34 = arith.constant 2.000000e-01 : f32
      %67 = vector.broadcast %cst_34 : f32 to vector<256x1xf32>
      %68 = arith.mulf %67, %66 : vector<256x1xf32>
      %69 = arith.maximumf %68, %66 : vector<256x1xf32>
      %c0_35 = arith.constant 0 : index
      %c0_36 = arith.constant 0 : index
      %70 = vector.load %arg9[%c0_35, %c0_36] : memref<256x1xf32, #tpu.memory_space<vmem>>, vector<256x1xf32>
      tpu.vector_store %arg9[%c0_35, %c0_36], %69 {strides = array<i32>} : memref<256x1xf32, #tpu.memory_space<vmem>>, vector<256x1xf32>,
    } else {
    }
    return
  }
  func.func @transform_0(%arg0: i32) -> (i32, i32) {
    %c0_i32 = arith.constant 0 : i32
    %c0_i32_0 = arith.constant 0 : i32
    %c0_i32_1 = arith.constant 0 : i32
    return %c0_i32, %c0_i32_0 : i32, i32
  }
  func.func @transform_1(%arg0: i32) -> (i32, i32) {
    %c0_i32 = arith.constant 0 : i32
    %c0_i32_0 = arith.constant 0 : i32
    %c0_i32_1 = arith.constant 0 : i32
    return %c0_i32, %c0_i32_0 : i32, i32
  }
  func.func @transform_2(%arg0: i32) -> (i32, i32) {
    %c0_i32 = arith.constant 0 : i32
    %c0_i32_0 = arith.constant 0 : i32
    %c0_i32_1 = arith.constant 0 : i32
    return %c0_i32, %c0_i32_0 : i32, i32
  }
  func.func @transform_3(%arg0: i32) -> (i32, i32, i32) {
    %c0_i32 = arith.constant 0 : i32
    %c0_i32_0 = arith.constant 0 : i32
    %c0_i32_1 = arith.constant 0 : i32
    return %c0_i32, %c0_i32_0, %arg0 : i32, i32, i32
  }
  func.func @transform_4(%arg0: i32) -> (i32, i32) {
    %c0_i32 = arith.constant 0 : i32
    %c0_i32_0 = arith.constant 0 : i32
    return %c0_i32, %arg0 : i32, i32
  }
  func.func @transform_5(%arg0: i32) -> i32 {
    %c0_i32 = arith.constant 0 : i32
    %c0_i32_0 = arith.constant 0 : i32
    return %c0_i32 : i32
  }
  func.func @transform_6(%arg0: i32) -> i32 {
    %c0_i32 = arith.constant 0 : i32
    %c0_i32_0 = arith.constant 0 : i32
    return %c0_i32 : i32
  }
  func.func @transform_7(%arg0: i32) -> (i32, i32) {
    %c0_i32 = arith.constant 0 : i32
    %c0_i32_0 = arith.constant 0 : i32
    %c0_i32_1 = arith.constant 0 : i32
    return %c0_i32, %c0_i32_0 : i32, i32
  }
  func.func @transform_8(%arg0: i32) -> (i32, i32) {
    %c0_i32 = arith.constant 0 : i32
    %c0_i32_0 = arith.constant 0 : i32
    %c0_i32_1 = arith.constant 0 : i32
    return %c0_i32, %c0_i32_0 : i32, i32
  }
}

</mosaic_0001>

<llo_original>
// kernel: rera_forward.3
$region0: #{rera_forward.3}
  #allocation0 [shape = 'u32[]', space=smem, size = 0x4, offset = 0x4, fixed_abs, tag = 'smem constant byte address 0x4 - core index']
  #allocation1 [shape = 'u32[72,128]{1,0:T(1,128)}', space=vmem, size = 0x9000, scoped, tag = 'internal scratch']
  #allocation2 [shape = 'f32[256,32]{1,0:T(8,128)}', space=vmem, size = 0x20000, scoped, tag = 'scratch operand']
  #allocation3 [shape = 'f32[1]{0:T(128)S(6)}', space=smem, size = 0x200, scoped, tag = 'scoped memory for rera_forward.3']
  %s0 = inlined_call_operand.vmem [shape: f32[256,32], index: 0, kind: input, shape index: {}]
  %s1 = inlined_call_operand.vmem [shape: f32[256,1], index: 1, kind: input, shape index: {}]
  %s2 = inlined_call_operand.vmem [shape: f32[256,1], index: 2, kind: input, shape index: {}]
  %s3 = inlined_call_operand.vmem [shape: bf16[4,256,256], index: 3, kind: input, shape index: {}]
  %s4 = inlined_call_operand.vmem [shape: bf16[256,256], index: 4, kind: input, shape index: {}]
  %s5 = inlined_call_operand.vmem [shape: f32[4], index: 5, kind: input, shape index: {}]
  %s6 = inlined_call_operand.<no memory space> [shape: f32[1], index: 6, kind: input, shape index: {}]
  %s7 = inlined_call_operand.vmem [shape: f32[32,1], index: 7, kind: input, shape index: {}]
  %s8 = inlined_call_operand.vmem [shape: f32[256,1], index: 8, kind: output, shape index: {}]
  %s9 = sld [smem:[#allocation0]]
  $region159: #{rera_forward.3} parent=0
    _
  %s11 = ssub.s32 1, %s9
  %s12 = scalar_select 0, %s11, %s9
  %13 = sst [smem:[#allocation3]] %s6
  $region1: #{rera_forward.3} parent=0
    #allocation4 [shape = 'u8[524288]{0}', space=vmem, size = 0x80000, scoped, tag = 'input window, operand 3']
    #allocation5 [shape = 'u8[131072]{0}', space=vmem, size = 0x20000, scoped, tag = 'input window, operand 4']
    #allocation6 [shape = 'u8[512]{0}', space=smem, size = 0x200, scoped, tag = 'input window, operand 5, single buffered']
    #allocation7 [shape = 's32[2]{0}', space=sflag, size = 0x8, scoped, tag = 'scoped memory for rera_forward.3']
    %14 = vsyncpa [#allocation7], 0
    loop: start=0, step=1, limit=4
    $region2: #{rera_forward.3} parent=1 // loop_pre_header
      _
    $region3: #{rera_forward.3} parent=1 // loop_header
      %s16 = sphi 0, %s20
      %p17 = scmp.ge.s32.totalorder %s16, 4
      %s24 = sphi 0, %s24
      %s26 = sphi 0, %s24
      %s27 = sphi 0, %s26
      %s41 = sphi 0, %s27
      %s45 = sphi 0, %s45
      %s47 = sphi 0, %s45
      %s48 = sphi 0, %s47
      %s62 = sphi 0, %s48
      %s66 = sphi 0, %s66
      %s68 = sphi 0, %s66
      %s69 = sphi 0, %s68
      %s83 = sphi 0, %s69
      %s89 = sphi 0, %s91
      %s92 = sphi 0, %s89
      %s93 = sphi 0, %s92
      %s109 = sphi 0, %s93
      %s115 = sphi 0, %s117
      %s118 = sphi 0, %s115
      %s119 = sphi 0, %s118
      %s135 = sphi 0, %s119
      %s139 = sphi 0, %s139
      %s141 = sphi 0, %s139
      %s142 = sphi 0, %s141
      %s156 = sphi 0, %s142
      %s160 = sphi 0, %s160
      %s162 = sphi 0, %s160
      %s163 = sphi 0, %s162
      %s177 = sphi 0, %s163
      %s181 = sphi 0, %s181
      %s183 = sphi 0, %s181
      %s184 = sphi 0, %s183
      %s198 = sphi 0, %s184
      %s202 = sphi 0, %s202
      %s204 = sphi 0, %s202
      %s205 = sphi 0, %s204
      %s219 = sphi 0, %s205
    $region4: #{rera_forward.3} parent=1 // loop_header_branch
      %19 = sbr.rel (%p17) target = $region8
    $region5: #{rera_forward.3} parent=1 // loop_body
      %s21 = ssub.s32 %s16, 1
      %s22 = ssub.s32 %s16, 2
      %s23 = sadd.s32 %s16, 1
      %s25 = sadd.s32 %s24, 1
      %p28 = scmp.eq.s32.totalorder %s16, 1
      %p29 = scmp.ne.s32.totalorder %s24, %s26
      %p30 = scmp.eq.s32.totalorder %s16, 0
      %p31 = por %p29, %p30
      %p32 = scmp.ne.s32.totalorder %s24, %s26
      %p33 = scmp.eq.s32.totalorder %s21, 1
      %p34 = por %p32, %p33
      %p35 = scmp.ne.s32.totalorder %s26, %s27
      %p36 = scmp.eq.s32.totalorder %s21, 0
      %p37 = por %p35, %p36
      %p38 = scmp.ne.s32.totalorder %s26, %s27
      %p39 = scmp.eq.s32.totalorder %s22, 1
      %p40 = por %p38, %p39
      %p42 = scmp.ne.s32.totalorder %s27, %s41
      %p43 = scmp.eq.s32.totalorder %s22, 0
      %p44 = por %p42, %p43
      %s46 = sadd.s32 %s45, 1
      %p49 = scmp.eq.s32.totalorder %s16, 1
      %p50 = scmp.ne.s32.totalorder %s45, %s47
      %p51 = scmp.eq.s32.totalorder %s16, 0
      %p52 = por %p50, %p51
      %p53 = scmp.ne.s32.totalorder %s45, %s47
      %p54 = scmp.eq.s32.totalorder %s21, 1
      %p55 = por %p53, %p54
      %p56 = scmp.ne.s32.totalorder %s47, %s48
      %p57 = scmp.eq.s32.totalorder %s21, 0
      %p58 = por %p56, %p57
      %p59 = scmp.ne.s32.totalorder %s47, %s48
      %p60 = scmp.eq.s32.totalorder %s22, 1
      %p61 = por %p59, %p60
      %p63 = scmp.ne.s32.totalorder %s48, %s62
      %p64 = scmp.eq.s32.totalorder %s22, 0
      %p65 = por %p63, %p64
      %s67 = sadd.s32 %s66, 1
      %p70 = scmp.eq.s32.totalorder %s16, 1
      %p71 = scmp.ne.s32.totalorder %s66, %s68
      %p72 = scmp.eq.s32.totalorder %s16, 0
      %p73 = por %p71, %p72
      %p74 = scmp.ne.s32.totalorder %s66, %s68
      %p75 = scmp.eq.s32.totalorder %s21, 1
      %p76 = por %p74, %p75
      %p77 = scmp.ne.s32.totalorder %s68, %s69
      %p78 = scmp.eq.s32.totalorder %s21, 0
      %p79 = por %p77, %p78
      %p80 = scmp.ne.s32.totalorder %s68, %s69
      %p81 = scmp.eq.s32.totalorder %s22, 1
      %p82 = por %p80, %p81
      %p84 = scmp.ne.s32.totalorder %s69, %s83
      %p85 = scmp.eq.s32.totalorder %s22, 0
      %p86 = por %p84, %p85
      %s87 = ssub.s32 %s16, %s23
      %p88 = scmp.eq.s32.totalorder %s87, 0
      %s90 = sadd.s32 %s89, 1
      %s91 = scalar_select %p88, %s89, %s90
      %p94 = pneg %p88
      %p95 = scmp.eq.s32.totalorder %s16, 1
      %p96 = por %p94, %p95
      %p97 = scmp.ne.s32.totalorder %s89, %s92
      %p98 = scmp.eq.s32.totalorder %s16, 0
      %p99 = por %p97, %p98
      %p100 = scmp.ne.s32.totalorder %s89, %s92
      %p101 = scmp.eq.s32.totalorder %s21, 1
      %p102 = por %p100, %p101
      %p103 = scmp.ne.s32.totalorder %s92, %s93
      %p104 = scmp.eq.s32.totalorder %s21, 0
      %p105 = por %p103, %p104
      %p106 = scmp.ne.s32.totalorder %s92, %s93
      %p107 = scmp.eq.s32.totalorder %s22, 1
      %p108 = por %p106, %p107
      %p110 = scmp.ne.s32.totalorder %s93, %s109
      %p111 = scmp.eq.s32.totalorder %s22, 0
      %p112 = por %p110, %p111
      %s113 = ssub.s32 %s16, %s23
      %p114 = scmp.eq.s32.totalorder %s113, 0
      %s116 = sadd.s32 %s115, 1
      %s117 = scalar_select %p114, %s115, %s116
      %p120 = pneg %p114
      %p121 = scmp.eq.s32.totalorder %s16, 1
      %p122 = por %p120, %p121
      %p123 = scmp.ne.s32.totalorder %s115, %s118
      %p124 = scmp.eq.s32.totalorder %s16, 0
      %p125 = por %p123, %p124
      %p126 = scmp.ne.s32.totalorder %s115, %s118
      %p127 = scmp.eq.s32.totalorder %s21, 1
      %p128 = por %p126, %p127
      %p129 = scmp.ne.s32.totalorder %s118, %s119
      %p130 = scmp.eq.s32.totalorder %s21, 0
      %p131 = por %p129, %p130
      %p132 = scmp.ne.s32.totalorder %s118, %s119
      %p133 = scmp.eq.s32.totalorder %s22, 1
      %p134 = por %p132, %p133
      %p136 = scmp.ne.s32.totalorder %s119, %s135
      %p137 = scmp.eq.s32.totalorder %s22, 0
      %p138 = por %p136, %p137
      %s140 = sadd.s32 %s139, 1
      %p143 = scmp.eq.s32.totalorder %s16, 1
      %p144 = scmp.ne.s32.totalorder %s139, %s141
      %p145 = scmp.eq.s32.totalorder %s16, 0
      %p146 = por %p144, %p145
      %p147 = scmp.ne.s32.totalorder %s139, %s141
      %p148 = scmp.eq.s32.totalorder %s21, 1
      %p149 = por %p147, %p148
      %p150 = scmp.ne.s32.totalorder %s141, %s142
      %p151 = scmp.eq.s32.totalorder %s21, 0
      %p152 = por %p150, %p151
      %p153 = scmp.ne.s32.totalorder %s141, %s142
      %p154 = scmp.eq.s32.totalorder %s22, 1
      %p155 = por %p153, %p154
      %p157 = scmp.ne.s32.totalorder %s142, %s156
      %p158 = scmp.eq.s32.totalorder %s22, 0
      %p159 = por %p157, %p158
      %s161 = sadd.s32 %s160, 1
      %p164 = scmp.eq.s32.totalorder %s16, 1
      %p165 = scmp.ne.s32.totalorder %s160, %s162
      %p166 = scmp.eq.s32.totalorder %s16, 0
      %p167 = por %p165, %p166
      %p168 = scmp.ne.s32.totalorder %s160, %s162
      %p169 = scmp.eq.s32.totalorder %s21, 1
      %p170 = por %p168, %p169
      %p171 = scmp.ne.s32.totalorder %s162, %s163
      %p172 = scmp.eq.s32.totalorder %s21, 0
      %p173 = por %p171, %p172
      %p174 = scmp.ne.s32.totalorder %s162, %s163
      %p175 = scmp.eq.s32.totalorder %s22, 1
      %p176 = por %p174, %p175
      %p178 = scmp.ne.s32.totalorder %s163, %s177
      %p179 = scmp.eq.s32.totalorder %s22, 0
      %p180 = por %p178, %p179
      %s182 = sadd.s32 %s181, 1
      %p185 = scmp.eq.s32.totalorder %s16, 1
      %p186 = scmp.ne.s32.totalorder %s181, %s183
      %p187 = scmp.eq.s32.totalorder %s16, 0
      %p188 = por %p186, %p187
      %p189 = scmp.ne.s32.totalorder %s181, %s183
      %p190 = scmp.eq.s32.totalorder %s21, 1
      %p191 = por %p189, %p190
      %p192 = scmp.ne.s32.totalorder %s183, %s184
      %p193 = scmp.eq.s32.totalorder %s21, 0
      %p194 = por %p192, %p193
      %p195 = scmp.ne.s32.totalorder %s183, %s184
      %p196 = scmp.eq.s32.totalorder %s22, 1
      %p197 = por %p195, %p196
      %p199 = scmp.ne.s32.totalorder %s184, %s198
      %p200 = scmp.eq.s32.totalorder %s22, 0
      %p201 = por %p199, %p200
      %s203 = sadd.s32 %s202, 1
      %p206 = scmp.eq.s32.totalorder %s16, 1
      %p207 = scmp.ne.s32.totalorder %s202, %s204
      %p208 = scmp.eq.s32.totalorder %s16, 0
      %p209 = por %p207, %p208
      %p210 = scmp.ne.s32.totalorder %s202, %s204
      %p211 = scmp.eq.s32.totalorder %s21, 1
      %p212 = por %p210, %p211
      %p213 = scmp.ne.s32.totalorder %s204, %s205
      %p214 = scmp.eq.s32.totalorder %s21, 0
      %p215 = por %p213, %p214
      %p216 = scmp.ne.s32.totalorder %s204, %s205
      %p217 = scmp.eq.s32.totalorder %s22, 1
      %p218 = por %p216, %p217
      %p220 = scmp.ne.s32.totalorder %s205, %s219
      %p221 = scmp.eq.s32.totalorder %s22, 0
      %p222 = por %p220, %p221
      %p223 = scmp.le.s32.totalorder 1, %s16
      %p224 = scmp.lt.s32.totalorder %s16, 3
      %p225 = pnand %p223, %p224
      %p226 = pneg %p225
      // Predicated region
      $region9: #{rera_forward.3} parent=5 // pred_check
        _
      $region10: #{rera_forward.3} parent=5 // pred_check_branch
        %228 = sbr.rel (%p225) target = $region12
      $region11: #{rera_forward.3} parent=5 // pred_region
        %s229 = ssub.s32 %s16, 1
        // Predicated region
        $region13: #{rera_forward.3} parent=11 // pred_check
          %p230 = pneg %p37
        $region14: #{rera_forward.3} parent=11 // pred_check_branch
          %232 = sbr.rel (%p230) target = $region16
        $region15: #{rera_forward.3} parent=11 // pred_region
          _
        $region16: #{rera_forward.3} parent=11 // pred_fallthru
          _
        // Predicated region
        $region17: #{rera_forward.3} parent=11 // pred_check
          %p233 = pneg %p58
        $region18: #{rera_forward.3} parent=11 // pred_check_branch
          %235 = sbr.rel (%p233) target = $region20
        $region19: #{rera_forward.3} parent=11 // pred_region
          _
        $region20: #{rera_forward.3} parent=11 // pred_fallthru
          _
        // Predicated region
        $region21: #{rera_forward.3} parent=11 // pred_check
          %p236 = pneg %p79
        $region22: #{rera_forward.3} parent=11 // pred_check_branch
          %238 = sbr.rel (%p236) target = $region24
        $region23: #{rera_forward.3} parent=11 // pred_region
          _
        $region24: #{rera_forward.3} parent=11 // pred_fallthru
          _
        // Predicated region
        $region25: #{rera_forward.3} parent=11 // pred_check
          %p239 = pneg %p152
        $region26: #{rera_forward.3} parent=11 // pred_check_branch
          %241 = sbr.rel (%p239) target = $region28
        $region27: #{rera_forward.3} parent=11 // pred_region
          %243 = vsyncadd [#allocation7], 0
          %s245 = sshll.u32 %s5, 4
          %s246 = int_to_ptr.vmem [resolvable:$true] %s245
          %248 = dma.vmem_to_smem %s246, 16, [#allocation6], [#allocation7]
        $region28: #{rera_forward.3} parent=11 // pred_fallthru
          _
        // Predicated region
        $region29: #{rera_forward.3} parent=11 // pred_check
          %p249 = pneg %p173
        $region30: #{rera_forward.3} parent=11 // pred_check_branch
          %251 = sbr.rel (%p249) target = $region32
        $region31: #{rera_forward.3} parent=11 // pred_region
          _
        $region32: #{rera_forward.3} parent=11 // pred_fallthru
          _
        // Predicated region
        $region33: #{rera_forward.3} parent=11 // pred_check
          %p252 = pneg %p194
        $region34: #{rera_forward.3} parent=11 // pred_check_branch
          %254 = sbr.rel (%p252) target = $region36
        $region35: #{rera_forward.3} parent=11 // pred_region
          _
        $region36: #{rera_forward.3} parent=11 // pred_fallthru
          _
      $region12: #{rera_forward.3} parent=5 // pred_fallthru
        _
      %p255 = scmp.lt.s32.totalorder %s16, 2
      // Predicated region
      $region37: #{rera_forward.3} parent=5 // pred_check
        %p256 = pneg %p255
      $region38: #{rera_forward.3} parent=5 // pred_check_branch
        %258 = sbr.rel (%p256) target = $region40
      $region39: #{rera_forward.3} parent=5 // pred_region
        // Predicated region
        $region41: #{rera_forward.3} parent=39 // pred_check
          %p259 = pneg %p99
        $region42: #{rera_forward.3} parent=39 // pred_check_branch
          %261 = sbr.rel (%p259) target = $region44
        $region43: #{rera_forward.3} parent=39 // pred_region
          %s262 = sand.u32 %s89, 1
          %s263 = sand.u32 %s89, 1
          %s264 = smul.addr %s263, 512
          %s265 = scalar_lea.vmem [#allocation4], %s264
          %s266 = smul.addr %s16, 4
          %s267 = scalar_lea.vmem %s3, %s266
          // Predicated region
          $region45: #{rera_forward.3} parent=43 // pred_check
            _
          $region46: #{rera_forward.3} parent=43 // pred_check_branch
            %269 = sbr.rel (0) target = $region48
          $region47: #{rera_forward.3} parent=43 // pred_region
            // Predicated region
            $region49: #{rera_forward.3} parent=47 // pred_check
              _
            $region50: #{rera_forward.3} parent=47 // pred_check_branch
              %271 = sbr.rel target = $region52
            $region51: #{rera_forward.3} parent=47 // pred_region
              // Predicated region
              $region64: #{rera_forward.3} parent=51 // pred_check
                _
              $region65: #{rera_forward.3} parent=51 // pred_check_branch
                %541 = sbr.rel (0) target = $region67
              $region66: #{rera_forward.3} parent=51 // pred_region
                loop: start=0, step=1, limit=1
                $region68: #{rera_forward.3} parent=66 // loop_pre_header
                  _
                $region69: #{rera_forward.3} parent=66 // loop_header
                  %s543 = sphi 0, %s547
                  %p544 = scmp.ge.s32.totalorder %s543, 1
                  %s548 = sphi %s267, %s267
                  %s549 = sphi %s265, %s265
                $region70: #{rera_forward.3} parent=66 // loop_header_branch
                  %546 = sbr.rel (%p544) target = $region74
                $region71: #{rera_forward.3} parent=66 // loop_body
                  _
                $region72: #{rera_forward.3} parent=66 // loop_footer
                  %s547 = sadd.s32 1, %s543
                $region73: #{rera_forward.3} parent=66 // loop_footer_branch
                  %542 = sbr.rel target = $region69
                $region74: #{rera_forward.3} parent=66 // loop_exit
                  _
                %s551 = ssub.s32 16, 1
                loop: start=0, step=1, limit=1
                $region75: #{rera_forward.3} parent=66 // loop_pre_header
                  _
                $region76: #{rera_forward.3} parent=66 // loop_header
                  %s553 = sphi 0, %s557
                  %p554 = scmp.ge.s32.totalorder %s553, 1
                  %s558 = sphi %s267, %s267
                  %s559 = sphi %s265, %s265
                $region77: #{rera_forward.3} parent=66 // loop_header_branch
                  %556 = sbr.rel (%p554) target = $region81
                $region78: #{rera_forward.3} parent=66 // loop_body
                  %v560 = vld [vmem:[%s558] sm:%s551]
                  %561 = vst [vmem:[%s559] sm:%s551] %v560
                  %v562 = vld [vmem:[%s558 + $0x8] sm:%s551]
                  %563 = vst [vmem:[%s559 + $0x4] sm:%s551] %v562
                  %v564 = vld [vmem:[%s558 + $0x10] sm:%s551]
                  %565 = vst [vmem:[%s559 + $0x8] sm:%s551] %v564
                  %v566 = vld [vmem:[%s558 + $0x18] sm:%s551]
                  %567 = vst [vmem:[%s559 + $0xc] sm:%s551] %v566
                  %v568 = vld [vmem:[%s558 + $0x20] sm:%s551]
                  %569 = vst [vmem:[%s559 + $0x10] sm:%s551] %v568
                  %v570 = vld [vmem:[%s558 + $0x28] sm:%s551]
                  %571 = vst [vmem:[%s559 + $0x14] sm:%s551] %v570
                  %v572 = vld [vmem:[%s558 + $0x30] sm:%s551]
                  %573 = vst [vmem:[%s559 + $0x18] sm:%s551] %v572
                  %v574 = vld [vmem:[%s558 + $0x38] sm:%s551]
                  %575 = vst [vmem:[%s559 + $0x1c] sm:%s551] %v574
                  %v576 = vld [vmem:[%s558 + $0x40] sm:%s551]
                  %577 = vst [vmem:[%s559 + $0x20] sm:%s551] %v576
                  %v578 = vld [vmem:[%s558 + $0x48] sm:%s551]
                  %579 = vst [vmem:[%s559 + $0x24] sm:%s551] %v578
                  %v580 = vld [vmem:[%s558 + $0x50] sm:%s551]
                  %581 = vst [vmem:[%s559 + $0x28] sm:%s551] %v580
                  %v582 = vld [vmem:[%s558 + $0x58] sm:%s551]
                  %583 = vst [vmem:[%s559 + $0x2c] sm:%s551] %v582
                  %v584 = vld [vmem:[%s558 + $0x60] sm:%s551]
                  %585 = vst [vmem:[%s559 + $0x30] sm:%s551] %v584
                  %v586 = vld [vmem:[%s558 + $0x68] sm:%s551]
                  %587 = vst [vmem:[%s559 + $0x34] sm:%s551] %v586
                  %v588 = vld [vmem:[%s558 + $0x70] sm:%s551]
                  %589 = vst [vmem:[%s559 + $0x38] sm:%s551] %v588
                  %v590 = vld [vmem:[%s558 + $0x78] sm:%s551]
                  %591 = vst [vmem:[%s559 + $0x3c] sm:%s551] %v590
                  %v592 = vld [vmem:[%s558 + $0x80] sm:%s551]
                  %593 = vst [vmem:[%s559 + $0x40] sm:%s551] %v592
                  %v594 = vld [vmem:[%s558 + $0x88] sm:%s551]
                  %595 = vst [vmem:[%s559 + $0x44] sm:%s551] %v594
                  %v596 = vld [vmem:[%s558 + $0x90] sm:%s551]
                  %597 = vst [vmem:[%s559 + $0x48] sm:%s551] %v596
                  %v598 = vld [vmem:[%s558 + $0x98] sm:%s551]
                  %599 = vst [vmem:[%s559 + $0x4c] sm:%s551] %v598
                  %v600 = vld [vmem:[%s558 + $0xa0] sm:%s551]
                  %601 = vst [vmem:[%s559 + $0x50] sm:%s551] %v600
                  %v602 = vld [vmem:[%s558 + $0xa8] sm:%s551]
                  %603 = vst [vmem:[%s559 + $0x54] sm:%s551] %v602
                  %v604 = vld [vmem:[%s558 + $0xb0] sm:%s551]
                  %605 = vst [vmem:[%s559 + $0x58] sm:%s551] %v604
                  %v606 = vld [vmem:[%s558 + $0xb8] sm:%s551]
                  %607 = vst [vmem:[%s559 + $0x5c] sm:%s551] %v606
                  %v608 = vld [vmem:[%s558 + $0xc0] sm:%s551]
                  %609 = vst [vmem:[%s559 + $0x60] sm:%s551] %v608
                  %v610 = vld [vmem:[%s558 + $0xc8] sm:%s551]
                  %611 = vst [vmem:[%s559 + $0x64] sm:%s551] %v610
                  %v612 = vld [vmem:[%s558 + $0xd0] sm:%s551]
                  %613 = vst [vmem:[%s559 + $0x68] sm:%s551] %v612
                  %v614 = vld [vmem:[%s558 + $0xd8] sm:%s551]
                  %615 = vst [vmem:[%s559 + $0x6c] sm:%s551] %v614
                  %v616 = vld [vmem:[%s558 + $0xe0] sm:%s551]
                  %617 = vst [vmem:[%s559 + $0x70] sm:%s551] %v616
                  %v618 = vld [vmem:[%s558 + $0xe8] sm:%s551]
                  %619 = vst [vmem:[%s559 + $0x74] sm:%s551] %v618
                  %v620 = vld [vmem:[%s558 + $0xf0] sm:%s551]
                  %621 = vst [vmem:[%s559 + $0x78] sm:%s551] %v620
                  %v622 = vld [vmem:[%s558 + $0xf8] sm:%s551]
                  %623 = vst [vmem:[%s559 + $0x7c] sm:%s551] %v622
                  %v624 = vld [vmem:[%s558 + $0x100] sm:%s551]
                  %625 = vst [vmem:[%s559 + $0x80] sm:%s551] %v624
                  %v626 = vld [vmem:[%s558 + $0x108] sm:%s551]
                  %627 = vst [vmem:[%s559 + $0x84] sm:%s551] %v626
                  %v628 = vld [vmem:[%s558 + $0x110] sm:%s551]
                  %629 = vst [vmem:[%s559 + $0x88] sm:%s551] %v628
                  %v630 = vld [vmem:[%s558 + $0x118] sm:%s551]
                  %631 = vst [vmem:[%s559 + $0x8c] sm:%s551] %v630
                  %v632 = vld [vmem:[%s558 + $0x120] sm:%s551]
                  %633 = vst [vmem:[%s559 + $0x90] sm:%s551] %v632
                  %v634 = vld [vmem:[%s558 + $0x128] sm:%s551]
                  %635 = vst [vmem:[%s559 + $0x94] sm:%s551] %v634
                  %v636 = vld [vmem:[%s558 + $0x130] sm:%s551]
                  %637 = vst [vmem:[%s559 + $0x98] sm:%s551] %v636
                  %v638 = vld [vmem:[%s558 + $0x138] sm:%s551]
                  %639 = vst [vmem:[%s559 + $0x9c] sm:%s551] %v638
                  %v640 = vld [vmem:[%s558 + $0x140] sm:%s551]
                  %641 = vst [vmem:[%s559 + $0xa0] sm:%s551] %v640
                  %v642 = vld [vmem:[%s558 + $0x148] sm:%s551]
                  %643 = vst [vmem:[%s559 + $0xa4] sm:%s551] %v642
                  %v644 = vld [vmem:[%s558 + $0x150] sm:%s551]
                  %645 = vst [vmem:[%s559 + $0xa8] sm:%s551] %v644
                  %v646 = vld [vmem:[%s558 + $0x158] sm:%s551]
                  %647 = vst [vmem:[%s559 + $0xac] sm:%s551] %v646
                  %v648 = vld [vmem:[%s558 + $0x160] sm:%s551]
                  %649 = vst [vmem:[%s559 + $0xb0] sm:%s551] %v648
                  %v650 = vld [vmem:[%s558 + $0x168] sm:%s551]
                  %651 = vst [vmem:[%s559 + $0xb4] sm:%s551] %v650
                  %v652 = vld [vmem:[%s558 + $0x170] sm:%s551]
                  %653 = vst [vmem:[%s559 + $0xb8] sm:%s551] %v652
                  %v654 = vld [vmem:[%s558 + $0x178] sm:%s551]
                  %655 = vst [vmem:[%s559 + $0xbc] sm:%s551] %v654
                  %v656 = vld [vmem:[%s558 + $0x180] sm:%s551]
                  %657 = vst [vmem:[%s559 + $0xc0] sm:%s551] %v656
                  %v658 = vld [vmem:[%s558 + $0x188] sm:%s551]
                  %659 = vst [vmem:[%s559 + $0xc4] sm:%s551] %v658
                  %v660 = vld [vmem:[%s558 + $0x190] sm:%s551]
                  %661 = vst [vmem:[%s559 + $0xc8] sm:%s551] %v660
                  %v662 = vld [vmem:[%s558 + $0x198] sm:%s551]
                  %663 = vst [vmem:[%s559 + $0xcc] sm:%s551] %v662
                  %v664 = vld [vmem:[%s558 + $0x1a0] sm:%s551]
                  %665 = vst [vmem:[%s559 + $0xd0] sm:%s551] %v664
                  %v666 = vld [vmem:[%s558 + $0x1a8] sm:%s551]
                  %667 = vst [vmem:[%s559 + $0xd4] sm:%s551] %v666
                  %v668 = vld [vmem:[%s558 + $0x1b0] sm:%s551]
                  %669 = vst [vmem:[%s559 + $0xd8] sm:%s551] %v668
                  %v670 = vld [vmem:[%s558 + $0x1b8] sm:%s551]
                  %671 = vst [vmem:[%s559 + $0xdc] sm:%s551] %v670
                  %v672 = vld [vmem:[%s558 + $0x1c0] sm:%s551]
                  %673 = vst [vmem:[%s559 + $0xe0] sm:%s551] %v672
                  %v674 = vld [vmem:[%s558 + $0x1c8] sm:%s551]
                  %675 = vst [vmem:[%s559 + $0xe4] sm:%s551] %v674
                  %v676 = vld [vmem:[%s558 + $0x1d0] sm:%s551]
                  %677 = vst [vmem:[%s559 + $0xe8] sm:%s551] %v676
                  %v678 = vld [vmem:[%s558 + $0x1d8] sm:%s551]
                  %679 = vst [vmem:[%s559 + $0xec] sm:%s551] %v678
                  %v680 = vld [vmem:[%s558 + $0x1e0] sm:%s551]
                  %681 = vst [vmem:[%s559 + $0xf0] sm:%s551] %v680
                  %v682 = vld [vmem:[%s558 + $0x1e8] sm:%s551]
                  %683 = vst [vmem:[%s559 + $0xf4] sm:%s551] %v682
                  %v684 = vld [vmem:[%s558 + $0x1f0] sm:%s551]
                  %685 = vst [vmem:[%s559 + $0xf8] sm:%s551] %v684
                  %v686 = vld [vmem:[%s558 + $0x1f8] sm:%s551]
                  %687 = vst [vmem:[%s559 + $0xfc] sm:%s551] %v686
                  %v688 = vld [vmem:[%s558 + $0x200] sm:%s551]
                  %689 = vst [vmem:[%s559 + $0x100] sm:%s551] %v688
                  %v690 = vld [vmem:[%s558 + $0x208] sm:%s551]
                  %691 = vst [vmem:[%s559 + $0x104] sm:%s551] %v690
                  %v692 = vld [vmem:[%s558 + $0x210] sm:%s551]
                  %693 = vst [vmem:[%s559 + $0x108] sm:%s551] %v692
                  %v694 = vld [vmem:[%s558 + $0x218] sm:%s551]
                  %695 = vst [vmem:[%s559 + $0x10c] sm:%s551] %v694
                  %v696 = vld [vmem:[%s558 + $0x220] sm:%s551]
                  %697 = vst [vmem:[%s559 + $0x110] sm:%s551] %v696
                  %v698 = vld [vmem:[%s558 + $0x228] sm:%s551]
                  %699 = vst [vmem:[%s559 + $0x114] sm:%s551] %v698
                  %v700 = vld [vmem:[%s558 + $0x230] sm:%s551]
                  %701 = vst [vmem:[%s559 + $0x118] sm:%s551] %v700
                  %v702 = vld [vmem:[%s558 + $0x238] sm:%s551]
                  %703 = vst [vmem:[%s559 + $0x11c] sm:%s551] %v702
                  %v704 = vld [vmem:[%s558 + $0x240] sm:%s551]
                  %705 = vst [vmem:[%s559 + $0x120] sm:%s551] %v704
                  %v706 = vld [vmem:[%s558 + $0x248] sm:%s551]
                  %707 = vst [vmem:[%s559 + $0x124] sm:%s551] %v706
                  %v708 = vld [vmem:[%s558 + $0x250] sm:%s551]
                  %709 = vst [vmem:[%s559 + $0x128] sm:%s551] %v708
                  %v710 = vld [vmem:[%s558 + $0x258] sm:%s551]
                  %711 = vst [vmem:[%s559 + $0x12c] sm:%s551] %v710
                  %v712 = vld [vmem:[%s558 + $0x260] sm:%s551]
                  %713 = vst [vmem:[%s559 + $0x130] sm:%s551] %v712
                  %v714 = vld [vmem:[%s558 + $0x268] sm:%s551]
                  %715 = vst [vmem:[%s559 + $0x134] sm:%s551] %v714
                  %v716 = vld [vmem:[%s558 + $0x270] sm:%s551]
                  %717 = vst [vmem:[%s559 + $0x138] sm:%s551] %v716
                  %v718 = vld [vmem:[%s558 + $0x278] sm:%s551]
                  %719 = vst [vmem:[%s559 + $0x13c] sm:%s551] %v718
                  %v720 = vld [vmem:[%s558 + $0x280] sm:%s551]
                  %721 = vst [vmem:[%s559 + $0x140] sm:%s551] %v720
                  %v722 = vld [vmem:[%s558 + $0x288] sm:%s551]
                  %723 = vst [vmem:[%s559 + $0x144] sm:%s551] %v722
                  %v724 = vld [vmem:[%s558 + $0x290] sm:%s551]
                  %725 = vst [vmem:[%s559 + $0x148] sm:%s551] %v724
                  %v726 = vld [vmem:[%s558 + $0x298] sm:%s551]
                  %727 = vst [vmem:[%s559 + $0x14c] sm:%s551] %v726
                  %v728 = vld [vmem:[%s558 + $0x2a0] sm:%s551]
                  %729 = vst [vmem:[%s559 + $0x150] sm:%s551] %v728
                  %v730 = vld [vmem:[%s558 + $0x2a8] sm:%s551]
                  %731 = vst [vmem:[%s559 + $0x154] sm:%s551] %v730
                  %v732 = vld [vmem:[%s558 + $0x2b0] sm:%s551]
                  %733 = vst [vmem:[%s559 + $0x158] sm:%s551] %v732
                  %v734 = vld [vmem:[%s558 + $0x2b8] sm:%s551]
                  %735 = vst [vmem:[%s559 + $0x15c] sm:%s551] %v734
                  %v736 = vld [vmem:[%s558 + $0x2c0] sm:%s551]
                  %737 = vst [vmem:[%s559 + $0x160] sm:%s551] %v736
                  %v738 = vld [vmem:[%s558 + $0x2c8] sm:%s551]
                  %739 = vst [vmem:[%s559 + $0x164] sm:%s551] %v738
                  %v740 = vld [vmem:[%s558 + $0x2d0] sm:%s551]
                  %741 = vst [vmem:[%s559 + $0x168] sm:%s551] %v740
                  %v742 = vld [vmem:[%s558 + $0x2d8] sm:%s551]
                  %743 = vst [vmem:[%s559 + $0x16c] sm:%s551] %v742
                  %v744 = vld [vmem:[%s558 + $0x2e0] sm:%s551]
                  %745 = vst [vmem:[%s559 + $0x170] sm:%s551] %v744
                  %v746 = vld [vmem:[%s558 + $0x2e8] sm:%s551]
                  %747 = vst [vmem:[%s559 + $0x174] sm:%s551] %v746
                  %v748 = vld [vmem:[%s558 + $0x2f0] sm:%s551]
                  %749 = vst [vmem:[%s559 + $0x178] sm:%s551] %v748
                  %v750 = vld [vmem:[%s558 + $0x2f8] sm:%s551]
                  %751 = vst [vmem:[%s559 + $0x17c] sm:%s551] %v750
                  %v752 = vld [vmem:[%s558 + $0x300] sm:%s551]
                  %753 = vst [vmem:[%s559 + $0x180] sm:%s551] %v752
                  %v754 = vld [vmem:[%s558 + $0x308] sm:%s551]
                  %755 = vst [vmem:[%s559 + $0x184] sm:%s551] %v754
                  %v756 = vld [vmem:[%s558 + $0x310] sm:%s551]
                  %757 = vst [vmem:[%s559 + $0x188] sm:%s551] %v756
                  %v758 = vld [vmem:[%s558 + $0x318] sm:%s551]
                  %759 = vst [vmem:[%s559 + $0x18c] sm:%s551] %v758
                  %v760 = vld [vmem:[%s558 + $0x320] sm:%s551]
                  %761 = vst [vmem:[%s559 + $0x190] sm:%s551] %v760
                  %v762 = vld [vmem:[%s558 + $0x328] sm:%s551]
                  %763 = vst [vmem:[%s559 + $0x194] sm:%s551] %v762
                  %v764 = vld [vmem:[%s558 + $0x330] sm:%s551]
                  %765 = vst [vmem:[%s559 + $0x198] sm:%s551] %v764
                  %v766 = vld [vmem:[%s558 + $0x338] sm:%s551]
                  %767 = vst [vmem:[%s559 + $0x19c] sm:%s551] %v766
                  %v768 = vld [vmem:[%s558 + $0x340] sm:%s551]
                  %769 = vst [vmem:[%s559 + $0x1a0] sm:%s551] %v768
                  %v770 = vld [vmem:[%s558 + $0x348] sm:%s551]
                  %771 = vst [vmem:[%s559 + $0x1a4] sm:%s551] %v770
                  %v772 = vld [vmem:[%s558 + $0x350] sm:%s551]
                  %773 = vst [vmem:[%s559 + $0x1a8] sm:%s551] %v772
                  %v774 = vld [vmem:[%s558 + $0x358] sm:%s551]
                  %775 = vst [vmem:[%s559 + $0x1ac] sm:%s551] %v774
                  %v776 = vld [vmem:[%s558 + $0x360] sm:%s551]
                  %777 = vst [vmem:[%s559 + $0x1b0] sm:%s551] %v776
                  %v778 = vld [vmem:[%s558 + $0x368] sm:%s551]
                  %779 = vst [vmem:[%s559 + $0x1b4] sm:%s551] %v778
                  %v780 = vld [vmem:[%s558 + $0x370] sm:%s551]
                  %781 = vst [vmem:[%s559 + $0x1b8] sm:%s551] %v780
                  %v782 = vld [vmem:[%s558 + $0x378] sm:%s551]
                  %783 = vst [vmem:[%s559 + $0x1bc] sm:%s551] %v782
                  %v784 = vld [vmem:[%s558 + $0x380] sm:%s551]
                  %785 = vst [vmem:[%s559 + $0x1c0] sm:%s551] %v784
                  %v786 = vld [vmem:[%s558 + $0x388] sm:%s551]
                  %787 = vst [vmem:[%s559 + $0x1c4] sm:%s551] %v786
                  %v788 = vld [vmem:[%s558 + $0x390] sm:%s551]
                  %789 = vst [vmem:[%s559 + $0x1c8] sm:%s551] %v788
                  %v790 = vld [vmem:[%s558 + $0x398] sm:%s551]
                  %791 = vst [vmem:[%s559 + $0x1cc] sm:%s551] %v790
                  %v792 = vld [vmem:[%s558 + $0x3a0] sm:%s551]
                  %793 = vst [vmem:[%s559 + $0x1d0] sm:%s551] %v792
                  %v794 = vld [vmem:[%s558 + $0x3a8] sm:%s551]
                  %795 = vst [vmem:[%s559 + $0x1d4] sm:%s551] %v794
                  %v796 = vld [vmem:[%s558 + $0x3b0] sm:%s551]
                  %797 = vst [vmem:[%s559 + $0x1d8] sm:%s551] %v796
                  %v798 = vld [vmem:[%s558 + $0x3b8] sm:%s551]
                  %799 = vst [vmem:[%s559 + $0x1dc] sm:%s551] %v798
                  %v800 = vld [vmem:[%s558 + $0x3c0] sm:%s551]
                  %801 = vst [vmem:[%s559 + $0x1e0] sm:%s551] %v800
                  %v802 = vld [vmem:[%s558 + $0x3c8] sm:%s551]
                  %803 = vst [vmem:[%s559 + $0x1e4] sm:%s551] %v802
                  %v804 = vld [vmem:[%s558 + $0x3d0] sm:%s551]
                  %805 = vst [vmem:[%s559 + $0x1e8] sm:%s551] %v804
                  %v806 = vld [vmem:[%s558 + $0x3d8] sm:%s551]
                  %807 = vst [vmem:[%s559 + $0x1ec] sm:%s551] %v806
                  %v808 = vld [vmem:[%s558 + $0x3e0] sm:%s551]
                  %809 = vst [vmem:[%s559 + $0x1f0] sm:%s551] %v808
                  %v810 = vld [vmem:[%s558 + $0x3e8] sm:%s551]
                  %811 = vst [vmem:[%s559 + $0x1f4] sm:%s551] %v810
                  %v812 = vld [vmem:[%s558 + $0x3f0] sm:%s551]
                  %813 = vst [vmem:[%s559 + $0x1f8] sm:%s551] %v812
                  %v814 = vld [vmem:[%s558 + $0x3f8] sm:%s551]
                  %815 = vst [vmem:[%s559 + $0x1fc] sm:%s551] %v814
                $region79: #{rera_forward.3} parent=66 // loop_footer
                  %s557 = sadd.s32 1, %s553
                $region80: #{rera_forward.3} parent=66 // loop_footer_branch
                  %552 = sbr.rel target = $region76
                $region81: #{rera_forward.3} parent=66 // loop_exit
                  _
              $region67: #{rera_forward.3} parent=51 // pred_fallthru
                _
            $region52: #{rera_forward.3} parent=47 // pred_fallthru
              _
            // Predicated region
            $region53: #{rera_forward.3} parent=47 // pred_check
              _
            $region54: #{rera_forward.3} parent=47 // pred_check_branch
              %273 = sbr.rel (0) target = $region56
            $region55: #{rera_forward.3} parent=47 // pred_region
              %s275 = ssub.s32 16, 1
              loop: start=0, step=1, limit=1
              $region57: #{rera_forward.3} parent=55 // loop_pre_header
                _
              $region58: #{rera_forward.3} parent=55 // loop_header
                %s277 = sphi 0, %s281
                %p278 = scmp.ge.s32.totalorder %s277, 1
                %s282 = sphi %s267, %s267
                %s283 = sphi %s265, %s265
              $region59: #{rera_forward.3} parent=55 // loop_header_branch
                %280 = sbr.rel (%p278) target = $region63
              $region60: #{rera_forward.3} parent=55 // loop_body
                %v284 = vld [vmem:[%s282] sm:%s275]
                %285 = vst [vmem:[%s283] sm:%s275] %v284
                %v286 = vld [vmem:[%s282 + $0x8] sm:%s275]
                %287 = vst [vmem:[%s283 + $0x4] sm:%s275] %v286
                %v288 = vld [vmem:[%s282 + $0x10] sm:%s275]
                %289 = vst [vmem:[%s283 + $0x8] sm:%s275] %v288
                %v290 = vld [vmem:[%s282 + $0x18] sm:%s275]
                %291 = vst [vmem:[%s283 + $0xc] sm:%s275] %v290
                %v292 = vld [vmem:[%s282 + $0x20] sm:%s275]
                %293 = vst [vmem:[%s283 + $0x10] sm:%s275] %v292
                %v294 = vld [vmem:[%s282 + $0x28] sm:%s275]
                %295 = vst [vmem:[%s283 + $0x14] sm:%s275] %v294
                %v296 = vld [vmem:[%s282 + $0x30] sm:%s275]
                %297 = vst [vmem:[%s283 + $0x18] sm:%s275] %v296
                %v298 = vld [vmem:[%s282 + $0x38] sm:%s275]
                %299 = vst [vmem:[%s283 + $0x1c] sm:%s275] %v298
                %v300 = vld [vmem:[%s282 + $0x40] sm:%s275]
                %301 = vst [vmem:[%s283 + $0x20] sm:%s275] %v300
                %v302 = vld [vmem:[%s282 + $0x48] sm:%s275]
                %303 = vst [vmem:[%s283 + $0x24] sm:%s275] %v302
                %v304 = vld [vmem:[%s282 + $0x50] sm:%s275]
                %305 = vst [vmem:[%s283 + $0x28] sm:%s275] %v304
                %v306 = vld [vmem:[%s282 + $0x58] sm:%s275]
                %307 = vst [vmem:[%s283 + $0x2c] sm:%s275] %v306
                %v308 = vld [vmem:[%s282 + $0x60] sm:%s275]
                %309 = vst [vmem:[%s283 + $0x30] sm:%s275] %v308
                %v310 = vld [vmem:[%s282 + $0x68] sm:%s275]
                %311 = vst [vmem:[%s283 + $0x34] sm:%s275] %v310
                %v312 = vld [vmem:[%s282 + $0x70] sm:%s275]
                %313 = vst [vmem:[%s283 + $0x38] sm:%s275] %v312
                %v314 = vld [vmem:[%s282 + $0x78] sm:%s275]
                %315 = vst [vmem:[%s283 + $0x3c] sm:%s275] %v314
                %v316 = vld [vmem:[%s282 + $0x80] sm:%s275]
                %317 = vst [vmem:[%s283 + $0x40] sm:%s275] %v316
                %v318 = vld [vmem:[%s282 + $0x88] sm:%s275]
                %319 = vst [vmem:[%s283 + $0x44] sm:%s275] %v318
                %v320 = vld [vmem:[%s282 + $0x90] sm:%s275]
                %321 = vst [vmem:[%s283 + $0x48] sm:%s275] %v320
                %v322 = vld [vmem:[%s282 + $0x98] sm:%s275]
                %323 = vst [vmem:[%s283 + $0x4c] sm:%s275] %v322
                %v324 = vld [vmem:[%s282 + $0xa0] sm:%s275]
                %325 = vst [vmem:[%s283 + $0x50] sm:%s275] %v324
                %v326 = vld [vmem:[%s282 + $0xa8] sm:%s275]
                %327 = vst [vmem:[%s283 + $0x54] sm:%s275] %v326
                %v328 = vld [vmem:[%s282 + $0xb0] sm:%s275]
                %329 = vst [vmem:[%s283 + $0x58] sm:%s275] %v328
                %v330 = vld [vmem:[%s282 + $0xb8] sm:%s275]
                %331 = vst [vmem:[%s283 + $0x5c] sm:%s275] %v330
                %v332 = vld [vmem:[%s282 + $0xc0] sm:%s275]
                %333 = vst [vmem:[%s283 + $0x60] sm:%s275] %v332
                %v334 = vld [vmem:[%s282 + $0xc8] sm:%s275]
                %335 = vst [vmem:[%s283 + $0x64] sm:%s275] %v334
                %v336 = vld [vmem:[%s282 + $0xd0] sm:%s275]
                %337 = vst [vmem:[%s283 + $0x68] sm:%s275] %v336
                %v338 = vld [vmem:[%s282 + $0xd8] sm:%s275]
                %339 = vst [vmem:[%s283 + $0x6c] sm:%s275] %v338
                %v340 = vld [vmem:[%s282 + $0xe0] sm:%s275]
                %341 = vst [vmem:[%s283 + $0x70] sm:%s275] %v340
                %v342 = vld [vmem:[%s282 + $0xe8] sm:%s275]
                %343 = vst [vmem:[%s283 + $0x74] sm:%s275] %v342
                %v344 = vld [vmem:[%s282 + $0xf0] sm:%s275]
                %345 = vst [vmem:[%s283 + $0x78] sm:%s275] %v344
                %v346 = vld [vmem:[%s282 + $0xf8] sm:%s275]
                %347 = vst [vmem:[%s283 + $0x7c] sm:%s275] %v346
                %v348 = vld [vmem:[%s282 + $0x100] sm:%s275]
                %349 = vst [vmem:[%s283 + $0x80] sm:%s275] %v348
                %v350 = vld [vmem:[%s282 + $0x108] sm:%s275]
                %351 = vst [vmem:[%s283 + $0x84] sm:%s275] %v350
                %v352 = vld [vmem:[%s282 + $0x110] sm:%s275]
                %353 = vst [vmem:[%s283 + $0x88] sm:%s275] %v352
                %v354 = vld [vmem:[%s282 + $0x118] sm:%s275]
                %355 = vst [vmem:[%s283 + $0x8c] sm:%s275] %v354
                %v356 = vld [vmem:[%s282 + $0x120] sm:%s275]
                %357 = vst [vmem:[%s283 + $0x90] sm:%s275] %v356
                %v358 = vld [vmem:[%s282 + $0x128] sm:%s275]
                %359 = vst [vmem:[%s283 + $0x94] sm:%s275] %v358
                %v360 = vld [vmem:[%s282 + $0x130] sm:%s275]
                %361 = vst [vmem:[%s283 + $0x98] sm:%s275] %v360
                %v362 = vld [vmem:[%s282 + $0x138] sm:%s275]
                %363 = vst [vmem:[%s283 + $0x9c] sm:%s275] %v362
                %v364 = vld [vmem:[%s282 + $0x140] sm:%s275]
                %365 = vst [vmem:[%s283 + $0xa0] sm:%s275] %v364
                %v366 = vld [vmem:[%s282 + $0x148] sm:%s275]
                %367 = vst [vmem:[%s283 + $0xa4] sm:%s275] %v366
                %v368 = vld [vmem:[%s282 + $0x150] sm:%s275]
                %369 = vst [vmem:[%s283 + $0xa8] sm:%s275] %v368
                %v370 = vld [vmem:[%s282 + $0x158] sm:%s275]
                %371 = vst [vmem:[%s283 + $0xac] sm:%s275] %v370
                %v372 = vld [vmem:[%s282 + $0x160] sm:%s275]
                %373 = vst [vmem:[%s283 + $0xb0] sm:%s275] %v372
                %v374 = vld [vmem:[%s282 + $0x168] sm:%s275]
                %375 = vst [vmem:[%s283 + $0xb4] sm:%s275] %v374
                %v376 = vld [vmem:[%s282 + $0x170] sm:%s275]
                %377 = vst [vmem:[%s283 + $0xb8] sm:%s275] %v376
                %v378 = vld [vmem:[%s282 + $0x178] sm:%s275]
                %379 = vst [vmem:[%s283 + $0xbc] sm:%s275] %v378
                %v380 = vld [vmem:[%s282 + $0x180] sm:%s275]
                %381 = vst [vmem:[%s283 + $0xc0] sm:%s275] %v380
                %v382 = vld [vmem:[%s282 + $0x188] sm:%s275]
                %383 = vst [vmem:[%s283 + $0xc4] sm:%s275] %v382
                %v384 = vld [vmem:[%s282 + $0x190] sm:%s275]
                %385 = vst [vmem:[%s283 + $0xc8] sm:%s275] %v384
                %v386 = vld [vmem:[%s282 + $0x198] sm:%s275]
                %387 = vst [vmem:[%s283 + $0xcc] sm:%s275] %v386
                %v388 = vld [vmem:[%s282 + $0x1a0] sm:%s275]
                %389 = vst [vmem:[%s283 + $0xd0] sm:%s275] %v388
                %v390 = vld [vmem:[%s282 + $0x1a8] sm:%s275]
                %391 = vst [vmem:[%s283 + $0xd4] sm:%s275] %v390
                %v392 = vld [vmem:[%s282 + $0x1b0] sm:%s275]
                %393 = vst [vmem:[%s283 + $0xd8] sm:%s275] %v392
                %v394 = vld [vmem:[%s282 + $0x1b8] sm:%s275]
                %395 = vst [vmem:[%s283 + $0xdc] sm:%s275] %v394
                %v396 = vld [vmem:[%s282 + $0x1c0] sm:%s275]
                %397 = vst [vmem:[%s283 + $0xe0] sm:%s275] %v396
                %v398 = vld [vmem:[%s282 + $0x1c8] sm:%s275]
                %399 = vst [vmem:[%s283 + $0xe4] sm:%s275] %v398
                %v400 = vld [vmem:[%s282 + $0x1d0] sm:%s275]
                %401 = vst [vmem:[%s283 + $0xe8] sm:%s275] %v400
                %v402 = vld [vmem:[%s282 + $0x1d8] sm:%s275]
                %403 = vst [vmem:[%s283 + $0xec] sm:%s275] %v402
                %v404 = vld [vmem:[%s282 + $0x1e0] sm:%s275]
                %405 = vst [vmem:[%s283 + $0xf0] sm:%s275] %v404
                %v406 = vld [vmem:[%s282 + $0x1e8] sm:%s275]
                %407 = vst [vmem:[%s283 + $0xf4] sm:%s275] %v406
                %v408 = vld [vmem:[%s282 + $0x1f0] sm:%s275]
                %409 = vst [vmem:[%s283 + $0xf8] sm:%s275] %v408
                %v410 = vld [vmem:[%s282 + $0x1f8] sm:%s275]
                %411 = vst [vmem:[%s283 + $0xfc] sm:%s275] %v410
                %v412 = vld [vmem:[%s282 + $0x200] sm:%s275]
                %413 = vst [vmem:[%s283 + $0x100] sm:%s275] %v412
                %v414 = vld [vmem:[%s282 + $0x208] sm:%s275]
                %415 = vst [vmem:[%s283 + $0x104] sm:%s275] %v414
                %v416 = vld [vmem:[%s282 + $0x210] sm:%s275]
                %417 = vst [vmem:[%s283 + $0x108] sm:%s275] %v416
                %v418 = vld [vmem:[%s282 + $0x218] sm:%s275]
                %419 = vst [vmem:[%s283 + $0x10c] sm:%s275] %v418
                %v420 = vld [vmem:[%s282 + $0x220] sm:%s275]
                %421 = vst [vmem:[%s283 + $0x110] sm:%s275] %v420
                %v422 = vld [vmem:[%s282 + $0x228] sm:%s275]
                %423 = vst [vmem:[%s283 + $0x114] sm:%s275] %v422
                %v424 = vld [vmem:[%s282 + $0x230] sm:%s275]
                %425 = vst [vmem:[%s283 + $0x118] sm:%s275] %v424
                %v426 = vld [vmem:[%s282 + $0x238] sm:%s275]
                %427 = vst [vmem:[%s283 + $0x11c] sm:%s275] %v426
                %v428 = vld [vmem:[%s282 + $0x240] sm:%s275]
                %429 = vst [vmem:[%s283 + $0x120] sm:%s275] %v428
                %v430 = vld [vmem:[%s282 + $0x248] sm:%s275]
                %431 = vst [vmem:[%s283 + $0x124] sm:%s275] %v430
                %v432 = vld [vmem:[%s282 + $0x250] sm:%s275]
                %433 = vst [vmem:[%s283 + $0x128] sm:%s275] %v432
                %v434 = vld [vmem:[%s282 + $0x258] sm:%s275]
                %435 = vst [vmem:[%s283 + $0x12c] sm:%s275] %v434
                %v436 = vld [vmem:[%s282 + $0x260] sm:%s275]
                %437 = vst [vmem:[%s283 + $0x130] sm:%s275] %v436
                %v438 = vld [vmem:[%s282 + $0x268] sm:%s275]
                %439 = vst [vmem:[%s283 + $0x134] sm:%s275] %v438
                %v440 = vld [vmem:[%s282 + $0x270] sm:%s275]
                %441 = vst [vmem:[%s283 + $0x138] sm:%s275] %v440
                %v442 = vld [vmem:[%s282 + $0x278] sm:%s275]
                %443 = vst [vmem:[%s283 + $0x13c] sm:%s275] %v442
                %v444 = vld [vmem:[%s282 + $0x280] sm:%s275]
                %445 = vst [vmem:[%s283 + $0x140] sm:%s275] %v444
                %v446 = vld [vmem:[%s282 + $0x288] sm:%s275]
                %447 = vst [vmem:[%s283 + $0x144] sm:%s275] %v446
                %v448 = vld [vmem:[%s282 + $0x290] sm:%s275]
                %449 = vst [vmem:[%s283 + $0x148] sm:%s275] %v448
                %v450 = vld [vmem:[%s282 + $0x298] sm:%s275]
                %451 = vst [vmem:[%s283 + $0x14c] sm:%s275] %v450
                %v452 = vld [vmem:[%s282 + $0x2a0] sm:%s275]
                %453 = vst [vmem:[%s283 + $0x150] sm:%s275] %v452
                %v454 = vld [vmem:[%s282 + $0x2a8] sm:%s275]
                %455 = vst [vmem:[%s283 + $0x154] sm:%s275] %v454
                %v456 = vld [vmem:[%s282 + $0x2b0] sm:%s275]
                %457 = vst [vmem:[%s283 + $0x158] sm:%s275] %v456
                %v458 = vld [vmem:[%s282 + $0x2b8] sm:%s275]
                %459 = vst [vmem:[%s283 + $0x15c] sm:%s275] %v458
                %v460 = vld [vmem:[%s282 + $0x2c0] sm:%s275]
                %461 = vst [vmem:[%s283 + $0x160] sm:%s275] %v460
                %v462 = vld [vmem:[%s282 + $0x2c8] sm:%s275]
                %463 = vst [vmem:[%s283 + $0x164] sm:%s275] %v462
                %v464 = vld [vmem:[%s282 + $0x2d0] sm:%s275]
                %465 = vst [vmem:[%s283 + $0x168] sm:%s275] %v464
                %v466 = vld [vmem:[%s282 + $0x2d8] sm:%s275]
                %467 = vst [vmem:[%s283 + $0x16c] sm:%s275] %v466
                %v468 = vld [vmem:[%s282 + $0x2e0] sm:%s275]
                %469 = vst [vmem:[%s283 + $0x170] sm:%s275] %v468
                %v470 = vld [vmem:[%s282 + $0x2e8] sm:%s275]
                %471 = vst [vmem:[%s283 + $0x174] sm:%s275] %v470
                %v472 = vld [vmem:[%s282 + $0x2f0] sm:%s275]
                %473 = vst [vmem:[%s283 + $0x178] sm:%s275] %v472
                %v474 = vld [vmem:[%s282 + $0x2f8] sm:%s275]
                %475 = vst [vmem:[%s283 + $0x17c] sm:%s275] %v474
                %v476 = vld [vmem:[%s282 + $0x300] sm:%s275]
                %477 = vst [vmem:[%s283 + $0x180] sm:%s275] %v476
                %v478 = vld [vmem:[%s282 + $0x308] sm:%s275]
                %479 = vst [vmem:[%s283 + $0x184] sm:%s275] %v478
                %v480 = vld [vmem:[%s282 + $0x310] sm:%s275]
                %481 = vst [vmem:[%s283 + $0x188] sm:%s275] %v480
                %v482 = vld [vmem:[%s282 + $0x318] sm:%s275]
                %483 = vst [vmem:[%s283 + $0x18c] sm:%s275] %v482
                %v484 = vld [vmem:[%s282 + $0x320] sm:%s275]
                %485 = vst [vmem:[%s283 + $0x190] sm:%s275] %v484
                %v486 = vld [vmem:[%s282 + $0x328] sm:%s275]
                %487 = vst [vmem:[%s283 + $0x194] sm:%s275] %v486
                %v488 = vld [vmem:[%s282 + $0x330] sm:%s275]
                %489 = vst [vmem:[%s283 + $0x198] sm:%s275] %v488
                %v490 = vld [vmem:[%s282 + $0x338] sm:%s275]
                %491 = vst [vmem:[%s283 + $0x19c] sm:%s275] %v490
                %v492 = vld [vmem:[%s282 + $0x340] sm:%s275]
                %493 = vst [vmem:[%s283 + $0x1a0] sm:%s275] %v492
                %v494 = vld [vmem:[%s282 + $0x348] sm:%s275]
                %495 = vst [vmem:[%s283 + $0x1a4] sm:%s275] %v494
                %v496 = vld [vmem:[%s282 + $0x350] sm:%s275]
                %497 = vst [vmem:[%s283 + $0x1a8] sm:%s275] %v496
                %v498 = vld [vmem:[%s282 + $0x358] sm:%s275]
                %499 = vst [vmem:[%s283 + $0x1ac] sm:%s275] %v498
                %v500 = vld [vmem:[%s282 + $0x360] sm:%s275]
                %501 = vst [vmem:[%s283 + $0x1b0] sm:%s275] %v500
                %v502 = vld [vmem:[%s282 + $0x368] sm:%s275]
                %503 = vst [vmem:[%s283 + $0x1b4] sm:%s275] %v502
                %v504 = vld [vmem:[%s282 + $0x370] sm:%s275]
                %505 = vst [vmem:[%s283 + $0x1b8] sm:%s275] %v504
                %v506 = vld [vmem:[%s282 + $0x378] sm:%s275]
                %507 = vst [vmem:[%s283 + $0x1bc] sm:%s275] %v506
                %v508 = vld [vmem:[%s282 + $0x380] sm:%s275]
                %509 = vst [vmem:[%s283 + $0x1c0] sm:%s275] %v508
                %v510 = vld [vmem:[%s282 + $0x388] sm:%s275]
                %511 = vst [vmem:[%s283 + $0x1c4] sm:%s275] %v510
                %v512 = vld [vmem:[%s282 + $0x390] sm:%s275]
                %513 = vst [vmem:[%s283 + $0x1c8] sm:%s275] %v512
                %v514 = vld [vmem:[%s282 + $0x398] sm:%s275]
                %515 = vst [vmem:[%s283 + $0x1cc] sm:%s275] %v514
                %v516 = vld [vmem:[%s282 + $0x3a0] sm:%s275]
                %517 = vst [vmem:[%s283 + $0x1d0] sm:%s275] %v516
                %v518 = vld [vmem:[%s282 + $0x3a8] sm:%s275]
                %519 = vst [vmem:[%s283 + $0x1d4] sm:%s275] %v518
                %v520 = vld [vmem:[%s282 + $0x3b0] sm:%s275]
                %521 = vst [vmem:[%s283 + $0x1d8] sm:%s275] %v520
                %v522 = vld [vmem:[%s282 + $0x3b8] sm:%s275]
                %523 = vst [vmem:[%s283 + $0x1dc] sm:%s275] %v522
                %v524 = vld [vmem:[%s282 + $0x3c0] sm:%s275]
                %525 = vst [vmem:[%s283 + $0x1e0] sm:%s275] %v524
                %v526 = vld [vmem:[%s282 + $0x3c8] sm:%s275]
                %527 = vst [vmem:[%s283 + $0x1e4] sm:%s275] %v526
                %v528 = vld [vmem:[%s282 + $0x3d0] sm:%s275]
                %529 = vst [vmem:[%s283 + $0x1e8] sm:%s275] %v528
                %v530 = vld [vmem:[%s282 + $0x3d8] sm:%s275]
                %531 = vst [vmem:[%s283 + $0x1ec] sm:%s275] %v530
                %v532 = vld [vmem:[%s282 + $0x3e0] sm:%s275]
                %533 = vst [vmem:[%s283 + $0x1f0] sm:%s275] %v532
                %v534 = vld [vmem:[%s282 + $0x3e8] sm:%s275]
                %535 = vst [vmem:[%s283 + $0x1f4] sm:%s275] %v534
                %v536 = vld [vmem:[%s282 + $0x3f0] sm:%s275]
                %537 = vst [vmem:[%s283 + $0x1f8] sm:%s275] %v536
                %v538 = vld [vmem:[%s282 + $0x3f8] sm:%s275]
                %539 = vst [vmem:[%s283 + $0x1fc] sm:%s275] %v538
              $region61: #{rera_forward.3} parent=55 // loop_footer
                %s281 = sadd.s32 1, %s277
              $region62: #{rera_forward.3} parent=55 // loop_footer_branch
                %276 = sbr.rel target = $region58
              $region63: #{rera_forward.3} parent=55 // loop_exit
                _
            $region56: #{rera_forward.3} parent=47 // pred_fallthru
              _
          $region48: #{rera_forward.3} parent=43 // pred_fallthru
            _
          %816 = vnop
        $region44: #{rera_forward.3} parent=39 // pred_fallthru
          _
        // Predicated region
        $region82: #{rera_forward.3} parent=39 // pred_check
          %p817 = pneg %p125
        $region83: #{rera_forward.3} parent=39 // pred_check_branch
          %819 = sbr.rel (%p817) target = $region85
        $region84: #{rera_forward.3} parent=39 // pred_region
          %s820 = sand.u32 %s115, 1
          %s821 = sand.u32 %s115, 1
          %s822 = smul.addr %s821, 128
          %s823 = scalar_lea.vmem [#allocation5], %s822
          %s824 = smul.addr %s16, 4
          %s825 = scalar_lea.vmem %s4, %s824
          // Predicated region
          $region86: #{rera_forward.3} parent=84 // pred_check
            _
          $region87: #{rera_forward.3} parent=84 // pred_check_branch
            %827 = sbr.rel (0) target = $region89
          $region88: #{rera_forward.3} parent=84 // pred_region
            // Predicated region
            $region90: #{rera_forward.3} parent=88 // pred_check
              _
            $region91: #{rera_forward.3} parent=88 // pred_check_branch
              %829 = sbr.rel target = $region93
            $region92: #{rera_forward.3} parent=88 // pred_region
              // Predicated region
              $region105: #{rera_forward.3} parent=92 // pred_check
                _
              $region106: #{rera_forward.3} parent=92 // pred_check_branch
                %907 = sbr.rel (0) target = $region108
              $region107: #{rera_forward.3} parent=92 // pred_region
                loop: start=0, step=1, limit=1
                $region109: #{rera_forward.3} parent=107 // loop_pre_header
                  _
                $region110: #{rera_forward.3} parent=107 // loop_header
                  %s909 = sphi 0, %s913
                  %p910 = scmp.ge.s32.totalorder %s909, 1
                  %s914 = sphi %s825, %s825
                  %s915 = sphi %s823, %s823
                $region111: #{rera_forward.3} parent=107 // loop_header_branch
                  %912 = sbr.rel (%p910) target = $region115
                $region112: #{rera_forward.3} parent=107 // loop_body
                  _
                $region113: #{rera_forward.3} parent=107 // loop_footer
                  %s913 = sadd.s32 1, %s909
                $region114: #{rera_forward.3} parent=107 // loop_footer_branch
                  %908 = sbr.rel target = $region110
                $region115: #{rera_forward.3} parent=107 // loop_exit
                  _
                %s917 = ssub.s32 16, 1
                loop: start=0, step=1, limit=1
                $region116: #{rera_forward.3} parent=107 // loop_pre_header
                  _
                $region117: #{rera_forward.3} parent=107 // loop_header
                  %s919 = sphi 0, %s923
                  %p920 = scmp.ge.s32.totalorder %s919, 1
                  %s924 = sphi %s825, %s825
                  %s925 = sphi %s823, %s823
                $region118: #{rera_forward.3} parent=107 // loop_header_branch
                  %922 = sbr.rel (%p920) target = $region122
                $region119: #{rera_forward.3} parent=107 // loop_body
                  %v926 = vld [vmem:[%s924] sm:%s917]
                  %927 = vst [vmem:[%s925] sm:%s917] %v926
                  %v928 = vld [vmem:[%s924 + $0x8] sm:%s917]
                  %929 = vst [vmem:[%s925 + $0x4] sm:%s917] %v928
                  %v930 = vld [vmem:[%s924 + $0x10] sm:%s917]
                  %931 = vst [vmem:[%s925 + $0x8] sm:%s917] %v930
                  %v932 = vld [vmem:[%s924 + $0x18] sm:%s917]
                  %933 = vst [vmem:[%s925 + $0xc] sm:%s917] %v932
                  %v934 = vld [vmem:[%s924 + $0x20] sm:%s917]
                  %935 = vst [vmem:[%s925 + $0x10] sm:%s917] %v934
                  %v936 = vld [vmem:[%s924 + $0x28] sm:%s917]
                  %937 = vst [vmem:[%s925 + $0x14] sm:%s917] %v936
                  %v938 = vld [vmem:[%s924 + $0x30] sm:%s917]
                  %939 = vst [vmem:[%s925 + $0x18] sm:%s917] %v938
                  %v940 = vld [vmem:[%s924 + $0x38] sm:%s917]
                  %941 = vst [vmem:[%s925 + $0x1c] sm:%s917] %v940
                  %v942 = vld [vmem:[%s924 + $0x40] sm:%s917]
                  %943 = vst [vmem:[%s925 + $0x20] sm:%s917] %v942
                  %v944 = vld [vmem:[%s924 + $0x48] sm:%s917]
                  %945 = vst [vmem:[%s925 + $0x24] sm:%s917] %v944
                  %v946 = vld [vmem:[%s924 + $0x50] sm:%s917]
                  %947 = vst [vmem:[%s925 + $0x28] sm:%s917] %v946
                  %v948 = vld [vmem:[%s924 + $0x58] sm:%s917]
                  %949 = vst [vmem:[%s925 + $0x2c] sm:%s917] %v948
                  %v950 = vld [vmem:[%s924 + $0x60] sm:%s917]
                  %951 = vst [vmem:[%s925 + $0x30] sm:%s917] %v950
                  %v952 = vld [vmem:[%s924 + $0x68] sm:%s917]
                  %953 = vst [vmem:[%s925 + $0x34] sm:%s917] %v952
                  %v954 = vld [vmem:[%s924 + $0x70] sm:%s917]
                  %955 = vst [vmem:[%s925 + $0x38] sm:%s917] %v954
                  %v956 = vld [vmem:[%s924 + $0x78] sm:%s917]
                  %957 = vst [vmem:[%s925 + $0x3c] sm:%s917] %v956
                  %v958 = vld [vmem:[%s924 + $0x80] sm:%s917]
                  %959 = vst [vmem:[%s925 + $0x40] sm:%s917] %v958
                  %v960 = vld [vmem:[%s924 + $0x88] sm:%s917]
                  %961 = vst [vmem:[%s925 + $0x44] sm:%s917] %v960
                  %v962 = vld [vmem:[%s924 + $0x90] sm:%s917]
                  %963 = vst [vmem:[%s925 + $0x48] sm:%s917] %v962
                  %v964 = vld [vmem:[%s924 + $0x98] sm:%s917]
                  %965 = vst [vmem:[%s925 + $0x4c] sm:%s917] %v964
                  %v966 = vld [vmem:[%s924 + $0xa0] sm:%s917]
                  %967 = vst [vmem:[%s925 + $0x50] sm:%s917] %v966
                  %v968 = vld [vmem:[%s924 + $0xa8] sm:%s917]
                  %969 = vst [vmem:[%s925 + $0x54] sm:%s917] %v968
                  %v970 = vld [vmem:[%s924 + $0xb0] sm:%s917]
                  %971 = vst [vmem:[%s925 + $0x58] sm:%s917] %v970
                  %v972 = vld [vmem:[%s924 + $0xb8] sm:%s917]
                  %973 = vst [vmem:[%s925 + $0x5c] sm:%s917] %v972
                  %v974 = vld [vmem:[%s924 + $0xc0] sm:%s917]
                  %975 = vst [vmem:[%s925 + $0x60] sm:%s917] %v974
                  %v976 = vld [vmem:[%s924 + $0xc8] sm:%s917]
                  %977 = vst [vmem:[%s925 + $0x64] sm:%s917] %v976
                  %v978 = vld [vmem:[%s924 + $0xd0] sm:%s917]
                  %979 = vst [vmem:[%s925 + $0x68] sm:%s917] %v978
                  %v980 = vld [vmem:[%s924 + $0xd8] sm:%s917]
                  %981 = vst [vmem:[%s925 + $0x6c] sm:%s917] %v980
                  %v982 = vld [vmem:[%s924 + $0xe0] sm:%s917]
                  %983 = vst [vmem:[%s925 + $0x70] sm:%s917] %v982
                  %v984 = vld [vmem:[%s924 + $0xe8] sm:%s917]
                  %985 = vst [vmem:[%s925 + $0x74] sm:%s917] %v984
                  %v986 = vld [vmem:[%s924 + $0xf0] sm:%s917]
                  %987 = vst [vmem:[%s925 + $0x78] sm:%s917] %v986
                  %v988 = vld [vmem:[%s924 + $0xf8] sm:%s917]
                  %989 = vst [vmem:[%s925 + $0x7c] sm:%s917] %v988
                $region120: #{rera_forward.3} parent=107 // loop_footer
                  %s923 = sadd.s32 1, %s919
                $region121: #{rera_forward.3} parent=107 // loop_footer_branch
                  %918 = sbr.rel target = $region117
                $region122: #{rera_forward.3} parent=107 // loop_exit
                  _
              $region108: #{rera_forward.3} parent=92 // pred_fallthru
                _
            $region93: #{rera_forward.3} parent=88 // pred_fallthru
              _
            // Predicated region
            $region94: #{rera_forward.3} parent=88 // pred_check
              _
            $region95: #{rera_forward.3} parent=88 // pred_check_branch
              %831 = sbr.rel (0) target = $region97
            $region96: #{rera_forward.3} parent=88 // pred_region
              %s833 = ssub.s32 16, 1
              loop: start=0, step=1, limit=1
              $region98: #{rera_forward.3} parent=96 // loop_pre_header
                _
              $region99: #{rera_forward.3} parent=96 // loop_header
                %s835 = sphi 0, %s839
                %p836 = scmp.ge.s32.totalorder %s835, 1
                %s840 = sphi %s825, %s825
                %s841 = sphi %s823, %s823
              $region100: #{rera_forward.3} parent=96 // loop_header_branch
                %838 = sbr.rel (%p836) target = $region104
              $region101: #{rera_forward.3} parent=96 // loop_body
                %v842 = vld [vmem:[%s840] sm:%s833]
                %843 = vst [vmem:[%s841] sm:%s833] %v842
                %v844 = vld [vmem:[%s840 + $0x8] sm:%s833]
                %845 = vst [vmem:[%s841 + $0x4] sm:%s833] %v844
                %v846 = vld [vmem:[%s840 + $0x10] sm:%s833]
                %847 = vst [vmem:[%s841 + $0x8] sm:%s833] %v846
                %v848 = vld [vmem:[%s840 + $0x18] sm:%s833]
                %849 = vst [vmem:[%s841 + $0xc] sm:%s833] %v848
                %v850 = vld [vmem:[%s840 + $0x20] sm:%s833]
                %851 = vst [vmem:[%s841 + $0x10] sm:%s833] %v850
                %v852 = vld [vmem:[%s840 + $0x28] sm:%s833]
                %853 = vst [vmem:[%s841 + $0x14] sm:%s833] %v852
                %v854 = vld [vmem:[%s840 + $0x30] sm:%s833]
                %855 = vst [vmem:[%s841 + $0x18] sm:%s833] %v854
                %v856 = vld [vmem:[%s840 + $0x38] sm:%s833]
                %857 = vst [vmem:[%s841 + $0x1c] sm:%s833] %v856
                %v858 = vld [vmem:[%s840 + $0x40] sm:%s833]
                %859 = vst [vmem:[%s841 + $0x20] sm:%s833] %v858
                %v860 = vld [vmem:[%s840 + $0x48] sm:%s833]
                %861 = vst [vmem:[%s841 + $0x24] sm:%s833] %v860
                %v862 = vld [vmem:[%s840 + $0x50] sm:%s833]
                %863 = vst [vmem:[%s841 + $0x28] sm:%s833] %v862
                %v864 = vld [vmem:[%s840 + $0x58] sm:%s833]
                %865 = vst [vmem:[%s841 + $0x2c] sm:%s833] %v864
                %v866 = vld [vmem:[%s840 + $0x60] sm:%s833]
                %867 = vst [vmem:[%s841 + $0x30] sm:%s833] %v866
                %v868 = vld [vmem:[%s840 + $0x68] sm:%s833]
                %869 = vst [vmem:[%s841 + $0x34] sm:%s833] %v868
                %v870 = vld [vmem:[%s840 + $0x70] sm:%s833]
                %871 = vst [vmem:[%s841 + $0x38] sm:%s833] %v870
                %v872 = vld [vmem:[%s840 + $0x78] sm:%s833]
                %873 = vst [vmem:[%s841 + $0x3c] sm:%s833] %v872
                %v874 = vld [vmem:[%s840 + $0x80] sm:%s833]
                %875 = vst [vmem:[%s841 + $0x40] sm:%s833] %v874
                %v876 = vld [vmem:[%s840 + $0x88] sm:%s833]
                %877 = vst [vmem:[%s841 + $0x44] sm:%s833] %v876
                %v878 = vld [vmem:[%s840 + $0x90] sm:%s833]
                %879 = vst [vmem:[%s841 + $0x48] sm:%s833] %v878
                %v880 = vld [vmem:[%s840 + $0x98] sm:%s833]
                %881 = vst [vmem:[%s841 + $0x4c] sm:%s833] %v880
                %v882 = vld [vmem:[%s840 + $0xa0] sm:%s833]
                %883 = vst [vmem:[%s841 + $0x50] sm:%s833] %v882
                %v884 = vld [vmem:[%s840 + $0xa8] sm:%s833]
                %885 = vst [vmem:[%s841 + $0x54] sm:%s833] %v884
                %v886 = vld [vmem:[%s840 + $0xb0] sm:%s833]
                %887 = vst [vmem:[%s841 + $0x58] sm:%s833] %v886
                %v888 = vld [vmem:[%s840 + $0xb8] sm:%s833]
                %889 = vst [vmem:[%s841 + $0x5c] sm:%s833] %v888
                %v890 = vld [vmem:[%s840 + $0xc0] sm:%s833]
                %891 = vst [vmem:[%s841 + $0x60] sm:%s833] %v890
                %v892 = vld [vmem:[%s840 + $0xc8] sm:%s833]
                %893 = vst [vmem:[%s841 + $0x64] sm:%s833] %v892
                %v894 = vld [vmem:[%s840 + $0xd0] sm:%s833]
                %895 = vst [vmem:[%s841 + $0x68] sm:%s833] %v894
                %v896 = vld [vmem:[%s840 + $0xd8] sm:%s833]
                %897 = vst [vmem:[%s841 + $0x6c] sm:%s833] %v896
                %v898 = vld [vmem:[%s840 + $0xe0] sm:%s833]
                %899 = vst [vmem:[%s841 + $0x70] sm:%s833] %v898
                %v900 = vld [vmem:[%s840 + $0xe8] sm:%s833]
                %901 = vst [vmem:[%s841 + $0x74] sm:%s833] %v900
                %v902 = vld [vmem:[%s840 + $0xf0] sm:%s833]
                %903 = vst [vmem:[%s841 + $0x78] sm:%s833] %v902
                %v904 = vld [vmem:[%s840 + $0xf8] sm:%s833]
                %905 = vst [vmem:[%s841 + $0x7c] sm:%s833] %v904
              $region102: #{rera_forward.3} parent=96 // loop_footer
                %s839 = sadd.s32 1, %s835
              $region103: #{rera_forward.3} parent=96 // loop_footer_branch
                %834 = sbr.rel target = $region99
              $region104: #{rera_forward.3} parent=96 // loop_exit
                _
            $region97: #{rera_forward.3} parent=88 // pred_fallthru
              _
          $region89: #{rera_forward.3} parent=84 // pred_fallthru
            _
          %990 = vnop
        $region85: #{rera_forward.3} parent=39 // pred_fallthru
          _
      $region40: #{rera_forward.3} parent=5 // pred_fallthru
        _
      %p991 = scmp.le.s32.totalorder 1, %s16
      %p992 = scmp.lt.s32.totalorder %s16, 3
      %p993 = pnand %p991, %p992
      %p994 = pneg %p993
      // Predicated region
      $region123: #{rera_forward.3} parent=5 // pred_check
        _
      $region124: #{rera_forward.3} parent=5 // pred_check_branch
        %996 = sbr.rel (%p993) target = $region126
      $region125: #{rera_forward.3} parent=5 // pred_region
        %s997 = ssub.s32 %s16, 1
        %s998 = sand.u32 %s92, 1
        %s999 = sand.u32 %s92, 1
        %s1000 = smul.addr %s999, 512
        %s1001 = scalar_lea.vmem [#allocation4], %s1000
        // Predicated region
        $region127: #{rera_forward.3} parent=125 // pred_check
          %p1002 = pneg %p105
        $region128: #{rera_forward.3} parent=125 // pred_check_branch
          %1004 = sbr.rel (%p1002) target = $region130
        $region129: #{rera_forward.3} parent=125 // pred_region
          _
        $region130: #{rera_forward.3} parent=125 // pred_fallthru
          _
        %s1005 = sand.u32 %s118, 1
        %s1006 = sand.u32 %s118, 1
        %s1007 = smul.addr %s1006, 128
        %s1008 = scalar_lea.vmem [#allocation5], %s1007
        // Predicated region
        $region131: #{rera_forward.3} parent=125 // pred_check
          %p1009 = pneg %p131
        $region132: #{rera_forward.3} parent=125 // pred_check_branch
          %1011 = sbr.rel (%p1009) target = $region134
        $region133: #{rera_forward.3} parent=125 // pred_region
          _
        $region134: #{rera_forward.3} parent=125 // pred_fallthru
          _
        // Predicated region
        $region135: #{rera_forward.3} parent=125 // pred_check
          %p1012 = pneg %p152
        $region136: #{rera_forward.3} parent=125 // pred_check_branch
          %1014 = sbr.rel (%p1012) target = $region138
        $region137: #{rera_forward.3} parent=125 // pred_region
          %1016 = dma.done [#allocation7], 16
        $region138: #{rera_forward.3} parent=125 // pred_fallthru
          _
        %1017 = sfence
        %p1018 = pneg %p37
        %p1019 = pneg %p34
        %p1020 = pneg %p58
        %p1021 = pneg %p55
        %p1022 = pneg %p79
        %p1023 = pneg %p76
        %s1024 = sand.u32 %s92, 1
        %s1025 = sand.u32 %s92, 1
        %s1026 = smul.addr %s1025, 512
        %s1027 = scalar_lea.vmem [#allocation4], %s1026
        %p1028 = pneg %p105
        %p1029 = pneg %p102
        %s1030 = sand.u32 %s118, 1
        %s1031 = sand.u32 %s118, 1
        %s1032 = smul.addr %s1031, 128
        %s1033 = scalar_lea.vmem [#allocation5], %s1032
        %p1034 = pneg %p131
        %p1035 = pneg %p128
        %p1036 = pneg %p152
        %p1037 = pneg %p149
        %p1038 = pneg %p173
        %p1039 = pneg %p170
        %p1040 = pneg %p194
        %p1041 = pneg %p191
        %p1042 = pneg %p215
        %p1043 = pneg %p212
        %p1044 = scmp.eq.s32.totalorder %s21, 0
        // Predicated region
        $region139: #{rera_forward.3} parent=125 // pred_check
          %p1045 = pneg %p1044
        $region140: #{rera_forward.3} parent=125 // pred_check_branch
          %1047 = sbr.rel (%p1045) target = $region142
        $region141: #{rera_forward.3} parent=125 // pred_region
          %vm1048 = vcmask 261120
          %1049 = vst.msk [vmem:[#allocation2] sm:$0xff] %vm1048, 0.0
          %1050 = vst.msk [vmem:[#allocation2 + $0x8] sm:$0xff] %vm1048, 0.0
          %1051 = vst.msk [vmem:[#allocation2 + $0x10] sm:$0xff] %vm1048, 0.0
          %1052 = vst.msk [vmem:[#allocation2 + $0x18] sm:$0xff] %vm1048, 0.0
          %1053 = vst.msk [vmem:[#allocation2 + $0x20] sm:$0xff] %vm1048, 0.0
          %1054 = vst.msk [vmem:[#allocation2 + $0x28] sm:$0xff] %vm1048, 0.0
          %1055 = vst.msk [vmem:[#allocation2 + $0x30] sm:$0xff] %vm1048, 0.0
          %1056 = vst.msk [vmem:[#allocation2 + $0x38] sm:$0xff] %vm1048, 0.0
          %1057 = vst.msk [vmem:[#allocation2 + $0x40] sm:$0xff] %vm1048, 0.0
          %1058 = vst.msk [vmem:[#allocation2 + $0x48] sm:$0xff] %vm1048, 0.0
          %1059 = vst.msk [vmem:[#allocation2 + $0x50] sm:$0xff] %vm1048, 0.0
          %1060 = vst.msk [vmem:[#allocation2 + $0x58] sm:$0xff] %vm1048, 0.0
          %1061 = vst.msk [vmem:[#allocation2 + $0x60] sm:$0xff] %vm1048, 0.0
          %1062 = vst.msk [vmem:[#allocation2 + $0x68] sm:$0xff] %vm1048, 0.0
          %1063 = vst.msk [vmem:[#allocation2 + $0x70] sm:$0xff] %vm1048, 0.0
          %1064 = vst.msk [vmem:[#allocation2 + $0x78] sm:$0xff] %vm1048, 0.0
          %1065 = vst.msk [vmem:[#allocation2 + $0x80] sm:$0xff] %vm1048, 0.0
          %1066 = vst.msk [vmem:[#allocation2 + $0x88] sm:$0xff] %vm1048, 0.0
          %1067 = vst.msk [vmem:[#allocation2 + $0x90] sm:$0xff] %vm1048, 0.0
          %1068 = vst.msk [vmem:[#allocation2 + $0x98] sm:$0xff] %vm1048, 0.0
          %1069 = vst.msk [vmem:[#allocation2 + $0xa0] sm:$0xff] %vm1048, 0.0
          %1070 = vst.msk [vmem:[#allocation2 + $0xa8] sm:$0xff] %vm1048, 0.0
          %1071 = vst.msk [vmem:[#allocation2 + $0xb0] sm:$0xff] %vm1048, 0.0
          %1072 = vst.msk [vmem:[#allocation2 + $0xb8] sm:$0xff] %vm1048, 0.0
          %1073 = vst.msk [vmem:[#allocation2 + $0xc0] sm:$0xff] %vm1048, 0.0
          %1074 = vst.msk [vmem:[#allocation2 + $0xc8] sm:$0xff] %vm1048, 0.0
          %1075 = vst.msk [vmem:[#allocation2 + $0xd0] sm:$0xff] %vm1048, 0.0
          %1076 = vst.msk [vmem:[#allocation2 + $0xd8] sm:$0xff] %vm1048, 0.0
          %1077 = vst.msk [vmem:[#allocation2 + $0xe0] sm:$0xff] %vm1048, 0.0
          %1078 = vst.msk [vmem:[#allocation2 + $0xe8] sm:$0xff] %vm1048, 0.0
          %1079 = vst.msk [vmem:[#allocation2 + $0xf0] sm:$0xff] %vm1048, 0.0
          %1080 = vst.msk [vmem:[#allocation2 + $0xf8] sm:$0xff] %vm1048, 0.0
        $region142: #{rera_forward.3} parent=125 // pred_fallthru
          _
        %s1081 = sld [smem:[#allocation6]]
        %v1082 = vld [vmem:[%s1001] sm:$0xf]
        %v1083 = vld [vmem:[%s1001 + $0x4] sm:$0xf]
        %v1084 = vld [vmem:[%s1001 + $0x8] sm:$0xf]
        %v1085 = vld [vmem:[%s1001 + $0xc] sm:$0xf]
        %v1086 = vld [vmem:[%s1001 + $0x10] sm:$0xf]
        %v1087 = vld [vmem:[%s1001 + $0x14] sm:$0xf]
        %v1088 = vld [vmem:[%s1001 + $0x18] sm:$0xf]
        %v1089 = vld [vmem:[%s1001 + $0x1c] sm:$0xf]
        %v1090 = vld [vmem:[%s1001 + $0x20] sm:$0xf]
        %v1091 = vld [vmem:[%s1001 + $0x24] sm:$0xf]
        %v1092 = vld [vmem:[%s1001 + $0x28] sm:$0xf]
        %v1093 = vld [vmem:[%s1001 + $0x2c] sm:$0xf]
        %v1094 = vld [vmem:[%s1001 + $0x30] sm:$0xf]
        %v1095 = vld [vmem:[%s1001 + $0x34] sm:$0xf]
        %v1096 = vld [vmem:[%s1001 + $0x38] sm:$0xf]
        %v1097 = vld [vmem:[%s1001 + $0x3c] sm:$0xf]
        %v1098 = vld [vmem:[%s1001 + $0x40] sm:$0xf]
        %v1099 = vld [vmem:[%s1001 + $0x44] sm:$0xf]
        %v1100 = vld [vmem:[%s1001 + $0x48] sm:$0xf]
        %v1101 = vld [vmem:[%s1001 + $0x4c] sm:$0xf]
        %v1102 = vld [vmem:[%s1001 + $0x50] sm:$0xf]
        %v1103 = vld [vmem:[%s1001 + $0x54] sm:$0xf]
        %v1104 = vld [vmem:[%s1001 + $0x58] sm:$0xf]
        %v1105 = vld [vmem:[%s1001 + $0x5c] sm:$0xf]
        %v1106 = vld [vmem:[%s1001 + $0x60] sm:$0xf]
        %v1107 = vld [vmem:[%s1001 + $0x64] sm:$0xf]
        %v1108 = vld [vmem:[%s1001 + $0x68] sm:$0xf]
        %v1109 = vld [vmem:[%s1001 + $0x6c] sm:$0xf]
        %v1110 = vld [vmem:[%s1001 + $0x70] sm:$0xf]
        %v1111 = vld [vmem:[%s1001 + $0x74] sm:$0xf]
        %v1112 = vld [vmem:[%s1001 + $0x78] sm:$0xf]
        %v1113 = vld [vmem:[%s1001 + $0x7c] sm:$0xf]
        %v1114 = vunpack.c.l.bf16 %v1082
        %v1115 = vunpack.c.l.bf16 %v1083
        %v1116 = vunpack.c.l.bf16 %v1084
        %v1117 = vunpack.c.l.bf16 %v1085
        %v1118 = vunpack.c.l.bf16 %v1086
        %v1119 = vunpack.c.l.bf16 %v1087
        %v1120 = vunpack.c.l.bf16 %v1088
        %v1121 = vunpack.c.l.bf16 %v1089
        %v1122 = vunpack.c.l.bf16 %v1090
        %v1123 = vunpack.c.l.bf16 %v1091
        %v1124 = vunpack.c.l.bf16 %v1092
        %v1125 = vunpack.c.l.bf16 %v1093
        %v1126 = vunpack.c.l.bf16 %v1094
        %v1127 = vunpack.c.l.bf16 %v1095
        %v1128 = vunpack.c.l.bf16 %v1096
        %v1129 = vunpack.c.l.bf16 %v1097
        %v1130 = vunpack.c.l.bf16 %v1098
        %v1131 = vunpack.c.l.bf16 %v1099
        %v1132 = vunpack.c.l.bf16 %v1100
        %v1133 = vunpack.c.l.bf16 %v1101
        %v1134 = vunpack.c.l.bf16 %v1102
        %v1135 = vunpack.c.l.bf16 %v1103
        %v1136 = vunpack.c.l.bf16 %v1104
        %v1137 = vunpack.c.l.bf16 %v1105
        %v1138 = vunpack.c.l.bf16 %v1106
        %v1139 = vunpack.c.l.bf16 %v1107
        %v1140 = vunpack.c.l.bf16 %v1108
        %v1141 = vunpack.c.l.bf16 %v1109
        %v1142 = vunpack.c.l.bf16 %v1110
        %v1143 = vunpack.c.l.bf16 %v1111
        %v1144 = vunpack.c.l.bf16 %v1112
        %v1145 = vunpack.c.l.bf16 %v1113
        %v1146 = vstv %s1081
        %v1147 = vmul.f32 %v1146, %v1114
        %v1148 = vmul.f32 %v1146, %v1115
        %v1149 = vmul.f32 %v1146, %v1116
        %v1150 = vmul.f32 %v1146, %v1117
        %v1151 = vmul.f32 %v1146, %v1118
        %v1152 = vmul.f32 %v1146, %v1119
        %v1153 = vmul.f32 %v1146, %v1120
        %v1154 = vmul.f32 %v1146, %v1121
        %v1155 = vmul.f32 %v1146, %v1122
        %v1156 = vmul.f32 %v1146, %v1123
        %v1157 = vmul.f32 %v1146, %v1124
        %v1158 = vmul.f32 %v1146, %v1125
        %v1159 = vmul.f32 %v1146, %v1126
        %v1160 = vmul.f32 %v1146, %v1127
        %v1161 = vmul.f32 %v1146, %v1128
        %v1162 = vmul.f32 %v1146, %v1129
        %v1163 = vmul.f32 %v1146, %v1130
        %v1164 = vmul.f32 %v1146, %v1131
        %v1165 = vmul.f32 %v1146, %v1132
        %v1166 = vmul.f32 %v1146, %v1133
        %v1167 = vmul.f32 %v1146, %v1134
        %v1168 = vmul.f32 %v1146, %v1135
        %v1169 = vmul.f32 %v1146, %v1136
        %v1170 = vmul.f32 %v1146, %v1137
        %v1171 = vmul.f32 %v1146, %v1138
        %v1172 = vmul.f32 %v1146, %v1139
        %v1173 = vmul.f32 %v1146, %v1140
        %v1174 = vmul.f32 %v1146, %v1141
        %v1175 = vmul.f32 %v1146, %v1142
        %v1176 = vmul.f32 %v1146, %v1143
        %v1177 = vmul.f32 %v1146, %v1144
        %v1178 = vmul.f32 %v1146, %v1145
        %s1179 = sld [smem:[#allocation6 + $0x1]]
        %s1180 = scalar_lea.vmem %s1001, 128 [#allocation4]
        %v1181 = vld [vmem:[%s1180] sm:$0xf]
        %v1182 = vld [vmem:[%s1180 + $0x4] sm:$0xf]
        %v1183 = vld [vmem:[%s1180 + $0x8] sm:$0xf]
        %v1184 = vld [vmem:[%s1180 + $0xc] sm:$0xf]
        %v1185 = vld [vmem:[%s1180 + $0x10] sm:$0xf]
        %v1186 = vld [vmem:[%s1180 + $0x14] sm:$0xf]
        %v1187 = vld [vmem:[%s1180 + $0x18] sm:$0xf]
        %v1188 = vld [vmem:[%s1180 + $0x1c] sm:$0xf]
        %v1189 = vld [vmem:[%s1180 + $0x20] sm:$0xf]
        %v1190 = vld [vmem:[%s1180 + $0x24] sm:$0xf]
        %v1191 = vld [vmem:[%s1180 + $0x28] sm:$0xf]
        %v1192 = vld [vmem:[%s1180 + $0x2c] sm:$0xf]
        %v1193 = vld [vmem:[%s1180 + $0x30] sm:$0xf]
        %v1194 = vld [vmem:[%s1180 + $0x34] sm:$0xf]
        %v1195 = vld [vmem:[%s1180 + $0x38] sm:$0xf]
        %v1196 = vld [vmem:[%s1180 + $0x3c] sm:$0xf]
        %v1197 = vld [vmem:[%s1180 + $0x40] sm:$0xf]
        %v1198 = vld [vmem:[%s1180 + $0x44] sm:$0xf]
        %v1199 = vld [vmem:[%s1180 + $0x48] sm:$0xf]
        %v1200 = vld [vmem:[%s1180 + $0x4c] sm:$0xf]
        %v1201 = vld [vmem:[%s1180 + $0x50] sm:$0xf]
        %v1202 = vld [vmem:[%s1180 + $0x54] sm:$0xf]
        %v1203 = vld [vmem:[%s1180 + $0x58] sm:$0xf]
        %v1204 = vld [vmem:[%s1180 + $0x5c] sm:$0xf]
        %v1205 = vld [vmem:[%s1180 + $0x60] sm:$0xf]
        %v1206 = vld [vmem:[%s1180 + $0x64] sm:$0xf]
        %v1207 = vld [vmem:[%s1180 + $0x68] sm:$0xf]
        %v1208 = vld [vmem:[%s1180 + $0x6c] sm:$0xf]
        %v1209 = vld [vmem:[%s1180 + $0x70] sm:$0xf]
        %v1210 = vld [vmem:[%s1180 + $0x74] sm:$0xf]
        %v1211 = vld [vmem:[%s1180 + $0x78] sm:$0xf]
        %v1212 = vld [vmem:[%s1180 + $0x7c] sm:$0xf]
        %v1213 = vunpack.c.l.bf16 %v1181
        %v1214 = vunpack.c.l.bf16 %v1182
        %v1215 = vunpack.c.l.bf16 %v1183
        %v1216 = vunpack.c.l.bf16 %v1184
        %v1217 = vunpack.c.l.bf16 %v1185
        %v1218 = vunpack.c.l.bf16 %v1186
        %v1219 = vunpack.c.l.bf16 %v1187
        %v1220 = vunpack.c.l.bf16 %v1188
        %v1221 = vunpack.c.l.bf16 %v1189
        %v1222 = vunpack.c.l.bf16 %v1190
        %v1223 = vunpack.c.l.bf16 %v1191
        %v1224 = vunpack.c.l.bf16 %v1192
        %v1225 = vunpack.c.l.bf16 %v1193
        %v1226 = vunpack.c.l.bf16 %v1194
        %v1227 = vunpack.c.l.bf16 %v1195
        %v1228 = vunpack.c.l.bf16 %v1196
        %v1229 = vunpack.c.l.bf16 %v1197
        %v1230 = vunpack.c.l.bf16 %v1198
        %v1231 = vunpack.c.l.bf16 %v1199
        %v1232 = vunpack.c.l.bf16 %v1200
        %v1233 = vunpack.c.l.bf16 %v1201
        %v1234 = vunpack.c.l.bf16 %v1202
        %v1235 = vunpack.c.l.bf16 %v1203
        %v1236 = vunpack.c.l.bf16 %v1204
        %v1237 = vunpack.c.l.bf16 %v1205
        %v1238 = vunpack.c.l.bf16 %v1206
        %v1239 = vunpack.c.l.bf16 %v1207
        %v1240 = vunpack.c.l.bf16 %v1208
        %v1241 = vunpack.c.l.bf16 %v1209
        %v1242 = vunpack.c.l.bf16 %v1210
        %v1243 = vunpack.c.l.bf16 %v1211
        %v1244 = vunpack.c.l.bf16 %v1212
        %v1245 = vstv %s1179
        %v1246 = vmul.f32 %v1245, %v1213
        %v1247 = vmul.f32 %v1245, %v1214
        %v1248 = vmul.f32 %v1245, %v1215
        %v1249 = vmul.f32 %v1245, %v1216
        %v1250 = vmul.f32 %v1245, %v1217
        %v1251 = vmul.f32 %v1245, %v1218
        %v1252 = vmul.f32 %v1245, %v1219
        %v1253 = vmul.f32 %v1245, %v1220
        %v1254 = vmul.f32 %v1245, %v1221
        %v1255 = vmul.f32 %v1245, %v1222
        %v1256 = vmul.f32 %v1245, %v1223
        %v1257 = vmul.f32 %v1245, %v1224
        %v1258 = vmul.f32 %v1245, %v1225
        %v1259 = vmul.f32 %v1245, %v1226
        %v1260 = vmul.f32 %v1245, %v1227
        %v1261 = vmul.f32 %v1245, %v1228
        %v1262 = vmul.f32 %v1245, %v1229
        %v1263 = vmul.f32 %v1245, %v1230
        %v1264 = vmul.f32 %v1245, %v1231
        %v1265 = vmul.f32 %v1245, %v1232
        %v1266 = vmul.f32 %v1245, %v1233
        %v1267 = vmul.f32 %v1245, %v1234
        %v1268 = vmul.f32 %v1245, %v1235
        %v1269 = vmul.f32 %v1245, %v1236
        %v1270 = vmul.f32 %v1245, %v1237
        %v1271 = vmul.f32 %v1245, %v1238
        %v1272 = vmul.f32 %v1245, %v1239
        %v1273 = vmul.f32 %v1245, %v1240
        %v1274 = vmul.f32 %v1245, %v1241
        %v1275 = vmul.f32 %v1245, %v1242
        %v1276 = vmul.f32 %v1245, %v1243
        %v1277 = vmul.f32 %v1245, %v1244
        %v1278 = vadd.f32 %v1147, %v1246
        %v1279 = vadd.f32 %v1148, %v1247
        %v1280 = vadd.f32 %v1149, %v1248
        %v1281 = vadd.f32 %v1150, %v1249
        %v1282 = vadd.f32 %v1151, %v1250
        %v1283 = vadd.f32 %v1152, %v1251
        %v1284 = vadd.f32 %v1153, %v1252
        %v1285 = vadd.f32 %v1154, %v1253
        %v1286 = vadd.f32 %v1155, %v1254
        %v1287 = vadd.f32 %v1156, %v1255
        %v1288 = vadd.f32 %v1157, %v1256
        %v1289 = vadd.f32 %v1158, %v1257
        %v1290 = vadd.f32 %v1159, %v1258
        %v1291 = vadd.f32 %v1160, %v1259
        %v1292 = vadd.f32 %v1161, %v1260
        %v1293 = vadd.f32 %v1162, %v1261
        %v1294 = vadd.f32 %v1163, %v1262
        %v1295 = vadd.f32 %v1164, %v1263
        %v1296 = vadd.f32 %v1165, %v1264
        %v1297 = vadd.f32 %v1166, %v1265
        %v1298 = vadd.f32 %v1167, %v1266
        %v1299 = vadd.f32 %v1168, %v1267
        %v1300 = vadd.f32 %v1169, %v1268
        %v1301 = vadd.f32 %v1170, %v1269
        %v1302 = vadd.f32 %v1171, %v1270
        %v1303 = vadd.f32 %v1172, %v1271
        %v1304 = vadd.f32 %v1173, %v1272
        %v1305 = vadd.f32 %v1174, %v1273
        %v1306 = vadd.f32 %v1175, %v1274
        %v1307 = vadd.f32 %v1176, %v1275
        %v1308 = vadd.f32 %v1177, %v1276
        %v1309 = vadd.f32 %v1178, %v1277
        %s1310 = sld [smem:[#allocation6 + $0x2]]
        %s1311 = scalar_lea.vmem %s1001, 256 [#allocation4]
        %v1312 = vld [vmem:[%s1311] sm:$0xf]
        %v1313 = vld [vmem:[%s1311 + $0x4] sm:$0xf]
        %v1314 = vld [vmem:[%s1311 + $0x8] sm:$0xf]
        %v1315 = vld [vmem:[%s1311 + $0xc] sm:$0xf]
        %v1316 = vld [vmem:[%s1311 + $0x10] sm:$0xf]
        %v1317 = vld [vmem:[%s1311 + $0x14] sm:$0xf]
        %v1318 = vld [vmem:[%s1311 + $0x18] sm:$0xf]
        %v1319 = vld [vmem:[%s1311 + $0x1c] sm:$0xf]
        %v1320 = vld [vmem:[%s1311 + $0x20] sm:$0xf]
        %v1321 = vld [vmem:[%s1311 + $0x24] sm:$0xf]
        %v1322 = vld [vmem:[%s1311 + $0x28] sm:$0xf]
        %v1323 = vld [vmem:[%s1311 + $0x2c] sm:$0xf]
        %v1324 = vld [vmem:[%s1311 + $0x30] sm:$0xf]
        %v1325 = vld [vmem:[%s1311 + $0x34] sm:$0xf]
        %v1326 = vld [vmem:[%s1311 + $0x38] sm:$0xf]
        %v1327 = vld [vmem:[%s1311 + $0x3c] sm:$0xf]
        %v1328 = vld [vmem:[%s1311 + $0x40] sm:$0xf]
        %v1329 = vld [vmem:[%s1311 + $0x44] sm:$0xf]
        %v1330 = vld [vmem:[%s1311 + $0x48] sm:$0xf]
        %v1331 = vld [vmem:[%s1311 + $0x4c] sm:$0xf]
        %v1332 = vld [vmem:[%s1311 + $0x50] sm:$0xf]
        %v1333 = vld [vmem:[%s1311 + $0x54] sm:$0xf]
        %v1334 = vld [vmem:[%s1311 + $0x58] sm:$0xf]
        %v1335 = vld [vmem:[%s1311 + $0x5c] sm:$0xf]
        %v1336 = vld [vmem:[%s1311 + $0x60] sm:$0xf]
        %v1337 = vld [vmem:[%s1311 + $0x64] sm:$0xf]
        %v1338 = vld [vmem:[%s1311 + $0x68] sm:$0xf]
        %v1339 = vld [vmem:[%s1311 + $0x6c] sm:$0xf]
        %v1340 = vld [vmem:[%s1311 + $0x70] sm:$0xf]
        %v1341 = vld [vmem:[%s1311 + $0x74] sm:$0xf]
        %v1342 = vld [vmem:[%s1311 + $0x78] sm:$0xf]
        %v1343 = vld [vmem:[%s1311 + $0x7c] sm:$0xf]
        %v1344 = vunpack.c.l.bf16 %v1312
        %v1345 = vunpack.c.l.bf16 %v1313
        %v1346 = vunpack.c.l.bf16 %v1314
        %v1347 = vunpack.c.l.bf16 %v1315
        %v1348 = vunpack.c.l.bf16 %v1316
        %v1349 = vunpack.c.l.bf16 %v1317
        %v1350 = vunpack.c.l.bf16 %v1318
        %v1351 = vunpack.c.l.bf16 %v1319
        %v1352 = vunpack.c.l.bf16 %v1320
        %v1353 = vunpack.c.l.bf16 %v1321
        %v1354 = vunpack.c.l.bf16 %v1322
        %v1355 = vunpack.c.l.bf16 %v1323
        %v1356 = vunpack.c.l.bf16 %v1324
        %v1357 = vunpack.c.l.bf16 %v1325
        %v1358 = vunpack.c.l.bf16 %v1326
        %v1359 = vunpack.c.l.bf16 %v1327
        %v1360 = vunpack.c.l.bf16 %v1328
        %v1361 = vunpack.c.l.bf16 %v1329
        %v1362 = vunpack.c.l.bf16 %v1330
        %v1363 = vunpack.c.l.bf16 %v1331
        %v1364 = vunpack.c.l.bf16 %v1332
        %v1365 = vunpack.c.l.bf16 %v1333
        %v1366 = vunpack.c.l.bf16 %v1334
        %v1367 = vunpack.c.l.bf16 %v1335
        %v1368 = vunpack.c.l.bf16 %v1336
        %v1369 = vunpack.c.l.bf16 %v1337
        %v1370 = vunpack.c.l.bf16 %v1338
        %v1371 = vunpack.c.l.bf16 %v1339
        %v1372 = vunpack.c.l.bf16 %v1340
        %v1373 = vunpack.c.l.bf16 %v1341
        %v1374 = vunpack.c.l.bf16 %v1342
        %v1375 = vunpack.c.l.bf16 %v1343
        %v1376 = vstv %s1310
        %v1377 = vmul.f32 %v1376, %v1344
        %v1378 = vmul.f32 %v1376, %v1345
        %v1379 = vmul.f32 %v1376, %v1346
        %v1380 = vmul.f32 %v1376, %v1347
        %v1381 = vmul.f32 %v1376, %v1348
        %v1382 = vmul.f32 %v1376, %v1349
        %v1383 = vmul.f32 %v1376, %v1350
        %v1384 = vmul.f32 %v1376, %v1351
        %v1385 = vmul.f32 %v1376, %v1352
        %v1386 = vmul.f32 %v1376, %v1353
        %v1387 = vmul.f32 %v1376, %v1354
        %v1388 = vmul.f32 %v1376, %v1355
        %v1389 = vmul.f32 %v1376, %v1356
        %v1390 = vmul.f32 %v1376, %v1357
        %v1391 = vmul.f32 %v1376, %v1358
        %v1392 = vmul.f32 %v1376, %v1359
        %v1393 = vmul.f32 %v1376, %v1360
        %v1394 = vmul.f32 %v1376, %v1361
        %v1395 = vmul.f32 %v1376, %v1362
        %v1396 = vmul.f32 %v1376, %v1363
        %v1397 = vmul.f32 %v1376, %v1364
        %v1398 = vmul.f32 %v1376, %v1365
        %v1399 = vmul.f32 %v1376, %v1366
        %v1400 = vmul.f32 %v1376, %v1367
        %v1401 = vmul.f32 %v1376, %v1368
        %v1402 = vmul.f32 %v1376, %v1369
        %v1403 = vmul.f32 %v1376, %v1370
        %v1404 = vmul.f32 %v1376, %v1371
        %v1405 = vmul.f32 %v1376, %v1372
        %v1406 = vmul.f32 %v1376, %v1373
        %v1407 = vmul.f32 %v1376, %v1374
        %v1408 = vmul.f32 %v1376, %v1375
        %v1409 = vadd.f32 %v1278, %v1377
        %v1410 = vadd.f32 %v1279, %v1378
        %v1411 = vadd.f32 %v1280, %v1379
        %v1412 = vadd.f32 %v1281, %v1380
        %v1413 = vadd.f32 %v1282, %v1381
        %v1414 = vadd.f32 %v1283, %v1382
        %v1415 = vadd.f32 %v1284, %v1383
        %v1416 = vadd.f32 %v1285, %v1384
        %v1417 = vadd.f32 %v1286, %v1385
        %v1418 = vadd.f32 %v1287, %v1386
        %v1419 = vadd.f32 %v1288, %v1387
        %v1420 = vadd.f32 %v1289, %v1388
        %v1421 = vadd.f32 %v1290, %v1389
        %v1422 = vadd.f32 %v1291, %v1390
        %v1423 = vadd.f32 %v1292, %v1391
        %v1424 = vadd.f32 %v1293, %v1392
        %v1425 = vadd.f32 %v1294, %v1393
        %v1426 = vadd.f32 %v1295, %v1394
        %v1427 = vadd.f32 %v1296, %v1395
        %v1428 = vadd.f32 %v1297, %v1396
        %v1429 = vadd.f32 %v1298, %v1397
        %v1430 = vadd.f32 %v1299, %v1398
        %v1431 = vadd.f32 %v1300, %v1399
        %v1432 = vadd.f32 %v1301, %v1400
        %v1433 = vadd.f32 %v1302, %v1401
        %v1434 = vadd.f32 %v1303, %v1402
        %v1435 = vadd.f32 %v1304, %v1403
        %v1436 = vadd.f32 %v1305, %v1404
        %v1437 = vadd.f32 %v1306, %v1405
        %v1438 = vadd.f32 %v1307, %v1406
        %v1439 = vadd.f32 %v1308, %v1407
        %v1440 = vadd.f32 %v1309, %v1408
        %s1441 = sld [smem:[#allocation6 + $0x3]]
        %s1442 = scalar_lea.vmem %s1001, 384 [#allocation4]
        %v1443 = vld [vmem:[%s1442] sm:$0xf]
        %v1444 = vld [vmem:[%s1442 + $0x4] sm:$0xf]
        %v1445 = vld [vmem:[%s1442 + $0x8] sm:$0xf]
        %v1446 = vld [vmem:[%s1442 + $0xc] sm:$0xf]
        %v1447 = vld [vmem:[%s1442 + $0x10] sm:$0xf]
        %v1448 = vld [vmem:[%s1442 + $0x14] sm:$0xf]
        %v1449 = vld [vmem:[%s1442 + $0x18] sm:$0xf]
        %v1450 = vld [vmem:[%s1442 + $0x1c] sm:$0xf]
        %v1451 = vld [vmem:[%s1442 + $0x20] sm:$0xf]
        %v1452 = vld [vmem:[%s1442 + $0x24] sm:$0xf]
        %v1453 = vld [vmem:[%s1442 + $0x28] sm:$0xf]
        %v1454 = vld [vmem:[%s1442 + $0x2c] sm:$0xf]
        %v1455 = vld [vmem:[%s1442 + $0x30] sm:$0xf]
        %v1456 = vld [vmem:[%s1442 + $0x34] sm:$0xf]
        %v1457 = vld [vmem:[%s1442 + $0x38] sm:$0xf]
        %v1458 = vld [vmem:[%s1442 + $0x3c] sm:$0xf]
        %v1459 = vld [vmem:[%s1442 + $0x40] sm:$0xf]
        %v1460 = vld [vmem:[%s1442 + $0x44] sm:$0xf]
        %v1461 = vld [vmem:[%s1442 + $0x48] sm:$0xf]
        %v1462 = vld [vmem:[%s1442 + $0x4c] sm:$0xf]
        %v1463 = vld [vmem:[%s1442 + $0x50] sm:$0xf]
        %v1464 = vld [vmem:[%s1442 + $0x54] sm:$0xf]
        %v1465 = vld [vmem:[%s1442 + $0x58] sm:$0xf]
        %v1466 = vld [vmem:[%s1442 + $0x5c] sm:$0xf]
        %v1467 = vld [vmem:[%s1442 + $0x60] sm:$0xf]
        %v1468 = vld [vmem:[%s1442 + $0x64] sm:$0xf]
        %v1469 = vld [vmem:[%s1442 + $0x68] sm:$0xf]
        %v1470 = vld [vmem:[%s1442 + $0x6c] sm:$0xf]
        %v1471 = vld [vmem:[%s1442 + $0x70] sm:$0xf]
        %v1472 = vld [vmem:[%s1442 + $0x74] sm:$0xf]
        %v1473 = vld [vmem:[%s1442 + $0x78] sm:$0xf]
        %v1474 = vld [vmem:[%s1442 + $0x7c] sm:$0xf]
        %v1475 = vunpack.c.l.bf16 %v1443
        %v1476 = vunpack.c.l.bf16 %v1444
        %v1477 = vunpack.c.l.bf16 %v1445
        %v1478 = vunpack.c.l.bf16 %v1446
        %v1479 = vunpack.c.l.bf16 %v1447
        %v1480 = vunpack.c.l.bf16 %v1448
        %v1481 = vunpack.c.l.bf16 %v1449
        %v1482 = vunpack.c.l.bf16 %v1450
        %v1483 = vunpack.c.l.bf16 %v1451
        %v1484 = vunpack.c.l.bf16 %v1452
        %v1485 = vunpack.c.l.bf16 %v1453
        %v1486 = vunpack.c.l.bf16 %v1454
        %v1487 = vunpack.c.l.bf16 %v1455
        %v1488 = vunpack.c.l.bf16 %v1456
        %v1489 = vunpack.c.l.bf16 %v1457
        %v1490 = vunpack.c.l.bf16 %v1458
        %v1491 = vunpack.c.l.bf16 %v1459
        %v1492 = vunpack.c.l.bf16 %v1460
        %v1493 = vunpack.c.l.bf16 %v1461
        %v1494 = vunpack.c.l.bf16 %v1462
        %v1495 = vunpack.c.l.bf16 %v1463
        %v1496 = vunpack.c.l.bf16 %v1464
        %v1497 = vunpack.c.l.bf16 %v1465
        %v1498 = vunpack.c.l.bf16 %v1466
        %v1499 = vunpack.c.l.bf16 %v1467
        %v1500 = vunpack.c.l.bf16 %v1468
        %v1501 = vunpack.c.l.bf16 %v1469
        %v1502 = vunpack.c.l.bf16 %v1470
        %v1503 = vunpack.c.l.bf16 %v1471
        %v1504 = vunpack.c.l.bf16 %v1472
        %v1505 = vunpack.c.l.bf16 %v1473
        %v1506 = vunpack.c.l.bf16 %v1474
        %v1507 = vstv %s1441
        %v1508 = vmul.f32 %v1507, %v1475
        %v1509 = vmul.f32 %v1507, %v1476
        %v1510 = vmul.f32 %v1507, %v1477
        %v1511 = vmul.f32 %v1507, %v1478
        %v1512 = vmul.f32 %v1507, %v1479
        %v1513 = vmul.f32 %v1507, %v1480
        %v1514 = vmul.f32 %v1507, %v1481
        %v1515 = vmul.f32 %v1507, %v1482
        %v1516 = vmul.f32 %v1507, %v1483
        %v1517 = vmul.f32 %v1507, %v1484
        %v1518 = vmul.f32 %v1507, %v1485
        %v1519 = vmul.f32 %v1507, %v1486
        %v1520 = vmul.f32 %v1507, %v1487
        %v1521 = vmul.f32 %v1507, %v1488
        %v1522 = vmul.f32 %v1507, %v1489
        %v1523 = vmul.f32 %v1507, %v1490
        %v1524 = vmul.f32 %v1507, %v1491
        %v1525 = vmul.f32 %v1507, %v1492
        %v1526 = vmul.f32 %v1507, %v1493
        %v1527 = vmul.f32 %v1507, %v1494
        %v1528 = vmul.f32 %v1507, %v1495
        %v1529 = vmul.f32 %v1507, %v1496
        %v1530 = vmul.f32 %v1507, %v1497
        %v1531 = vmul.f32 %v1507, %v1498
        %v1532 = vmul.f32 %v1507, %v1499
        %v1533 = vmul.f32 %v1507, %v1500
        %v1534 = vmul.f32 %v1507, %v1501
        %v1535 = vmul.f32 %v1507, %v1502
        %v1536 = vmul.f32 %v1507, %v1503
        %v1537 = vmul.f32 %v1507, %v1504
        %v1538 = vmul.f32 %v1507, %v1505
        %v1539 = vmul.f32 %v1507, %v1506
        %v1540 = vadd.f32 %v1409, %v1508
        %v1541 = vadd.f32 %v1410, %v1509
        %v1542 = vadd.f32 %v1411, %v1510
        %v1543 = vadd.f32 %v1412, %v1511
        %v1544 = vadd.f32 %v1413, %v1512
        %v1545 = vadd.f32 %v1414, %v1513
        %v1546 = vadd.f32 %v1415, %v1514
        %v1547 = vadd.f32 %v1416, %v1515
        %v1548 = vadd.f32 %v1417, %v1516
        %v1549 = vadd.f32 %v1418, %v1517
        %v1550 = vadd.f32 %v1419, %v1518
        %v1551 = vadd.f32 %v1420, %v1519
        %v1552 = vadd.f32 %v1421, %v1520
        %v1553 = vadd.f32 %v1422, %v1521
        %v1554 = vadd.f32 %v1423, %v1522
        %v1555 = vadd.f32 %v1424, %v1523
        %v1556 = vadd.f32 %v1425, %v1524
        %v1557 = vadd.f32 %v1426, %v1525
        %v1558 = vadd.f32 %v1427, %v1526
        %v1559 = vadd.f32 %v1428, %v1527
        %v1560 = vadd.f32 %v1429, %v1528
        %v1561 = vadd.f32 %v1430, %v1529
        %v1562 = vadd.f32 %v1431, %v1530
        %v1563 = vadd.f32 %v1432, %v1531
        %v1564 = vadd.f32 %v1433, %v1532
        %v1565 = vadd.f32 %v1434, %v1533
        %v1566 = vadd.f32 %v1435, %v1534
        %v1567 = vadd.f32 %v1436, %v1535
        %v1568 = vadd.f32 %v1437, %v1536
        %v1569 = vadd.f32 %v1438, %v1537
        %v1570 = vadd.f32 %v1439, %v1538
        %v1571 = vadd.f32 %v1440, %v1539
        %s1572 = sld [smem:[#allocation3]]
        %v1573 = vstv %s1572
        %v1574 = vadd.f32 %v1540, %v1573
        %v1575 = vadd.f32 %v1541, %v1573
        %v1576 = vadd.f32 %v1542, %v1573
        %v1577 = vadd.f32 %v1543, %v1573
        %v1578 = vadd.f32 %v1544, %v1573
        %v1579 = vadd.f32 %v1545, %v1573
        %v1580 = vadd.f32 %v1546, %v1573
        %v1581 = vadd.f32 %v1547, %v1573
        %v1582 = vadd.f32 %v1548, %v1573
        %v1583 = vadd.f32 %v1549, %v1573
        %v1584 = vadd.f32 %v1550, %v1573
        %v1585 = vadd.f32 %v1551, %v1573
        %v1586 = vadd.f32 %v1552, %v1573
        %v1587 = vadd.f32 %v1553, %v1573
        %v1588 = vadd.f32 %v1554, %v1573
        %v1589 = vadd.f32 %v1555, %v1573
        %v1590 = vadd.f32 %v1556, %v1573
        %v1591 = vadd.f32 %v1557, %v1573
        %v1592 = vadd.f32 %v1558, %v1573
        %v1593 = vadd.f32 %v1559, %v1573
        %v1594 = vadd.f32 %v1560, %v1573
        %v1595 = vadd.f32 %v1561, %v1573
        %v1596 = vadd.f32 %v1562, %v1573
        %v1597 = vadd.f32 %v1563, %v1573
        %v1598 = vadd.f32 %v1564, %v1573
        %v1599 = vadd.f32 %v1565, %v1573
        %v1600 = vadd.f32 %v1566, %v1573
        %v1601 = vadd.f32 %v1567, %v1573
        %v1602 = vadd.f32 %v1568, %v1573
        %v1603 = vadd.f32 %v1569, %v1573
        %v1604 = vadd.f32 %v1570, %v1573
        %v1605 = vadd.f32 %v1571, %v1573
        %v1606 = vmul.f32 %v1574, 0.2
        %v1607 = vmul.f32 %v1575, 0.2
        %v1608 = vmul.f32 %v1576, 0.2
        %v1609 = vmul.f32 %v1577, 0.2
        %v1610 = vmul.f32 %v1578, 0.2
        %v1611 = vmul.f32 %v1579, 0.2
        %v1612 = vmul.f32 %v1580, 0.2
        %v1613 = vmul.f32 %v1581, 0.2
        %v1614 = vmul.f32 %v1582, 0.2
        %v1615 = vmul.f32 %v1583, 0.2
        %v1616 = vmul.f32 %v1584, 0.2
        %v1617 = vmul.f32 %v1585, 0.2
        %v1618 = vmul.f32 %v1586, 0.2
        %v1619 = vmul.f32 %v1587, 0.2
        %v1620 = vmul.f32 %v1588, 0.2
        %v1621 = vmul.f32 %v1589, 0.2
        %v1622 = vmul.f32 %v1590, 0.2
        %v1623 = vmul.f32 %v1591, 0.2
        %v1624 = vmul.f32 %v1592, 0.2
        %v1625 = vmul.f32 %v1593, 0.2
        %v1626 = vmul.f32 %v1594, 0.2
        %v1627 = vmul.f32 %v1595, 0.2
        %v1628 = vmul.f32 %v1596, 0.2
        %v1629 = vmul.f32 %v1597, 0.2
        %v1630 = vmul.f32 %v1598, 0.2
        %v1631 = vmul.f32 %v1599, 0.2
        %v1632 = vmul.f32 %v1600, 0.2
        %v1633 = vmul.f32 %v1601, 0.2
        %v1634 = vmul.f32 %v1602, 0.2
        %v1635 = vmul.f32 %v1603, 0.2
        %v1636 = vmul.f32 %v1604, 0.2
        %v1637 = vmul.f32 %v1605, 0.2
        %v1638 = vmax.f32 %v1606, %v1574
        %v1639 = vmax.f32 %v1607, %v1575
        %v1640 = vmax.f32 %v1608, %v1576
        %v1641 = vmax.f32 %v1609, %v1577
        %v1642 = vmax.f32 %v1610, %v1578
        %v1643 = vmax.f32 %v1611, %v1579
        %v1644 = vmax.f32 %v1612, %v1580
        %v1645 = vmax.f32 %v1613, %v1581
        %v1646 = vmax.f32 %v1614, %v1582
        %v1647 = vmax.f32 %v1615, %v1583
        %v1648 = vmax.f32 %v1616, %v1584
        %v1649 = vmax.f32 %v1617, %v1585
        %v1650 = vmax.f32 %v1618, %v1586
        %v1651 = vmax.f32 %v1619, %v1587
        %v1652 = vmax.f32 %v1620, %v1588
        %v1653 = vmax.f32 %v1621, %v1589
        %v1654 = vmax.f32 %v1622, %v1590
        %v1655 = vmax.f32 %v1623, %v1591
        %v1656 = vmax.f32 %v1624, %v1592
        %v1657 = vmax.f32 %v1625, %v1593
        %v1658 = vmax.f32 %v1626, %v1594
        %v1659 = vmax.f32 %v1627, %v1595
        %v1660 = vmax.f32 %v1628, %v1596
        %v1661 = vmax.f32 %v1629, %v1597
        %v1662 = vmax.f32 %v1630, %v1598
        %v1663 = vmax.f32 %v1631, %v1599
        %v1664 = vmax.f32 %v1632, %v1600
        %v1665 = vmax.f32 %v1633, %v1601
        %v1666 = vmax.f32 %v1634, %v1602
        %v1667 = vmax.f32 %v1635, %v1603
        %v1668 = vmax.f32 %v1636, %v1604
        %v1669 = vmax.f32 %v1637, %v1605
        %v1670 = vld [vmem:[%s1008] sm:$0xf]
        %v1671 = vld [vmem:[%s1008 + $0x4] sm:$0xf]
        %v1672 = vld [vmem:[%s1008 + $0x8] sm:$0xf]
        %v1673 = vld [vmem:[%s1008 + $0xc] sm:$0xf]
        %v1674 = vld [vmem:[%s1008 + $0x10] sm:$0xf]
        %v1675 = vld [vmem:[%s1008 + $0x14] sm:$0xf]
        %v1676 = vld [vmem:[%s1008 + $0x18] sm:$0xf]
        %v1677 = vld [vmem:[%s1008 + $0x1c] sm:$0xf]
        %v1678 = vld [vmem:[%s1008 + $0x20] sm:$0xf]
        %v1679 = vld [vmem:[%s1008 + $0x24] sm:$0xf]
        %v1680 = vld [vmem:[%s1008 + $0x28] sm:$0xf]
        %v1681 = vld [vmem:[%s1008 + $0x2c] sm:$0xf]
        %v1682 = vld [vmem:[%s1008 + $0x30] sm:$0xf]
        %v1683 = vld [vmem:[%s1008 + $0x34] sm:$0xf]
        %v1684 = vld [vmem:[%s1008 + $0x38] sm:$0xf]
        %v1685 = vld [vmem:[%s1008 + $0x3c] sm:$0xf]
        %v1686 = vld [vmem:[%s1008 + $0x40] sm:$0xf]
        %v1687 = vld [vmem:[%s1008 + $0x44] sm:$0xf]
        %v1688 = vld [vmem:[%s1008 + $0x48] sm:$0xf]
        %v1689 = vld [vmem:[%s1008 + $0x4c] sm:$0xf]
        %v1690 = vld [vmem:[%s1008 + $0x50] sm:$0xf]
        %v1691 = vld [vmem:[%s1008 + $0x54] sm:$0xf]
        %v1692 = vld [vmem:[%s1008 + $0x58] sm:$0xf]
        %v1693 = vld [vmem:[%s1008 + $0x5c] sm:$0xf]
        %v1694 = vld [vmem:[%s1008 + $0x60] sm:$0xf]
        %v1695 = vld [vmem:[%s1008 + $0x64] sm:$0xf]
        %v1696 = vld [vmem:[%s1008 + $0x68] sm:$0xf]
        %v1697 = vld [vmem:[%s1008 + $0x6c] sm:$0xf]
        %v1698 = vld [vmem:[%s1008 + $0x70] sm:$0xf]
        %v1699 = vld [vmem:[%s1008 + $0x74] sm:$0xf]
        %v1700 = vld [vmem:[%s1008 + $0x78] sm:$0xf]
        %v1701 = vld [vmem:[%s1008 + $0x7c] sm:$0xf]
        %v1702 = vunpack.c.l.bf16 %v1670
        %v1703 = vunpack.c.l.bf16 %v1671
        %v1704 = vunpack.c.l.bf16 %v1672
        %v1705 = vunpack.c.l.bf16 %v1673
        %v1706 = vunpack.c.l.bf16 %v1674
        %v1707 = vunpack.c.l.bf16 %v1675
        %v1708 = vunpack.c.l.bf16 %v1676
        %v1709 = vunpack.c.l.bf16 %v1677
        %v1710 = vunpack.c.l.bf16 %v1678
        %v1711 = vunpack.c.l.bf16 %v1679
        %v1712 = vunpack.c.l.bf16 %v1680
        %v1713 = vunpack.c.l.bf16 %v1681
        %v1714 = vunpack.c.l.bf16 %v1682
        %v1715 = vunpack.c.l.bf16 %v1683
        %v1716 = vunpack.c.l.bf16 %v1684
        %v1717 = vunpack.c.l.bf16 %v1685
        %v1718 = vunpack.c.l.bf16 %v1686
        %v1719 = vunpack.c.l.bf16 %v1687
        %v1720 = vunpack.c.l.bf16 %v1688
        %v1721 = vunpack.c.l.bf16 %v1689
        %v1722 = vunpack.c.l.bf16 %v1690
        %v1723 = vunpack.c.l.bf16 %v1691
        %v1724 = vunpack.c.l.bf16 %v1692
        %v1725 = vunpack.c.l.bf16 %v1693
        %v1726 = vunpack.c.l.bf16 %v1694
        %v1727 = vunpack.c.l.bf16 %v1695
        %v1728 = vunpack.c.l.bf16 %v1696
        %v1729 = vunpack.c.l.bf16 %v1697
        %v1730 = vunpack.c.l.bf16 %v1698
        %v1731 = vunpack.c.l.bf16 %v1699
        %v1732 = vunpack.c.l.bf16 %v1700
        %v1733 = vunpack.c.l.bf16 %v1701
        %v1734 = vld [vmem:[%s1] sm:$0xff]
        %v1735 = vld [vmem:[%s1 + $0x8] sm:$0xff]
        %v1736 = vld [vmem:[%s1 + $0x10] sm:$0xff]
        %v1737 = vld [vmem:[%s1 + $0x18] sm:$0xff]
        %v1738 = vld [vmem:[%s1 + $0x20] sm:$0xff]
        %v1739 = vld [vmem:[%s1 + $0x28] sm:$0xff]
        %v1740 = vld [vmem:[%s1 + $0x30] sm:$0xff]
        %v1741 = vld [vmem:[%s1 + $0x38] sm:$0xff]
        %v1742 = vld [vmem:[%s1 + $0x40] sm:$0xff]
        %v1743 = vld [vmem:[%s1 + $0x48] sm:$0xff]
        %v1744 = vld [vmem:[%s1 + $0x50] sm:$0xff]
        %v1745 = vld [vmem:[%s1 + $0x58] sm:$0xff]
        %v1746 = vld [vmem:[%s1 + $0x60] sm:$0xff]
        %v1747 = vld [vmem:[%s1 + $0x68] sm:$0xff]
        %v1748 = vld [vmem:[%s1 + $0x70] sm:$0xff]
        %v1749 = vld [vmem:[%s1 + $0x78] sm:$0xff]
        %v1750 = vld [vmem:[%s1 + $0x80] sm:$0xff]
        %v1751 = vld [vmem:[%s1 + $0x88] sm:$0xff]
        %v1752 = vld [vmem:[%s1 + $0x90] sm:$0xff]
        %v1753 = vld [vmem:[%s1 + $0x98] sm:$0xff]
        %v1754 = vld [vmem:[%s1 + $0xa0] sm:$0xff]
        %v1755 = vld [vmem:[%s1 + $0xa8] sm:$0xff]
        %v1756 = vld [vmem:[%s1 + $0xb0] sm:$0xff]
        %v1757 = vld [vmem:[%s1 + $0xb8] sm:$0xff]
        %v1758 = vld [vmem:[%s1 + $0xc0] sm:$0xff]
        %v1759 = vld [vmem:[%s1 + $0xc8] sm:$0xff]
        %v1760 = vld [vmem:[%s1 + $0xd0] sm:$0xff]
        %v1761 = vld [vmem:[%s1 + $0xd8] sm:$0xff]
        %v1762 = vld [vmem:[%s1 + $0xe0] sm:$0xff]
        %v1763 = vld [vmem:[%s1 + $0xe8] sm:$0xff]
        %v1764 = vld [vmem:[%s1 + $0xf0] sm:$0xff]
        %v1765 = vld [vmem:[%s1 + $0xf8] sm:$0xff]
        %1767 = vset.pattern.permute.xlu0 0
        %1768 = vperm.xlu0 %1767, %v1734
        %v1769 = vpop.permute.xlu0 %1768
        %1772 = vset.pattern.permute.xlu0 0
        %1773 = vperm.xlu0 %1772, %v1735
        %v1774 = vpop.permute.xlu0 %1773
        %1777 = vset.pattern.permute.xlu0 0
        %1778 = vperm.xlu0 %1777, %v1736
        %v1779 = vpop.permute.xlu0 %1778
        %1782 = vset.pattern.permute.xlu0 0
        %1783 = vperm.xlu0 %1782, %v1737
        %v1784 = vpop.permute.xlu0 %1783
        %1787 = vset.pattern.permute.xlu0 0
        %1788 = vperm.xlu0 %1787, %v1738
        %v1789 = vpop.permute.xlu0 %1788
        %1792 = vset.pattern.permute.xlu0 0
        %1793 = vperm.xlu0 %1792, %v1739
        %v1794 = vpop.permute.xlu0 %1793
        %1797 = vset.pattern.permute.xlu0 0
        %1798 = vperm.xlu0 %1797, %v1740
        %v1799 = vpop.permute.xlu0 %1798
        %1802 = vset.pattern.permute.xlu0 0
        %1803 = vperm.xlu0 %1802, %v1741
        %v1804 = vpop.permute.xlu0 %1803
        %1807 = vset.pattern.permute.xlu0 0
        %1808 = vperm.xlu0 %1807, %v1742
        %v1809 = vpop.permute.xlu0 %1808
        %1812 = vset.pattern.permute.xlu0 0
        %1813 = vperm.xlu0 %1812, %v1743
        %v1814 = vpop.permute.xlu0 %1813
        %1817 = vset.pattern.permute.xlu0 0
        %1818 = vperm.xlu0 %1817, %v1744
        %v1819 = vpop.permute.xlu0 %1818
        %1822 = vset.pattern.permute.xlu0 0
        %1823 = vperm.xlu0 %1822, %v1745
        %v1824 = vpop.permute.xlu0 %1823
        %1827 = vset.pattern.permute.xlu0 0
        %1828 = vperm.xlu0 %1827, %v1746
        %v1829 = vpop.permute.xlu0 %1828
        %1832 = vset.pattern.permute.xlu0 0
        %1833 = vperm.xlu0 %1832, %v1747
        %v1834 = vpop.permute.xlu0 %1833
        %1837 = vset.pattern.permute.xlu0 0
        %1838 = vperm.xlu0 %1837, %v1748
        %v1839 = vpop.permute.xlu0 %1838
        %1842 = vset.pattern.permute.xlu0 0
        %1843 = vperm.xlu0 %1842, %v1749
        %v1844 = vpop.permute.xlu0 %1843
        %1847 = vset.pattern.permute.xlu0 0
        %1848 = vperm.xlu0 %1847, %v1750
        %v1849 = vpop.permute.xlu0 %1848
        %1852 = vset.pattern.permute.xlu0 0
        %1853 = vperm.xlu0 %1852, %v1751
        %v1854 = vpop.permute.xlu0 %1853
        %1857 = vset.pattern.permute.xlu0 0
        %1858 = vperm.xlu0 %1857, %v1752
        %v1859 = vpop.permute.xlu0 %1858
        %1862 = vset.pattern.permute.xlu0 0
        %1863 = vperm.xlu0 %1862, %v1753
        %v1864 = vpop.permute.xlu0 %1863
        %1867 = vset.pattern.permute.xlu0 0
        %1868 = vperm.xlu0 %1867, %v1754
        %v1869 = vpop.permute.xlu0 %1868
        %1872 = vset.pattern.permute.xlu0 0
        %1873 = vperm.xlu0 %1872, %v1755
        %v1874 = vpop.permute.xlu0 %1873
        %1877 = vset.pattern.permute.xlu0 0
        %1878 = vperm.xlu0 %1877, %v1756
        %v1879 = vpop.permute.xlu0 %1878
        %1882 = vset.pattern.permute.xlu0 0
        %1883 = vperm.xlu0 %1882, %v1757
        %v1884 = vpop.permute.xlu0 %1883
        %1887 = vset.pattern.permute.xlu0 0
        %1888 = vperm.xlu0 %1887, %v1758
        %v1889 = vpop.permute.xlu0 %1888
        %1892 = vset.pattern.permute.xlu0 0
        %1893 = vperm.xlu0 %1892, %v1759
        %v1894 = vpop.permute.xlu0 %1893
        %1897 = vset.pattern.permute.xlu0 0
        %1898 = vperm.xlu0 %1897, %v1760
        %v1899 = vpop.permute.xlu0 %1898
        %1902 = vset.pattern.permute.xlu0 0
        %1903 = vperm.xlu0 %1902, %v1761
        %v1904 = vpop.permute.xlu0 %1903
        %1907 = vset.pattern.permute.xlu0 0
        %1908 = vperm.xlu0 %1907, %v1762
        %v1909 = vpop.permute.xlu0 %1908
        %1912 = vset.pattern.permute.xlu0 0
        %1913 = vperm.xlu0 %1912, %v1763
        %v1914 = vpop.permute.xlu0 %1913
        %1917 = vset.pattern.permute.xlu0 0
        %1918 = vperm.xlu0 %1917, %v1764
        %v1919 = vpop.permute.xlu0 %1918
        %1922 = vset.pattern.permute.xlu0 0
        %1923 = vperm.xlu0 %1922, %v1765
        %v1924 = vpop.permute.xlu0 %1923
        %v1926 = vadd.f32 %v1702, %v1769
        %v1927 = vadd.f32 %v1703, %v1774
        %v1928 = vadd.f32 %v1704, %v1779
        %v1929 = vadd.f32 %v1705, %v1784
        %v1930 = vadd.f32 %v1706, %v1789
        %v1931 = vadd.f32 %v1707, %v1794
        %v1932 = vadd.f32 %v1708, %v1799
        %v1933 = vadd.f32 %v1709, %v1804
        %v1934 = vadd.f32 %v1710, %v1809
        %v1935 = vadd.f32 %v1711, %v1814
        %v1936 = vadd.f32 %v1712, %v1819
        %v1937 = vadd.f32 %v1713, %v1824
        %v1938 = vadd.f32 %v1714, %v1829
        %v1939 = vadd.f32 %v1715, %v1834
        %v1940 = vadd.f32 %v1716, %v1839
        %v1941 = vadd.f32 %v1717, %v1844
        %v1942 = vadd.f32 %v1718, %v1849
        %v1943 = vadd.f32 %v1719, %v1854
        %v1944 = vadd.f32 %v1720, %v1859
        %v1945 = vadd.f32 %v1721, %v1864
        %v1946 = vadd.f32 %v1722, %v1869
        %v1947 = vadd.f32 %v1723, %v1874
        %v1948 = vadd.f32 %v1724, %v1879
        %v1949 = vadd.f32 %v1725, %v1884
        %v1950 = vadd.f32 %v1726, %v1889
        %v1951 = vadd.f32 %v1727, %v1894
        %v1952 = vadd.f32 %v1728, %v1899
        %v1953 = vadd.f32 %v1729, %v1904
        %v1954 = vadd.f32 %v1730, %v1909
        %v1955 = vadd.f32 %v1731, %v1914
        %v1956 = vadd.f32 %v1732, %v1919
        %v1957 = vadd.f32 %v1733, %v1924
        %v1958 = vadd.f32 %v1926, %v1638
        %v1959 = vadd.f32 %v1927, %v1639
        %v1960 = vadd.f32 %v1928, %v1640
        %v1961 = vadd.f32 %v1929, %v1641
        %v1962 = vadd.f32 %v1930, %v1642
        %v1963 = vadd.f32 %v1931, %v1643
        %v1964 = vadd.f32 %v1932, %v1644
        %v1965 = vadd.f32 %v1933, %v1645
        %v1966 = vadd.f32 %v1934, %v1646
        %v1967 = vadd.f32 %v1935, %v1647
        %v1968 = vadd.f32 %v1936, %v1648
        %v1969 = vadd.f32 %v1937, %v1649
        %v1970 = vadd.f32 %v1938, %v1650
        %v1971 = vadd.f32 %v1939, %v1651
        %v1972 = vadd.f32 %v1940, %v1652
        %v1973 = vadd.f32 %v1941, %v1653
        %v1974 = vadd.f32 %v1942, %v1654
        %v1975 = vadd.f32 %v1943, %v1655
        %v1976 = vadd.f32 %v1944, %v1656
        %v1977 = vadd.f32 %v1945, %v1657
        %v1978 = vadd.f32 %v1946, %v1658
        %v1979 = vadd.f32 %v1947, %v1659
        %v1980 = vadd.f32 %v1948, %v1660
        %v1981 = vadd.f32 %v1949, %v1661
        %v1982 = vadd.f32 %v1950, %v1662
        %v1983 = vadd.f32 %v1951, %v1663
        %v1984 = vadd.f32 %v1952, %v1664
        %v1985 = vadd.f32 %v1953, %v1665
        %v1986 = vadd.f32 %v1954, %v1666
        %v1987 = vadd.f32 %v1955, %v1667
        %v1988 = vadd.f32 %v1956, %v1668
        %v1989 = vadd.f32 %v1957, %v1669
        %v1990 = vmax.f32 %v1958, %v1962
        %v1991 = vmax.f32 %v1959, %v1963
        %v1992 = vmax.f32 %v1960, %v1964
        %v1993 = vmax.f32 %v1961, %v1965
        %v1994 = vmax.f32 %v1990, %v1966
        %v1995 = vmax.f32 %v1991, %v1967
        %v1996 = vmax.f32 %v1992, %v1968
        %v1997 = vmax.f32 %v1993, %v1969
        %v1998 = vmax.f32 %v1994, %v1970
        %v1999 = vmax.f32 %v1995, %v1971
        %v2000 = vmax.f32 %v1996, %v1972
        %v2001 = vmax.f32 %v1997, %v1973
        %v2002 = vmax.f32 %v1998, %v1974
        %v2003 = vmax.f32 %v1999, %v1975
        %v2004 = vmax.f32 %v2000, %v1976
        %v2005 = vmax.f32 %v2001, %v1977
        %v2006 = vmax.f32 %v2002, %v1978
        %v2007 = vmax.f32 %v2003, %v1979
        %v2008 = vmax.f32 %v2004, %v1980
        %v2009 = vmax.f32 %v2005, %v1981
        %v2010 = vmax.f32 %v2006, %v1982
        %v2011 = vmax.f32 %v2007, %v1983
        %v2012 = vmax.f32 %v2008, %v1984
        %v2013 = vmax.f32 %v2009, %v1985
        %v2014 = vmax.f32 %v2010, %v1986
        %v2015 = vmax.f32 %v2011, %v1987
        %v2016 = vmax.f32 %v2012, %v1988
        %v2017 = vmax.f32 %v2013, %v1989
        %v2018 = vmax.f32 %v2014, %v2015
        %v2019 = vmax.f32 %v2016, %v2017
        %v2020 = vmax.f32 %v2018, %v2019
        %v2021 = vrot.slane %v2020, 4
        %v2022 = vmax.f32 %v2020, %v2021
        %v2023 = vrot.slane %v2022, 2
        %v2024 = vmax.f32 %v2022, %v2023
        %v2025 = vrot.slane %v2024, 1
        %v2026 = vmax.f32 %v2024, %v2025
        %v2027 = vsub.f32 %v1958, %v2026
        %v2028 = vsub.f32 %v1959, %v2026
        %v2029 = vsub.f32 %v1960, %v2026
        %v2030 = vsub.f32 %v1961, %v2026
        %v2031 = vsub.f32 %v1962, %v2026
        %v2032 = vsub.f32 %v1963, %v2026
        %v2033 = vsub.f32 %v1964, %v2026
        %v2034 = vsub.f32 %v1965, %v2026
        %v2035 = vsub.f32 %v1966, %v2026
        %v2036 = vsub.f32 %v1967, %v2026
        %v2037 = vsub.f32 %v1968, %v2026
        %v2038 = vsub.f32 %v1969, %v2026
        %v2039 = vsub.f32 %v1970, %v2026
        %v2040 = vsub.f32 %v1971, %v2026
        %v2041 = vsub.f32 %v1972, %v2026
        %v2042 = vsub.f32 %v1973, %v2026
        %v2043 = vsub.f32 %v1974, %v2026
        %v2044 = vsub.f32 %v1975, %v2026
        %v2045 = vsub.f32 %v1976, %v2026
        %v2046 = vsub.f32 %v1977, %v2026
        %v2047 = vsub.f32 %v1978, %v2026
        %v2048 = vsub.f32 %v1979, %v2026
        %v2049 = vsub.f32 %v1980, %v2026
        %v2050 = vsub.f32 %v1981, %v2026
        %v2051 = vsub.f32 %v1982, %v2026
        %v2052 = vsub.f32 %v1983, %v2026
        %v2053 = vsub.f32 %v1984, %v2026
        %v2054 = vsub.f32 %v1985, %v2026
        %v2055 = vsub.f32 %v1986, %v2026
        %v2056 = vsub.f32 %v1987, %v2026
        %v2057 = vsub.f32 %v1988, %v2026
        %v2058 = vsub.f32 %v1989, %v2026
        %v2059 = vmul.f32 %v2027, 1.442695
        %v2060 = vpow.pop %v2059
        %v2061 = vmul.f32 %v2028, 1.442695
        %v2062 = vpow.pop %v2061
        %v2063 = vmul.f32 %v2029, 1.442695
        %v2064 = vpow.pop %v2063
        %v2065 = vmul.f32 %v2030, 1.442695
        %v2066 = vpow.pop %v2065
        %v2067 = vmul.f32 %v2031, 1.442695
        %v2068 = vpow.pop %v2067
        %v2069 = vmul.f32 %v2032, 1.442695
        %v2070 = vpow.pop %v2069
        %v2071 = vmul.f32 %v2033, 1.442695
        %v2072 = vpow.pop %v2071
        %v2073 = vmul.f32 %v2034, 1.442695
        %v2074 = vpow.pop %v2073
        %v2075 = vmul.f32 %v2035, 1.442695
        %v2076 = vpow.pop %v2075
        %v2077 = vmul.f32 %v2036, 1.442695
        %v2078 = vpow.pop %v2077
        %v2079 = vmul.f32 %v2037, 1.442695
        %v2080 = vpow.pop %v2079
        %v2081 = vmul.f32 %v2038, 1.442695
        %v2082 = vpow.pop %v2081
        %v2083 = vmul.f32 %v2039, 1.442695
        %v2084 = vpow.pop %v2083
        %v2085 = vmul.f32 %v2040, 1.442695
        %v2086 = vpow.pop %v2085
        %v2087 = vmul.f32 %v2041, 1.442695
        %v2088 = vpow.pop %v2087
        %v2089 = vmul.f32 %v2042, 1.442695
        %v2090 = vpow.pop %v2089
        %v2091 = vmul.f32 %v2043, 1.442695
        %v2092 = vpow.pop %v2091
        %v2093 = vmul.f32 %v2044, 1.442695
        %v2094 = vpow.pop %v2093
        %v2095 = vmul.f32 %v2045, 1.442695
        %v2096 = vpow.pop %v2095
        %v2097 = vmul.f32 %v2046, 1.442695
        %v2098 = vpow.pop %v2097
        %v2099 = vmul.f32 %v2047, 1.442695
        %v2100 = vpow.pop %v2099
        %v2101 = vmul.f32 %v2048, 1.442695
        %v2102 = vpow.pop %v2101
        %v2103 = vmul.f32 %v2049, 1.442695
        %v2104 = vpow.pop %v2103
        %v2105 = vmul.f32 %v2050, 1.442695
        %v2106 = vpow.pop %v2105
        %v2107 = vmul.f32 %v2051, 1.442695
        %v2108 = vpow.pop %v2107
        %v2109 = vmul.f32 %v2052, 1.442695
        %v2110 = vpow.pop %v2109
        %v2111 = vmul.f32 %v2053, 1.442695
        %v2112 = vpow.pop %v2111
        %v2113 = vmul.f32 %v2054, 1.442695
        %v2114 = vpow.pop %v2113
        %v2115 = vmul.f32 %v2055, 1.442695
        %v2116 = vpow.pop %v2115
        %v2117 = vmul.f32 %v2056, 1.442695
        %v2118 = vpow.pop %v2117
        %v2119 = vmul.f32 %v2057, 1.442695
        %v2120 = vpow.pop %v2119
        %v2121 = vmul.f32 %v2058, 1.442695
        %v2122 = vpow.pop %v2121
        %v2123 = vadd.f32 %v2060, %v2062
        %v2124 = vadd.f32 %v2123, %v2064
        %v2125 = vadd.f32 %v2124, %v2066
        %v2126 = vadd.f32 %v2125, %v2068
        %v2127 = vadd.f32 %v2126, %v2070
        %v2128 = vadd.f32 %v2127, %v2072
        %v2129 = vadd.f32 %v2128, %v2074
        %v2130 = vadd.f32 %v2129, %v2076
        %v2131 = vadd.f32 %v2130, %v2078
        %v2132 = vadd.f32 %v2131, %v2080
        %v2133 = vadd.f32 %v2132, %v2082
        %v2134 = vadd.f32 %v2133, %v2084
        %v2135 = vadd.f32 %v2134, %v2086
        %v2136 = vadd.f32 %v2135, %v2088
        %v2137 = vadd.f32 %v2136, %v2090
        %v2138 = vadd.f32 %v2137, %v2092
        %v2139 = vadd.f32 %v2138, %v2094
        %v2140 = vadd.f32 %v2139, %v2096
        %v2141 = vadd.f32 %v2140, %v2098
        %v2142 = vadd.f32 %v2141, %v2100
        %v2143 = vadd.f32 %v2142, %v2102
        %v2144 = vadd.f32 %v2143, %v2104
        %v2145 = vadd.f32 %v2144, %v2106
        %v2146 = vadd.f32 %v2145, %v2108
        %v2147 = vadd.f32 %v2146, %v2110
        %v2148 = vadd.f32 %v2147, %v2112
        %v2149 = vadd.f32 %v2148, %v2114
        %v2150 = vadd.f32 %v2149, %v2116
        %v2151 = vadd.f32 %v2150, %v2118
        %v2152 = vadd.f32 %v2151, %v2120
        %v2153 = vadd.f32 %v2152, %v2122
        %v2154 = vrot.slane %v2153, 4
        %v2155 = vadd.f32 %v2153, %v2154
        %v2156 = vrot.slane %v2155, 2
        %v2157 = vadd.f32 %v2155, %v2156
        %v2158 = vrot.slane %v2157, 1
        %v2159 = vadd.f32 %v2157, %v2158
        %v2160 = vrcp.pop %v2159
        %v2161 = vmul.f32 %v2159, %v2160
        %v2162 = vsub.f32 1.0, %v2161
        %v2163 = vmul.f32 %v2160, %v2162
        %v2164 = vadd.f32 %v2160, %v2163
        %vm2165 = vweird.f32 %v2159
        %vm2166 = vweird.f32 %v2160
        %vm2167 = vmor %vm2165, %vm2166
        %v2168 = vsel %vm2167, %v2160, %v2164
        %v2169 = vand.u32 2147483647, %v2159
        %vm2170 = vcmp.eq.f32.partialorder %v2169, 8.507059e+37
        %v2171 = vand.u32 %v2159, 2147483648
        %v2172 = vor.u32 1.1754944e-38, %v2171
        %v2173 = vsel %vm2170, %v2172, %v2168
        %v2174 = vmul.f32 %v2060, %v2173
        %v2175 = vmul.f32 %v2062, %v2173
        %v2176 = vmul.f32 %v2064, %v2173
        %v2177 = vmul.f32 %v2066, %v2173
        %v2178 = vmul.f32 %v2068, %v2173
        %v2179 = vmul.f32 %v2070, %v2173
        %v2180 = vmul.f32 %v2072, %v2173
        %v2181 = vmul.f32 %v2074, %v2173
        %v2182 = vmul.f32 %v2076, %v2173
        %v2183 = vmul.f32 %v2078, %v2173
        %v2184 = vmul.f32 %v2080, %v2173
        %v2185 = vmul.f32 %v2082, %v2173
        %v2186 = vmul.f32 %v2084, %v2173
        %v2187 = vmul.f32 %v2086, %v2173
        %v2188 = vmul.f32 %v2088, %v2173
        %v2189 = vmul.f32 %v2090, %v2173
        %v2190 = vmul.f32 %v2092, %v2173
        %v2191 = vmul.f32 %v2094, %v2173
        %v2192 = vmul.f32 %v2096, %v2173
        %v2193 = vmul.f32 %v2098, %v2173
        %v2194 = vmul.f32 %v2100, %v2173
        %v2195 = vmul.f32 %v2102, %v2173
        %v2196 = vmul.f32 %v2104, %v2173
        %v2197 = vmul.f32 %v2106, %v2173
        %v2198 = vmul.f32 %v2108, %v2173
        %v2199 = vmul.f32 %v2110, %v2173
        %v2200 = vmul.f32 %v2112, %v2173
        %v2201 = vmul.f32 %v2114, %v2173
        %v2202 = vmul.f32 %v2116, %v2173
        %v2203 = vmul.f32 %v2118, %v2173
        %v2204 = vmul.f32 %v2120, %v2173
        %v2205 = vmul.f32 %v2122, %v2173
        %s2206 = smul.u32 %s21, 128
        %s2207 = scalar_lea.vmem %s0, %s2206
        %v2208 = vld [vmem:[%s2207] sm:$0xff]
        %v2209 = vld [vmem:[%s2207 + $0x8] sm:$0xff]
        %v2210 = vld [vmem:[%s2207 + $0x10] sm:$0xff]
        %v2211 = vld [vmem:[%s2207 + $0x18] sm:$0xff]
        %v2212 = vld [vmem:[%s2207 + $0x20] sm:$0xff]
        %v2213 = vld [vmem:[%s2207 + $0x28] sm:$0xff]
        %v2214 = vld [vmem:[%s2207 + $0x30] sm:$0xff]
        %v2215 = vld [vmem:[%s2207 + $0x38] sm:$0xff]
        %v2216 = vld [vmem:[%s2207 + $0x40] sm:$0xff]
        %v2217 = vld [vmem:[%s2207 + $0x48] sm:$0xff]
        %v2218 = vld [vmem:[%s2207 + $0x50] sm:$0xff]
        %v2219 = vld [vmem:[%s2207 + $0x58] sm:$0xff]
        %v2220 = vld [vmem:[%s2207 + $0x60] sm:$0xff]
        %v2221 = vld [vmem:[%s2207 + $0x68] sm:$0xff]
        %v2222 = vld [vmem:[%s2207 + $0x70] sm:$0xff]
        %v2223 = vld [vmem:[%s2207 + $0x78] sm:$0xff]
        %v2224 = vld [vmem:[#allocation2] sm:$0xff]
        %v2225 = vld [vmem:[#allocation2 + $0x8] sm:$0xff]
        %v2226 = vld [vmem:[#allocation2 + $0x10] sm:$0xff]
        %v2227 = vld [vmem:[#allocation2 + $0x18] sm:$0xff]
        %v2228 = vld [vmem:[#allocation2 + $0x20] sm:$0xff]
        %v2229 = vld [vmem:[#allocation2 + $0x28] sm:$0xff]
        %v2230 = vld [vmem:[#allocation2 + $0x30] sm:$0xff]
        %v2231 = vld [vmem:[#allocation2 + $0x38] sm:$0xff]
        %v2232 = vld [vmem:[#allocation2 + $0x40] sm:$0xff]
        %v2233 = vld [vmem:[#allocation2 + $0x48] sm:$0xff]
        %v2234 = vld [vmem:[#allocation2 + $0x50] sm:$0xff]
        %v2235 = vld [vmem:[#allocation2 + $0x58] sm:$0xff]
        %v2236 = vld [vmem:[#allocation2 + $0x60] sm:$0xff]
        %v2237 = vld [vmem:[#allocation2 + $0x68] sm:$0xff]
        %v2238 = vld [vmem:[#allocation2 + $0x70] sm:$0xff]
        %v2239 = vld [vmem:[#allocation2 + $0x78] sm:$0xff]
        %v2240 = vld [vmem:[#allocation2 + $0x80] sm:$0xff]
        %v2241 = vld [vmem:[#allocation2 + $0x88] sm:$0xff]
        %v2242 = vld [vmem:[#allocation2 + $0x90] sm:$0xff]
        %v2243 = vld [vmem:[#allocation2 + $0x98] sm:$0xff]
        %v2244 = vld [vmem:[#allocation2 + $0xa0] sm:$0xff]
        %v2245 = vld [vmem:[#allocation2 + $0xa8] sm:$0xff]
        %v2246 = vld [vmem:[#allocation2 + $0xb0] sm:$0xff]
        %v2247 = vld [vmem:[#allocation2 + $0xb8] sm:$0xff]
        %v2248 = vld [vmem:[#allocation2 + $0xc0] sm:$0xff]
        %v2249 = vld [vmem:[#allocation2 + $0xc8] sm:$0xff]
        %v2250 = vld [vmem:[#allocation2 + $0xd0] sm:$0xff]
        %v2251 = vld [vmem:[#allocation2 + $0xd8] sm:$0xff]
        %v2252 = vld [vmem:[#allocation2 + $0xe0] sm:$0xff]
        %v2253 = vld [vmem:[#allocation2 + $0xe8] sm:$0xff]
        %v2254 = vld [vmem:[#allocation2 + $0xf0] sm:$0xff]
        %v2255 = vld [vmem:[#allocation2 + $0xf8] sm:$0xff]
        %2256 = vmatpush.msra.mxu0 %v2223
        %2257 = vmatpush.msra.mxu0 %v2222
        %2258 = vmatpush.msra.mxu0 %v2221
        %2259 = vmatpush.msra.mxu0 %v2220
        %2260 = vmatpush.msra.mxu0 %v2219
        %2261 = vmatpush.msra.mxu0 %v2218
        %2262 = vmatpush.msra.mxu0 %v2217
        %2263 = vmatpush.msra.mxu0 %v2216
        %2264 = vmatpush.msra.mxu0 %v2215
        %2265 = vmatpush.msra.mxu0 %v2214
        %2266 = vmatpush.msra.mxu0 %v2213
        %2267 = vmatpush.msra.mxu0 %v2212
        %2268 = vmatpush.msra.mxu0 %v2211
        %2269 = vmatpush.msra.mxu0 %v2210
        %2270 = vmatpush.msra.mxu0 %v2209
        %2271 = vmatpush.msra.mxu0 %v2208
        %2272 = vmatmul.f32.gmra.mxu0 %v2174
        %v2273 = vpop.f32.mrf.mxu0
        %v2274 = vadd.f32 0.0, %v2273
        %2275 = vmatmul.f32.gmra.mxu0 %v2175
        %v2276 = vpop.f32.mrf.mxu0
        %v2277 = vadd.f32 0.0, %v2276
        %2278 = vmatmul.f32.gmra.mxu0 %v2176
        %v2279 = vpop.f32.mrf.mxu0
        %v2280 = vadd.f32 0.0, %v2279
        %2281 = vmatmul.f32.gmra.mxu0 %v2177
        %v2282 = vpop.f32.mrf.mxu0
        %v2283 = vadd.f32 0.0, %v2282
        %2284 = vmatmul.f32.gmra.mxu0 %v2178
        %v2285 = vpop.f32.mrf.mxu0
        %v2286 = vadd.f32 0.0, %v2285
        %2287 = vmatmul.f32.gmra.mxu0 %v2179
        %v2288 = vpop.f32.mrf.mxu0
        %v2289 = vadd.f32 0.0, %v2288
        %2290 = vmatmul.f32.gmra.mxu0 %v2180
        %v2291 = vpop.f32.mrf.mxu0
        %v2292 = vadd.f32 0.0, %v2291
        %2293 = vmatmul.f32.gmra.mxu0 %v2181
        %v2294 = vpop.f32.mrf.mxu0
        %v2295 = vadd.f32 0.0, %v2294
        %2296 = vmatmul.f32.gmra.mxu0 %v2182
        %v2297 = vpop.f32.mrf.mxu0
        %v2298 = vadd.f32 0.0, %v2297
        %2299 = vmatmul.f32.gmra.mxu0 %v2183
        %v2300 = vpop.f32.mrf.mxu0
        %v2301 = vadd.f32 0.0, %v2300
        %2302 = vmatmul.f32.gmra.mxu0 %v2184
        %v2303 = vpop.f32.mrf.mxu0
        %v2304 = vadd.f32 0.0, %v2303
        %2305 = vmatmul.f32.gmra.mxu0 %v2185
        %v2306 = vpop.f32.mrf.mxu0
        %v2307 = vadd.f32 0.0, %v2306
        %2308 = vmatmul.f32.gmra.mxu0 %v2186
        %v2309 = vpop.f32.mrf.mxu0
        %v2310 = vadd.f32 0.0, %v2309
        %2311 = vmatmul.f32.gmra.mxu0 %v2187
        %v2312 = vpop.f32.mrf.mxu0
        %v2313 = vadd.f32 0.0, %v2312
        %2314 = vmatmul.f32.gmra.mxu0 %v2188
        %v2315 = vpop.f32.mrf.mxu0
        %v2316 = vadd.f32 0.0, %v2315
        %2317 = vmatmul.f32.gmra.mxu0 %v2189
        %v2318 = vpop.f32.mrf.mxu0
        %v2319 = vadd.f32 0.0, %v2318
        %2320 = vmatmul.f32.gmra.mxu0 %v2190
        %v2321 = vpop.f32.mrf.mxu0
        %v2322 = vadd.f32 0.0, %v2321
        %2323 = vmatmul.f32.gmra.mxu0 %v2191
        %v2324 = vpop.f32.mrf.mxu0
        %v2325 = vadd.f32 0.0, %v2324
        %2326 = vmatmul.f32.gmra.mxu0 %v2192
        %v2327 = vpop.f32.mrf.mxu0
        %v2328 = vadd.f32 0.0, %v2327
        %2329 = vmatmul.f32.gmra.mxu0 %v2193
        %v2330 = vpop.f32.mrf.mxu0
        %v2331 = vadd.f32 0.0, %v2330
        %2332 = vmatmul.f32.gmra.mxu0 %v2194
        %v2333 = vpop.f32.mrf.mxu0
        %v2334 = vadd.f32 0.0, %v2333
        %2335 = vmatmul.f32.gmra.mxu0 %v2195
        %v2336 = vpop.f32.mrf.mxu0
        %v2337 = vadd.f32 0.0, %v2336
        %2338 = vmatmul.f32.gmra.mxu0 %v2196
        %v2339 = vpop.f32.mrf.mxu0
        %v2340 = vadd.f32 0.0, %v2339
        %2341 = vmatmul.f32.gmra.mxu0 %v2197
        %v2342 = vpop.f32.mrf.mxu0
        %v2343 = vadd.f32 0.0, %v2342
        %2344 = vmatmul.f32.gmra.mxu0 %v2198
        %v2345 = vpop.f32.mrf.mxu0
        %v2346 = vadd.f32 0.0, %v2345
        %2347 = vmatmul.f32.gmra.mxu0 %v2199
        %v2348 = vpop.f32.mrf.mxu0
        %v2349 = vadd.f32 0.0, %v2348
        %2350 = vmatmul.f32.gmra.mxu0 %v2200
        %v2351 = vpop.f32.mrf.mxu0
        %v2352 = vadd.f32 0.0, %v2351
        %2353 = vmatmul.f32.gmra.mxu0 %v2201
        %v2354 = vpop.f32.mrf.mxu0
        %v2355 = vadd.f32 0.0, %v2354
        %2356 = vmatmul.f32.gmra.mxu0 %v2202
        %v2357 = vpop.f32.mrf.mxu0
        %v2358 = vadd.f32 0.0, %v2357
        %2359 = vmatmul.f32.gmra.mxu0 %v2203
        %v2360 = vpop.f32.mrf.mxu0
        %v2361 = vadd.f32 0.0, %v2360
        %2362 = vmatmul.f32.gmra.mxu0 %v2204
        %v2363 = vpop.f32.mrf.mxu0
        %v2364 = vadd.f32 0.0, %v2363
        %2365 = vmatmul.f32.gmra.mxu0 %v2205
        %v2366 = vpop.f32.mrf.mxu0
        %v2367 = vadd.f32 0.0, %v2366
        %2368 = vdwg.mxu0
        %v2369 = vadd.f32 %v2224, %v2274
        %v2370 = vadd.f32 %v2225, %v2277
        %v2371 = vadd.f32 %v2226, %v2280
        %v2372 = vadd.f32 %v2227, %v2283
        %v2373 = vadd.f32 %v2228, %v2286
        %v2374 = vadd.f32 %v2229, %v2289
        %v2375 = vadd.f32 %v2230, %v2292
        %v2376 = vadd.f32 %v2231, %v2295
        %v2377 = vadd.f32 %v2232, %v2298
        %v2378 = vadd.f32 %v2233, %v2301
        %v2379 = vadd.f32 %v2234, %v2304
        %v2380 = vadd.f32 %v2235, %v2307
        %v2381 = vadd.f32 %v2236, %v2310
        %v2382 = vadd.f32 %v2237, %v2313
        %v2383 = vadd.f32 %v2238, %v2316
        %v2384 = vadd.f32 %v2239, %v2319
        %v2385 = vadd.f32 %v2240, %v2322
        %v2386 = vadd.f32 %v2241, %v2325
        %v2387 = vadd.f32 %v2242, %v2328
        %v2388 = vadd.f32 %v2243, %v2331
        %v2389 = vadd.f32 %v2244, %v2334
        %v2390 = vadd.f32 %v2245, %v2337
        %v2391 = vadd.f32 %v2246, %v2340
        %v2392 = vadd.f32 %v2247, %v2343
        %v2393 = vadd.f32 %v2248, %v2346
        %v2394 = vadd.f32 %v2249, %v2349
        %v2395 = vadd.f32 %v2250, %v2352
        %v2396 = vadd.f32 %v2251, %v2355
        %v2397 = vadd.f32 %v2252, %v2358
        %v2398 = vadd.f32 %v2253, %v2361
        %v2399 = vadd.f32 %v2254, %v2364
        %v2400 = vadd.f32 %v2255, %v2367
        %vm2401 = vcmask 261120
        %2402 = vst.msk [vmem:[#allocation2] sm:$0xff] %vm2401, %v2369
        %2403 = vst.msk [vmem:[#allocation2 + $0x8] sm:$0xff] %vm2401, %v2370
        %2404 = vst.msk [vmem:[#allocation2 + $0x10] sm:$0xff] %vm2401, %v2371
        %2405 = vst.msk [vmem:[#allocation2 + $0x18] sm:$0xff] %vm2401, %v2372
        %2406 = vst.msk [vmem:[#allocation2 + $0x20] sm:$0xff] %vm2401, %v2373
        %2407 = vst.msk [vmem:[#allocation2 + $0x28] sm:$0xff] %vm2401, %v2374
        %2408 = vst.msk [vmem:[#allocation2 + $0x30] sm:$0xff] %vm2401, %v2375
        %2409 = vst.msk [vmem:[#allocation2 + $0x38] sm:$0xff] %vm2401, %v2376
        %2410 = vst.msk [vmem:[#allocation2 + $0x40] sm:$0xff] %vm2401, %v2377
        %2411 = vst.msk [vmem:[#allocation2 + $0x48] sm:$0xff] %vm2401, %v2378
        %2412 = vst.msk [vmem:[#allocation2 + $0x50] sm:$0xff] %vm2401, %v2379
        %2413 = vst.msk [vmem:[#allocation2 + $0x58] sm:$0xff] %vm2401, %v2380
        %2414 = vst.msk [vmem:[#allocation2 + $0x60] sm:$0xff] %vm2401, %v2381
        %2415 = vst.msk [vmem:[#allocation2 + $0x68] sm:$0xff] %vm2401, %v2382
        %2416 = vst.msk [vmem:[#allocation2 + $0x70] sm:$0xff] %vm2401, %v2383
        %2417 = vst.msk [vmem:[#allocation2 + $0x78] sm:$0xff] %vm2401, %v2384
        %2418 = vst.msk [vmem:[#allocation2 + $0x80] sm:$0xff] %vm2401, %v2385
        %2419 = vst.msk [vmem:[#allocation2 + $0x88] sm:$0xff] %vm2401, %v2386
        %2420 = vst.msk [vmem:[#allocation2 + $0x90] sm:$0xff] %vm2401, %v2387
        %2421 = vst.msk [vmem:[#allocation2 + $0x98] sm:$0xff] %vm2401, %v2388
        %2422 = vst.msk [vmem:[#allocation2 + $0xa0] sm:$0xff] %vm2401, %v2389
        %2423 = vst.msk [vmem:[#allocation2 + $0xa8] sm:$0xff] %vm2401, %v2390
        %2424 = vst.msk [vmem:[#allocation2 + $0xb0] sm:$0xff] %vm2401, %v2391
        %2425 = vst.msk [vmem:[#allocation2 + $0xb8] sm:$0xff] %vm2401, %v2392
        %2426 = vst.msk [vmem:[#allocation2 + $0xc0] sm:$0xff] %vm2401, %v2393
        %2427 = vst.msk [vmem:[#allocation2 + $0xc8] sm:$0xff] %vm2401, %v2394
        %2428 = vst.msk [vmem:[#allocation2 + $0xd0] sm:$0xff] %vm2401, %v2395
        %2429 = vst.msk [vmem:[#allocation2 + $0xd8] sm:$0xff] %vm2401, %v2396
        %2430 = vst.msk [vmem:[#allocation2 + $0xe0] sm:$0xff] %vm2401, %v2397
        %2431 = vst.msk [vmem:[#allocation2 + $0xe8] sm:$0xff] %vm2401, %v2398
        %2432 = vst.msk [vmem:[#allocation2 + $0xf0] sm:$0xff] %vm2401, %v2399
        %2433 = vst.msk [vmem:[#allocation2 + $0xf8] sm:$0xff] %vm2401, %v2400
        %p2434 = scmp.eq.s32.totalorder %s21, 1
        // Predicated region
        $region143: #{rera_forward.3} parent=125 // pred_check
          %p2435 = pneg %p2434
        $region144: #{rera_forward.3} parent=125 // pred_check_branch
          %2437 = sbr.rel (%p2435) target = $region146
        $region145: #{rera_forward.3} parent=125 // pred_region
          %v2438 = vld [vmem:[%s2] sm:$0xff]
          %v2439 = vld [vmem:[%s2 + $0x8] sm:$0xff]
          %v2440 = vld [vmem:[%s2 + $0x10] sm:$0xff]
          %v2441 = vld [vmem:[%s2 + $0x18] sm:$0xff]
          %v2442 = vld [vmem:[%s2 + $0x20] sm:$0xff]
          %v2443 = vld [vmem:[%s2 + $0x28] sm:$0xff]
          %v2444 = vld [vmem:[%s2 + $0x30] sm:$0xff]
          %v2445 = vld [vmem:[%s2 + $0x38] sm:$0xff]
          %v2446 = vld [vmem:[%s2 + $0x40] sm:$0xff]
          %v2447 = vld [vmem:[%s2 + $0x48] sm:$0xff]
          %v2448 = vld [vmem:[%s2 + $0x50] sm:$0xff]
          %v2449 = vld [vmem:[%s2 + $0x58] sm:$0xff]
          %v2450 = vld [vmem:[%s2 + $0x60] sm:$0xff]
          %v2451 = vld [vmem:[%s2 + $0x68] sm:$0xff]
          %v2452 = vld [vmem:[%s2 + $0x70] sm:$0xff]
          %v2453 = vld [vmem:[%s2 + $0x78] sm:$0xff]
          %v2454 = vld [vmem:[%s2 + $0x80] sm:$0xff]
          %v2455 = vld [vmem:[%s2 + $0x88] sm:$0xff]
          %v2456 = vld [vmem:[%s2 + $0x90] sm:$0xff]
          %v2457 = vld [vmem:[%s2 + $0x98] sm:$0xff]
          %v2458 = vld [vmem:[%s2 + $0xa0] sm:$0xff]
          %v2459 = vld [vmem:[%s2 + $0xa8] sm:$0xff]
          %v2460 = vld [vmem:[%s2 + $0xb0] sm:$0xff]
          %v2461 = vld [vmem:[%s2 + $0xb8] sm:$0xff]
          %v2462 = vld [vmem:[%s2 + $0xc0] sm:$0xff]
          %v2463 = vld [vmem:[%s2 + $0xc8] sm:$0xff]
          %v2464 = vld [vmem:[%s2 + $0xd0] sm:$0xff]
          %v2465 = vld [vmem:[%s2 + $0xd8] sm:$0xff]
          %v2466 = vld [vmem:[%s2 + $0xe0] sm:$0xff]
          %v2467 = vld [vmem:[%s2 + $0xe8] sm:$0xff]
          %v2468 = vld [vmem:[%s2 + $0xf0] sm:$0xff]
          %v2469 = vld [vmem:[%s2 + $0xf8] sm:$0xff]
          %v2470 = vld [vmem:[#allocation2] sm:$0xff]
          %v2471 = vld [vmem:[#allocation2 + $0x8] sm:$0xff]
          %v2472 = vld [vmem:[#allocation2 + $0x10] sm:$0xff]
          %v2473 = vld [vmem:[#allocation2 + $0x18] sm:$0xff]
          %v2474 = vld [vmem:[#allocation2 + $0x20] sm:$0xff]
          %v2475 = vld [vmem:[#allocation2 + $0x28] sm:$0xff]
          %v2476 = vld [vmem:[#allocation2 + $0x30] sm:$0xff]
          %v2477 = vld [vmem:[#allocation2 + $0x38] sm:$0xff]
          %v2478 = vld [vmem:[#allocation2 + $0x40] sm:$0xff]
          %v2479 = vld [vmem:[#allocation2 + $0x48] sm:$0xff]
          %v2480 = vld [vmem:[#allocation2 + $0x50] sm:$0xff]
          %v2481 = vld [vmem:[#allocation2 + $0x58] sm:$0xff]
          %v2482 = vld [vmem:[#allocation2 + $0x60] sm:$0xff]
          %v2483 = vld [vmem:[#allocation2 + $0x68] sm:$0xff]
          %v2484 = vld [vmem:[#allocation2 + $0x70] sm:$0xff]
          %v2485 = vld [vmem:[#allocation2 + $0x78] sm:$0xff]
          %v2486 = vld [vmem:[#allocation2 + $0x80] sm:$0xff]
          %v2487 = vld [vmem:[#allocation2 + $0x88] sm:$0xff]
          %v2488 = vld [vmem:[#allocation2 + $0x90] sm:$0xff]
          %v2489 = vld [vmem:[#allocation2 + $0x98] sm:$0xff]
          %v2490 = vld [vmem:[#allocation2 + $0xa0] sm:$0xff]
          %v2491 = vld [vmem:[#allocation2 + $0xa8] sm:$0xff]
          %v2492 = vld [vmem:[#allocation2 + $0xb0] sm:$0xff]
          %v2493 = vld [vmem:[#allocation2 + $0xb8] sm:$0xff]
          %v2494 = vld [vmem:[#allocation2 + $0xc0] sm:$0xff]
          %v2495 = vld [vmem:[#allocation2 + $0xc8] sm:$0xff]
          %v2496 = vld [vmem:[#allocation2 + $0xd0] sm:$0xff]
          %v2497 = vld [vmem:[#allocation2 + $0xd8] sm:$0xff]
          %v2498 = vld [vmem:[#allocation2 + $0xe0] sm:$0xff]
          %v2499 = vld [vmem:[#allocation2 + $0xe8] sm:$0xff]
          %v2500 = vld [vmem:[#allocation2 + $0xf0] sm:$0xff]
          %v2501 = vld [vmem:[#allocation2 + $0xf8] sm:$0xff]
          %v2502 = vld [vmem:[%s7] sm:$0xff]
          %v2503 = vld [vmem:[%s7 + $0x8] sm:$0xff]
          %v2504 = vld [vmem:[%s7 + $0x10] sm:$0xff]
          %v2505 = vld [vmem:[%s7 + $0x18] sm:$0xff]
          %v2507 = vsel %vm2401, %v2470, 0
          %v2510 = vsel %vm2401, %v2471, 0
          %v2513 = vsel %vm2401, %v2472, 0
          %v2516 = vsel %vm2401, %v2473, 0
          %v2519 = vsel %vm2401, %v2474, 0
          %v2522 = vsel %vm2401, %v2475, 0
          %v2525 = vsel %vm2401, %v2476, 0
          %v2528 = vsel %vm2401, %v2477, 0
          %v2531 = vsel %vm2401, %v2478, 0
          %v2534 = vsel %vm2401, %v2479, 0
          %v2537 = vsel %vm2401, %v2480, 0
          %v2540 = vsel %vm2401, %v2481, 0
          %v2543 = vsel %vm2401, %v2482, 0
          %v2546 = vsel %vm2401, %v2483, 0
          %v2549 = vsel %vm2401, %v2484, 0
          %v2552 = vsel %vm2401, %v2485, 0
          %v2555 = vsel %vm2401, %v2486, 0
          %v2558 = vsel %vm2401, %v2487, 0
          %v2561 = vsel %vm2401, %v2488, 0
          %v2564 = vsel %vm2401, %v2489, 0
          %v2567 = vsel %vm2401, %v2490, 0
          %v2570 = vsel %vm2401, %v2491, 0
          %v2573 = vsel %vm2401, %v2492, 0
          %v2576 = vsel %vm2401, %v2493, 0
          %v2579 = vsel %vm2401, %v2494, 0
          %v2582 = vsel %vm2401, %v2495, 0
          %v2585 = vsel %vm2401, %v2496, 0
          %v2588 = vsel %vm2401, %v2497, 0
          %v2591 = vsel %vm2401, %v2498, 0
          %v2594 = vsel %vm2401, %v2499, 0
          %v2597 = vsel %vm2401, %v2500, 0
          %v2600 = vsel %vm2401, %v2501, 0
          %2602 = vmatpush.msra.mxu0 0.0
          %2603 = vmatpush.msra.mxu0 0.0
          %2604 = vmatpush.msra.mxu0 0.0
          %2605 = vmatpush.msra.mxu0 0.0
          %2606 = vmatpush.msra.mxu0 0.0
          %2607 = vmatpush.msra.mxu0 0.0
          %2608 = vmatpush.msra.mxu0 0.0
          %2609 = vmatpush.msra.mxu0 0.0
          %2610 = vmatpush.msra.mxu0 0.0
          %2611 = vmatpush.msra.mxu0 0.0
          %2612 = vmatpush.msra.mxu0 0.0
          %2613 = vmatpush.msra.mxu0 0.0
          %2614 = vmatpush.msra.mxu0 %v2505
          %2615 = vmatpush.msra.mxu0 %v2504
          %2616 = vmatpush.msra.mxu0 %v2503
          %2617 = vmatpush.msra.mxu0 %v2502
          %2618 = vmatmul.f32.gmra.mxu0 %v2507
          %v2619 = vpop.f32.mrf.mxu0
          %v2620 = vadd.f32 0.0, %v2619
          %2621 = vmatmul.f32.gmra.mxu0 %v2510
          %v2622 = vpop.f32.mrf.mxu0
          %v2623 = vadd.f32 0.0, %v2622
          %2624 = vmatmul.f32.gmra.mxu0 %v2513
          %v2625 = vpop.f32.mrf.mxu0
          %v2626 = vadd.f32 0.0, %v2625
          %2627 = vmatmul.f32.gmra.mxu0 %v2516
          %v2628 = vpop.f32.mrf.mxu0
          %v2629 = vadd.f32 0.0, %v2628
          %2630 = vmatmul.f32.gmra.mxu0 %v2519
          %v2631 = vpop.f32.mrf.mxu0
          %v2632 = vadd.f32 0.0, %v2631
          %2633 = vmatmul.f32.gmra.mxu0 %v2522
          %v2634 = vpop.f32.mrf.mxu0
          %v2635 = vadd.f32 0.0, %v2634
          %2636 = vmatmul.f32.gmra.mxu0 %v2525
          %v2637 = vpop.f32.mrf.mxu0
          %v2638 = vadd.f32 0.0, %v2637
          %2639 = vmatmul.f32.gmra.mxu0 %v2528
          %v2640 = vpop.f32.mrf.mxu0
          %v2641 = vadd.f32 0.0, %v2640
          %2642 = vmatmul.f32.gmra.mxu0 %v2531
          %v2643 = vpop.f32.mrf.mxu0
          %v2644 = vadd.f32 0.0, %v2643
          %2645 = vmatmul.f32.gmra.mxu0 %v2534
          %v2646 = vpop.f32.mrf.mxu0
          %v2647 = vadd.f32 0.0, %v2646
          %2648 = vmatmul.f32.gmra.mxu0 %v2537
          %v2649 = vpop.f32.mrf.mxu0
          %v2650 = vadd.f32 0.0, %v2649
          %2651 = vmatmul.f32.gmra.mxu0 %v2540
          %v2652 = vpop.f32.mrf.mxu0
          %v2653 = vadd.f32 0.0, %v2652
          %2654 = vmatmul.f32.gmra.mxu0 %v2543
          %v2655 = vpop.f32.mrf.mxu0
          %v2656 = vadd.f32 0.0, %v2655
          %2657 = vmatmul.f32.gmra.mxu0 %v2546
          %v2658 = vpop.f32.mrf.mxu0
          %v2659 = vadd.f32 0.0, %v2658
          %2660 = vmatmul.f32.gmra.mxu0 %v2549
          %v2661 = vpop.f32.mrf.mxu0
          %v2662 = vadd.f32 0.0, %v2661
          %2663 = vmatmul.f32.gmra.mxu0 %v2552
          %v2664 = vpop.f32.mrf.mxu0
          %v2665 = vadd.f32 0.0, %v2664
          %2666 = vmatmul.f32.gmra.mxu0 %v2555
          %v2667 = vpop.f32.mrf.mxu0
          %v2668 = vadd.f32 0.0, %v2667
          %2669 = vmatmul.f32.gmra.mxu0 %v2558
          %v2670 = vpop.f32.mrf.mxu0
          %v2671 = vadd.f32 0.0, %v2670
          %2672 = vmatmul.f32.gmra.mxu0 %v2561
          %v2673 = vpop.f32.mrf.mxu0
          %v2674 = vadd.f32 0.0, %v2673
          %2675 = vmatmul.f32.gmra.mxu0 %v2564
          %v2676 = vpop.f32.mrf.mxu0
          %v2677 = vadd.f32 0.0, %v2676
          %2678 = vmatmul.f32.gmra.mxu0 %v2567
          %v2679 = vpop.f32.mrf.mxu0
          %v2680 = vadd.f32 0.0, %v2679
          %2681 = vmatmul.f32.gmra.mxu0 %v2570
          %v2682 = vpop.f32.mrf.mxu0
          %v2683 = vadd.f32 0.0, %v2682
          %2684 = vmatmul.f32.gmra.mxu0 %v2573
          %v2685 = vpop.f32.mrf.mxu0
          %v2686 = vadd.f32 0.0, %v2685
          %2687 = vmatmul.f32.gmra.mxu0 %v2576
          %v2688 = vpop.f32.mrf.mxu0
          %v2689 = vadd.f32 0.0, %v2688
          %2690 = vmatmul.f32.gmra.mxu0 %v2579
          %v2691 = vpop.f32.mrf.mxu0
          %v2692 = vadd.f32 0.0, %v2691
          %2693 = vmatmul.f32.gmra.mxu0 %v2582
          %v2694 = vpop.f32.mrf.mxu0
          %v2695 = vadd.f32 0.0, %v2694
          %2696 = vmatmul.f32.gmra.mxu0 %v2585
          %v2697 = vpop.f32.mrf.mxu0
          %v2698 = vadd.f32 0.0, %v2697
          %2699 = vmatmul.f32.gmra.mxu0 %v2588
          %v2700 = vpop.f32.mrf.mxu0
          %v2701 = vadd.f32 0.0, %v2700
          %2702 = vmatmul.f32.gmra.mxu0 %v2591
          %v2703 = vpop.f32.mrf.mxu0
          %v2704 = vadd.f32 0.0, %v2703
          %2705 = vmatmul.f32.gmra.mxu0 %v2594
          %v2706 = vpop.f32.mrf.mxu0
          %v2707 = vadd.f32 0.0, %v2706
          %2708 = vmatmul.f32.gmra.mxu0 %v2597
          %v2709 = vpop.f32.mrf.mxu0
          %v2710 = vadd.f32 0.0, %v2709
          %2711 = vmatmul.f32.gmra.mxu0 %v2600
          %v2712 = vpop.f32.mrf.mxu0
          %v2713 = vadd.f32 0.0, %v2712
          %2714 = vdwg.mxu0
          %v2715 = vadd.f32 %v2438, %v2620
          %v2716 = vadd.f32 %v2439, %v2623
          %v2717 = vadd.f32 %v2440, %v2626
          %v2718 = vadd.f32 %v2441, %v2629
          %v2719 = vadd.f32 %v2442, %v2632
          %v2720 = vadd.f32 %v2443, %v2635
          %v2721 = vadd.f32 %v2444, %v2638
          %v2722 = vadd.f32 %v2445, %v2641
          %v2723 = vadd.f32 %v2446, %v2644
          %v2724 = vadd.f32 %v2447, %v2647
          %v2725 = vadd.f32 %v2448, %v2650
          %v2726 = vadd.f32 %v2449, %v2653
          %v2727 = vadd.f32 %v2450, %v2656
          %v2728 = vadd.f32 %v2451, %v2659
          %v2729 = vadd.f32 %v2452, %v2662
          %v2730 = vadd.f32 %v2453, %v2665
          %v2731 = vadd.f32 %v2454, %v2668
          %v2732 = vadd.f32 %v2455, %v2671
          %v2733 = vadd.f32 %v2456, %v2674
          %v2734 = vadd.f32 %v2457, %v2677
          %v2735 = vadd.f32 %v2458, %v2680
          %v2736 = vadd.f32 %v2459, %v2683
          %v2737 = vadd.f32 %v2460, %v2686
          %v2738 = vadd.f32 %v2461, %v2689
          %v2739 = vadd.f32 %v2462, %v2692
          %v2740 = vadd.f32 %v2463, %v2695
          %v2741 = vadd.f32 %v2464, %v2698
          %v2742 = vadd.f32 %v2465, %v2701
          %v2743 = vadd.f32 %v2466, %v2704
          %v2744 = vadd.f32 %v2467, %v2707
          %v2745 = vadd.f32 %v2468, %v2710
          %v2746 = vadd.f32 %v2469, %v2713
          %v2747 = vmul.f32 %v2715, 0.2
          %v2748 = vmul.f32 %v2716, 0.2
          %v2749 = vmul.f32 %v2717, 0.2
          %v2750 = vmul.f32 %v2718, 0.2
          %v2751 = vmul.f32 %v2719, 0.2
          %v2752 = vmul.f32 %v2720, 0.2
          %v2753 = vmul.f32 %v2721, 0.2
          %v2754 = vmul.f32 %v2722, 0.2
          %v2755 = vmul.f32 %v2723, 0.2
          %v2756 = vmul.f32 %v2724, 0.2
          %v2757 = vmul.f32 %v2725, 0.2
          %v2758 = vmul.f32 %v2726, 0.2
          %v2759 = vmul.f32 %v2727, 0.2
          %v2760 = vmul.f32 %v2728, 0.2
          %v2761 = vmul.f32 %v2729, 0.2
          %v2762 = vmul.f32 %v2730, 0.2
          %v2763 = vmul.f32 %v2731, 0.2
          %v2764 = vmul.f32 %v2732, 0.2
          %v2765 = vmul.f32 %v2733, 0.2
          %v2766 = vmul.f32 %v2734, 0.2
          %v2767 = vmul.f32 %v2735, 0.2
          %v2768 = vmul.f32 %v2736, 0.2
          %v2769 = vmul.f32 %v2737, 0.2
          %v2770 = vmul.f32 %v2738, 0.2
          %v2771 = vmul.f32 %v2739, 0.2
          %v2772 = vmul.f32 %v2740, 0.2
          %v2773 = vmul.f32 %v2741, 0.2
          %v2774 = vmul.f32 %v2742, 0.2
          %v2775 = vmul.f32 %v2743, 0.2
          %v2776 = vmul.f32 %v2744, 0.2
          %v2777 = vmul.f32 %v2745, 0.2
          %v2778 = vmul.f32 %v2746, 0.2
          %v2779 = vmax.f32 %v2747, %v2715
          %v2780 = vmax.f32 %v2748, %v2716
          %v2781 = vmax.f32 %v2749, %v2717
          %v2782 = vmax.f32 %v2750, %v2718
          %v2783 = vmax.f32 %v2751, %v2719
          %v2784 = vmax.f32 %v2752, %v2720
          %v2785 = vmax.f32 %v2753, %v2721
          %v2786 = vmax.f32 %v2754, %v2722
          %v2787 = vmax.f32 %v2755, %v2723
          %v2788 = vmax.f32 %v2756, %v2724
          %v2789 = vmax.f32 %v2757, %v2725
          %v2790 = vmax.f32 %v2758, %v2726
          %v2791 = vmax.f32 %v2759, %v2727
          %v2792 = vmax.f32 %v2760, %v2728
          %v2793 = vmax.f32 %v2761, %v2729
          %v2794 = vmax.f32 %v2762, %v2730
          %v2795 = vmax.f32 %v2763, %v2731
          %v2796 = vmax.f32 %v2764, %v2732
          %v2797 = vmax.f32 %v2765, %v2733
          %v2798 = vmax.f32 %v2766, %v2734
          %v2799 = vmax.f32 %v2767, %v2735
          %v2800 = vmax.f32 %v2768, %v2736
          %v2801 = vmax.f32 %v2769, %v2737
          %v2802 = vmax.f32 %v2770, %v2738
          %v2803 = vmax.f32 %v2771, %v2739
          %v2804 = vmax.f32 %v2772, %v2740
          %v2805 = vmax.f32 %v2773, %v2741
          %v2806 = vmax.f32 %v2774, %v2742
          %v2807 = vmax.f32 %v2775, %v2743
          %v2808 = vmax.f32 %v2776, %v2744
          %v2809 = vmax.f32 %v2777, %v2745
          %v2810 = vmax.f32 %v2778, %v2746
          %vm2811 = vcmask 7168
          %2812 = vst.msk [vmem:[%s8] sm:$0xff] %vm2811, %v2779
          %2813 = vst.msk [vmem:[%s8 + $0x8] sm:$0xff] %vm2811, %v2780
          %2814 = vst.msk [vmem:[%s8 + $0x10] sm:$0xff] %vm2811, %v2781
          %2815 = vst.msk [vmem:[%s8 + $0x18] sm:$0xff] %vm2811, %v2782
          %2816 = vst.msk [vmem:[%s8 + $0x20] sm:$0xff] %vm2811, %v2783
          %2817 = vst.msk [vmem:[%s8 + $0x28] sm:$0xff] %vm2811, %v2784
          %2818 = vst.msk [vmem:[%s8 + $0x30] sm:$0xff] %vm2811, %v2785
          %2819 = vst.msk [vmem:[%s8 + $0x38] sm:$0xff] %vm2811, %v2786
          %2820 = vst.msk [vmem:[%s8 + $0x40] sm:$0xff] %vm2811, %v2787
          %2821 = vst.msk [vmem:[%s8 + $0x48] sm:$0xff] %vm2811, %v2788
          %2822 = vst.msk [vmem:[%s8 + $0x50] sm:$0xff] %vm2811, %v2789
          %2823 = vst.msk [vmem:[%s8 + $0x58] sm:$0xff] %vm2811, %v2790
          %2824 = vst.msk [vmem:[%s8 + $0x60] sm:$0xff] %vm2811, %v2791
          %2825 = vst.msk [vmem:[%s8 + $0x68] sm:$0xff] %vm2811, %v2792
          %2826 = vst.msk [vmem:[%s8 + $0x70] sm:$0xff] %vm2811, %v2793
          %2827 = vst.msk [vmem:[%s8 + $0x78] sm:$0xff] %vm2811, %v2794
          %2828 = vst.msk [vmem:[%s8 + $0x80] sm:$0xff] %vm2811, %v2795
          %2829 = vst.msk [vmem:[%s8 + $0x88] sm:$0xff] %vm2811, %v2796
          %2830 = vst.msk [vmem:[%s8 + $0x90] sm:$0xff] %vm2811, %v2797
          %2831 = vst.msk [vmem:[%s8 + $0x98] sm:$0xff] %vm2811, %v2798
          %2832 = vst.msk [vmem:[%s8 + $0xa0] sm:$0xff] %vm2811, %v2799
          %2833 = vst.msk [vmem:[%s8 + $0xa8] sm:$0xff] %vm2811, %v2800
          %2834 = vst.msk [vmem:[%s8 + $0xb0] sm:$0xff] %vm2811, %v2801
          %2835 = vst.msk [vmem:[%s8 + $0xb8] sm:$0xff] %vm2811, %v2802
          %2836 = vst.msk [vmem:[%s8 + $0xc0] sm:$0xff] %vm2811, %v2803
          %2837 = vst.msk [vmem:[%s8 + $0xc8] sm:$0xff] %vm2811, %v2804
          %2838 = vst.msk [vmem:[%s8 + $0xd0] sm:$0xff] %vm2811, %v2805
          %2839 = vst.msk [vmem:[%s8 + $0xd8] sm:$0xff] %vm2811, %v2806
          %2840 = vst.msk [vmem:[%s8 + $0xe0] sm:$0xff] %vm2811, %v2807
          %2841 = vst.msk [vmem:[%s8 + $0xe8] sm:$0xff] %vm2811, %v2808
          %2842 = vst.msk [vmem:[%s8 + $0xf0] sm:$0xff] %vm2811, %v2809
          %2843 = vst.msk [vmem:[%s8 + $0xf8] sm:$0xff] %vm2811, %v2810
        $region146: #{rera_forward.3} parent=125 // pred_fallthru
          _
        // Predicated region
        $region147: #{rera_forward.3} parent=125 // pred_check
          %p2844 = pneg %p212
        $region148: #{rera_forward.3} parent=125 // pred_check_branch
          %2846 = sbr.rel (%p2844) target = $region150
        $region149: #{rera_forward.3} parent=125 // pred_region
          _
        $region150: #{rera_forward.3} parent=125 // pred_fallthru
          _
        // Predicated region
        $region151: #{rera_forward.3} parent=125 // pred_check
          %p2847 = pneg %p212
        $region152: #{rera_forward.3} parent=125 // pred_check_branch
          %2849 = sbr.rel (%p2847) target = $region154
        $region153: #{rera_forward.3} parent=125 // pred_region
          _
        $region154: #{rera_forward.3} parent=125 // pred_fallthru
          _
      $region126: #{rera_forward.3} parent=5 // pred_fallthru
        _
      %p2850 = scmp.le.s32.totalorder 2, %s16
      // Predicated region
      $region155: #{rera_forward.3} parent=5 // pred_check
        %p2851 = pneg %p2850
      $region156: #{rera_forward.3} parent=5 // pred_check_branch
        %2853 = sbr.rel (%p2851) target = $region158
      $region157: #{rera_forward.3} parent=5 // pred_region
        %s2854 = ssub.s32 %s16, 2
      $region158: #{rera_forward.3} parent=5 // pred_fallthru
        _
    $region6: #{rera_forward.3} parent=1 // loop_footer
      %s20 = sadd.s32 1, %s16
    $region7: #{rera_forward.3} parent=1 // loop_footer_branch
      %15 = sbr.rel target = $region3
    $region8: #{rera_forward.3} parent=1 // loop_exit
      _
    %2855 = vsyncpa [#allocation7], 1
    %s2856 = scalar_lea.sflag [#allocation7], 1
    %2857 = vsyncpa %s2856, 1

// kernel: rera_forward.2
$region0: #{rera_forward.2}
  #allocation0 [shape = 'u32[]', space=smem, size = 0x4, offset = 0x4, fixed_abs, tag = 'smem constant byte address 0x4 - core index']
  #allocation1 [shape = 'u32[72,128]{1,0:T(1,128)}', space=vmem, size = 0x9000, scoped, tag = 'internal scratch']
  %s0 = inlined_call_operand.vmem [shape: f32[8,200,128], index: 0, kind: input, shape index: {}]
  %s1 = inlined_call_operand.vmem [shape: f32[32,128], index: 1, kind: input, shape index: {}]
  %s2 = inlined_call_operand.vmem [shape: f32[200,32], index: 2, kind: output, shape index: {}]
  %s3 = sld [smem:[#allocation0]]
  $region18: #{rera_forward.2} parent=0
    _
  %s5 = ssub.s32 1, %s3
  %s6 = scalar_select 0, %s5, %s3
  // Predicated region
  $region2: #{rera_forward.2} parent=0 // pred_check
    _
  $region3: #{rera_forward.2} parent=0 // pred_check_branch
    %8 = sbr.rel (0) target = $region5
  $region4: #{rera_forward.2} parent=0 // pred_region
    _
  $region5: #{rera_forward.2} parent=0 // pred_fallthru
    _
  // Predicated region
  $region6: #{rera_forward.2} parent=0 // pred_check
    _
  $region7: #{rera_forward.2} parent=0 // pred_check_branch
    %10 = sbr.rel (0) target = $region9
  $region8: #{rera_forward.2} parent=0 // pred_region
    _
  $region9: #{rera_forward.2} parent=0 // pred_fallthru
    _
  %v11 = vld [vmem:[%s0] sm:$0xff]
  %v12 = vld [vmem:[%s0 + $0x8] sm:$0xff]
  %v13 = vld [vmem:[%s0 + $0x10] sm:$0xff]
  %v14 = vld [vmem:[%s0 + $0x18] sm:$0xff]
  %v15 = vld [vmem:[%s0 + $0x20] sm:$0xff]
  %v16 = vld [vmem:[%s0 + $0x28] sm:$0xff]
  %v17 = vld [vmem:[%s0 + $0x30] sm:$0xff]
  %v18 = vld [vmem:[%s0 + $0x38] sm:$0xff]
  %v19 = vld [vmem:[%s0 + $0x40] sm:$0xff]
  %v20 = vld [vmem:[%s0 + $0x48] sm:$0xff]
  %v21 = vld [vmem:[%s0 + $0x50] sm:$0xff]
  %v22 = vld [vmem:[%s0 + $0x58] sm:$0xff]
  %v23 = vld [vmem:[%s0 + $0x60] sm:$0xff]
  %v24 = vld [vmem:[%s0 + $0x68] sm:$0xff]
  %v25 = vld [vmem:[%s0 + $0x70] sm:$0xff]
  %v26 = vld [vmem:[%s0 + $0x78] sm:$0xff]
  %v27 = vld [vmem:[%s0 + $0x80] sm:$0xff]
  %v28 = vld [vmem:[%s0 + $0x88] sm:$0xff]
  %v29 = vld [vmem:[%s0 + $0x90] sm:$0xff]
  %v30 = vld [vmem:[%s0 + $0x98] sm:$0xff]
  %v31 = vld [vmem:[%s0 + $0xa0] sm:$0xff]
  %v32 = vld [vmem:[%s0 + $0xa8] sm:$0xff]
  %v33 = vld [vmem:[%s0 + $0xb0] sm:$0xff]
  %v34 = vld [vmem:[%s0 + $0xb8] sm:$0xff]
  %v35 = vld [vmem:[%s0 + $0xc0] sm:$0xff]
  %v36 = vld [vmem:[%s1] sm:$0xff]
  %v37 = vld [vmem:[%s1 + $0x8] sm:$0xff]
  %v38 = vld [vmem:[%s1 + $0x10] sm:$0xff]
  %v39 = vld [vmem:[%s1 + $0x18] sm:$0xff]
  %vm40 = vcmask 261120
  %v42 = vsel %vm40, 0.0, 0
  %44 = vmatpush.msra.mxu0 0.0
  %45 = vmatpush.msra.mxu0 0.0
  %46 = vmatpush.msra.mxu0 0.0
  %47 = vmatpush.msra.mxu0 0.0
  %48 = vmatpush.msra.mxu0 0.0
  %49 = vmatpush.msra.mxu0 0.0
  %50 = vmatpush.msra.mxu0 0.0
  %51 = vmatpush.msra.mxu0 0.0
  %52 = vmatpush.msra.mxu0 0.0
  %53 = vmatpush.msra.mxu0 0.0
  %54 = vmatpush.msra.mxu0 0.0
  %55 = vmatpush.msra.mxu0 0.0
  %56 = vmatpush.msra.mxu0 %v39
  %57 = vmatpush.msra.mxu0 %v38
  %58 = vmatpush.msra.mxu0 %v37
  %59 = vmatpush.msra.mxu0 %v36
  %60 = vmatmul.f32.gmra.mxu0 %v42
  %v61 = vpop.f32.mrf.mxu0
  %v62 = vadd.f32 0.0, %v61
  %63 = vmatmul.f32.gmra.mxu0 %v42
  %v64 = vpop.f32.mrf.mxu0
  %v65 = vadd.f32 0.0, %v64
  %66 = vmatmul.f32.gmra.mxu0 %v42
  %v67 = vpop.f32.mrf.mxu0
  %v68 = vadd.f32 0.0, %v67
  %69 = vmatmul.f32.gmra.mxu0 %v42
  %v70 = vpop.f32.mrf.mxu0
  %v71 = vadd.f32 0.0, %v70
  %72 = vmatmul.f32.gmra.mxu0 %v42
  %v73 = vpop.f32.mrf.mxu0
  %v74 = vadd.f32 0.0, %v73
  %75 = vmatmul.f32.gmra.mxu0 %v42
  %v76 = vpop.f32.mrf.mxu0
  %v77 = vadd.f32 0.0, %v76
  %78 = vmatmul.f32.gmra.mxu0 %v42
  %v79 = vpop.f32.mrf.mxu0
  %v80 = vadd.f32 0.0, %v79
  %81 = vmatmul.f32.gmra.mxu0 %v42
  %v82 = vpop.f32.mrf.mxu0
  %v83 = vadd.f32 0.0, %v82
  %84 = vmatmul.f32.gmra.mxu0 %v42
  %v85 = vpop.f32.mrf.mxu0
  %v86 = vadd.f32 0.0, %v85
  %87 = vmatmul.f32.gmra.mxu0 %v42
  %v88 = vpop.f32.mrf.mxu0
  %v89 = vadd.f32 0.0, %v88
  %90 = vmatmul.f32.gmra.mxu0 %v42
  %v91 = vpop.f32.mrf.mxu0
  %v92 = vadd.f32 0.0, %v91
  %93 = vmatmul.f32.gmra.mxu0 %v42
  %v94 = vpop.f32.mrf.mxu0
  %v95 = vadd.f32 0.0, %v94
  %96 = vmatmul.f32.gmra.mxu0 %v42
  %v97 = vpop.f32.mrf.mxu0
  %v98 = vadd.f32 0.0, %v97
  %99 = vmatmul.f32.gmra.mxu0 %v42
  %v100 = vpop.f32.mrf.mxu0
  %v101 = vadd.f32 0.0, %v100
  %102 = vmatmul.f32.gmra.mxu0 %v42
  %v103 = vpop.f32.mrf.mxu0
  %v104 = vadd.f32 0.0, %v103
  %105 = vmatmul.f32.gmra.mxu0 %v42
  %v106 = vpop.f32.mrf.mxu0
  %v107 = vadd.f32 0.0, %v106
  %108 = vmatmul.f32.gmra.mxu0 %v42
  %v109 = vpop.f32.mrf.mxu0
  %v110 = vadd.f32 0.0, %v109
  %111 = vmatmul.f32.gmra.mxu0 %v42
  %v112 = vpop.f32.mrf.mxu0
  %v113 = vadd.f32 0.0, %v112
  %114 = vmatmul.f32.gmra.mxu0 %v42
  %v115 = vpop.f32.mrf.mxu0
  %v116 = vadd.f32 0.0, %v115
  %117 = vmatmul.f32.gmra.mxu0 %v42
  %v118 = vpop.f32.mrf.mxu0
  %v119 = vadd.f32 0.0, %v118
  %120 = vmatmul.f32.gmra.mxu0 %v42
  %v121 = vpop.f32.mrf.mxu0
  %v122 = vadd.f32 0.0, %v121
  %123 = vmatmul.f32.gmra.mxu0 %v42
  %v124 = vpop.f32.mrf.mxu0
  %v125 = vadd.f32 0.0, %v124
  %126 = vmatmul.f32.gmra.mxu0 %v42
  %v127 = vpop.f32.mrf.mxu0
  %v128 = vadd.f32 0.0, %v127
  %129 = vmatmul.f32.gmra.mxu0 %v42
  %v130 = vpop.f32.mrf.mxu0
  %v131 = vadd.f32 0.0, %v130
  %132 = vmatmul.f32.gmra.mxu0 %v42
  %v133 = vpop.f32.mrf.mxu0
  %v134 = vadd.f32 0.0, %v133
  %135 = vdwg.mxu0
  %v136 = vadd.f32 %v11, %v62
  %v137 = vadd.f32 %v12, %v65
  %v138 = vadd.f32 %v13, %v68
  %v139 = vadd.f32 %v14, %v71
  %v140 = vadd.f32 %v15, %v74
  %v141 = vadd.f32 %v16, %v77
  %v142 = vadd.f32 %v17, %v80
  %v143 = vadd.f32 %v18, %v83
  %v144 = vadd.f32 %v19, %v86
  %v145 = vadd.f32 %v20, %v89
  %v146 = vadd.f32 %v21, %v92
  %v147 = vadd.f32 %v22, %v95
  %v148 = vadd.f32 %v23, %v98
  %v149 = vadd.f32 %v24, %v101
  %v150 = vadd.f32 %v25, %v104
  %v151 = vadd.f32 %v26, %v107
  %v152 = vadd.f32 %v27, %v110
  %v153 = vadd.f32 %v28, %v113
  %v154 = vadd.f32 %v29, %v116
  %v155 = vadd.f32 %v30, %v119
  %v156 = vadd.f32 %v31, %v122
  %v157 = vadd.f32 %v32, %v125
  %v158 = vadd.f32 %v33, %v128
  %v159 = vadd.f32 %v34, %v131
  %v160 = vadd.f32 %v35, %v134
  %v161 = vxor.u32 %v136, 2147483648
  %v162 = vxor.u32 %v137, 2147483648
  %v163 = vxor.u32 %v138, 2147483648
  %v164 = vxor.u32 %v139, 2147483648
  %v165 = vxor.u32 %v140, 2147483648
  %v166 = vxor.u32 %v141, 2147483648
  %v167 = vxor.u32 %v142, 2147483648
  %v168 = vxor.u32 %v143, 2147483648
  %v169 = vxor.u32 %v144, 2147483648
  %v170 = vxor.u32 %v145, 2147483648
  %v171 = vxor.u32 %v146, 2147483648
  %v172 = vxor.u32 %v147, 2147483648
  %v173 = vxor.u32 %v148, 2147483648
  %v174 = vxor.u32 %v149, 2147483648
  %v175 = vxor.u32 %v150, 2147483648
  %v176 = vxor.u32 %v151, 2147483648
  %v177 = vxor.u32 %v152, 2147483648
  %v178 = vxor.u32 %v153, 2147483648
  %v179 = vxor.u32 %v154, 2147483648
  %v180 = vxor.u32 %v155, 2147483648
  %v181 = vxor.u32 %v156, 2147483648
  %v182 = vxor.u32 %v157, 2147483648
  %v183 = vxor.u32 %v158, 2147483648
  %v184 = vxor.u32 %v159, 2147483648
  %v185 = vxor.u32 %v160, 2147483648
  %v186 = vmul.f32 %v161, 1.442695
  %v187 = vpow.pop %v186
  %v188 = vmul.f32 %v162, 1.442695
  %v189 = vpow.pop %v188
  %v190 = vmul.f32 %v163, 1.442695
  %v191 = vpow.pop %v190
  %v192 = vmul.f32 %v164, 1.442695
  %v193 = vpow.pop %v192
  %v194 = vmul.f32 %v165, 1.442695
  %v195 = vpow.pop %v194
  %v196 = vmul.f32 %v166, 1.442695
  %v197 = vpow.pop %v196
  %v198 = vmul.f32 %v167, 1.442695
  %v199 = vpow.pop %v198
  %v200 = vmul.f32 %v168, 1.442695
  %v201 = vpow.pop %v200
  %v202 = vmul.f32 %v169, 1.442695
  %v203 = vpow.pop %v202
  %v204 = vmul.f32 %v170, 1.442695
  %v205 = vpow.pop %v204
  %v206 = vmul.f32 %v171, 1.442695
  %v207 = vpow.pop %v206
  %v208 = vmul.f32 %v172, 1.442695
  %v209 = vpow.pop %v208
  %v210 = vmul.f32 %v173, 1.442695
  %v211 = vpow.pop %v210
  %v212 = vmul.f32 %v174, 1.442695
  %v213 = vpow.pop %v212
  %v214 = vmul.f32 %v175, 1.442695
  %v215 = vpow.pop %v214
  %v216 = vmul.f32 %v176, 1.442695
  %v217 = vpow.pop %v216
  %v218 = vmul.f32 %v177, 1.442695
  %v219 = vpow.pop %v218
  %v220 = vmul.f32 %v178, 1.442695
  %v221 = vpow.pop %v220
  %v222 = vmul.f32 %v179, 1.442695
  %v223 = vpow.pop %v222
  %v224 = vmul.f32 %v180, 1.442695
  %v225 = vpow.pop %v224
  %v226 = vmul.f32 %v181, 1.442695
  %v227 = vpow.pop %v226
  %v228 = vmul.f32 %v182, 1.442695
  %v229 = vpow.pop %v228
  %v230 = vmul.f32 %v183, 1.442695
  %v231 = vpow.pop %v230
  %v232 = vmul.f32 %v184, 1.442695
  %v233 = vpow.pop %v232
  %v234 = vmul.f32 %v185, 1.442695
  %v235 = vpow.pop %v234
  %v236 = vadd.f32 %v187, 1.0
  %v237 = vadd.f32 %v189, 1.0
  %v238 = vadd.f32 %v191, 1.0
  %v239 = vadd.f32 %v193, 1.0
  %v240 = vadd.f32 %v195, 1.0
  %v241 = vadd.f32 %v197, 1.0
  %v242 = vadd.f32 %v199, 1.0
  %v243 = vadd.f32 %v201, 1.0
  %v244 = vadd.f32 %v203, 1.0
  %v245 = vadd.f32 %v205, 1.0
  %v246 = vadd.f32 %v207, 1.0
  %v247 = vadd.f32 %v209, 1.0
  %v248 = vadd.f32 %v211, 1.0
  %v249 = vadd.f32 %v213, 1.0
  %v250 = vadd.f32 %v215, 1.0
  %v251 = vadd.f32 %v217, 1.0
  %v252 = vadd.f32 %v219, 1.0
  %v253 = vadd.f32 %v221, 1.0
  %v254 = vadd.f32 %v223, 1.0
  %v255 = vadd.f32 %v225, 1.0
  %v256 = vadd.f32 %v227, 1.0
  %v257 = vadd.f32 %v229, 1.0
  %v258 = vadd.f32 %v231, 1.0
  %v259 = vadd.f32 %v233, 1.0
  %v260 = vadd.f32 %v235, 1.0
  %v261 = vrcp.pop %v236
  %v262 = vmul.f32 %v236, %v261
  %v263 = vsub.f32 1.0, %v262
  %v264 = vmul.f32 %v261, %v263
  %v265 = vadd.f32 %v261, %v264
  %vm266 = vweird.f32 %v236
  %vm267 = vweird.f32 %v261
  %vm268 = vmor %vm266, %vm267
  %v269 = vsel %vm268, %v261, %v265
  %v270 = vand.u32 2147483647, %v236
  %vm271 = vcmp.eq.f32.partialorder %v270, 8.507059e+37
  %v272 = vand.u32 %v236, 2147483648
  %v273 = vor.u32 1.1754944e-38, %v272
  %v274 = vsel %vm271, %v273, %v269
  %v275 = vmul.f32 1.0, %v274
  %v276 = vrcp.pop %v237
  %v277 = vmul.f32 %v237, %v276
  %v278 = vsub.f32 1.0, %v277
  %v279 = vmul.f32 %v276, %v278
  %v280 = vadd.f32 %v276, %v279
  %vm281 = vweird.f32 %v237
  %vm282 = vweird.f32 %v276
  %vm283 = vmor %vm281, %vm282
  %v284 = vsel %vm283, %v276, %v280
  %v285 = vand.u32 2147483647, %v237
  %vm286 = vcmp.eq.f32.partialorder %v285, 8.507059e+37
  %v287 = vand.u32 %v237, 2147483648
  %v288 = vor.u32 1.1754944e-38, %v287
  %v289 = vsel %vm286, %v288, %v284
  %v290 = vmul.f32 1.0, %v289
  %v291 = vrcp.pop %v238
  %v292 = vmul.f32 %v238, %v291
  %v293 = vsub.f32 1.0, %v292
  %v294 = vmul.f32 %v291, %v293
  %v295 = vadd.f32 %v291, %v294
  %vm296 = vweird.f32 %v238
  %vm297 = vweird.f32 %v291
  %vm298 = vmor %vm296, %vm297
  %v299 = vsel %vm298, %v291, %v295
  %v300 = vand.u32 2147483647, %v238
  %vm301 = vcmp.eq.f32.partialorder %v300, 8.507059e+37
  %v302 = vand.u32 %v238, 2147483648
  %v303 = vor.u32 1.1754944e-38, %v302
  %v304 = vsel %vm301, %v303, %v299
  %v305 = vmul.f32 1.0, %v304
  %v306 = vrcp.pop %v239
  %v307 = vmul.f32 %v239, %v306
  %v308 = vsub.f32 1.0, %v307
  %v309 = vmul.f32 %v306, %v308
  %v310 = vadd.f32 %v306, %v309
  %vm311 = vweird.f32 %v239
  %vm312 = vweird.f32 %v306
  %vm313 = vmor %vm311, %vm312
  %v314 = vsel %vm313, %v306, %v310
  %v315 = vand.u32 2147483647, %v239
  %vm316 = vcmp.eq.f32.partialorder %v315, 8.507059e+37
  %v317 = vand.u32 %v239, 2147483648
  %v318 = vor.u32 1.1754944e-38, %v317
  %v319 = vsel %vm316, %v318, %v314
  %v320 = vmul.f32 1.0, %v319
  %v321 = vrcp.pop %v240
  %v322 = vmul.f32 %v240, %v321
  %v323 = vsub.f32 1.0, %v322
  %v324 = vmul.f32 %v321, %v323
  %v325 = vadd.f32 %v321, %v324
  %vm326 = vweird.f32 %v240
  %vm327 = vweird.f32 %v321
  %vm328 = vmor %vm326, %vm327
  %v329 = vsel %vm328, %v321, %v325
  %v330 = vand.u32 2147483647, %v240
  %vm331 = vcmp.eq.f32.partialorder %v330, 8.507059e+37
  %v332 = vand.u32 %v240, 2147483648
  %v333 = vor.u32 1.1754944e-38, %v332
  %v334 = vsel %vm331, %v333, %v329
  %v335 = vmul.f32 1.0, %v334
  %v336 = vrcp.pop %v241
  %v337 = vmul.f32 %v241, %v336
  %v338 = vsub.f32 1.0, %v337
  %v339 = vmul.f32 %v336, %v338
  %v340 = vadd.f32 %v336, %v339
  %vm341 = vweird.f32 %v241
  %vm342 = vweird.f32 %v336
  %vm343 = vmor %vm341, %vm342
  %v344 = vsel %vm343, %v336, %v340
  %v345 = vand.u32 2147483647, %v241
  %vm346 = vcmp.eq.f32.partialorder %v345, 8.507059e+37
  %v347 = vand.u32 %v241, 2147483648
  %v348 = vor.u32 1.1754944e-38, %v347
  %v349 = vsel %vm346, %v348, %v344
  %v350 = vmul.f32 1.0, %v349
  %v351 = vrcp.pop %v242
  %v352 = vmul.f32 %v242, %v351
  %v353 = vsub.f32 1.0, %v352
  %v354 = vmul.f32 %v351, %v353
  %v355 = vadd.f32 %v351, %v354
  %vm356 = vweird.f32 %v242
  %vm357 = vweird.f32 %v351
  %vm358 = vmor %vm356, %vm357
  %v359 = vsel %vm358, %v351, %v355
  %v360 = vand.u32 2147483647, %v242
  %vm361 = vcmp.eq.f32.partialorder %v360, 8.507059e+37
  %v362 = vand.u32 %v242, 2147483648
  %v363 = vor.u32 1.1754944e-38, %v362
  %v364 = vsel %vm361, %v363, %v359
  %v365 = vmul.f32 1.0, %v364
  %v366 = vrcp.pop %v243
  %v367 = vmul.f32 %v243, %v366
  %v368 = vsub.f32 1.0, %v367
  %v369 = vmul.f32 %v366, %v368
  %v370 = vadd.f32 %v366, %v369
  %vm371 = vweird.f32 %v243
  %vm372 = vweird.f32 %v366
  %vm373 = vmor %vm371, %vm372
  %v374 = vsel %vm373, %v366, %v370
  %v375 = vand.u32 2147483647, %v243
  %vm376 = vcmp.eq.f32.partialorder %v375, 8.507059e+37
  %v377 = vand.u32 %v243, 2147483648
  %v378 = vor.u32 1.1754944e-38, %v377
  %v379 = vsel %vm376, %v378, %v374
  %v380 = vmul.f32 1.0, %v379
  %v381 = vrcp.pop %v244
  %v382 = vmul.f32 %v244, %v381
  %v383 = vsub.f32 1.0, %v382
  %v384 = vmul.f32 %v381, %v383
  %v385 = vadd.f32 %v381, %v384
  %vm386 = vweird.f32 %v244
  %vm387 = vweird.f32 %v381
  %vm388 = vmor %vm386, %vm387
  %v389 = vsel %vm388, %v381, %v385
  %v390 = vand.u32 2147483647, %v244
  %vm391 = vcmp.eq.f32.partialorder %v390, 8.507059e+37
  %v392 = vand.u32 %v244, 2147483648
  %v393 = vor.u32 1.1754944e-38, %v392
  %v394 = vsel %vm391, %v393, %v389
  %v395 = vmul.f32 1.0, %v394
  %v396 = vrcp.pop %v245
  %v397 = vmul.f32 %v245, %v396
  %v398 = vsub.f32 1.0, %v397
  %v399 = vmul.f32 %v396, %v398
  %v400 = vadd.f32 %v396, %v399
  %vm401 = vweird.f32 %v245
  %vm402 = vweird.f32 %v396
  %vm403 = vmor %vm401, %vm402
  %v404 = vsel %vm403, %v396, %v400
  %v405 = vand.u32 2147483647, %v245
  %vm406 = vcmp.eq.f32.partialorder %v405, 8.507059e+37
  %v407 = vand.u32 %v245, 2147483648
  %v408 = vor.u32 1.1754944e-38, %v407
  %v409 = vsel %vm406, %v408, %v404
  %v410 = vmul.f32 1.0, %v409
  %v411 = vrcp.pop %v246
  %v412 = vmul.f32 %v246, %v411
  %v413 = vsub.f32 1.0, %v412
  %v414 = vmul.f32 %v411, %v413
  %v415 = vadd.f32 %v411, %v414
  %vm416 = vweird.f32 %v246
  %vm417 = vweird.f32 %v411
  %vm418 = vmor %vm416, %vm417
  %v419 = vsel %vm418, %v411, %v415
  %v420 = vand.u32 2147483647, %v246
  %vm421 = vcmp.eq.f32.partialorder %v420, 8.507059e+37
  %v422 = vand.u32 %v246, 2147483648
  %v423 = vor.u32 1.1754944e-38, %v422
  %v424 = vsel %vm421, %v423, %v419
  %v425 = vmul.f32 1.0, %v424
  %v426 = vrcp.pop %v247
  %v427 = vmul.f32 %v247, %v426
  %v428 = vsub.f32 1.0, %v427
  %v429 = vmul.f32 %v426, %v428
  %v430 = vadd.f32 %v426, %v429
  %vm431 = vweird.f32 %v247
  %vm432 = vweird.f32 %v426
  %vm433 = vmor %vm431, %vm432
  %v434 = vsel %vm433, %v426, %v430
  %v435 = vand.u32 2147483647, %v247
  %vm436 = vcmp.eq.f32.partialorder %v435, 8.507059e+37
  %v437 = vand.u32 %v247, 2147483648
  %v438 = vor.u32 1.1754944e-38, %v437
  %v439 = vsel %vm436, %v438, %v434
  %v440 = vmul.f32 1.0, %v439
  %v441 = vrcp.pop %v248
  %v442 = vmul.f32 %v248, %v441
  %v443 = vsub.f32 1.0, %v442
  %v444 = vmul.f32 %v441, %v443
  %v445 = vadd.f32 %v441, %v444
  %vm446 = vweird.f32 %v248
  %vm447 = vweird.f32 %v441
  %vm448 = vmor %vm446, %vm447
  %v449 = vsel %vm448, %v441, %v445
  %v450 = vand.u32 2147483647, %v248
  %vm451 = vcmp.eq.f32.partialorder %v450, 8.507059e+37
  %v452 = vand.u32 %v248, 2147483648
  %v453 = vor.u32 1.1754944e-38, %v452
  %v454 = vsel %vm451, %v453, %v449
  %v455 = vmul.f32 1.0, %v454
  %v456 = vrcp.pop %v249
  %v457 = vmul.f32 %v249, %v456
  %v458 = vsub.f32 1.0, %v457
  %v459 = vmul.f32 %v456, %v458
  %v460 = vadd.f32 %v456, %v459
  %vm461 = vweird.f32 %v249
  %vm462 = vweird.f32 %v456
  %vm463 = vmor %vm461, %vm462
  %v464 = vsel %vm463, %v456, %v460
  %v465 = vand.u32 2147483647, %v249
  %vm466 = vcmp.eq.f32.partialorder %v465, 8.507059e+37
  %v467 = vand.u32 %v249, 2147483648
  %v468 = vor.u32 1.1754944e-38, %v467
  %v469 = vsel %vm466, %v468, %v464
  %v470 = vmul.f32 1.0, %v469
  %v471 = vrcp.pop %v250
  %v472 = vmul.f32 %v250, %v471
  %v473 = vsub.f32 1.0, %v472
  %v474 = vmul.f32 %v471, %v473
  %v475 = vadd.f32 %v471, %v474
  %vm476 = vweird.f32 %v250
  %vm477 = vweird.f32 %v471
  %vm478 = vmor %vm476, %vm477
  %v479 = vsel %vm478, %v471, %v475
  %v480 = vand.u32 2147483647, %v250
  %vm481 = vcmp.eq.f32.partialorder %v480, 8.507059e+37
  %v482 = vand.u32 %v250, 2147483648
  %v483 = vor.u32 1.1754944e-38, %v482
  %v484 = vsel %vm481, %v483, %v479
  %v485 = vmul.f32 1.0, %v484
  %v486 = vrcp.pop %v251
  %v487 = vmul.f32 %v251, %v486
  %v488 = vsub.f32 1.0, %v487
  %v489 = vmul.f32 %v486, %v488
  %v490 = vadd.f32 %v486, %v489
  %vm491 = vweird.f32 %v251
  %vm492 = vweird.f32 %v486
  %vm493 = vmor %vm491, %vm492
  %v494 = vsel %vm493, %v486, %v490
  %v495 = vand.u32 2147483647, %v251
  %vm496 = vcmp.eq.f32.partialorder %v495, 8.507059e+37
  %v497 = vand.u32 %v251, 2147483648
  %v498 = vor.u32 1.1754944e-38, %v497
  %v499 = vsel %vm496, %v498, %v494
  %v500 = vmul.f32 1.0, %v499
  %v501 = vrcp.pop %v252
  %v502 = vmul.f32 %v252, %v501
  %v503 = vsub.f32 1.0, %v502
  %v504 = vmul.f32 %v501, %v503
  %v505 = vadd.f32 %v501, %v504
  %vm506 = vweird.f32 %v252
  %vm507 = vweird.f32 %v501
  %vm508 = vmor %vm506, %vm507
  %v509 = vsel %vm508, %v501, %v505
  %v510 = vand.u32 2147483647, %v252
  %vm511 = vcmp.eq.f32.partialorder %v510, 8.507059e+37
  %v512 = vand.u32 %v252, 2147483648
  %v513 = vor.u32 1.1754944e-38, %v512
  %v514 = vsel %vm511, %v513, %v509
  %v515 = vmul.f32 1.0, %v514
  %v516 = vrcp.pop %v253
  %v517 = vmul.f32 %v253, %v516
  %v518 = vsub.f32 1.0, %v517
  %v519 = vmul.f32 %v516, %v518
  %v520 = vadd.f32 %v516, %v519
  %vm521 = vweird.f32 %v253
  %vm522 = vweird.f32 %v516
  %vm523 = vmor %vm521, %vm522
  %v524 = vsel %vm523, %v516, %v520
  %v525 = vand.u32 2147483647, %v253
  %vm526 = vcmp.eq.f32.partialorder %v525, 8.507059e+37
  %v527 = vand.u32 %v253, 2147483648
  %v528 = vor.u32 1.1754944e-38, %v527
  %v529 = vsel %vm526, %v528, %v524
  %v530 = vmul.f32 1.0, %v529
  %v531 = vrcp.pop %v254
  %v532 = vmul.f32 %v254, %v531
  %v533 = vsub.f32 1.0, %v532
  %v534 = vmul.f32 %v531, %v533
  %v535 = vadd.f32 %v531, %v534
  %vm536 = vweird.f32 %v254
  %vm537 = vweird.f32 %v531
  %vm538 = vmor %vm536, %vm537
  %v539 = vsel %vm538, %v531, %v535
  %v540 = vand.u32 2147483647, %v254
  %vm541 = vcmp.eq.f32.partialorder %v540, 8.507059e+37
  %v542 = vand.u32 %v254, 2147483648
  %v543 = vor.u32 1.1754944e-38, %v542
  %v544 = vsel %vm541, %v543, %v539
  %v545 = vmul.f32 1.0, %v544
  %v546 = vrcp.pop %v255
  %v547 = vmul.f32 %v255, %v546
  %v548 = vsub.f32 1.0, %v547
  %v549 = vmul.f32 %v546, %v548
  %v550 = vadd.f32 %v546, %v549
  %vm551 = vweird.f32 %v255
  %vm552 = vweird.f32 %v546
  %vm553 = vmor %vm551, %vm552
  %v554 = vsel %vm553, %v546, %v550
  %v555 = vand.u32 2147483647, %v255
  %vm556 = vcmp.eq.f32.partialorder %v555, 8.507059e+37
  %v557 = vand.u32 %v255, 2147483648
  %v558 = vor.u32 1.1754944e-38, %v557
  %v559 = vsel %vm556, %v558, %v554
  %v560 = vmul.f32 1.0, %v559
  %v561 = vrcp.pop %v256
  %v562 = vmul.f32 %v256, %v561
  %v563 = vsub.f32 1.0, %v562
  %v564 = vmul.f32 %v561, %v563
  %v565 = vadd.f32 %v561, %v564
  %vm566 = vweird.f32 %v256
  %vm567 = vweird.f32 %v561
  %vm568 = vmor %vm566, %vm567
  %v569 = vsel %vm568, %v561, %v565
  %v570 = vand.u32 2147483647, %v256
  %vm571 = vcmp.eq.f32.partialorder %v570, 8.507059e+37
  %v572 = vand.u32 %v256, 2147483648
  %v573 = vor.u32 1.1754944e-38, %v572
  %v574 = vsel %vm571, %v573, %v569
  %v575 = vmul.f32 1.0, %v574
  %v576 = vrcp.pop %v257
  %v577 = vmul.f32 %v257, %v576
  %v578 = vsub.f32 1.0, %v577
  %v579 = vmul.f32 %v576, %v578
  %v580 = vadd.f32 %v576, %v579
  %vm581 = vweird.f32 %v257
  %vm582 = vweird.f32 %v576
  %vm583 = vmor %vm581, %vm582
  %v584 = vsel %vm583, %v576, %v580
  %v585 = vand.u32 2147483647, %v257
  %vm586 = vcmp.eq.f32.partialorder %v585, 8.507059e+37
  %v587 = vand.u32 %v257, 2147483648
  %v588 = vor.u32 1.1754944e-38, %v587
  %v589 = vsel %vm586, %v588, %v584
  %v590 = vmul.f32 1.0, %v589
  %v591 = vrcp.pop %v258
  %v592 = vmul.f32 %v258, %v591
  %v593 = vsub.f32 1.0, %v592
  %v594 = vmul.f32 %v591, %v593
  %v595 = vadd.f32 %v591, %v594
  %vm596 = vweird.f32 %v258
  %vm597 = vweird.f32 %v591
  %vm598 = vmor %vm596, %vm597
  %v599 = vsel %vm598, %v591, %v595
  %v600 = vand.u32 2147483647, %v258
  %vm601 = vcmp.eq.f32.partialorder %v600, 8.507059e+37
  %v602 = vand.u32 %v258, 2147483648
  %v603 = vor.u32 1.1754944e-38, %v602
  %v604 = vsel %vm601, %v603, %v599
  %v605 = vmul.f32 1.0, %v604
  %v606 = vrcp.pop %v259
  %v607 = vmul.f32 %v259, %v606
  %v608 = vsub.f32 1.0, %v607
  %v609 = vmul.f32 %v606, %v608
  %v610 = vadd.f32 %v606, %v609
  %vm611 = vweird.f32 %v259
  %vm612 = vweird.f32 %v606
  %vm613 = vmor %vm611, %vm612
  %v614 = vsel %vm613, %v606, %v610
  %v615 = vand.u32 2147483647, %v259
  %vm616 = vcmp.eq.f32.partialorder %v615, 8.507059e+37
  %v617 = vand.u32 %v259, 2147483648
  %v618 = vor.u32 1.1754944e-38, %v617
  %v619 = vsel %vm616, %v618, %v614
  %v620 = vmul.f32 1.0, %v619
  %v621 = vrcp.pop %v260
  %v622 = vmul.f32 %v260, %v621
  %v623 = vsub.f32 1.0, %v622
  %v624 = vmul.f32 %v621, %v623
  %v625 = vadd.f32 %v621, %v624
  %vm626 = vweird.f32 %v260
  %vm627 = vweird.f32 %v621
  %vm628 = vmor %vm626, %vm627
  %v629 = vsel %vm628, %v621, %v625
  %v630 = vand.u32 2147483647, %v260
  %vm631 = vcmp.eq.f32.partialorder %v630, 8.507059e+37
  %v632 = vand.u32 %v260, 2147483648
  %v633 = vor.u32 1.1754944e-38, %v632
  %v634 = vsel %vm631, %v633, %v629
  %v635 = vmul.f32 1.0, %v634
  %v636 = vmul.f32 %v275, 2.0
  %v637 = vmul.f32 %v290, 2.0
  %v638 = vmul.f32 %v305, 2.0
  %v639 = vmul.f32 %v320, 2.0
  %v640 = vmul.f32 %v335, 2.0
  %v641 = vmul.f32 %v350, 2.0
  %v642 = vmul.f32 %v365, 2.0
  %v643 = vmul.f32 %v380, 2.0
  %v644 = vmul.f32 %v395, 2.0
  %v645 = vmul.f32 %v410, 2.0
  %v646 = vmul.f32 %v425, 2.0
  %v647 = vmul.f32 %v440, 2.0
  %v648 = vmul.f32 %v455, 2.0
  %v649 = vmul.f32 %v470, 2.0
  %v650 = vmul.f32 %v485, 2.0
  %v651 = vmul.f32 %v500, 2.0
  %v652 = vmul.f32 %v515, 2.0
  %v653 = vmul.f32 %v530, 2.0
  %v654 = vmul.f32 %v545, 2.0
  %v655 = vmul.f32 %v560, 2.0
  %v656 = vmul.f32 %v575, 2.0
  %v657 = vmul.f32 %v590, 2.0
  %v658 = vmul.f32 %v605, 2.0
  %v659 = vmul.f32 %v620, 2.0
  %v660 = vmul.f32 %v635, 2.0
  %v661 = vsub.f32 %v636, 1.0
  %v662 = vsub.f32 %v637, 1.0
  %v663 = vsub.f32 %v638, 1.0
  %v664 = vsub.f32 %v639, 1.0
  %v665 = vsub.f32 %v640, 1.0
  %v666 = vsub.f32 %v641, 1.0
  %v667 = vsub.f32 %v642, 1.0
  %v668 = vsub.f32 %v643, 1.0
  %v669 = vsub.f32 %v644, 1.0
  %v670 = vsub.f32 %v645, 1.0
  %v671 = vsub.f32 %v646, 1.0
  %v672 = vsub.f32 %v647, 1.0
  %v673 = vsub.f32 %v648, 1.0
  %v674 = vsub.f32 %v649, 1.0
  %v675 = vsub.f32 %v650, 1.0
  %v676 = vsub.f32 %v651, 1.0
  %v677 = vsub.f32 %v652, 1.0
  %v678 = vsub.f32 %v653, 1.0
  %v679 = vsub.f32 %v654, 1.0
  %v680 = vsub.f32 %v655, 1.0
  %v681 = vsub.f32 %v656, 1.0
  %v682 = vsub.f32 %v657, 1.0
  %v683 = vsub.f32 %v658, 1.0
  %v684 = vsub.f32 %v659, 1.0
  %v685 = vsub.f32 %v660, 1.0
  %v686 = vmul.f32 %v275, 0.0
  %v687 = vmul.f32 %v290, 0.0
  %v688 = vmul.f32 %v305, 0.0
  %v689 = vmul.f32 %v320, 0.0
  %v690 = vmul.f32 %v335, 0.0
  %v691 = vmul.f32 %v350, 0.0
  %v692 = vmul.f32 %v365, 0.0
  %v693 = vmul.f32 %v380, 0.0
  %v694 = vmul.f32 %v395, 0.0
  %v695 = vmul.f32 %v410, 0.0
  %v696 = vmul.f32 %v425, 0.0
  %v697 = vmul.f32 %v440, 0.0
  %v698 = vmul.f32 %v455, 0.0
  %v699 = vmul.f32 %v470, 0.0
  %v700 = vmul.f32 %v485, 0.0
  %v701 = vmul.f32 %v500, 0.0
  %v702 = vmul.f32 %v515, 0.0
  %v703 = vmul.f32 %v530, 0.0
  %v704 = vmul.f32 %v545, 0.0
  %v705 = vmul.f32 %v560, 0.0
  %v706 = vmul.f32 %v575, 0.0
  %v707 = vmul.f32 %v590, 0.0
  %v708 = vmul.f32 %v605, 0.0
  %v709 = vmul.f32 %v620, 0.0
  %v710 = vmul.f32 %v635, 0.0
  %736 = vrot.lane.b32.xlu0 %v661, 32
  %v737 = vpop.permute.xlu0 %736
  %738 = vrot.lane.b32.xlu0 %v662, 32
  %v739 = vpop.permute.xlu0 %738
  %740 = vrot.lane.b32.xlu0 %v663, 32
  %v741 = vpop.permute.xlu0 %740
  %742 = vrot.lane.b32.xlu0 %v664, 32
  %v743 = vpop.permute.xlu0 %742
  %744 = vrot.lane.b32.xlu0 %v665, 32
  %v745 = vpop.permute.xlu0 %744
  %746 = vrot.lane.b32.xlu0 %v666, 32
  %v747 = vpop.permute.xlu0 %746
  %748 = vrot.lane.b32.xlu0 %v667, 32
  %v749 = vpop.permute.xlu0 %748
  %750 = vrot.lane.b32.xlu0 %v668, 32
  %v751 = vpop.permute.xlu0 %750
  %752 = vrot.lane.b32.xlu0 %v669, 32
  %v753 = vpop.permute.xlu0 %752
  %754 = vrot.lane.b32.xlu0 %v670, 32
  %v755 = vpop.permute.xlu0 %754
  %756 = vrot.lane.b32.xlu0 %v671, 32
  %v757 = vpop.permute.xlu0 %756
  %758 = vrot.lane.b32.xlu0 %v672, 32
  %v759 = vpop.permute.xlu0 %758
  %760 = vrot.lane.b32.xlu0 %v673, 32
  %v761 = vpop.permute.xlu0 %760
  %762 = vrot.lane.b32.xlu0 %v674, 32
  %v763 = vpop.permute.xlu0 %762
  %764 = vrot.lane.b32.xlu0 %v675, 32
  %v765 = vpop.permute.xlu0 %764
  %766 = vrot.lane.b32.xlu0 %v676, 32
  %v767 = vpop.permute.xlu0 %766
  %768 = vrot.lane.b32.xlu0 %v677, 32
  %v769 = vpop.permute.xlu0 %768
  %770 = vrot.lane.b32.xlu0 %v678, 32
  %v771 = vpop.permute.xlu0 %770
  %772 = vrot.lane.b32.xlu0 %v679, 32
  %v773 = vpop.permute.xlu0 %772
  %774 = vrot.lane.b32.xlu0 %v680, 32
  %v775 = vpop.permute.xlu0 %774
  %776 = vrot.lane.b32.xlu0 %v681, 32
  %v777 = vpop.permute.xlu0 %776
  %778 = vrot.lane.b32.xlu0 %v682, 32
  %v779 = vpop.permute.xlu0 %778
  %780 = vrot.lane.b32.xlu0 %v683, 32
  %v781 = vpop.permute.xlu0 %780
  %782 = vrot.lane.b32.xlu0 %v684, 32
  %v783 = vpop.permute.xlu0 %782
  %784 = vrot.lane.b32.xlu0 %v685, 32
  %v785 = vpop.permute.xlu0 %784
  %v811 = vmul.f32 %v275, %v737
  %v812 = vmul.f32 %v290, %v739
  %v813 = vmul.f32 %v305, %v741
  %v814 = vmul.f32 %v320, %v743
  %v815 = vmul.f32 %v335, %v745
  %v816 = vmul.f32 %v350, %v747
  %v817 = vmul.f32 %v365, %v749
  %v818 = vmul.f32 %v380, %v751
  %v819 = vmul.f32 %v395, %v753
  %v820 = vmul.f32 %v410, %v755
  %v821 = vmul.f32 %v425, %v757
  %v822 = vmul.f32 %v440, %v759
  %v823 = vmul.f32 %v455, %v761
  %v824 = vmul.f32 %v470, %v763
  %v825 = vmul.f32 %v485, %v765
  %v826 = vmul.f32 %v500, %v767
  %v827 = vmul.f32 %v515, %v769
  %v828 = vmul.f32 %v530, %v771
  %v829 = vmul.f32 %v545, %v773
  %v830 = vmul.f32 %v560, %v775
  %v831 = vmul.f32 %v575, %v777
  %v832 = vmul.f32 %v590, %v779
  %v833 = vmul.f32 %v605, %v781
  %v834 = vmul.f32 %v620, %v783
  %v835 = vmul.f32 %v635, %v785
  %861 = vrot.lane.b32.xlu0 %v811, 32
  %v862 = vpop.permute.xlu0 %861
  %863 = vrot.lane.b32.xlu0 %v812, 32
  %v864 = vpop.permute.xlu0 %863
  %865 = vrot.lane.b32.xlu0 %v813, 32
  %v866 = vpop.permute.xlu0 %865
  %867 = vrot.lane.b32.xlu0 %v814, 32
  %v868 = vpop.permute.xlu0 %867
  %869 = vrot.lane.b32.xlu0 %v815, 32
  %v870 = vpop.permute.xlu0 %869
  %871 = vrot.lane.b32.xlu0 %v816, 32
  %v872 = vpop.permute.xlu0 %871
  %873 = vrot.lane.b32.xlu0 %v817, 32
  %v874 = vpop.permute.xlu0 %873
  %875 = vrot.lane.b32.xlu0 %v818, 32
  %v876 = vpop.permute.xlu0 %875
  %877 = vrot.lane.b32.xlu0 %v819, 32
  %v878 = vpop.permute.xlu0 %877
  %879 = vrot.lane.b32.xlu0 %v820, 32
  %v880 = vpop.permute.xlu0 %879
  %881 = vrot.lane.b32.xlu0 %v821, 32
  %v882 = vpop.permute.xlu0 %881
  %883 = vrot.lane.b32.xlu0 %v822, 32
  %v884 = vpop.permute.xlu0 %883
  %885 = vrot.lane.b32.xlu0 %v823, 32
  %v886 = vpop.permute.xlu0 %885
  %887 = vrot.lane.b32.xlu0 %v824, 32
  %v888 = vpop.permute.xlu0 %887
  %889 = vrot.lane.b32.xlu0 %v825, 32
  %v890 = vpop.permute.xlu0 %889
  %891 = vrot.lane.b32.xlu0 %v826, 32
  %v892 = vpop.permute.xlu0 %891
  %893 = vrot.lane.b32.xlu0 %v827, 32
  %v894 = vpop.permute.xlu0 %893
  %895 = vrot.lane.b32.xlu0 %v828, 32
  %v896 = vpop.permute.xlu0 %895
  %897 = vrot.lane.b32.xlu0 %v829, 32
  %v898 = vpop.permute.xlu0 %897
  %899 = vrot.lane.b32.xlu0 %v830, 32
  %v900 = vpop.permute.xlu0 %899
  %901 = vrot.lane.b32.xlu0 %v831, 32
  %v902 = vpop.permute.xlu0 %901
  %903 = vrot.lane.b32.xlu0 %v832, 32
  %v904 = vpop.permute.xlu0 %903
  %905 = vrot.lane.b32.xlu0 %v833, 32
  %v906 = vpop.permute.xlu0 %905
  %907 = vrot.lane.b32.xlu0 %v834, 32
  %v908 = vpop.permute.xlu0 %907
  %909 = vrot.lane.b32.xlu0 %v835, 32
  %v910 = vpop.permute.xlu0 %909
  %v936 = vadd.f32 %v686, %v862
  %v937 = vadd.f32 %v687, %v864
  %v938 = vadd.f32 %v688, %v866
  %v939 = vadd.f32 %v689, %v868
  %v940 = vadd.f32 %v690, %v870
  %v941 = vadd.f32 %v691, %v872
  %v942 = vadd.f32 %v692, %v874
  %v943 = vadd.f32 %v693, %v876
  %v944 = vadd.f32 %v694, %v878
  %v945 = vadd.f32 %v695, %v880
  %v946 = vadd.f32 %v696, %v882
  %v947 = vadd.f32 %v697, %v884
  %v948 = vadd.f32 %v698, %v886
  %v949 = vadd.f32 %v699, %v888
  %v950 = vadd.f32 %v700, %v890
  %v951 = vadd.f32 %v701, %v892
  %v952 = vadd.f32 %v702, %v894
  %v953 = vadd.f32 %v703, %v896
  %v954 = vadd.f32 %v704, %v898
  %v955 = vadd.f32 %v705, %v900
  %v956 = vadd.f32 %v706, %v902
  %v957 = vadd.f32 %v707, %v904
  %v958 = vadd.f32 %v708, %v906
  %v959 = vadd.f32 %v709, %v908
  %v960 = vadd.f32 %v710, %v910
  %v961 = vtanh.pop %v936
  %v962 = vtanh.pop %v937
  %v963 = vtanh.pop %v938
  %v964 = vtanh.pop %v939
  %v965 = vtanh.pop %v940
  %v966 = vtanh.pop %v941
  %v967 = vtanh.pop %v942
  %v968 = vtanh.pop %v943
  %v969 = vtanh.pop %v944
  %v970 = vtanh.pop %v945
  %v971 = vtanh.pop %v946
  %v972 = vtanh.pop %v947
  %v973 = vtanh.pop %v948
  %v974 = vtanh.pop %v949
  %v975 = vtanh.pop %v950
  %v976 = vtanh.pop %v951
  %v977 = vtanh.pop %v952
  %v978 = vtanh.pop %v953
  %v979 = vtanh.pop %v954
  %v980 = vtanh.pop %v955
  %v981 = vtanh.pop %v956
  %v982 = vtanh.pop %v957
  %v983 = vtanh.pop %v958
  %v984 = vtanh.pop %v959
  %v985 = vtanh.pop %v960
  %1011 = vrot.lane.b32.xlu0 %v961, 32
  %v1012 = vpop.permute.xlu0 %1011
  %1013 = vrot.lane.b32.xlu0 %v962, 32
  %v1014 = vpop.permute.xlu0 %1013
  %1015 = vrot.lane.b32.xlu0 %v963, 32
  %v1016 = vpop.permute.xlu0 %1015
  %1017 = vrot.lane.b32.xlu0 %v964, 32
  %v1018 = vpop.permute.xlu0 %1017
  %1019 = vrot.lane.b32.xlu0 %v965, 32
  %v1020 = vpop.permute.xlu0 %1019
  %1021 = vrot.lane.b32.xlu0 %v966, 32
  %v1022 = vpop.permute.xlu0 %1021
  %1023 = vrot.lane.b32.xlu0 %v967, 32
  %v1024 = vpop.permute.xlu0 %1023
  %1025 = vrot.lane.b32.xlu0 %v968, 32
  %v1026 = vpop.permute.xlu0 %1025
  %1027 = vrot.lane.b32.xlu0 %v969, 32
  %v1028 = vpop.permute.xlu0 %1027
  %1029 = vrot.lane.b32.xlu0 %v970, 32
  %v1030 = vpop.permute.xlu0 %1029
  %1031 = vrot.lane.b32.xlu0 %v971, 32
  %v1032 = vpop.permute.xlu0 %1031
  %1033 = vrot.lane.b32.xlu0 %v972, 32
  %v1034 = vpop.permute.xlu0 %1033
  %1035 = vrot.lane.b32.xlu0 %v973, 32
  %v1036 = vpop.permute.xlu0 %1035
  %1037 = vrot.lane.b32.xlu0 %v974, 32
  %v1038 = vpop.permute.xlu0 %1037
  %1039 = vrot.lane.b32.xlu0 %v975, 32
  %v1040 = vpop.permute.xlu0 %1039
  %1041 = vrot.lane.b32.xlu0 %v976, 32
  %v1042 = vpop.permute.xlu0 %1041
  %1043 = vrot.lane.b32.xlu0 %v977, 32
  %v1044 = vpop.permute.xlu0 %1043
  %1045 = vrot.lane.b32.xlu0 %v978, 32
  %v1046 = vpop.permute.xlu0 %1045
  %1047 = vrot.lane.b32.xlu0 %v979, 32
  %v1048 = vpop.permute.xlu0 %1047
  %1049 = vrot.lane.b32.xlu0 %v980, 32
  %v1050 = vpop.permute.xlu0 %1049
  %1051 = vrot.lane.b32.xlu0 %v981, 32
  %v1052 = vpop.permute.xlu0 %1051
  %1053 = vrot.lane.b32.xlu0 %v982, 32
  %v1054 = vpop.permute.xlu0 %1053
  %1055 = vrot.lane.b32.xlu0 %v983, 32
  %v1056 = vpop.permute.xlu0 %1055
  %1057 = vrot.lane.b32.xlu0 %v984, 32
  %v1058 = vpop.permute.xlu0 %1057
  %1059 = vrot.lane.b32.xlu0 %v985, 32
  %v1060 = vpop.permute.xlu0 %1059
  %v1086 = vmul.f32 %v275, %v1012
  %v1087 = vmul.f32 %v290, %v1014
  %v1088 = vmul.f32 %v305, %v1016
  %v1089 = vmul.f32 %v320, %v1018
  %v1090 = vmul.f32 %v335, %v1020
  %v1091 = vmul.f32 %v350, %v1022
  %v1092 = vmul.f32 %v365, %v1024
  %v1093 = vmul.f32 %v380, %v1026
  %v1094 = vmul.f32 %v395, %v1028
  %v1095 = vmul.f32 %v410, %v1030
  %v1096 = vmul.f32 %v425, %v1032
  %v1097 = vmul.f32 %v440, %v1034
  %v1098 = vmul.f32 %v455, %v1036
  %v1099 = vmul.f32 %v470, %v1038
  %v1100 = vmul.f32 %v485, %v1040
  %v1101 = vmul.f32 %v500, %v1042
  %v1102 = vmul.f32 %v515, %v1044
  %v1103 = vmul.f32 %v530, %v1046
  %v1104 = vmul.f32 %v545, %v1048
  %v1105 = vmul.f32 %v560, %v1050
  %v1106 = vmul.f32 %v575, %v1052
  %v1107 = vmul.f32 %v590, %v1054
  %v1108 = vmul.f32 %v605, %v1056
  %v1109 = vmul.f32 %v620, %v1058
  %v1110 = vmul.f32 %v635, %v1060
  %s1111 = scalar_lea.vmem %s0, 200
  %v1112 = vld [vmem:[%s1111] sm:$0xff]
  %v1113 = vld [vmem:[%s1111 + $0x8] sm:$0xff]
  %v1114 = vld [vmem:[%s1111 + $0x10] sm:$0xff]
  %v1115 = vld [vmem:[%s1111 + $0x18] sm:$0xff]
  %v1116 = vld [vmem:[%s1111 + $0x20] sm:$0xff]
  %v1117 = vld [vmem:[%s1111 + $0x28] sm:$0xff]
  %v1118 = vld [vmem:[%s1111 + $0x30] sm:$0xff]
  %v1119 = vld [vmem:[%s1111 + $0x38] sm:$0xff]
  %v1120 = vld [vmem:[%s1111 + $0x40] sm:$0xff]
  %v1121 = vld [vmem:[%s1111 + $0x48] sm:$0xff]
  %v1122 = vld [vmem:[%s1111 + $0x50] sm:$0xff]
  %v1123 = vld [vmem:[%s1111 + $0x58] sm:$0xff]
  %v1124 = vld [vmem:[%s1111 + $0x60] sm:$0xff]
  %v1125 = vld [vmem:[%s1111 + $0x68] sm:$0xff]
  %v1126 = vld [vmem:[%s1111 + $0x70] sm:$0xff]
  %v1127 = vld [vmem:[%s1111 + $0x78] sm:$0xff]
  %v1128 = vld [vmem:[%s1111 + $0x80] sm:$0xff]
  %v1129 = vld [vmem:[%s1111 + $0x88] sm:$0xff]
  %v1130 = vld [vmem:[%s1111 + $0x90] sm:$0xff]
  %v1131 = vld [vmem:[%s1111 + $0x98] sm:$0xff]
  %v1132 = vld [vmem:[%s1111 + $0xa0] sm:$0xff]
  %v1133 = vld [vmem:[%s1111 + $0xa8] sm:$0xff]
  %v1134 = vld [vmem:[%s1111 + $0xb0] sm:$0xff]
  %v1135 = vld [vmem:[%s1111 + $0xb8] sm:$0xff]
  %v1136 = vld [vmem:[%s1111 + $0xc0] sm:$0xff]
  %1162 = vrot.lane.b32.xlu0 %v1086, 64
  %v1163 = vpop.permute.xlu0 %1162
  %1164 = vrot.lane.b32.xlu0 %v1087, 64
  %v1165 = vpop.permute.xlu0 %1164
  %1166 = vrot.lane.b32.xlu0 %v1088, 64
  %v1167 = vpop.permute.xlu0 %1166
  %1168 = vrot.lane.b32.xlu0 %v1089, 64
  %v1169 = vpop.permute.xlu0 %1168
  %1170 = vrot.lane.b32.xlu0 %v1090, 64
  %v1171 = vpop.permute.xlu0 %1170
  %1172 = vrot.lane.b32.xlu0 %v1091, 64
  %v1173 = vpop.permute.xlu0 %1172
  %1174 = vrot.lane.b32.xlu0 %v1092, 64
  %v1175 = vpop.permute.xlu0 %1174
  %1176 = vrot.lane.b32.xlu0 %v1093, 64
  %v1177 = vpop.permute.xlu0 %1176
  %1178 = vrot.lane.b32.xlu0 %v1094, 64
  %v1179 = vpop.permute.xlu0 %1178
  %1180 = vrot.lane.b32.xlu0 %v1095, 64
  %v1181 = vpop.permute.xlu0 %1180
  %1182 = vrot.lane.b32.xlu0 %v1096, 64
  %v1183 = vpop.permute.xlu0 %1182
  %1184 = vrot.lane.b32.xlu0 %v1097, 64
  %v1185 = vpop.permute.xlu0 %1184
  %1186 = vrot.lane.b32.xlu0 %v1098, 64
  %v1187 = vpop.permute.xlu0 %1186
  %1188 = vrot.lane.b32.xlu0 %v1099, 64
  %v1189 = vpop.permute.xlu0 %1188
  %1190 = vrot.lane.b32.xlu0 %v1100, 64
  %v1191 = vpop.permute.xlu0 %1190
  %1192 = vrot.lane.b32.xlu0 %v1101, 64
  %v1193 = vpop.permute.xlu0 %1192
  %1194 = vrot.lane.b32.xlu0 %v1102, 64
  %v1195 = vpop.permute.xlu0 %1194
  %1196 = vrot.lane.b32.xlu0 %v1103, 64
  %v1197 = vpop.permute.xlu0 %1196
  %1198 = vrot.lane.b32.xlu0 %v1104, 64
  %v1199 = vpop.permute.xlu0 %1198
  %1200 = vrot.lane.b32.xlu0 %v1105, 64
  %v1201 = vpop.permute.xlu0 %1200
  %1202 = vrot.lane.b32.xlu0 %v1106, 64
  %v1203 = vpop.permute.xlu0 %1202
  %1204 = vrot.lane.b32.xlu0 %v1107, 64
  %v1205 = vpop.permute.xlu0 %1204
  %1206 = vrot.lane.b32.xlu0 %v1108, 64
  %v1207 = vpop.permute.xlu0 %1206
  %1208 = vrot.lane.b32.xlu0 %v1109, 64
  %v1209 = vpop.permute.xlu0 %1208
  %1210 = vrot.lane.b32.xlu0 %v1110, 64
  %v1211 = vpop.permute.xlu0 %1210
  %v1212 = vsel %vm40, %v1163, 0
  %v1214 = vsel %vm40, %v1165, 0
  %v1216 = vsel %vm40, %v1167, 0
  %v1218 = vsel %vm40, %v1169, 0
  %v1220 = vsel %vm40, %v1171, 0
  %v1222 = vsel %vm40, %v1173, 0
  %v1224 = vsel %vm40, %v1175, 0
  %v1226 = vsel %vm40, %v1177, 0
  %v1228 = vsel %vm40, %v1179, 0
  %v1230 = vsel %vm40, %v1181, 0
  %v1232 = vsel %vm40, %v1183, 0
  %v1234 = vsel %vm40, %v1185, 0
  %v1236 = vsel %vm40, %v1187, 0
  %v1238 = vsel %vm40, %v1189, 0
  %v1240 = vsel %vm40, %v1191, 0
  %v1242 = vsel %vm40, %v1193, 0
  %v1244 = vsel %vm40, %v1195, 0
  %v1246 = vsel %vm40, %v1197, 0
  %v1248 = vsel %vm40, %v1199, 0
  %v1250 = vsel %vm40, %v1201, 0
  %v1252 = vsel %vm40, %v1203, 0
  %v1254 = vsel %vm40, %v1205, 0
  %v1256 = vsel %vm40, %v1207, 0
  %v1258 = vsel %vm40, %v1209, 0
  %v1260 = vsel %vm40, %v1211, 0
  %1262 = vmatpush.msra.mxu0 0.0
  %1263 = vmatpush.msra.mxu0 0.0
  %1264 = vmatpush.msra.mxu0 0.0
  %1265 = vmatpush.msra.mxu0 0.0
  %1266 = vmatpush.msra.mxu0 0.0
  %1267 = vmatpush.msra.mxu0 0.0
  %1268 = vmatpush.msra.mxu0 0.0
  %1269 = vmatpush.msra.mxu0 0.0
  %1270 = vmatpush.msra.mxu0 0.0
  %1271 = vmatpush.msra.mxu0 0.0
  %1272 = vmatpush.msra.mxu0 0.0
  %1273 = vmatpush.msra.mxu0 0.0
  %1274 = vmatpush.msra.mxu0 %v39
  %1275 = vmatpush.msra.mxu0 %v38
  %1276 = vmatpush.msra.mxu0 %v37
  %1277 = vmatpush.msra.mxu0 %v36
  %1278 = vmatmul.f32.gmra.mxu0 %v1212
  %v1279 = vpop.f32.mrf.mxu0
  %v1280 = vadd.f32 0.0, %v1279
  %1281 = vmatmul.f32.gmra.mxu0 %v1214
  %v1282 = vpop.f32.mrf.mxu0
  %v1283 = vadd.f32 0.0, %v1282
  %1284 = vmatmul.f32.gmra.mxu0 %v1216
  %v1285 = vpop.f32.mrf.mxu0
  %v1286 = vadd.f32 0.0, %v1285
  %1287 = vmatmul.f32.gmra.mxu0 %v1218
  %v1288 = vpop.f32.mrf.mxu0
  %v1289 = vadd.f32 0.0, %v1288
  %1290 = vmatmul.f32.gmra.mxu0 %v1220
  %v1291 = vpop.f32.mrf.mxu0
  %v1292 = vadd.f32 0.0, %v1291
  %1293 = vmatmul.f32.gmra.mxu0 %v1222
  %v1294 = vpop.f32.mrf.mxu0
  %v1295 = vadd.f32 0.0, %v1294
  %1296 = vmatmul.f32.gmra.mxu0 %v1224
  %v1297 = vpop.f32.mrf.mxu0
  %v1298 = vadd.f32 0.0, %v1297
  %1299 = vmatmul.f32.gmra.mxu0 %v1226
  %v1300 = vpop.f32.mrf.mxu0
  %v1301 = vadd.f32 0.0, %v1300
  %1302 = vmatmul.f32.gmra.mxu0 %v1228
  %v1303 = vpop.f32.mrf.mxu0
  %v1304 = vadd.f32 0.0, %v1303
  %1305 = vmatmul.f32.gmra.mxu0 %v1230
  %v1306 = vpop.f32.mrf.mxu0
  %v1307 = vadd.f32 0.0, %v1306
  %1308 = vmatmul.f32.gmra.mxu0 %v1232
  %v1309 = vpop.f32.mrf.mxu0
  %v1310 = vadd.f32 0.0, %v1309
  %1311 = vmatmul.f32.gmra.mxu0 %v1234
  %v1312 = vpop.f32.mrf.mxu0
  %v1313 = vadd.f32 0.0, %v1312
  %1314 = vmatmul.f32.gmra.mxu0 %v1236
  %v1315 = vpop.f32.mrf.mxu0
  %v1316 = vadd.f32 0.0, %v1315
  %1317 = vmatmul.f32.gmra.mxu0 %v1238
  %v1318 = vpop.f32.mrf.mxu0
  %v1319 = vadd.f32 0.0, %v1318
  %1320 = vmatmul.f32.gmra.mxu0 %v1240
  %v1321 = vpop.f32.mrf.mxu0
  %v1322 = vadd.f32 0.0, %v1321
  %1323 = vmatmul.f32.gmra.mxu0 %v1242
  %v1324 = vpop.f32.mrf.mxu0
  %v1325 = vadd.f32 0.0, %v1324
  %1326 = vmatmul.f32.gmra.mxu0 %v1244
  %v1327 = vpop.f32.mrf.mxu0
  %v1328 = vadd.f32 0.0, %v1327
  %1329 = vmatmul.f32.gmra.mxu0 %v1246
  %v1330 = vpop.f32.mrf.mxu0
  %v1331 = vadd.f32 0.0, %v1330
  %1332 = vmatmul.f32.gmra.mxu0 %v1248
  %v1333 = vpop.f32.mrf.mxu0
  %v1334 = vadd.f32 0.0, %v1333
  %1335 = vmatmul.f32.gmra.mxu0 %v1250
  %v1336 = vpop.f32.mrf.mxu0
  %v1337 = vadd.f32 0.0, %v1336
  %1338 = vmatmul.f32.gmra.mxu0 %v1252
  %v1339 = vpop.f32.mrf.mxu0
  %v1340 = vadd.f32 0.0, %v1339
  %1341 = vmatmul.f32.gmra.mxu0 %v1254
  %v1342 = vpop.f32.mrf.mxu0
  %v1343 = vadd.f32 0.0, %v1342
  %1344 = vmatmul.f32.gmra.mxu0 %v1256
  %v1345 = vpop.f32.mrf.mxu0
  %v1346 = vadd.f32 0.0, %v1345
  %1347 = vmatmul.f32.gmra.mxu0 %v1258
  %v1348 = vpop.f32.mrf.mxu0
  %v1349 = vadd.f32 0.0, %v1348
  %1350 = vmatmul.f32.gmra.mxu0 %v1260
  %v1351 = vpop.f32.mrf.mxu0
  %v1352 = vadd.f32 0.0, %v1351
  %1353 = vdwg.mxu0
  %v1354 = vadd.f32 %v1112, %v1280
  %v1355 = vadd.f32 %v1113, %v1283
  %v1356 = vadd.f32 %v1114, %v1286
  %v1357 = vadd.f32 %v1115, %v1289
  %v1358 = vadd.f32 %v1116, %v1292
  %v1359 = vadd.f32 %v1117, %v1295
  %v1360 = vadd.f32 %v1118, %v1298
  %v1361 = vadd.f32 %v1119, %v1301
  %v1362 = vadd.f32 %v1120, %v1304
  %v1363 = vadd.f32 %v1121, %v1307
  %v1364 = vadd.f32 %v1122, %v1310
  %v1365 = vadd.f32 %v1123, %v1313
  %v1366 = vadd.f32 %v1124, %v1316
  %v1367 = vadd.f32 %v1125, %v1319
  %v1368 = vadd.f32 %v1126, %v1322
  %v1369 = vadd.f32 %v1127, %v1325
  %v1370 = vadd.f32 %v1128, %v1328
  %v1371 = vadd.f32 %v1129, %v1331
  %v1372 = vadd.f32 %v1130, %v1334
  %v1373 = vadd.f32 %v1131, %v1337
  %v1374 = vadd.f32 %v1132, %v1340
  %v1375 = vadd.f32 %v1133, %v1343
  %v1376 = vadd.f32 %v1134, %v1346
  %v1377 = vadd.f32 %v1135, %v1349
  %v1378 = vadd.f32 %v1136, %v1352
  %v1379 = vxor.u32 %v1354, 2147483648
  %v1380 = vxor.u32 %v1355, 2147483648
  %v1381 = vxor.u32 %v1356, 2147483648
  %v1382 = vxor.u32 %v1357, 2147483648
  %v1383 = vxor.u32 %v1358, 2147483648
  %v1384 = vxor.u32 %v1359, 2147483648
  %v1385 = vxor.u32 %v1360, 2147483648
  %v1386 = vxor.u32 %v1361, 2147483648
  %v1387 = vxor.u32 %v1362, 2147483648
  %v1388 = vxor.u32 %v1363, 2147483648
  %v1389 = vxor.u32 %v1364, 2147483648
  %v1390 = vxor.u32 %v1365, 2147483648
  %v1391 = vxor.u32 %v1366, 2147483648
  %v1392 = vxor.u32 %v1367, 2147483648
  %v1393 = vxor.u32 %v1368, 2147483648
  %v1394 = vxor.u32 %v1369, 2147483648
  %v1395 = vxor.u32 %v1370, 2147483648
  %v1396 = vxor.u32 %v1371, 2147483648
  %v1397 = vxor.u32 %v1372, 2147483648
  %v1398 = vxor.u32 %v1373, 2147483648
  %v1399 = vxor.u32 %v1374, 2147483648
  %v1400 = vxor.u32 %v1375, 2147483648
  %v1401 = vxor.u32 %v1376, 2147483648
  %v1402 = vxor.u32 %v1377, 2147483648
  %v1403 = vxor.u32 %v1378, 2147483648
  %v1404 = vmul.f32 %v1379, 1.442695
  %v1405 = vpow.pop %v1404
  %v1406 = vmul.f32 %v1380, 1.442695
  %v1407 = vpow.pop %v1406
  %v1408 = vmul.f32 %v1381, 1.442695
  %v1409 = vpow.pop %v1408
  %v1410 = vmul.f32 %v1382, 1.442695
  %v1411 = vpow.pop %v1410
  %v1412 = vmul.f32 %v1383, 1.442695
  %v1413 = vpow.pop %v1412
  %v1414 = vmul.f32 %v1384, 1.442695
  %v1415 = vpow.pop %v1414
  %v1416 = vmul.f32 %v1385, 1.442695
  %v1417 = vpow.pop %v1416
  %v1418 = vmul.f32 %v1386, 1.442695
  %v1419 = vpow.pop %v1418
  %v1420 = vmul.f32 %v1387, 1.442695
  %v1421 = vpow.pop %v1420
  %v1422 = vmul.f32 %v1388, 1.442695
  %v1423 = vpow.pop %v1422
  %v1424 = vmul.f32 %v1389, 1.442695
  %v1425 = vpow.pop %v1424
  %v1426 = vmul.f32 %v1390, 1.442695
  %v1427 = vpow.pop %v1426
  %v1428 = vmul.f32 %v1391, 1.442695
  %v1429 = vpow.pop %v1428
  %v1430 = vmul.f32 %v1392, 1.442695
  %v1431 = vpow.pop %v1430
  %v1432 = vmul.f32 %v1393, 1.442695
  %v1433 = vpow.pop %v1432
  %v1434 = vmul.f32 %v1394, 1.442695
  %v1435 = vpow.pop %v1434
  %v1436 = vmul.f32 %v1395, 1.442695
  %v1437 = vpow.pop %v1436
  %v1438 = vmul.f32 %v1396, 1.442695
  %v1439 = vpow.pop %v1438
  %v1440 = vmul.f32 %v1397, 1.442695
  %v1441 = vpow.pop %v1440
  %v1442 = vmul.f32 %v1398, 1.442695
  %v1443 = vpow.pop %v1442
  %v1444 = vmul.f32 %v1399, 1.442695
  %v1445 = vpow.pop %v1444
  %v1446 = vmul.f32 %v1400, 1.442695
  %v1447 = vpow.pop %v1446
  %v1448 = vmul.f32 %v1401, 1.442695
  %v1449 = vpow.pop %v1448
  %v1450 = vmul.f32 %v1402, 1.442695
  %v1451 = vpow.pop %v1450
  %v1452 = vmul.f32 %v1403, 1.442695
  %v1453 = vpow.pop %v1452
  %v1454 = vadd.f32 %v1405, 1.0
  %v1455 = vadd.f32 %v1407, 1.0
  %v1456 = vadd.f32 %v1409, 1.0
  %v1457 = vadd.f32 %v1411, 1.0
  %v1458 = vadd.f32 %v1413, 1.0
  %v1459 = vadd.f32 %v1415, 1.0
  %v1460 = vadd.f32 %v1417, 1.0
  %v1461 = vadd.f32 %v1419, 1.0
  %v1462 = vadd.f32 %v1421, 1.0
  %v1463 = vadd.f32 %v1423, 1.0
  %v1464 = vadd.f32 %v1425, 1.0
  %v1465 = vadd.f32 %v1427, 1.0
  %v1466 = vadd.f32 %v1429, 1.0
  %v1467 = vadd.f32 %v1431, 1.0
  %v1468 = vadd.f32 %v1433, 1.0
  %v1469 = vadd.f32 %v1435, 1.0
  %v1470 = vadd.f32 %v1437, 1.0
  %v1471 = vadd.f32 %v1439, 1.0
  %v1472 = vadd.f32 %v1441, 1.0
  %v1473 = vadd.f32 %v1443, 1.0
  %v1474 = vadd.f32 %v1445, 1.0
  %v1475 = vadd.f32 %v1447, 1.0
  %v1476 = vadd.f32 %v1449, 1.0
  %v1477 = vadd.f32 %v1451, 1.0
  %v1478 = vadd.f32 %v1453, 1.0
  %v1479 = vrcp.pop %v1454
  %v1480 = vmul.f32 %v1454, %v1479
  %v1481 = vsub.f32 1.0, %v1480
  %v1482 = vmul.f32 %v1479, %v1481
  %v1483 = vadd.f32 %v1479, %v1482
  %vm1484 = vweird.f32 %v1454
  %vm1485 = vweird.f32 %v1479
  %vm1486 = vmor %vm1484, %vm1485
  %v1487 = vsel %vm1486, %v1479, %v1483
  %v1488 = vand.u32 2147483647, %v1454
  %vm1489 = vcmp.eq.f32.partialorder %v1488, 8.507059e+37
  %v1490 = vand.u32 %v1454, 2147483648
  %v1491 = vor.u32 1.1754944e-38, %v1490
  %v1492 = vsel %vm1489, %v1491, %v1487
  %v1493 = vmul.f32 1.0, %v1492
  %v1494 = vrcp.pop %v1455
  %v1495 = vmul.f32 %v1455, %v1494
  %v1496 = vsub.f32 1.0, %v1495
  %v1497 = vmul.f32 %v1494, %v1496
  %v1498 = vadd.f32 %v1494, %v1497
  %vm1499 = vweird.f32 %v1455
  %vm1500 = vweird.f32 %v1494
  %vm1501 = vmor %vm1499, %vm1500
  %v1502 = vsel %vm1501, %v1494, %v1498
  %v1503 = vand.u32 2147483647, %v1455
  %vm1504 = vcmp.eq.f32.partialorder %v1503, 8.507059e+37
  %v1505 = vand.u32 %v1455, 2147483648
  %v1506 = vor.u32 1.1754944e-38, %v1505
  %v1507 = vsel %vm1504, %v1506, %v1502
  %v1508 = vmul.f32 1.0, %v1507
  %v1509 = vrcp.pop %v1456
  %v1510 = vmul.f32 %v1456, %v1509
  %v1511 = vsub.f32 1.0, %v1510
  %v1512 = vmul.f32 %v1509, %v1511
  %v1513 = vadd.f32 %v1509, %v1512
  %vm1514 = vweird.f32 %v1456
  %vm1515 = vweird.f32 %v1509
  %vm1516 = vmor %vm1514, %vm1515
  %v1517 = vsel %vm1516, %v1509, %v1513
  %v1518 = vand.u32 2147483647, %v1456
  %vm1519 = vcmp.eq.f32.partialorder %v1518, 8.507059e+37
  %v1520 = vand.u32 %v1456, 2147483648
  %v1521 = vor.u32 1.1754944e-38, %v1520
  %v1522 = vsel %vm1519, %v1521, %v1517
  %v1523 = vmul.f32 1.0, %v1522
  %v1524 = vrcp.pop %v1457
  %v1525 = vmul.f32 %v1457, %v1524
  %v1526 = vsub.f32 1.0, %v1525
  %v1527 = vmul.f32 %v1524, %v1526
  %v1528 = vadd.f32 %v1524, %v1527
  %vm1529 = vweird.f32 %v1457
  %vm1530 = vweird.f32 %v1524
  %vm1531 = vmor %vm1529, %vm1530
  %v1532 = vsel %vm1531, %v1524, %v1528
  %v1533 = vand.u32 2147483647, %v1457
  %vm1534 = vcmp.eq.f32.partialorder %v1533, 8.507059e+37
  %v1535 = vand.u32 %v1457, 2147483648
  %v1536 = vor.u32 1.1754944e-38, %v1535
  %v1537 = vsel %vm1534, %v1536, %v1532
  %v1538 = vmul.f32 1.0, %v1537
  %v1539 = vrcp.pop %v1458
  %v1540 = vmul.f32 %v1458, %v1539
  %v1541 = vsub.f32 1.0, %v1540
  %v1542 = vmul.f32 %v1539, %v1541
  %v1543 = vadd.f32 %v1539, %v1542
  %vm1544 = vweird.f32 %v1458
  %vm1545 = vweird.f32 %v1539
  %vm1546 = vmor %vm1544, %vm1545
  %v1547 = vsel %vm1546, %v1539, %v1543
  %v1548 = vand.u32 2147483647, %v1458
  %vm1549 = vcmp.eq.f32.partialorder %v1548, 8.507059e+37
  %v1550 = vand.u32 %v1458, 2147483648
  %v1551 = vor.u32 1.1754944e-38, %v1550
  %v1552 = vsel %vm1549, %v1551, %v1547
  %v1553 = vmul.f32 1.0, %v1552
  %v1554 = vrcp.pop %v1459
  %v1555 = vmul.f32 %v1459, %v1554
  %v1556 = vsub.f32 1.0, %v1555
  %v1557 = vmul.f32 %v1554, %v1556
  %v1558 = vadd.f32 %v1554, %v1557
  %vm1559 = vweird.f32 %v1459
  %vm1560 = vweird.f32 %v1554
  %vm1561 = vmor %vm1559, %vm1560
  %v1562 = vsel %vm1561, %v1554, %v1558
  %v1563 = vand.u32 2147483647, %v1459
  %vm1564 = vcmp.eq.f32.partialorder %v1563, 8.507059e+37
  %v1565 = vand.u32 %v1459, 2147483648
  %v1566 = vor.u32 1.1754944e-38, %v1565
  %v1567 = vsel %vm1564, %v1566, %v1562
  %v1568 = vmul.f32 1.0, %v1567
  %v1569 = vrcp.pop %v1460
  %v1570 = vmul.f32 %v1460, %v1569
  %v1571 = vsub.f32 1.0, %v1570
  %v1572 = vmul.f32 %v1569, %v1571
  %v1573 = vadd.f32 %v1569, %v1572
  %vm1574 = vweird.f32 %v1460
  %vm1575 = vweird.f32 %v1569
  %vm1576 = vmor %vm1574, %vm1575
  %v1577 = vsel %vm1576, %v1569, %v1573
  %v1578 = vand.u32 2147483647, %v1460
  %vm1579 = vcmp.eq.f32.partialorder %v1578, 8.507059e+37
  %v1580 = vand.u32 %v1460, 2147483648
  %v1581 = vor.u32 1.1754944e-38, %v1580
  %v1582 = vsel %vm1579, %v1581, %v1577
  %v1583 = vmul.f32 1.0, %v1582
  %v1584 = vrcp.pop %v1461
  %v1585 = vmul.f32 %v1461, %v1584
  %v1586 = vsub.f32 1.0, %v1585
  %v1587 = vmul.f32 %v1584, %v1586
  %v1588 = vadd.f32 %v1584, %v1587
  %vm1589 = vweird.f32 %v1461
  %vm1590 = vweird.f32 %v1584
  %vm1591 = vmor %vm1589, %vm1590
  %v1592 = vsel %vm1591, %v1584, %v1588
  %v1593 = vand.u32 2147483647, %v1461
  %vm1594 = vcmp.eq.f32.partialorder %v1593, 8.507059e+37
  %v1595 = vand.u32 %v1461, 2147483648
  %v1596 = vor.u32 1.1754944e-38, %v1595
  %v1597 = vsel %vm1594, %v1596, %v1592
  %v1598 = vmul.f32 1.0, %v1597
  %v1599 = vrcp.pop %v1462
  %v1600 = vmul.f32 %v1462, %v1599
  %v1601 = vsub.f32 1.0, %v1600
  %v1602 = vmul.f32 %v1599, %v1601
  %v1603 = vadd.f32 %v1599, %v1602
  %vm1604 = vweird.f32 %v1462
  %vm1605 = vweird.f32 %v1599
  %vm1606 = vmor %vm1604, %vm1605
  %v1607 = vsel %vm1606, %v1599, %v1603
  %v1608 = vand.u32 2147483647, %v1462
  %vm1609 = vcmp.eq.f32.partialorder %v1608, 8.507059e+37
  %v1610 = vand.u32 %v1462, 2147483648
  %v1611 = vor.u32 1.1754944e-38, %v1610
  %v1612 = vsel %vm1609, %v1611, %v1607
  %v1613 = vmul.f32 1.0, %v1612
  %v1614 = vrcp.pop %v1463
  %v1615 = vmul.f32 %v1463, %v1614
  %v1616 = vsub.f32 1.0, %v1615
  %v1617 = vmul.f32 %v1614, %v1616
  %v1618 = vadd.f32 %v1614, %v1617
  %vm1619 = vweird.f32 %v1463
  %vm1620 = vweird.f32 %v1614
  %vm1621 = vmor %vm1619, %vm1620
  %v1622 = vsel %vm1621, %v1614, %v1618
  %v1623 = vand.u32 2147483647, %v1463
  %vm1624 = vcmp.eq.f32.partialorder %v1623, 8.507059e+37
  %v1625 = vand.u32 %v1463, 2147483648
  %v1626 = vor.u32 1.1754944e-38, %v1625
  %v1627 = vsel %vm1624, %v1626, %v1622
  %v1628 = vmul.f32 1.0, %v1627
  %v1629 = vrcp.pop %v1464
  %v1630 = vmul.f32 %v1464, %v1629
  %v1631 = vsub.f32 1.0, %v1630
  %v1632 = vmul.f32 %v1629, %v1631
  %v1633 = vadd.f32 %v1629, %v1632
  %vm1634 = vweird.f32 %v1464
  %vm1635 = vweird.f32 %v1629
  %vm1636 = vmor %vm1634, %vm1635
  %v1637 = vsel %vm1636, %v1629, %v1633
  %v1638 = vand.u32 2147483647, %v1464
  %vm1639 = vcmp.eq.f32.partialorder %v1638, 8.507059e+37
  %v1640 = vand.u32 %v1464, 2147483648
  %v1641 = vor.u32 1.1754944e-38, %v1640
  %v1642 = vsel %vm1639, %v1641, %v1637
  %v1643 = vmul.f32 1.0, %v1642
  %v1644 = vrcp.pop %v1465
  %v1645 = vmul.f32 %v1465, %v1644
  %v1646 = vsub.f32 1.0, %v1645
  %v1647 = vmul.f32 %v1644, %v1646
  %v1648 = vadd.f32 %v1644, %v1647
  %vm1649 = vweird.f32 %v1465
  %vm1650 = vweird.f32 %v1644
  %vm1651 = vmor %vm1649, %vm1650
  %v1652 = vsel %vm1651, %v1644, %v1648
  %v1653 = vand.u32 2147483647, %v1465
  %vm1654 = vcmp.eq.f32.partialorder %v1653, 8.507059e+37
  %v1655 = vand.u32 %v1465, 2147483648
  %v1656 = vor.u32 1.1754944e-38, %v1655
  %v1657 = vsel %vm1654, %v1656, %v1652
  %v1658 = vmul.f32 1.0, %v1657
  %v1659 = vrcp.pop %v1466
  %v1660 = vmul.f32 %v1466, %v1659
  %v1661 = vsub.f32 1.0, %v1660
  %v1662 = vmul.f32 %v1659, %v1661
  %v1663 = vadd.f32 %v1659, %v1662
  %vm1664 = vweird.f32 %v1466
  %vm1665 = vweird.f32 %v1659
  %vm1666 = vmor %vm1664, %vm1665
  %v1667 = vsel %vm1666, %v1659, %v1663
  %v1668 = vand.u32 2147483647, %v1466
  %vm1669 = vcmp.eq.f32.partialorder %v1668, 8.507059e+37
  %v1670 = vand.u32 %v1466, 2147483648
  %v1671 = vor.u32 1.1754944e-38, %v1670
  %v1672 = vsel %vm1669, %v1671, %v1667
  %v1673 = vmul.f32 1.0, %v1672
  %v1674 = vrcp.pop %v1467
  %v1675 = vmul.f32 %v1467, %v1674
  %v1676 = vsub.f32 1.0, %v1675
  %v1677 = vmul.f32 %v1674, %v1676
  %v1678 = vadd.f32 %v1674, %v1677
  %vm1679 = vweird.f32 %v1467
  %vm1680 = vweird.f32 %v1674
  %vm1681 = vmor %vm1679, %vm1680
  %v1682 = vsel %vm1681, %v1674, %v1678
  %v1683 = vand.u32 2147483647, %v1467
  %vm1684 = vcmp.eq.f32.partialorder %v1683, 8.507059e+37
  %v1685 = vand.u32 %v1467, 2147483648
  %v1686 = vor.u32 1.1754944e-38, %v1685
  %v1687 = vsel %vm1684, %v1686, %v1682
  %v1688 = vmul.f32 1.0, %v1687
  %v1689 = vrcp.pop %v1468
  %v1690 = vmul.f32 %v1468, %v1689
  %v1691 = vsub.f32 1.0, %v1690
  %v1692 = vmul.f32 %v1689, %v1691
  %v1693 = vadd.f32 %v1689, %v1692
  %vm1694 = vweird.f32 %v1468
  %vm1695 = vweird.f32 %v1689
  %vm1696 = vmor %vm1694, %vm1695
  %v1697 = vsel %vm1696, %v1689, %v1693
  %v1698 = vand.u32 2147483647, %v1468
  %vm1699 = vcmp.eq.f32.partialorder %v1698, 8.507059e+37
  %v1700 = vand.u32 %v1468, 2147483648
  %v1701 = vor.u32 1.1754944e-38, %v1700
  %v1702 = vsel %vm1699, %v1701, %v1697
  %v1703 = vmul.f32 1.0, %v1702
  %v1704 = vrcp.pop %v1469
  %v1705 = vmul.f32 %v1469, %v1704
  %v1706 = vsub.f32 1.0, %v1705
  %v1707 = vmul.f32 %v1704, %v1706
  %v1708 = vadd.f32 %v1704, %v1707
  %vm1709 = vweird.f32 %v1469
  %vm1710 = vweird.f32 %v1704
  %vm1711 = vmor %vm1709, %vm1710
  %v1712 = vsel %vm1711, %v1704, %v1708
  %v1713 = vand.u32 2147483647, %v1469
  %vm1714 = vcmp.eq.f32.partialorder %v1713, 8.507059e+37
  %v1715 = vand.u32 %v1469, 2147483648
  %v1716 = vor.u32 1.1754944e-38, %v1715
  %v1717 = vsel %vm1714, %v1716, %v1712
  %v1718 = vmul.f32 1.0, %v1717
  %v1719 = vrcp.pop %v1470
  %v1720 = vmul.f32 %v1470, %v1719
  %v1721 = vsub.f32 1.0, %v1720
  %v1722 = vmul.f32 %v1719, %v1721
  %v1723 = vadd.f32 %v1719, %v1722
  %vm1724 = vweird.f32 %v1470
  %vm1725 = vweird.f32 %v1719
  %vm1726 = vmor %vm1724, %vm1725
  %v1727 = vsel %vm1726, %v1719, %v1723
  %v1728 = vand.u32 2147483647, %v1470
  %vm1729 = vcmp.eq.f32.partialorder %v1728, 8.507059e+37
  %v1730 = vand.u32 %v1470, 2147483648
  %v1731 = vor.u32 1.1754944e-38, %v1730
  %v1732 = vsel %vm1729, %v1731, %v1727
  %v1733 = vmul.f32 1.0, %v1732
  %v1734 = vrcp.pop %v1471
  %v1735 = vmul.f32 %v1471, %v1734
  %v1736 = vsub.f32 1.0, %v1735
  %v1737 = vmul.f32 %v1734, %v1736
  %v1738 = vadd.f32 %v1734, %v1737
  %vm1739 = vweird.f32 %v1471
  %vm1740 = vweird.f32 %v1734
  %vm1741 = vmor %vm1739, %vm1740
  %v1742 = vsel %vm1741, %v1734, %v1738
  %v1743 = vand.u32 2147483647, %v1471
  %vm1744 = vcmp.eq.f32.partialorder %v1743, 8.507059e+37
  %v1745 = vand.u32 %v1471, 2147483648
  %v1746 = vor.u32 1.1754944e-38, %v1745
  %v1747 = vsel %vm1744, %v1746, %v1742
  %v1748 = vmul.f32 1.0, %v1747
  %v1749 = vrcp.pop %v1472
  %v1750 = vmul.f32 %v1472, %v1749
  %v1751 = vsub.f32 1.0, %v1750
  %v1752 = vmul.f32 %v1749, %v1751
  %v1753 = vadd.f32 %v1749, %v1752
  %vm1754 = vweird.f32 %v1472
  %vm1755 = vweird.f32 %v1749
  %vm1756 = vmor %vm1754, %vm1755
  %v1757 = vsel %vm1756, %v1749, %v1753
  %v1758 = vand.u32 2147483647, %v1472
  %vm1759 = vcmp.eq.f32.partialorder %v1758, 8.507059e+37
  %v1760 = vand.u32 %v1472, 2147483648
  %v1761 = vor.u32 1.1754944e-38, %v1760
  %v1762 = vsel %vm1759, %v1761, %v1757
  %v1763 = vmul.f32 1.0, %v1762
  %v1764 = vrcp.pop %v1473
  %v1765 = vmul.f32 %v1473, %v1764
  %v1766 = vsub.f32 1.0, %v1765
  %v1767 = vmul.f32 %v1764, %v1766
  %v1768 = vadd.f32 %v1764, %v1767
  %vm1769 = vweird.f32 %v1473
  %vm1770 = vweird.f32 %v1764
  %vm1771 = vmor %vm1769, %vm1770
  %v1772 = vsel %vm1771, %v1764, %v1768
  %v1773 = vand.u32 2147483647, %v1473
  %vm1774 = vcmp.eq.f32.partialorder %v1773, 8.507059e+37
  %v1775 = vand.u32 %v1473, 2147483648
  %v1776 = vor.u32 1.1754944e-38, %v1775
  %v1777 = vsel %vm1774, %v1776, %v1772
  %v1778 = vmul.f32 1.0, %v1777
  %v1779 = vrcp.pop %v1474
  %v1780 = vmul.f32 %v1474, %v1779
  %v1781 = vsub.f32 1.0, %v1780
  %v1782 = vmul.f32 %v1779, %v1781
  %v1783 = vadd.f32 %v1779, %v1782
  %vm1784 = vweird.f32 %v1474
  %vm1785 = vweird.f32 %v1779
  %vm1786 = vmor %vm1784, %vm1785
  %v1787 = vsel %vm1786, %v1779, %v1783
  %v1788 = vand.u32 2147483647, %v1474
  %vm1789 = vcmp.eq.f32.partialorder %v1788, 8.507059e+37
  %v1790 = vand.u32 %v1474, 2147483648
  %v1791 = vor.u32 1.1754944e-38, %v1790
  %v1792 = vsel %vm1789, %v1791, %v1787
  %v1793 = vmul.f32 1.0, %v1792
  %v1794 = vrcp.pop %v1475
  %v1795 = vmul.f32 %v1475, %v1794
  %v1796 = vsub.f32 1.0, %v1795
  %v1797 = vmul.f32 %v1794, %v1796
  %v1798 = vadd.f32 %v1794, %v1797
  %vm1799 = vweird.f32 %v1475
  %vm1800 = vweird.f32 %v1794
  %vm1801 = vmor %vm1799, %vm1800
  %v1802 = vsel %vm1801, %v1794, %v1798
  %v1803 = vand.u32 2147483647, %v1475
  %vm1804 = vcmp.eq.f32.partialorder %v1803, 8.507059e+37
  %v1805 = vand.u32 %v1475, 2147483648
  %v1806 = vor.u32 1.1754944e-38, %v1805
  %v1807 = vsel %vm1804, %v1806, %v1802
  %v1808 = vmul.f32 1.0, %v1807
  %v1809 = vrcp.pop %v1476
  %v1810 = vmul.f32 %v1476, %v1809
  %v1811 = vsub.f32 1.0, %v1810
  %v1812 = vmul.f32 %v1809, %v1811
  %v1813 = vadd.f32 %v1809, %v1812
  %vm1814 = vweird.f32 %v1476
  %vm1815 = vweird.f32 %v1809
  %vm1816 = vmor %vm1814, %vm1815
  %v1817 = vsel %vm1816, %v1809, %v1813
  %v1818 = vand.u32 2147483647, %v1476
  %vm1819 = vcmp.eq.f32.partialorder %v1818, 8.507059e+37
  %v1820 = vand.u32 %v1476, 2147483648
  %v1821 = vor.u32 1.1754944e-38, %v1820
  %v1822 = vsel %vm1819, %v1821, %v1817
  %v1823 = vmul.f32 1.0, %v1822
  %v1824 = vrcp.pop %v1477
  %v1825 = vmul.f32 %v1477, %v1824
  %v1826 = vsub.f32 1.0, %v1825
  %v1827 = vmul.f32 %v1824, %v1826
  %v1828 = vadd.f32 %v1824, %v1827
  %vm1829 = vweird.f32 %v1477
  %vm1830 = vweird.f32 %v1824
  %vm1831 = vmor %vm1829, %vm1830
  %v1832 = vsel %vm1831, %v1824, %v1828
  %v1833 = vand.u32 2147483647, %v1477
  %vm1834 = vcmp.eq.f32.partialorder %v1833, 8.507059e+37
  %v1835 = vand.u32 %v1477, 2147483648
  %v1836 = vor.u32 1.1754944e-38, %v1835
  %v1837 = vsel %vm1834, %v1836, %v1832
  %v1838 = vmul.f32 1.0, %v1837
  %v1839 = vrcp.pop %v1478
  %v1840 = vmul.f32 %v1478, %v1839
  %v1841 = vsub.f32 1.0, %v1840
  %v1842 = vmul.f32 %v1839, %v1841
  %v1843 = vadd.f32 %v1839, %v1842
  %vm1844 = vweird.f32 %v1478
  %vm1845 = vweird.f32 %v1839
  %vm1846 = vmor %vm1844, %vm1845
  %v1847 = vsel %vm1846, %v1839, %v1843
  %v1848 = vand.u32 2147483647, %v1478
  %vm1849 = vcmp.eq.f32.partialorder %v1848, 8.507059e+37
  %v1850 = vand.u32 %v1478, 2147483648
  %v1851 = vor.u32 1.1754944e-38, %v1850
  %v1852 = vsel %vm1849, %v1851, %v1847
  %v1853 = vmul.f32 1.0, %v1852
  %v1854 = vmul.f32 %v1493, 2.0
  %v1855 = vmul.f32 %v1508, 2.0
  %v1856 = vmul.f32 %v1523, 2.0
  %v1857 = vmul.f32 %v1538, 2.0
  %v1858 = vmul.f32 %v1553, 2.0
  %v1859 = vmul.f32 %v1568, 2.0
  %v1860 = vmul.f32 %v1583, 2.0
  %v1861 = vmul.f32 %v1598, 2.0
  %v1862 = vmul.f32 %v1613, 2.0
  %v1863 = vmul.f32 %v1628, 2.0
  %v1864 = vmul.f32 %v1643, 2.0
  %v1865 = vmul.f32 %v1658, 2.0
  %v1866 = vmul.f32 %v1673, 2.0
  %v1867 = vmul.f32 %v1688, 2.0
  %v1868 = vmul.f32 %v1703, 2.0
  %v1869 = vmul.f32 %v1718, 2.0
  %v1870 = vmul.f32 %v1733, 2.0
  %v1871 = vmul.f32 %v1748, 2.0
  %v1872 = vmul.f32 %v1763, 2.0
  %v1873 = vmul.f32 %v1778, 2.0
  %v1874 = vmul.f32 %v1793, 2.0
  %v1875 = vmul.f32 %v1808, 2.0
  %v1876 = vmul.f32 %v1823, 2.0
  %v1877 = vmul.f32 %v1838, 2.0
  %v1878 = vmul.f32 %v1853, 2.0
  %v1879 = vsub.f32 %v1854, 1.0
  %v1880 = vsub.f32 %v1855, 1.0
  %v1881 = vsub.f32 %v1856, 1.0
  %v1882 = vsub.f32 %v1857, 1.0
  %v1883 = vsub.f32 %v1858, 1.0
  %v1884 = vsub.f32 %v1859, 1.0
  %v1885 = vsub.f32 %v1860, 1.0
  %v1886 = vsub.f32 %v1861, 1.0
  %v1887 = vsub.f32 %v1862, 1.0
  %v1888 = vsub.f32 %v1863, 1.0
  %v1889 = vsub.f32 %v1864, 1.0
  %v1890 = vsub.f32 %v1865, 1.0
  %v1891 = vsub.f32 %v1866, 1.0
  %v1892 = vsub.f32 %v1867, 1.0
  %v1893 = vsub.f32 %v1868, 1.0
  %v1894 = vsub.f32 %v1869, 1.0
  %v1895 = vsub.f32 %v1870, 1.0
  %v1896 = vsub.f32 %v1871, 1.0
  %v1897 = vsub.f32 %v1872, 1.0
  %v1898 = vsub.f32 %v1873, 1.0
  %v1899 = vsub.f32 %v1874, 1.0
  %v1900 = vsub.f32 %v1875, 1.0
  %v1901 = vsub.f32 %v1876, 1.0
  %v1902 = vsub.f32 %v1877, 1.0
  %v1903 = vsub.f32 %v1878, 1.0
  %v1904 = vmul.f32 %v1493, %v936
  %v1905 = vmul.f32 %v1508, %v937
  %v1906 = vmul.f32 %v1523, %v938
  %v1907 = vmul.f32 %v1538, %v939
  %v1908 = vmul.f32 %v1553, %v940
  %v1909 = vmul.f32 %v1568, %v941
  %v1910 = vmul.f32 %v1583, %v942
  %v1911 = vmul.f32 %v1598, %v943
  %v1912 = vmul.f32 %v1613, %v944
  %v1913 = vmul.f32 %v1628, %v945
  %v1914 = vmul.f32 %v1643, %v946
  %v1915 = vmul.f32 %v1658, %v947
  %v1916 = vmul.f32 %v1673, %v948
  %v1917 = vmul.f32 %v1688, %v949
  %v1918 = vmul.f32 %v1703, %v950
  %v1919 = vmul.f32 %v1718, %v951
  %v1920 = vmul.f32 %v1733, %v952
  %v1921 = vmul.f32 %v1748, %v953
  %v1922 = vmul.f32 %v1763, %v954
  %v1923 = vmul.f32 %v1778, %v955
  %v1924 = vmul.f32 %v1793, %v956
  %v1925 = vmul.f32 %v1808, %v957
  %v1926 = vmul.f32 %v1823, %v958
  %v1927 = vmul.f32 %v1838, %v959
  %v1928 = vmul.f32 %v1853, %v960
  %1954 = vrot.lane.b32.xlu0 %v1879, 32
  %v1955 = vpop.permute.xlu0 %1954
  %1956 = vrot.lane.b32.xlu0 %v1880, 32
  %v1957 = vpop.permute.xlu0 %1956
  %1958 = vrot.lane.b32.xlu0 %v1881, 32
  %v1959 = vpop.permute.xlu0 %1958
  %1960 = vrot.lane.b32.xlu0 %v1882, 32
  %v1961 = vpop.permute.xlu0 %1960
  %1962 = vrot.lane.b32.xlu0 %v1883, 32
  %v1963 = vpop.permute.xlu0 %1962
  %1964 = vrot.lane.b32.xlu0 %v1884, 32
  %v1965 = vpop.permute.xlu0 %1964
  %1966 = vrot.lane.b32.xlu0 %v1885, 32
  %v1967 = vpop.permute.xlu0 %1966
  %1968 = vrot.lane.b32.xlu0 %v1886, 32
  %v1969 = vpop.permute.xlu0 %1968
  %1970 = vrot.lane.b32.xlu0 %v1887, 32
  %v1971 = vpop.permute.xlu0 %1970
  %1972 = vrot.lane.b32.xlu0 %v1888, 32
  %v1973 = vpop.permute.xlu0 %1972
  %1974 = vrot.lane.b32.xlu0 %v1889, 32
  %v1975 = vpop.permute.xlu0 %1974
  %1976 = vrot.lane.b32.xlu0 %v1890, 32
  %v1977 = vpop.permute.xlu0 %1976
  %1978 = vrot.lane.b32.xlu0 %v1891, 32
  %v1979 = vpop.permute.xlu0 %1978
  %1980 = vrot.lane.b32.xlu0 %v1892, 32
  %v1981 = vpop.permute.xlu0 %1980
  %1982 = vrot.lane.b32.xlu0 %v1893, 32
  %v1983 = vpop.permute.xlu0 %1982
  %1984 = vrot.lane.b32.xlu0 %v1894, 32
  %v1985 = vpop.permute.xlu0 %1984
  %1986 = vrot.lane.b32.xlu0 %v1895, 32
  %v1987 = vpop.permute.xlu0 %1986
  %1988 = vrot.lane.b32.xlu0 %v1896, 32
  %v1989 = vpop.permute.xlu0 %1988
  %1990 = vrot.lane.b32.xlu0 %v1897, 32
  %v1991 = vpop.permute.xlu0 %1990
  %1992 = vrot.lane.b32.xlu0 %v1898, 32
  %v1993 = vpop.permute.xlu0 %1992
  %1994 = vrot.lane.b32.xlu0 %v1899, 32
  %v1995 = vpop.permute.xlu0 %1994
  %1996 = vrot.lane.b32.xlu0 %v1900, 32
  %v1997 = vpop.permute.xlu0 %1996
  %1998 = vrot.lane.b32.xlu0 %v1901, 32
  %v1999 = vpop.permute.xlu0 %1998
  %2000 = vrot.lane.b32.xlu0 %v1902, 32
  %v2001 = vpop.permute.xlu0 %2000
  %2002 = vrot.lane.b32.xlu0 %v1903, 32
  %v2003 = vpop.permute.xlu0 %2002
  %v2029 = vmul.f32 %v1493, %v1955
  %v2030 = vmul.f32 %v1508, %v1957
  %v2031 = vmul.f32 %v1523, %v1959
  %v2032 = vmul.f32 %v1538, %v1961
  %v2033 = vmul.f32 %v1553, %v1963
  %v2034 = vmul.f32 %v1568, %v1965
  %v2035 = vmul.f32 %v1583, %v1967
  %v2036 = vmul.f32 %v1598, %v1969
  %v2037 = vmul.f32 %v1613, %v1971
  %v2038 = vmul.f32 %v1628, %v1973
  %v2039 = vmul.f32 %v1643, %v1975
  %v2040 = vmul.f32 %v1658, %v1977
  %v2041 = vmul.f32 %v1673, %v1979
  %v2042 = vmul.f32 %v1688, %v1981
  %v2043 = vmul.f32 %v1703, %v1983
  %v2044 = vmul.f32 %v1718, %v1985
  %v2045 = vmul.f32 %v1733, %v1987
  %v2046 = vmul.f32 %v1748, %v1989
  %v2047 = vmul.f32 %v1763, %v1991
  %v2048 = vmul.f32 %v1778, %v1993
  %v2049 = vmul.f32 %v1793, %v1995
  %v2050 = vmul.f32 %v1808, %v1997
  %v2051 = vmul.f32 %v1823, %v1999
  %v2052 = vmul.f32 %v1838, %v2001
  %v2053 = vmul.f32 %v1853, %v2003
  %2079 = vrot.lane.b32.xlu0 %v2029, 32
  %v2080 = vpop.permute.xlu0 %2079
  %2081 = vrot.lane.b32.xlu0 %v2030, 32
  %v2082 = vpop.permute.xlu0 %2081
  %2083 = vrot.lane.b32.xlu0 %v2031, 32
  %v2084 = vpop.permute.xlu0 %2083
  %2085 = vrot.lane.b32.xlu0 %v2032, 32
  %v2086 = vpop.permute.xlu0 %2085
  %2087 = vrot.lane.b32.xlu0 %v2033, 32
  %v2088 = vpop.permute.xlu0 %2087
  %2089 = vrot.lane.b32.xlu0 %v2034, 32
  %v2090 = vpop.permute.xlu0 %2089
  %2091 = vrot.lane.b32.xlu0 %v2035, 32
  %v2092 = vpop.permute.xlu0 %2091
  %2093 = vrot.lane.b32.xlu0 %v2036, 32
  %v2094 = vpop.permute.xlu0 %2093
  %2095 = vrot.lane.b32.xlu0 %v2037, 32
  %v2096 = vpop.permute.xlu0 %2095
  %2097 = vrot.lane.b32.xlu0 %v2038, 32
  %v2098 = vpop.permute.xlu0 %2097
  %2099 = vrot.lane.b32.xlu0 %v2039, 32
  %v2100 = vpop.permute.xlu0 %2099
  %2101 = vrot.lane.b32.xlu0 %v2040, 32
  %v2102 = vpop.permute.xlu0 %2101
  %2103 = vrot.lane.b32.xlu0 %v2041, 32
  %v2104 = vpop.permute.xlu0 %2103
  %2105 = vrot.lane.b32.xlu0 %v2042, 32
  %v2106 = vpop.permute.xlu0 %2105
  %2107 = vrot.lane.b32.xlu0 %v2043, 32
  %v2108 = vpop.permute.xlu0 %2107
  %2109 = vrot.lane.b32.xlu0 %v2044, 32
  %v2110 = vpop.permute.xlu0 %2109
  %2111 = vrot.lane.b32.xlu0 %v2045, 32
  %v2112 = vpop.permute.xlu0 %2111
  %2113 = vrot.lane.b32.xlu0 %v2046, 32
  %v2114 = vpop.permute.xlu0 %2113
  %2115 = vrot.lane.b32.xlu0 %v2047, 32
  %v2116 = vpop.permute.xlu0 %2115
  %2117 = vrot.lane.b32.xlu0 %v2048, 32
  %v2118 = vpop.permute.xlu0 %2117
  %2119 = vrot.lane.b32.xlu0 %v2049, 32
  %v2120 = vpop.permute.xlu0 %2119
  %2121 = vrot.lane.b32.xlu0 %v2050, 32
  %v2122 = vpop.permute.xlu0 %2121
  %2123 = vrot.lane.b32.xlu0 %v2051, 32
  %v2124 = vpop.permute.xlu0 %2123
  %2125 = vrot.lane.b32.xlu0 %v2052, 32
  %v2126 = vpop.permute.xlu0 %2125
  %2127 = vrot.lane.b32.xlu0 %v2053, 32
  %v2128 = vpop.permute.xlu0 %2127
  %v2154 = vadd.f32 %v1904, %v2080
  %v2155 = vadd.f32 %v1905, %v2082
  %v2156 = vadd.f32 %v1906, %v2084
  %v2157 = vadd.f32 %v1907, %v2086
  %v2158 = vadd.f32 %v1908, %v2088
  %v2159 = vadd.f32 %v1909, %v2090
  %v2160 = vadd.f32 %v1910, %v2092
  %v2161 = vadd.f32 %v1911, %v2094
  %v2162 = vadd.f32 %v1912, %v2096
  %v2163 = vadd.f32 %v1913, %v2098
  %v2164 = vadd.f32 %v1914, %v2100
  %v2165 = vadd.f32 %v1915, %v2102
  %v2166 = vadd.f32 %v1916, %v2104
  %v2167 = vadd.f32 %v1917, %v2106
  %v2168 = vadd.f32 %v1918, %v2108
  %v2169 = vadd.f32 %v1919, %v2110
  %v2170 = vadd.f32 %v1920, %v2112
  %v2171 = vadd.f32 %v1921, %v2114
  %v2172 = vadd.f32 %v1922, %v2116
  %v2173 = vadd.f32 %v1923, %v2118
  %v2174 = vadd.f32 %v1924, %v2120
  %v2175 = vadd.f32 %v1925, %v2122
  %v2176 = vadd.f32 %v1926, %v2124
  %v2177 = vadd.f32 %v1927, %v2126
  %v2178 = vadd.f32 %v1928, %v2128
  %v2179 = vtanh.pop %v2154
  %v2180 = vtanh.pop %v2155
  %v2181 = vtanh.pop %v2156
  %v2182 = vtanh.pop %v2157
  %v2183 = vtanh.pop %v2158
  %v2184 = vtanh.pop %v2159
  %v2185 = vtanh.pop %v2160
  %v2186 = vtanh.pop %v2161
  %v2187 = vtanh.pop %v2162
  %v2188 = vtanh.pop %v2163
  %v2189 = vtanh.pop %v2164
  %v2190 = vtanh.pop %v2165
  %v2191 = vtanh.pop %v2166
  %v2192 = vtanh.pop %v2167
  %v2193 = vtanh.pop %v2168
  %v2194 = vtanh.pop %v2169
  %v2195 = vtanh.pop %v2170
  %v2196 = vtanh.pop %v2171
  %v2197 = vtanh.pop %v2172
  %v2198 = vtanh.pop %v2173
  %v2199 = vtanh.pop %v2174
  %v2200 = vtanh.pop %v2175
  %v2201 = vtanh.pop %v2176
  %v2202 = vtanh.pop %v2177
  %v2203 = vtanh.pop %v2178
  %2229 = vrot.lane.b32.xlu0 %v2179, 32
  %v2230 = vpop.permute.xlu0 %2229
  %2231 = vrot.lane.b32.xlu0 %v2180, 32
  %v2232 = vpop.permute.xlu0 %2231
  %2233 = vrot.lane.b32.xlu0 %v2181, 32
  %v2234 = vpop.permute.xlu0 %2233
  %2235 = vrot.lane.b32.xlu0 %v2182, 32
  %v2236 = vpop.permute.xlu0 %2235
  %2237 = vrot.lane.b32.xlu0 %v2183, 32
  %v2238 = vpop.permute.xlu0 %2237
  %2239 = vrot.lane.b32.xlu0 %v2184, 32
  %v2240 = vpop.permute.xlu0 %2239
  %2241 = vrot.lane.b32.xlu0 %v2185, 32
  %v2242 = vpop.permute.xlu0 %2241
  %2243 = vrot.lane.b32.xlu0 %v2186, 32
  %v2244 = vpop.permute.xlu0 %2243
  %2245 = vrot.lane.b32.xlu0 %v2187, 32
  %v2246 = vpop.permute.xlu0 %2245
  %2247 = vrot.lane.b32.xlu0 %v2188, 32
  %v2248 = vpop.permute.xlu0 %2247
  %2249 = vrot.lane.b32.xlu0 %v2189, 32
  %v2250 = vpop.permute.xlu0 %2249
  %2251 = vrot.lane.b32.xlu0 %v2190, 32
  %v2252 = vpop.permute.xlu0 %2251
  %2253 = vrot.lane.b32.xlu0 %v2191, 32
  %v2254 = vpop.permute.xlu0 %2253
  %2255 = vrot.lane.b32.xlu0 %v2192, 32
  %v2256 = vpop.permute.xlu0 %2255
  %2257 = vrot.lane.b32.xlu0 %v2193, 32
  %v2258 = vpop.permute.xlu0 %2257
  %2259 = vrot.lane.b32.xlu0 %v2194, 32
  %v2260 = vpop.permute.xlu0 %2259
  %2261 = vrot.lane.b32.xlu0 %v2195, 32
  %v2262 = vpop.permute.xlu0 %2261
  %2263 = vrot.lane.b32.xlu0 %v2196, 32
  %v2264 = vpop.permute.xlu0 %2263
  %2265 = vrot.lane.b32.xlu0 %v2197, 32
  %v2266 = vpop.permute.xlu0 %2265
  %2267 = vrot.lane.b32.xlu0 %v2198, 32
  %v2268 = vpop.permute.xlu0 %2267
  %2269 = vrot.lane.b32.xlu0 %v2199, 32
  %v2270 = vpop.permute.xlu0 %2269
  %2271 = vrot.lane.b32.xlu0 %v2200, 32
  %v2272 = vpop.permute.xlu0 %2271
  %2273 = vrot.lane.b32.xlu0 %v2201, 32
  %v2274 = vpop.permute.xlu0 %2273
  %2275 = vrot.lane.b32.xlu0 %v2202, 32
  %v2276 = vpop.permute.xlu0 %2275
  %2277 = vrot.lane.b32.xlu0 %v2203, 32
  %v2278 = vpop.permute.xlu0 %2277
  %v2304 = vmul.f32 %v1493, %v2230
  %v2305 = vmul.f32 %v1508, %v2232
  %v2306 = vmul.f32 %v1523, %v2234
  %v2307 = vmul.f32 %v1538, %v2236
  %v2308 = vmul.f32 %v1553, %v2238
  %v2309 = vmul.f32 %v1568, %v2240
  %v2310 = vmul.f32 %v1583, %v2242
  %v2311 = vmul.f32 %v1598, %v2244
  %v2312 = vmul.f32 %v1613, %v2246
  %v2313 = vmul.f32 %v1628, %v2248
  %v2314 = vmul.f32 %v1643, %v2250
  %v2315 = vmul.f32 %v1658, %v2252
  %v2316 = vmul.f32 %v1673, %v2254
  %v2317 = vmul.f32 %v1688, %v2256
  %v2318 = vmul.f32 %v1703, %v2258
  %v2319 = vmul.f32 %v1718, %v2260
  %v2320 = vmul.f32 %v1733, %v2262
  %v2321 = vmul.f32 %v1748, %v2264
  %v2322 = vmul.f32 %v1763, %v2266
  %v2323 = vmul.f32 %v1778, %v2268
  %v2324 = vmul.f32 %v1793, %v2270
  %v2325 = vmul.f32 %v1808, %v2272
  %v2326 = vmul.f32 %v1823, %v2274
  %v2327 = vmul.f32 %v1838, %v2276
  %v2328 = vmul.f32 %v1853, %v2278
  %s2329 = scalar_lea.vmem %s0, 400
  %v2330 = vld [vmem:[%s2329] sm:$0xff]
  %v2331 = vld [vmem:[%s2329 + $0x8] sm:$0xff]
  %v2332 = vld [vmem:[%s2329 + $0x10] sm:$0xff]
  %v2333 = vld [vmem:[%s2329 + $0x18] sm:$0xff]
  %v2334 = vld [vmem:[%s2329 + $0x20] sm:$0xff]
  %v2335 = vld [vmem:[%s2329 + $0x28] sm:$0xff]
  %v2336 = vld [vmem:[%s2329 + $0x30] sm:$0xff]
  %v2337 = vld [vmem:[%s2329 + $0x38] sm:$0xff]
  %v2338 = vld [vmem:[%s2329 + $0x40] sm:$0xff]
  %v2339 = vld [vmem:[%s2329 + $0x48] sm:$0xff]
  %v2340 = vld [vmem:[%s2329 + $0x50] sm:$0xff]
  %v2341 = vld [vmem:[%s2329 + $0x58] sm:$0xff]
  %v2342 = vld [vmem:[%s2329 + $0x60] sm:$0xff]
  %v2343 = vld [vmem:[%s2329 + $0x68] sm:$0xff]
  %v2344 = vld [vmem:[%s2329 + $0x70] sm:$0xff]
  %v2345 = vld [vmem:[%s2329 + $0x78] sm:$0xff]
  %v2346 = vld [vmem:[%s2329 + $0x80] sm:$0xff]
  %v2347 = vld [vmem:[%s2329 + $0x88] sm:$0xff]
  %v2348 = vld [vmem:[%s2329 + $0x90] sm:$0xff]
  %v2349 = vld [vmem:[%s2329 + $0x98] sm:$0xff]
  %v2350 = vld [vmem:[%s2329 + $0xa0] sm:$0xff]
  %v2351 = vld [vmem:[%s2329 + $0xa8] sm:$0xff]
  %v2352 = vld [vmem:[%s2329 + $0xb0] sm:$0xff]
  %v2353 = vld [vmem:[%s2329 + $0xb8] sm:$0xff]
  %v2354 = vld [vmem:[%s2329 + $0xc0] sm:$0xff]
  %2380 = vrot.lane.b32.xlu0 %v2304, 64
  %v2381 = vpop.permute.xlu0 %2380
  %2382 = vrot.lane.b32.xlu0 %v2305, 64
  %v2383 = vpop.permute.xlu0 %2382
  %2384 = vrot.lane.b32.xlu0 %v2306, 64
  %v2385 = vpop.permute.xlu0 %2384
  %2386 = vrot.lane.b32.xlu0 %v2307, 64
  %v2387 = vpop.permute.xlu0 %2386
  %2388 = vrot.lane.b32.xlu0 %v2308, 64
  %v2389 = vpop.permute.xlu0 %2388
  %2390 = vrot.lane.b32.xlu0 %v2309, 64
  %v2391 = vpop.permute.xlu0 %2390
  %2392 = vrot.lane.b32.xlu0 %v2310, 64
  %v2393 = vpop.permute.xlu0 %2392
  %2394 = vrot.lane.b32.xlu0 %v2311, 64
  %v2395 = vpop.permute.xlu0 %2394
  %2396 = vrot.lane.b32.xlu0 %v2312, 64
  %v2397 = vpop.permute.xlu0 %2396
  %2398 = vrot.lane.b32.xlu0 %v2313, 64
  %v2399 = vpop.permute.xlu0 %2398
  %2400 = vrot.lane.b32.xlu0 %v2314, 64
  %v2401 = vpop.permute.xlu0 %2400
  %2402 = vrot.lane.b32.xlu0 %v2315, 64
  %v2403 = vpop.permute.xlu0 %2402
  %2404 = vrot.lane.b32.xlu0 %v2316, 64
  %v2405 = vpop.permute.xlu0 %2404
  %2406 = vrot.lane.b32.xlu0 %v2317, 64
  %v2407 = vpop.permute.xlu0 %2406
  %2408 = vrot.lane.b32.xlu0 %v2318, 64
  %v2409 = vpop.permute.xlu0 %2408
  %2410 = vrot.lane.b32.xlu0 %v2319, 64
  %v2411 = vpop.permute.xlu0 %2410
  %2412 = vrot.lane.b32.xlu0 %v2320, 64
  %v2413 = vpop.permute.xlu0 %2412
  %2414 = vrot.lane.b32.xlu0 %v2321, 64
  %v2415 = vpop.permute.xlu0 %2414
  %2416 = vrot.lane.b32.xlu0 %v2322, 64
  %v2417 = vpop.permute.xlu0 %2416
  %2418 = vrot.lane.b32.xlu0 %v2323, 64
  %v2419 = vpop.permute.xlu0 %2418
  %2420 = vrot.lane.b32.xlu0 %v2324, 64
  %v2421 = vpop.permute.xlu0 %2420
  %2422 = vrot.lane.b32.xlu0 %v2325, 64
  %v2423 = vpop.permute.xlu0 %2422
  %2424 = vrot.lane.b32.xlu0 %v2326, 64
  %v2425 = vpop.permute.xlu0 %2424
  %2426 = vrot.lane.b32.xlu0 %v2327, 64
  %v2427 = vpop.permute.xlu0 %2426
  %2428 = vrot.lane.b32.xlu0 %v2328, 64
  %v2429 = vpop.permute.xlu0 %2428
  %v2430 = vsel %vm40, %v2381, 0
  %v2432 = vsel %vm40, %v2383, 0
  %v2434 = vsel %vm40, %v2385, 0
  %v2436 = vsel %vm40, %v2387, 0
  %v2438 = vsel %vm40, %v2389, 0
  %v2440 = vsel %vm40, %v2391, 0
  %v2442 = vsel %vm40, %v2393, 0
  %v2444 = vsel %vm40, %v2395, 0
  %v2446 = vsel %vm40, %v2397, 0
  %v2448 = vsel %vm40, %v2399, 0
  %v2450 = vsel %vm40, %v2401, 0
  %v2452 = vsel %vm40, %v2403, 0
  %v2454 = vsel %vm40, %v2405, 0
  %v2456 = vsel %vm40, %v2407, 0
  %v2458 = vsel %vm40, %v2409, 0
  %v2460 = vsel %vm40, %v2411, 0
  %v2462 = vsel %vm40, %v2413, 0
  %v2464 = vsel %vm40, %v2415, 0
  %v2466 = vsel %vm40, %v2417, 0
  %v2468 = vsel %vm40, %v2419, 0
  %v2470 = vsel %vm40, %v2421, 0
  %v2472 = vsel %vm40, %v2423, 0
  %v2474 = vsel %vm40, %v2425, 0
  %v2476 = vsel %vm40, %v2427, 0
  %v2478 = vsel %vm40, %v2429, 0
  %2480 = vmatpush.msra.mxu0 0.0
  %2481 = vmatpush.msra.mxu0 0.0
  %2482 = vmatpush.msra.mxu0 0.0
  %2483 = vmatpush.msra.mxu0 0.0
  %2484 = vmatpush.msra.mxu0 0.0
  %2485 = vmatpush.msra.mxu0 0.0
  %2486 = vmatpush.msra.mxu0 0.0
  %2487 = vmatpush.msra.mxu0 0.0
  %2488 = vmatpush.msra.mxu0 0.0
  %2489 = vmatpush.msra.mxu0 0.0
  %2490 = vmatpush.msra.mxu0 0.0
  %2491 = vmatpush.msra.mxu0 0.0
  %2492 = vmatpush.msra.mxu0 %v39
  %2493 = vmatpush.msra.mxu0 %v38
  %2494 = vmatpush.msra.mxu0 %v37
  %2495 = vmatpush.msra.mxu0 %v36
  %2496 = vmatmul.f32.gmra.mxu0 %v2430
  %v2497 = vpop.f32.mrf.mxu0
  %v2498 = vadd.f32 0.0, %v2497
  %2499 = vmatmul.f32.gmra.mxu0 %v2432
  %v2500 = vpop.f32.mrf.mxu0
  %v2501 = vadd.f32 0.0, %v2500
  %2502 = vmatmul.f32.gmra.mxu0 %v2434
  %v2503 = vpop.f32.mrf.mxu0
  %v2504 = vadd.f32 0.0, %v2503
  %2505 = vmatmul.f32.gmra.mxu0 %v2436
  %v2506 = vpop.f32.mrf.mxu0
  %v2507 = vadd.f32 0.0, %v2506
  %2508 = vmatmul.f32.gmra.mxu0 %v2438
  %v2509 = vpop.f32.mrf.mxu0
  %v2510 = vadd.f32 0.0, %v2509
  %2511 = vmatmul.f32.gmra.mxu0 %v2440
  %v2512 = vpop.f32.mrf.mxu0
  %v2513 = vadd.f32 0.0, %v2512
  %2514 = vmatmul.f32.gmra.mxu0 %v2442
  %v2515 = vpop.f32.mrf.mxu0
  %v2516 = vadd.f32 0.0, %v2515
  %2517 = vmatmul.f32.gmra.mxu0 %v2444
  %v2518 = vpop.f32.mrf.mxu0
  %v2519 = vadd.f32 0.0, %v2518
  %2520 = vmatmul.f32.gmra.mxu0 %v2446
  %v2521 = vpop.f32.mrf.mxu0
  %v2522 = vadd.f32 0.0, %v2521
  %2523 = vmatmul.f32.gmra.mxu0 %v2448
  %v2524 = vpop.f32.mrf.mxu0
  %v2525 = vadd.f32 0.0, %v2524
  %2526 = vmatmul.f32.gmra.mxu0 %v2450
  %v2527 = vpop.f32.mrf.mxu0
  %v2528 = vadd.f32 0.0, %v2527
  %2529 = vmatmul.f32.gmra.mxu0 %v2452
  %v2530 = vpop.f32.mrf.mxu0
  %v2531 = vadd.f32 0.0, %v2530
  %2532 = vmatmul.f32.gmra.mxu0 %v2454
  %v2533 = vpop.f32.mrf.mxu0
  %v2534 = vadd.f32 0.0, %v2533
  %2535 = vmatmul.f32.gmra.mxu0 %v2456
  %v2536 = vpop.f32.mrf.mxu0
  %v2537 = vadd.f32 0.0, %v2536
  %2538 = vmatmul.f32.gmra.mxu0 %v2458
  %v2539 = vpop.f32.mrf.mxu0
  %v2540 = vadd.f32 0.0, %v2539
  %2541 = vmatmul.f32.gmra.mxu0 %v2460
  %v2542 = vpop.f32.mrf.mxu0
  %v2543 = vadd.f32 0.0, %v2542
  %2544 = vmatmul.f32.gmra.mxu0 %v2462
  %v2545 = vpop.f32.mrf.mxu0
  %v2546 = vadd.f32 0.0, %v2545
  %2547 = vmatmul.f32.gmra.mxu0 %v2464
  %v2548 = vpop.f32.mrf.mxu0
  %v2549 = vadd.f32 0.0, %v2548
  %2550 = vmatmul.f32.gmra.mxu0 %v2466
  %v2551 = vpop.f32.mrf.mxu0
  %v2552 = vadd.f32 0.0, %v2551
  %2553 = vmatmul.f32.gmra.mxu0 %v2468
  %v2554 = vpop.f32.mrf.mxu0
  %v2555 = vadd.f32 0.0, %v2554
  %2556 = vmatmul.f32.gmra.mxu0 %v2470
  %v2557 = vpop.f32.mrf.mxu0
  %v2558 = vadd.f32 0.0, %v2557
  %2559 = vmatmul.f32.gmra.mxu0 %v2472
  %v2560 = vpop.f32.mrf.mxu0
  %v2561 = vadd.f32 0.0, %v2560
  %2562 = vmatmul.f32.gmra.mxu0 %v2474
  %v2563 = vpop.f32.mrf.mxu0
  %v2564 = vadd.f32 0.0, %v2563
  %2565 = vmatmul.f32.gmra.mxu0 %v2476
  %v2566 = vpop.f32.mrf.mxu0
  %v2567 = vadd.f32 0.0, %v2566
  %2568 = vmatmul.f32.gmra.mxu0 %v2478
  %v2569 = vpop.f32.mrf.mxu0
  %v2570 = vadd.f32 0.0, %v2569
  %2571 = vdwg.mxu0
  %v2572 = vadd.f32 %v2330, %v2498
  %v2573 = vadd.f32 %v2331, %v2501
  %v2574 = vadd.f32 %v2332, %v2504
  %v2575 = vadd.f32 %v2333, %v2507
  %v2576 = vadd.f32 %v2334, %v2510
  %v2577 = vadd.f32 %v2335, %v2513
  %v2578 = vadd.f32 %v2336, %v2516
  %v2579 = vadd.f32 %v2337, %v2519
  %v2580 = vadd.f32 %v2338, %v2522
  %v2581 = vadd.f32 %v2339, %v2525
  %v2582 = vadd.f32 %v2340, %v2528
  %v2583 = vadd.f32 %v2341, %v2531
  %v2584 = vadd.f32 %v2342, %v2534
  %v2585 = vadd.f32 %v2343, %v2537
  %v2586 = vadd.f32 %v2344, %v2540
  %v2587 = vadd.f32 %v2345, %v2543
  %v2588 = vadd.f32 %v2346, %v2546
  %v2589 = vadd.f32 %v2347, %v2549
  %v2590 = vadd.f32 %v2348, %v2552
  %v2591 = vadd.f32 %v2349, %v2555
  %v2592 = vadd.f32 %v2350, %v2558
  %v2593 = vadd.f32 %v2351, %v2561
  %v2594 = vadd.f32 %v2352, %v2564
  %v2595 = vadd.f32 %v2353, %v2567
  %v2596 = vadd.f32 %v2354, %v2570
  %v2597 = vxor.u32 %v2572, 2147483648
  %v2598 = vxor.u32 %v2573, 2147483648
  %v2599 = vxor.u32 %v2574, 2147483648
  %v2600 = vxor.u32 %v2575, 2147483648
  %v2601 = vxor.u32 %v2576, 2147483648
  %v2602 = vxor.u32 %v2577, 2147483648
  %v2603 = vxor.u32 %v2578, 2147483648
  %v2604 = vxor.u32 %v2579, 2147483648
  %v2605 = vxor.u32 %v2580, 2147483648
  %v2606 = vxor.u32 %v2581, 2147483648
  %v2607 = vxor.u32 %v2582, 2147483648
  %v2608 = vxor.u32 %v2583, 2147483648
  %v2609 = vxor.u32 %v2584, 2147483648
  %v2610 = vxor.u32 %v2585, 2147483648
  %v2611 = vxor.u32 %v2586, 2147483648
  %v2612 = vxor.u32 %v2587, 2147483648
  %v2613 = vxor.u32 %v2588, 2147483648
  %v2614 = vxor.u32 %v2589, 2147483648
  %v2615 = vxor.u32 %v2590, 2147483648
  %v2616 = vxor.u32 %v2591, 2147483648
  %v2617 = vxor.u32 %v2592, 2147483648
  %v2618 = vxor.u32 %v2593, 2147483648
  %v2619 = vxor.u32 %v2594, 2147483648
  %v2620 = vxor.u32 %v2595, 2147483648
  %v2621 = vxor.u32 %v2596, 2147483648
  %v2622 = vmul.f32 %v2597, 1.442695
  %v2623 = vpow.pop %v2622
  %v2624 = vmul.f32 %v2598, 1.442695
  %v2625 = vpow.pop %v2624
  %v2626 = vmul.f32 %v2599, 1.442695
  %v2627 = vpow.pop %v2626
  %v2628 = vmul.f32 %v2600, 1.442695
  %v2629 = vpow.pop %v2628
  %v2630 = vmul.f32 %v2601, 1.442695
  %v2631 = vpow.pop %v2630
  %v2632 = vmul.f32 %v2602, 1.442695
  %v2633 = vpow.pop %v2632
  %v2634 = vmul.f32 %v2603, 1.442695
  %v2635 = vpow.pop %v2634
  %v2636 = vmul.f32 %v2604, 1.442695
  %v2637 = vpow.pop %v2636
  %v2638 = vmul.f32 %v2605, 1.442695
  %v2639 = vpow.pop %v2638
  %v2640 = vmul.f32 %v2606, 1.442695
  %v2641 = vpow.pop %v2640
  %v2642 = vmul.f32 %v2607, 1.442695
  %v2643 = vpow.pop %v2642
  %v2644 = vmul.f32 %v2608, 1.442695
  %v2645 = vpow.pop %v2644
  %v2646 = vmul.f32 %v2609, 1.442695
  %v2647 = vpow.pop %v2646
  %v2648 = vmul.f32 %v2610, 1.442695
  %v2649 = vpow.pop %v2648
  %v2650 = vmul.f32 %v2611, 1.442695
  %v2651 = vpow.pop %v2650
  %v2652 = vmul.f32 %v2612, 1.442695
  %v2653 = vpow.pop %v2652
  %v2654 = vmul.f32 %v2613, 1.442695
  %v2655 = vpow.pop %v2654
  %v2656 = vmul.f32 %v2614, 1.442695
  %v2657 = vpow.pop %v2656
  %v2658 = vmul.f32 %v2615, 1.442695
  %v2659 = vpow.pop %v2658
  %v2660 = vmul.f32 %v2616, 1.442695
  %v2661 = vpow.pop %v2660
  %v2662 = vmul.f32 %v2617, 1.442695
  %v2663 = vpow.pop %v2662
  %v2664 = vmul.f32 %v2618, 1.442695
  %v2665 = vpow.pop %v2664
  %v2666 = vmul.f32 %v2619, 1.442695
  %v2667 = vpow.pop %v2666
  %v2668 = vmul.f32 %v2620, 1.442695
  %v2669 = vpow.pop %v2668
  %v2670 = vmul.f32 %v2621, 1.442695
  %v2671 = vpow.pop %v2670
  %v2672 = vadd.f32 %v2623, 1.0
  %v2673 = vadd.f32 %v2625, 1.0
  %v2674 = vadd.f32 %v2627, 1.0
  %v2675 = vadd.f32 %v2629, 1.0
  %v2676 = vadd.f32 %v2631, 1.0
  %v2677 = vadd.f32 %v2633, 1.0
  %v2678 = vadd.f32 %v2635, 1.0
  %v2679 = vadd.f32 %v2637, 1.0
  %v2680 = vadd.f32 %v2639, 1.0
  %v2681 = vadd.f32 %v2641, 1.0
  %v2682 = vadd.f32 %v2643, 1.0
  %v2683 = vadd.f32 %v2645, 1.0
  %v2684 = vadd.f32 %v2647, 1.0
  %v2685 = vadd.f32 %v2649, 1.0
  %v2686 = vadd.f32 %v2651, 1.0
  %v2687 = vadd.f32 %v2653, 1.0
  %v2688 = vadd.f32 %v2655, 1.0
  %v2689 = vadd.f32 %v2657, 1.0
  %v2690 = vadd.f32 %v2659, 1.0
  %v2691 = vadd.f32 %v2661, 1.0
  %v2692 = vadd.f32 %v2663, 1.0
  %v2693 = vadd.f32 %v2665, 1.0
  %v2694 = vadd.f32 %v2667, 1.0
  %v2695 = vadd.f32 %v2669, 1.0
  %v2696 = vadd.f32 %v2671, 1.0
  %v2697 = vrcp.pop %v2672
  %v2698 = vmul.f32 %v2672, %v2697
  %v2699 = vsub.f32 1.0, %v2698
  %v2700 = vmul.f32 %v2697, %v2699
  %v2701 = vadd.f32 %v2697, %v2700
  %vm2702 = vweird.f32 %v2672
  %vm2703 = vweird.f32 %v2697
  %vm2704 = vmor %vm2702, %vm2703
  %v2705 = vsel %vm2704, %v2697, %v2701
  %v2706 = vand.u32 2147483647, %v2672
  %vm2707 = vcmp.eq.f32.partialorder %v2706, 8.507059e+37
  %v2708 = vand.u32 %v2672, 2147483648
  %v2709 = vor.u32 1.1754944e-38, %v2708
  %v2710 = vsel %vm2707, %v2709, %v2705
  %v2711 = vmul.f32 1.0, %v2710
  %v2712 = vrcp.pop %v2673
  %v2713 = vmul.f32 %v2673, %v2712
  %v2714 = vsub.f32 1.0, %v2713
  %v2715 = vmul.f32 %v2712, %v2714
  %v2716 = vadd.f32 %v2712, %v2715
  %vm2717 = vweird.f32 %v2673
  %vm2718 = vweird.f32 %v2712
  %vm2719 = vmor %vm2717, %vm2718
  %v2720 = vsel %vm2719, %v2712, %v2716
  %v2721 = vand.u32 2147483647, %v2673
  %vm2722 = vcmp.eq.f32.partialorder %v2721, 8.507059e+37
  %v2723 = vand.u32 %v2673, 2147483648
  %v2724 = vor.u32 1.1754944e-38, %v2723
  %v2725 = vsel %vm2722, %v2724, %v2720
  %v2726 = vmul.f32 1.0, %v2725
  %v2727 = vrcp.pop %v2674
  %v2728 = vmul.f32 %v2674, %v2727
  %v2729 = vsub.f32 1.0, %v2728
  %v2730 = vmul.f32 %v2727, %v2729
  %v2731 = vadd.f32 %v2727, %v2730
  %vm2732 = vweird.f32 %v2674
  %vm2733 = vweird.f32 %v2727
  %vm2734 = vmor %vm2732, %vm2733
  %v2735 = vsel %vm2734, %v2727, %v2731
  %v2736 = vand.u32 2147483647, %v2674
  %vm2737 = vcmp.eq.f32.partialorder %v2736, 8.507059e+37
  %v2738 = vand.u32 %v2674, 2147483648
  %v2739 = vor.u32 1.1754944e-38, %v2738
  %v2740 = vsel %vm2737, %v2739, %v2735
  %v2741 = vmul.f32 1.0, %v2740
  %v2742 = vrcp.pop %v2675
  %v2743 = vmul.f32 %v2675, %v2742
  %v2744 = vsub.f32 1.0, %v2743
  %v2745 = vmul.f32 %v2742, %v2744
  %v2746 = vadd.f32 %v2742, %v2745
  %vm2747 = vweird.f32 %v2675
  %vm2748 = vweird.f32 %v2742
  %vm2749 = vmor %vm2747, %vm2748
  %v2750 = vsel %vm2749, %v2742, %v2746
  %v2751 = vand.u32 2147483647, %v2675
  %vm2752 = vcmp.eq.f32.partialorder %v2751, 8.507059e+37
  %v2753 = vand.u32 %v2675, 2147483648
  %v2754 = vor.u32 1.1754944e-38, %v2753
  %v2755 = vsel %vm2752, %v2754, %v2750
  %v2756 = vmul.f32 1.0, %v2755
  %v2757 = vrcp.pop %v2676
  %v2758 = vmul.f32 %v2676, %v2757
  %v2759 = vsub.f32 1.0, %v2758
  %v2760 = vmul.f32 %v2757, %v2759
  %v2761 = vadd.f32 %v2757, %v2760
  %vm2762 = vweird.f32 %v2676
  %vm2763 = vweird.f32 %v2757
  %vm2764 = vmor %vm2762, %vm2763
  %v2765 = vsel %vm2764, %v2757, %v2761
  %v2766 = vand.u32 2147483647, %v2676
  %vm2767 = vcmp.eq.f32.partialorder %v2766, 8.507059e+37
  %v2768 = vand.u32 %v2676, 2147483648
  %v2769 = vor.u32 1.1754944e-38, %v2768
  %v2770 = vsel %vm2767, %v2769, %v2765
  %v2771 = vmul.f32 1.0, %v2770
  %v2772 = vrcp.pop %v2677
  %v2773 = vmul.f32 %v2677, %v2772
  %v2774 = vsub.f32 1.0, %v2773
  %v2775 = vmul.f32 %v2772, %v2774
  %v2776 = vadd.f32 %v2772, %v2775
  %vm2777 = vweird.f32 %v2677
  %vm2778 = vweird.f32 %v2772
  %vm2779 = vmor %vm2777, %vm2778
  %v2780 = vsel %vm2779, %v2772, %v2776
  %v2781 = vand.u32 2147483647, %v2677
  %vm2782 = vcmp.eq.f32.partialorder %v2781, 8.507059e+37
  %v2783 = vand.u32 %v2677, 2147483648
  %v2784 = vor.u32 1.1754944e-38, %v2783
  %v2785 = vsel %vm2782, %v2784, %v2780
  %v2786 = vmul.f32 1.0, %v2785
  %v2787 = vrcp.pop %v2678
  %v2788 = vmul.f32 %v2678, %v2787
  %v2789 = vsub.f32 1.0, %v2788
  %v2790 = vmul.f32 %v2787, %v2789
  %v2791 = vadd.f32 %v2787, %v2790
  %vm2792 = vweird.f32 %v2678
  %vm2793 = vweird.f32 %v2787
  %vm2794 = vmor %vm2792, %vm2793
  %v2795 = vsel %vm2794, %v2787, %v2791
  %v2796 = vand.u32 2147483647, %v2678
  %vm2797 = vcmp.eq.f32.partialorder %v2796, 8.507059e+37
  %v2798 = vand.u32 %v2678, 2147483648
  %v2799 = vor.u32 1.1754944e-38, %v2798
  %v2800 = vsel %vm2797, %v2799, %v2795
  %v2801 = vmul.f32 1.0, %v2800
  %v2802 = vrcp.pop %v2679
  %v2803 = vmul.f32 %v2679, %v2802
  %v2804 = vsub.f32 1.0, %v2803
  %v2805 = vmul.f32 %v2802, %v2804
  %v2806 = vadd.f32 %v2802, %v2805
  %vm2807 = vweird.f32 %v2679
  %vm2808 = vweird.f32 %v2802
  %vm2809 = vmor %vm2807, %vm2808
  %v2810 = vsel %vm2809, %v2802, %v2806
  %v2811 = vand.u32 2147483647, %v2679
  %vm2812 = vcmp.eq.f32.partialorder %v2811, 8.507059e+37
  %v2813 = vand.u32 %v2679, 2147483648
  %v2814 = vor.u32 1.1754944e-38, %v2813
  %v2815 = vsel %vm2812, %v2814, %v2810
  %v2816 = vmul.f32 1.0, %v2815
  %v2817 = vrcp.pop %v2680
  %v2818 = vmul.f32 %v2680, %v2817
  %v2819 = vsub.f32 1.0, %v2818
  %v2820 = vmul.f32 %v2817, %v2819
  %v2821 = vadd.f32 %v2817, %v2820
  %vm2822 = vweird.f32 %v2680
  %vm2823 = vweird.f32 %v2817
  %vm2824 = vmor %vm2822, %vm2823
  %v2825 = vsel %vm2824, %v2817, %v2821
  %v2826 = vand.u32 2147483647, %v2680
  %vm2827 = vcmp.eq.f32.partialorder %v2826, 8.507059e+37
  %v2828 = vand.u32 %v2680, 2147483648
  %v2829 = vor.u32 1.1754944e-38, %v2828
  %v2830 = vsel %vm2827, %v2829, %v2825
  %v2831 = vmul.f32 1.0, %v2830
  %v2832 = vrcp.pop %v2681
  %v2833 = vmul.f32 %v2681, %v2832
  %v2834 = vsub.f32 1.0, %v2833
  %v2835 = vmul.f32 %v2832, %v2834
  %v2836 = vadd.f32 %v2832, %v2835
  %vm2837 = vweird.f32 %v2681
  %vm2838 = vweird.f32 %v2832
  %vm2839 = vmor %vm2837, %vm2838
  %v2840 = vsel %vm2839, %v2832, %v2836
  %v2841 = vand.u32 2147483647, %v2681
  %vm2842 = vcmp.eq.f32.partialorder %v2841, 8.507059e+37
  %v2843 = vand.u32 %v2681, 2147483648
  %v2844 = vor.u32 1.1754944e-38, %v2843
  %v2845 = vsel %vm2842, %v2844, %v2840
  %v2846 = vmul.f32 1.0, %v2845
  %v2847 = vrcp.pop %v2682
  %v2848 = vmul.f32 %v2682, %v2847
  %v2849 = vsub.f32 1.0, %v2848
  %v2850 = vmul.f32 %v2847, %v2849
  %v2851 = vadd.f32 %v2847, %v2850
  %vm2852 = vweird.f32 %v2682
  %vm2853 = vweird.f32 %v2847
  %vm2854 = vmor %vm2852, %vm2853
  %v2855 = vsel %vm2854, %v2847, %v2851
  %v2856 = vand.u32 2147483647, %v2682
  %vm2857 = vcmp.eq.f32.partialorder %v2856, 8.507059e+37
  %v2858 = vand.u32 %v2682, 2147483648
  %v2859 = vor.u32 1.1754944e-38, %v2858
  %v2860 = vsel %vm2857, %v2859, %v2855
  %v2861 = vmul.f32 1.0, %v2860
  %v2862 = vrcp.pop %v2683
  %v2863 = vmul.f32 %v2683, %v2862
  %v2864 = vsub.f32 1.0, %v2863
  %v2865 = vmul.f32 %v2862, %v2864
  %v2866 = vadd.f32 %v2862, %v2865
  %vm2867 = vweird.f32 %v2683
  %vm2868 = vweird.f32 %v2862
  %vm2869 = vmor %vm2867, %vm2868
  %v2870 = vsel %vm2869, %v2862, %v2866
  %v2871 = vand.u32 2147483647, %v2683
  %vm2872 = vcmp.eq.f32.partialorder %v2871, 8.507059e+37
  %v2873 = vand.u32 %v2683, 2147483648
  %v2874 = vor.u32 1.1754944e-38, %v2873
  %v2875 = vsel %vm2872, %v2874, %v2870
  %v2876 = vmul.f32 1.0, %v2875
  %v2877 = vrcp.pop %v2684
  %v2878 = vmul.f32 %v2684, %v2877
  %v2879 = vsub.f32 1.0, %v2878
  %v2880 = vmul.f32 %v2877, %v2879
  %v2881 = vadd.f32 %v2877, %v2880
  %vm2882 = vweird.f32 %v2684
  %vm2883 = vweird.f32 %v2877
  %vm2884 = vmor %vm2882, %vm2883
  %v2885 = vsel %vm2884, %v2877, %v2881
  %v2886 = vand.u32 2147483647, %v2684
  %vm2887 = vcmp.eq.f32.partialorder %v2886, 8.507059e+37
  %v2888 = vand.u32 %v2684, 2147483648
  %v2889 = vor.u32 1.1754944e-38, %v2888
  %v2890 = vsel %vm2887, %v2889, %v2885
  %v2891 = vmul.f32 1.0, %v2890
  %v2892 = vrcp.pop %v2685
  %v2893 = vmul.f32 %v2685, %v2892
  %v2894 = vsub.f32 1.0, %v2893
  %v2895 = vmul.f32 %v2892, %v2894
  %v2896 = vadd.f32 %v2892, %v2895
  %vm2897 = vweird.f32 %v2685
  %vm2898 = vweird.f32 %v2892
  %vm2899 = vmor %vm2897, %vm2898
  %v2900 = vsel %vm2899, %v2892, %v2896
  %v2901 = vand.u32 2147483647, %v2685
  %vm2902 = vcmp.eq.f32.partialorder %v2901, 8.507059e+37
  %v2903 = vand.u32 %v2685, 2147483648
  %v2904 = vor.u32 1.1754944e-38, %v2903
  %v2905 = vsel %vm2902, %v2904, %v2900
  %v2906 = vmul.f32 1.0, %v2905
  %v2907 = vrcp.pop %v2686
  %v2908 = vmul.f32 %v2686, %v2907
  %v2909 = vsub.f32 1.0, %v2908
  %v2910 = vmul.f32 %v2907, %v2909
  %v2911 = vadd.f32 %v2907, %v2910
  %vm2912 = vweird.f32 %v2686
  %vm2913 = vweird.f32 %v2907
  %vm2914 = vmor %vm2912, %vm2913
  %v2915 = vsel %vm2914, %v2907, %v2911
  %v2916 = vand.u32 2147483647, %v2686
  %vm2917 = vcmp.eq.f32.partialorder %v2916, 8.507059e+37
  %v2918 = vand.u32 %v2686, 2147483648
  %v2919 = vor.u32 1.1754944e-38, %v2918
  %v2920 = vsel %vm2917, %v2919, %v2915
  %v2921 = vmul.f32 1.0, %v2920
  %v2922 = vrcp.pop %v2687
  %v2923 = vmul.f32 %v2687, %v2922
  %v2924 = vsub.f32 1.0, %v2923
  %v2925 = vmul.f32 %v2922, %v2924
  %v2926 = vadd.f32 %v2922, %v2925
  %vm2927 = vweird.f32 %v2687
  %vm2928 = vweird.f32 %v2922
  %vm2929 = vmor %vm2927, %vm2928
  %v2930 = vsel %vm2929, %v2922, %v2926
  %v2931 = vand.u32 2147483647, %v2687
  %vm2932 = vcmp.eq.f32.partialorder %v2931, 8.507059e+37
  %v2933 = vand.u32 %v2687, 2147483648
  %v2934 = vor.u32 1.1754944e-38, %v2933
  %v2935 = vsel %vm2932, %v2934, %v2930
  %v2936 = vmul.f32 1.0, %v2935
  %v2937 = vrcp.pop %v2688
  %v2938 = vmul.f32 %v2688, %v2937
  %v2939 = vsub.f32 1.0, %v2938
  %v2940 = vmul.f32 %v2937, %v2939
  %v2941 = vadd.f32 %v2937, %v2940
  %vm2942 = vweird.f32 %v2688
  %vm2943 = vweird.f32 %v2937
  %vm2944 = vmor %vm2942, %vm2943
  %v2945 = vsel %vm2944, %v2937, %v2941
  %v2946 = vand.u32 2147483647, %v2688
  %vm2947 = vcmp.eq.f32.partialorder %v2946, 8.507059e+37
  %v2948 = vand.u32 %v2688, 2147483648
  %v2949 = vor.u32 1.1754944e-38, %v2948
  %v2950 = vsel %vm2947, %v2949, %v2945
  %v2951 = vmul.f32 1.0, %v2950
  %v2952 = vrcp.pop %v2689
  %v2953 = vmul.f32 %v2689, %v2952
  %v2954 = vsub.f32 1.0, %v2953
  %v2955 = vmul.f32 %v2952, %v2954
  %v2956 = vadd.f32 %v2952, %v2955
  %vm2957 = vweird.f32 %v2689
  %vm2958 = vweird.f32 %v2952
  %vm2959 = vmor %vm2957, %vm2958
  %v2960 = vsel %vm2959, %v2952, %v2956
  %v2961 = vand.u32 2147483647, %v2689
  %vm2962 = vcmp.eq.f32.partialorder %v2961, 8.507059e+37
  %v2963 = vand.u32 %v2689, 2147483648
  %v2964 = vor.u32 1.1754944e-38, %v2963
  %v2965 = vsel %vm2962, %v2964, %v2960
  %v2966 = vmul.f32 1.0, %v2965
  %v2967 = vrcp.pop %v2690
  %v2968 = vmul.f32 %v2690, %v2967
  %v2969 = vsub.f32 1.0, %v2968
  %v2970 = vmul.f32 %v2967, %v2969
  %v2971 = vadd.f32 %v2967, %v2970
  %vm2972 = vweird.f32 %v2690
  %vm2973 = vweird.f32 %v2967
  %vm2974 = vmor %vm2972, %vm2973
  %v2975 = vsel %vm2974, %v2967, %v2971
  %v2976 = vand.u32 2147483647, %v2690
  %vm2977 = vcmp.eq.f32.partialorder %v2976, 8.507059e+37
  %v2978 = vand.u32 %v2690, 2147483648
  %v2979 = vor.u32 1.1754944e-38, %v2978
  %v2980 = vsel %vm2977, %v2979, %v2975
  %v2981 = vmul.f32 1.0, %v2980
  %v2982 = vrcp.pop %v2691
  %v2983 = vmul.f32 %v2691, %v2982
  %v2984 = vsub.f32 1.0, %v2983
  %v2985 = vmul.f32 %v2982, %v2984
  %v2986 = vadd.f32 %v2982, %v2985
  %vm2987 = vweird.f32 %v2691
  %vm2988 = vweird.f32 %v2982
  %vm2989 = vmor %vm2987, %vm2988
  %v2990 = vsel %vm2989, %v2982, %v2986
  %v2991 = vand.u32 2147483647, %v2691
  %vm2992 = vcmp.eq.f32.partialorder %v2991, 8.507059e+37
  %v2993 = vand.u32 %v2691, 2147483648
  %v2994 = vor.u32 1.1754944e-38, %v2993
  %v2995 = vsel %vm2992, %v2994, %v2990
  %v2996 = vmul.f32 1.0, %v2995
  %v2997 = vrcp.pop %v2692
  %v2998 = vmul.f32 %v2692, %v2997
  %v2999 = vsub.f32 1.0, %v2998
  %v3000 = vmul.f32 %v2997, %v2999
  %v3001 = vadd.f32 %v2997, %v3000
  %vm3002 = vweird.f32 %v2692
  %vm3003 = vweird.f32 %v2997
  %vm3004 = vmor %vm3002, %vm3003
  %v3005 = vsel %vm3004, %v2997, %v3001
  %v3006 = vand.u32 2147483647, %v2692
  %vm3007 = vcmp.eq.f32.partialorder %v3006, 8.507059e+37
  %v3008 = vand.u32 %v2692, 2147483648
  %v3009 = vor.u32 1.1754944e-38, %v3008
  %v3010 = vsel %vm3007, %v3009, %v3005
  %v3011 = vmul.f32 1.0, %v3010
  %v3012 = vrcp.pop %v2693
  %v3013 = vmul.f32 %v2693, %v3012
  %v3014 = vsub.f32 1.0, %v3013
  %v3015 = vmul.f32 %v3012, %v3014
  %v3016 = vadd.f32 %v3012, %v3015
  %vm3017 = vweird.f32 %v2693
  %vm3018 = vweird.f32 %v3012
  %vm3019 = vmor %vm3017, %vm3018
  %v3020 = vsel %vm3019, %v3012, %v3016
  %v3021 = vand.u32 2147483647, %v2693
  %vm3022 = vcmp.eq.f32.partialorder %v3021, 8.507059e+37
  %v3023 = vand.u32 %v2693, 2147483648
  %v3024 = vor.u32 1.1754944e-38, %v3023
  %v3025 = vsel %vm3022, %v3024, %v3020
  %v3026 = vmul.f32 1.0, %v3025
  %v3027 = vrcp.pop %v2694
  %v3028 = vmul.f32 %v2694, %v3027
  %v3029 = vsub.f32 1.0, %v3028
  %v3030 = vmul.f32 %v3027, %v3029
  %v3031 = vadd.f32 %v3027, %v3030
  %vm3032 = vweird.f32 %v2694
  %vm3033 = vweird.f32 %v3027
  %vm3034 = vmor %vm3032, %vm3033
  %v3035 = vsel %vm3034, %v3027, %v3031
  %v3036 = vand.u32 2147483647, %v2694
  %vm3037 = vcmp.eq.f32.partialorder %v3036, 8.507059e+37
  %v3038 = vand.u32 %v2694, 2147483648
  %v3039 = vor.u32 1.1754944e-38, %v3038
  %v3040 = vsel %vm3037, %v3039, %v3035
  %v3041 = vmul.f32 1.0, %v3040
  %v3042 = vrcp.pop %v2695
  %v3043 = vmul.f32 %v2695, %v3042
  %v3044 = vsub.f32 1.0, %v3043
  %v3045 = vmul.f32 %v3042, %v3044
  %v3046 = vadd.f32 %v3042, %v3045
  %vm3047 = vweird.f32 %v2695
  %vm3048 = vweird.f32 %v3042
  %vm3049 = vmor %vm3047, %vm3048
  %v3050 = vsel %vm3049, %v3042, %v3046
  %v3051 = vand.u32 2147483647, %v2695
  %vm3052 = vcmp.eq.f32.partialorder %v3051, 8.507059e+37
  %v3053 = vand.u32 %v2695, 2147483648
  %v3054 = vor.u32 1.1754944e-38, %v3053
  %v3055 = vsel %vm3052, %v3054, %v3050
  %v3056 = vmul.f32 1.0, %v3055
  %v3057 = vrcp.pop %v2696
  %v3058 = vmul.f32 %v2696, %v3057
  %v3059 = vsub.f32 1.0, %v3058
  %v3060 = vmul.f32 %v3057, %v3059
  %v3061 = vadd.f32 %v3057, %v3060
  %vm3062 = vweird.f32 %v2696
  %vm3063 = vweird.f32 %v3057
  %vm3064 = vmor %vm3062, %vm3063
  %v3065 = vsel %vm3064, %v3057, %v3061
  %v3066 = vand.u32 2147483647, %v2696
  %vm3067 = vcmp.eq.f32.partialorder %v3066, 8.507059e+37
  %v3068 = vand.u32 %v2696, 2147483648
  %v3069 = vor.u32 1.1754944e-38, %v3068
  %v3070 = vsel %vm3067, %v3069, %v3065
  %v3071 = vmul.f32 1.0, %v3070
  %v3072 = vmul.f32 %v2711, 2.0
  %v3073 = vmul.f32 %v2726, 2.0
  %v3074 = vmul.f32 %v2741, 2.0
  %v3075 = vmul.f32 %v2756, 2.0
  %v3076 = vmul.f32 %v2771, 2.0
  %v3077 = vmul.f32 %v2786, 2.0
  %v3078 = vmul.f32 %v2801, 2.0
  %v3079 = vmul.f32 %v2816, 2.0
  %v3080 = vmul.f32 %v2831, 2.0
  %v3081 = vmul.f32 %v2846, 2.0
  %v3082 = vmul.f32 %v2861, 2.0
  %v3083 = vmul.f32 %v2876, 2.0
  %v3084 = vmul.f32 %v2891, 2.0
  %v3085 = vmul.f32 %v2906, 2.0
  %v3086 = vmul.f32 %v2921, 2.0
  %v3087 = vmul.f32 %v2936, 2.0
  %v3088 = vmul.f32 %v2951, 2.0
  %v3089 = vmul.f32 %v2966, 2.0
  %v3090 = vmul.f32 %v2981, 2.0
  %v3091 = vmul.f32 %v2996, 2.0
  %v3092 = vmul.f32 %v3011, 2.0
  %v3093 = vmul.f32 %v3026, 2.0
  %v3094 = vmul.f32 %v3041, 2.0
  %v3095 = vmul.f32 %v3056, 2.0
  %v3096 = vmul.f32 %v3071, 2.0
  %v3097 = vsub.f32 %v3072, 1.0
  %v3098 = vsub.f32 %v3073, 1.0
  %v3099 = vsub.f32 %v3074, 1.0
  %v3100 = vsub.f32 %v3075, 1.0
  %v3101 = vsub.f32 %v3076, 1.0
  %v3102 = vsub.f32 %v3077, 1.0
  %v3103 = vsub.f32 %v3078, 1.0
  %v3104 = vsub.f32 %v3079, 1.0
  %v3105 = vsub.f32 %v3080, 1.0
  %v3106 = vsub.f32 %v3081, 1.0
  %v3107 = vsub.f32 %v3082, 1.0
  %v3108 = vsub.f32 %v3083, 1.0
  %v3109 = vsub.f32 %v3084, 1.0
  %v3110 = vsub.f32 %v3085, 1.0
  %v3111 = vsub.f32 %v3086, 1.0
  %v3112 = vsub.f32 %v3087, 1.0
  %v3113 = vsub.f32 %v3088, 1.0
  %v3114 = vsub.f32 %v3089, 1.0
  %v3115 = vsub.f32 %v3090, 1.0
  %v3116 = vsub.f32 %v3091, 1.0
  %v3117 = vsub.f32 %v3092, 1.0
  %v3118 = vsub.f32 %v3093, 1.0
  %v3119 = vsub.f32 %v3094, 1.0
  %v3120 = vsub.f32 %v3095, 1.0
  %v3121 = vsub.f32 %v3096, 1.0
  %v3122 = vmul.f32 %v2711, %v2154
  %v3123 = vmul.f32 %v2726, %v2155
  %v3124 = vmul.f32 %v2741, %v2156
  %v3125 = vmul.f32 %v2756, %v2157
  %v3126 = vmul.f32 %v2771, %v2158
  %v3127 = vmul.f32 %v2786, %v2159
  %v3128 = vmul.f32 %v2801, %v2160
  %v3129 = vmul.f32 %v2816, %v2161
  %v3130 = vmul.f32 %v2831, %v2162
  %v3131 = vmul.f32 %v2846, %v2163
  %v3132 = vmul.f32 %v2861, %v2164
  %v3133 = vmul.f32 %v2876, %v2165
  %v3134 = vmul.f32 %v2891, %v2166
  %v3135 = vmul.f32 %v2906, %v2167
  %v3136 = vmul.f32 %v2921, %v2168
  %v3137 = vmul.f32 %v2936, %v2169
  %v3138 = vmul.f32 %v2951, %v2170
  %v3139 = vmul.f32 %v2966, %v2171
  %v3140 = vmul.f32 %v2981, %v2172
  %v3141 = vmul.f32 %v2996, %v2173
  %v3142 = vmul.f32 %v3011, %v2174
  %v3143 = vmul.f32 %v3026, %v2175
  %v3144 = vmul.f32 %v3041, %v2176
  %v3145 = vmul.f32 %v3056, %v2177
  %v3146 = vmul.f32 %v3071, %v2178
  %3172 = vrot.lane.b32.xlu0 %v3097, 32
  %v3173 = vpop.permute.xlu0 %3172
  %3174 = vrot.lane.b32.xlu0 %v3098, 32
  %v3175 = vpop.permute.xlu0 %3174
  %3176 = vrot.lane.b32.xlu0 %v3099, 32
  %v3177 = vpop.permute.xlu0 %3176
  %3178 = vrot.lane.b32.xlu0 %v3100, 32
  %v3179 = vpop.permute.xlu0 %3178
  %3180 = vrot.lane.b32.xlu0 %v3101, 32
  %v3181 = vpop.permute.xlu0 %3180
  %3182 = vrot.lane.b32.xlu0 %v3102, 32
  %v3183 = vpop.permute.xlu0 %3182
  %3184 = vrot.lane.b32.xlu0 %v3103, 32
  %v3185 = vpop.permute.xlu0 %3184
  %3186 = vrot.lane.b32.xlu0 %v3104, 32
  %v3187 = vpop.permute.xlu0 %3186
  %3188 = vrot.lane.b32.xlu0 %v3105, 32
  %v3189 = vpop.permute.xlu0 %3188
  %3190 = vrot.lane.b32.xlu0 %v3106, 32
  %v3191 = vpop.permute.xlu0 %3190
  %3192 = vrot.lane.b32.xlu0 %v3107, 32
  %v3193 = vpop.permute.xlu0 %3192
  %3194 = vrot.lane.b32.xlu0 %v3108, 32
  %v3195 = vpop.permute.xlu0 %3194
  %3196 = vrot.lane.b32.xlu0 %v3109, 32
  %v3197 = vpop.permute.xlu0 %3196
  %3198 = vrot.lane.b32.xlu0 %v3110, 32
  %v3199 = vpop.permute.xlu0 %3198
  %3200 = vrot.lane.b32.xlu0 %v3111, 32
  %v3201 = vpop.permute.xlu0 %3200
  %3202 = vrot.lane.b32.xlu0 %v3112, 32
  %v3203 = vpop.permute.xlu0 %3202
  %3204 = vrot.lane.b32.xlu0 %v3113, 32
  %v3205 = vpop.permute.xlu0 %3204
  %3206 = vrot.lane.b32.xlu0 %v3114, 32
  %v3207 = vpop.permute.xlu0 %3206
  %3208 = vrot.lane.b32.xlu0 %v3115, 32
  %v3209 = vpop.permute.xlu0 %3208
  %3210 = vrot.lane.b32.xlu0 %v3116, 32
  %v3211 = vpop.permute.xlu0 %3210
  %3212 = vrot.lane.b32.xlu0 %v3117, 32
  %v3213 = vpop.permute.xlu0 %3212
  %3214 = vrot.lane.b32.xlu0 %v3118, 32
  %v3215 = vpop.permute.xlu0 %3214
  %3216 = vrot.lane.b32.xlu0 %v3119, 32
  %v3217 = vpop.permute.xlu0 %3216
  %3218 = vrot.lane.b32.xlu0 %v3120, 32
  %v3219 = vpop.permute.xlu0 %3218
  %3220 = vrot.lane.b32.xlu0 %v3121, 32
  %v3221 = vpop.permute.xlu0 %3220
  %v3247 = vmul.f32 %v2711, %v3173
  %v3248 = vmul.f32 %v2726, %v3175
  %v3249 = vmul.f32 %v2741, %v3177
  %v3250 = vmul.f32 %v2756, %v3179
  %v3251 = vmul.f32 %v2771, %v3181
  %v3252 = vmul.f32 %v2786, %v3183
  %v3253 = vmul.f32 %v2801, %v3185
  %v3254 = vmul.f32 %v2816, %v3187
  %v3255 = vmul.f32 %v2831, %v3189
  %v3256 = vmul.f32 %v2846, %v3191
  %v3257 = vmul.f32 %v2861, %v3193
  %v3258 = vmul.f32 %v2876, %v3195
  %v3259 = vmul.f32 %v2891, %v3197
  %v3260 = vmul.f32 %v2906, %v3199
  %v3261 = vmul.f32 %v2921, %v3201
  %v3262 = vmul.f32 %v2936, %v3203
  %v3263 = vmul.f32 %v2951, %v3205
  %v3264 = vmul.f32 %v2966, %v3207
  %v3265 = vmul.f32 %v2981, %v3209
  %v3266 = vmul.f32 %v2996, %v3211
  %v3267 = vmul.f32 %v3011, %v3213
  %v3268 = vmul.f32 %v3026, %v3215
  %v3269 = vmul.f32 %v3041, %v3217
  %v3270 = vmul.f32 %v3056, %v3219
  %v3271 = vmul.f32 %v3071, %v3221
  %3297 = vrot.lane.b32.xlu0 %v3247, 32
  %v3298 = vpop.permute.xlu0 %3297
  %3299 = vrot.lane.b32.xlu0 %v3248, 32
  %v3300 = vpop.permute.xlu0 %3299
  %3301 = vrot.lane.b32.xlu0 %v3249, 32
  %v3302 = vpop.permute.xlu0 %3301
  %3303 = vrot.lane.b32.xlu0 %v3250, 32
  %v3304 = vpop.permute.xlu0 %3303
  %3305 = vrot.lane.b32.xlu0 %v3251, 32
  %v3306 = vpop.permute.xlu0 %3305
  %3307 = vrot.lane.b32.xlu0 %v3252, 32
  %v3308 = vpop.permute.xlu0 %3307
  %3309 = vrot.lane.b32.xlu0 %v3253, 32
  %v3310 = vpop.permute.xlu0 %3309
  %3311 = vrot.lane.b32.xlu0 %v3254, 32
  %v3312 = vpop.permute.xlu0 %3311
  %3313 = vrot.lane.b32.xlu0 %v3255, 32
  %v3314 = vpop.permute.xlu0 %3313
  %3315 = vrot.lane.b32.xlu0 %v3256, 32
  %v3316 = vpop.permute.xlu0 %3315
  %3317 = vrot.lane.b32.xlu0 %v3257, 32
  %v3318 = vpop.permute.xlu0 %3317
  %3319 = vrot.lane.b32.xlu0 %v3258, 32
  %v3320 = vpop.permute.xlu0 %3319
  %3321 = vrot.lane.b32.xlu0 %v3259, 32
  %v3322 = vpop.permute.xlu0 %3321
  %3323 = vrot.lane.b32.xlu0 %v3260, 32
  %v3324 = vpop.permute.xlu0 %3323
  %3325 = vrot.lane.b32.xlu0 %v3261, 32
  %v3326 = vpop.permute.xlu0 %3325
  %3327 = vrot.lane.b32.xlu0 %v3262, 32
  %v3328 = vpop.permute.xlu0 %3327
  %3329 = vrot.lane.b32.xlu0 %v3263, 32
  %v3330 = vpop.permute.xlu0 %3329
  %3331 = vrot.lane.b32.xlu0 %v3264, 32
  %v3332 = vpop.permute.xlu0 %3331
  %3333 = vrot.lane.b32.xlu0 %v3265, 32
  %v3334 = vpop.permute.xlu0 %3333
  %3335 = vrot.lane.b32.xlu0 %v3266, 32
  %v3336 = vpop.permute.xlu0 %3335
  %3337 = vrot.lane.b32.xlu0 %v3267, 32
  %v3338 = vpop.permute.xlu0 %3337
  %3339 = vrot.lane.b32.xlu0 %v3268, 32
  %v3340 = vpop.permute.xlu0 %3339
  %3341 = vrot.lane.b32.xlu0 %v3269, 32
  %v3342 = vpop.permute.xlu0 %3341
  %3343 = vrot.lane.b32.xlu0 %v3270, 32
  %v3344 = vpop.permute.xlu0 %3343
  %3345 = vrot.lane.b32.xlu0 %v3271, 32
  %v3346 = vpop.permute.xlu0 %3345
  %v3372 = vadd.f32 %v3122, %v3298
  %v3373 = vadd.f32 %v3123, %v3300
  %v3374 = vadd.f32 %v3124, %v3302
  %v3375 = vadd.f32 %v3125, %v3304
  %v3376 = vadd.f32 %v3126, %v3306
  %v3377 = vadd.f32 %v3127, %v3308
  %v3378 = vadd.f32 %v3128, %v3310
  %v3379 = vadd.f32 %v3129, %v3312
  %v3380 = vadd.f32 %v3130, %v3314
  %v3381 = vadd.f32 %v3131, %v3316
  %v3382 = vadd.f32 %v3132, %v3318
  %v3383 = vadd.f32 %v3133, %v3320
  %v3384 = vadd.f32 %v3134, %v3322
  %v3385 = vadd.f32 %v3135, %v3324
  %v3386 = vadd.f32 %v3136, %v3326
  %v3387 = vadd.f32 %v3137, %v3328
  %v3388 = vadd.f32 %v3138, %v3330
  %v3389 = vadd.f32 %v3139, %v3332
  %v3390 = vadd.f32 %v3140, %v3334
  %v3391 = vadd.f32 %v3141, %v3336
  %v3392 = vadd.f32 %v3142, %v3338
  %v3393 = vadd.f32 %v3143, %v3340
  %v3394 = vadd.f32 %v3144, %v3342
  %v3395 = vadd.f32 %v3145, %v3344
  %v3396 = vadd.f32 %v3146, %v3346
  %v3397 = vtanh.pop %v3372
  %v3398 = vtanh.pop %v3373
  %v3399 = vtanh.pop %v3374
  %v3400 = vtanh.pop %v3375
  %v3401 = vtanh.pop %v3376
  %v3402 = vtanh.pop %v3377
  %v3403 = vtanh.pop %v3378
  %v3404 = vtanh.pop %v3379
  %v3405 = vtanh.pop %v3380
  %v3406 = vtanh.pop %v3381
  %v3407 = vtanh.pop %v3382
  %v3408 = vtanh.pop %v3383
  %v3409 = vtanh.pop %v3384
  %v3410 = vtanh.pop %v3385
  %v3411 = vtanh.pop %v3386
  %v3412 = vtanh.pop %v3387
  %v3413 = vtanh.pop %v3388
  %v3414 = vtanh.pop %v3389
  %v3415 = vtanh.pop %v3390
  %v3416 = vtanh.pop %v3391
  %v3417 = vtanh.pop %v3392
  %v3418 = vtanh.pop %v3393
  %v3419 = vtanh.pop %v3394
  %v3420 = vtanh.pop %v3395
  %v3421 = vtanh.pop %v3396
  %3447 = vrot.lane.b32.xlu0 %v3397, 32
  %v3448 = vpop.permute.xlu0 %3447
  %3449 = vrot.lane.b32.xlu0 %v3398, 32
  %v3450 = vpop.permute.xlu0 %3449
  %3451 = vrot.lane.b32.xlu0 %v3399, 32
  %v3452 = vpop.permute.xlu0 %3451
  %3453 = vrot.lane.b32.xlu0 %v3400, 32
  %v3454 = vpop.permute.xlu0 %3453
  %3455 = vrot.lane.b32.xlu0 %v3401, 32
  %v3456 = vpop.permute.xlu0 %3455
  %3457 = vrot.lane.b32.xlu0 %v3402, 32
  %v3458 = vpop.permute.xlu0 %3457
  %3459 = vrot.lane.b32.xlu0 %v3403, 32
  %v3460 = vpop.permute.xlu0 %3459
  %3461 = vrot.lane.b32.xlu0 %v3404, 32
  %v3462 = vpop.permute.xlu0 %3461
  %3463 = vrot.lane.b32.xlu0 %v3405, 32
  %v3464 = vpop.permute.xlu0 %3463
  %3465 = vrot.lane.b32.xlu0 %v3406, 32
  %v3466 = vpop.permute.xlu0 %3465
  %3467 = vrot.lane.b32.xlu0 %v3407, 32
  %v3468 = vpop.permute.xlu0 %3467
  %3469 = vrot.lane.b32.xlu0 %v3408, 32
  %v3470 = vpop.permute.xlu0 %3469
  %3471 = vrot.lane.b32.xlu0 %v3409, 32
  %v3472 = vpop.permute.xlu0 %3471
  %3473 = vrot.lane.b32.xlu0 %v3410, 32
  %v3474 = vpop.permute.xlu0 %3473
  %3475 = vrot.lane.b32.xlu0 %v3411, 32
  %v3476 = vpop.permute.xlu0 %3475
  %3477 = vrot.lane.b32.xlu0 %v3412, 32
  %v3478 = vpop.permute.xlu0 %3477
  %3479 = vrot.lane.b32.xlu0 %v3413, 32
  %v3480 = vpop.permute.xlu0 %3479
  %3481 = vrot.lane.b32.xlu0 %v3414, 32
  %v3482 = vpop.permute.xlu0 %3481
  %3483 = vrot.lane.b32.xlu0 %v3415, 32
  %v3484 = vpop.permute.xlu0 %3483
  %3485 = vrot.lane.b32.xlu0 %v3416, 32
  %v3486 = vpop.permute.xlu0 %3485
  %3487 = vrot.lane.b32.xlu0 %v3417, 32
  %v3488 = vpop.permute.xlu0 %3487
  %3489 = vrot.lane.b32.xlu0 %v3418, 32
  %v3490 = vpop.permute.xlu0 %3489
  %3491 = vrot.lane.b32.xlu0 %v3419, 32
  %v3492 = vpop.permute.xlu0 %3491
  %3493 = vrot.lane.b32.xlu0 %v3420, 32
  %v3494 = vpop.permute.xlu0 %3493
  %3495 = vrot.lane.b32.xlu0 %v3421, 32
  %v3496 = vpop.permute.xlu0 %3495
  %v3522 = vmul.f32 %v2711, %v3448
  %v3523 = vmul.f32 %v2726, %v3450
  %v3524 = vmul.f32 %v2741, %v3452
  %v3525 = vmul.f32 %v2756, %v3454
  %v3526 = vmul.f32 %v2771, %v3456
  %v3527 = vmul.f32 %v2786, %v3458
  %v3528 = vmul.f32 %v2801, %v3460
  %v3529 = vmul.f32 %v2816, %v3462
  %v3530 = vmul.f32 %v2831, %v3464
  %v3531 = vmul.f32 %v2846, %v3466
  %v3532 = vmul.f32 %v2861, %v3468
  %v3533 = vmul.f32 %v2876, %v3470
  %v3534 = vmul.f32 %v2891, %v3472
  %v3535 = vmul.f32 %v2906, %v3474
  %v3536 = vmul.f32 %v2921, %v3476
  %v3537 = vmul.f32 %v2936, %v3478
  %v3538 = vmul.f32 %v2951, %v3480
  %v3539 = vmul.f32 %v2966, %v3482
  %v3540 = vmul.f32 %v2981, %v3484
  %v3541 = vmul.f32 %v2996, %v3486
  %v3542 = vmul.f32 %v3011, %v3488
  %v3543 = vmul.f32 %v3026, %v3490
  %v3544 = vmul.f32 %v3041, %v3492
  %v3545 = vmul.f32 %v3056, %v3494
  %v3546 = vmul.f32 %v3071, %v3496
  %s3547 = scalar_lea.vmem %s0, 600
  %v3548 = vld [vmem:[%s3547] sm:$0xff]
  %v3549 = vld [vmem:[%s3547 + $0x8] sm:$0xff]
  %v3550 = vld [vmem:[%s3547 + $0x10] sm:$0xff]
  %v3551 = vld [vmem:[%s3547 + $0x18] sm:$0xff]
  %v3552 = vld [vmem:[%s3547 + $0x20] sm:$0xff]
  %v3553 = vld [vmem:[%s3547 + $0x28] sm:$0xff]
  %v3554 = vld [vmem:[%s3547 + $0x30] sm:$0xff]
  %v3555 = vld [vmem:[%s3547 + $0x38] sm:$0xff]
  %v3556 = vld [vmem:[%s3547 + $0x40] sm:$0xff]
  %v3557 = vld [vmem:[%s3547 + $0x48] sm:$0xff]
  %v3558 = vld [vmem:[%s3547 + $0x50] sm:$0xff]
  %v3559 = vld [vmem:[%s3547 + $0x58] sm:$0xff]
  %v3560 = vld [vmem:[%s3547 + $0x60] sm:$0xff]
  %v3561 = vld [vmem:[%s3547 + $0x68] sm:$0xff]
  %v3562 = vld [vmem:[%s3547 + $0x70] sm:$0xff]
  %v3563 = vld [vmem:[%s3547 + $0x78] sm:$0xff]
  %v3564 = vld [vmem:[%s3547 + $0x80] sm:$0xff]
  %v3565 = vld [vmem:[%s3547 + $0x88] sm:$0xff]
  %v3566 = vld [vmem:[%s3547 + $0x90] sm:$0xff]
  %v3567 = vld [vmem:[%s3547 + $0x98] sm:$0xff]
  %v3568 = vld [vmem:[%s3547 + $0xa0] sm:$0xff]
  %v3569 = vld [vmem:[%s3547 + $0xa8] sm:$0xff]
  %v3570 = vld [vmem:[%s3547 + $0xb0] sm:$0xff]
  %v3571 = vld [vmem:[%s3547 + $0xb8] sm:$0xff]
  %v3572 = vld [vmem:[%s3547 + $0xc0] sm:$0xff]
  %3598 = vrot.lane.b32.xlu0 %v3522, 64
  %v3599 = vpop.permute.xlu0 %3598
  %3600 = vrot.lane.b32.xlu0 %v3523, 64
  %v3601 = vpop.permute.xlu0 %3600
  %3602 = vrot.lane.b32.xlu0 %v3524, 64
  %v3603 = vpop.permute.xlu0 %3602
  %3604 = vrot.lane.b32.xlu0 %v3525, 64
  %v3605 = vpop.permute.xlu0 %3604
  %3606 = vrot.lane.b32.xlu0 %v3526, 64
  %v3607 = vpop.permute.xlu0 %3606
  %3608 = vrot.lane.b32.xlu0 %v3527, 64
  %v3609 = vpop.permute.xlu0 %3608
  %3610 = vrot.lane.b32.xlu0 %v3528, 64
  %v3611 = vpop.permute.xlu0 %3610
  %3612 = vrot.lane.b32.xlu0 %v3529, 64
  %v3613 = vpop.permute.xlu0 %3612
  %3614 = vrot.lane.b32.xlu0 %v3530, 64
  %v3615 = vpop.permute.xlu0 %3614
  %3616 = vrot.lane.b32.xlu0 %v3531, 64
  %v3617 = vpop.permute.xlu0 %3616
  %3618 = vrot.lane.b32.xlu0 %v3532, 64
  %v3619 = vpop.permute.xlu0 %3618
  %3620 = vrot.lane.b32.xlu0 %v3533, 64
  %v3621 = vpop.permute.xlu0 %3620
  %3622 = vrot.lane.b32.xlu0 %v3534, 64
  %v3623 = vpop.permute.xlu0 %3622
  %3624 = vrot.lane.b32.xlu0 %v3535, 64
  %v3625 = vpop.permute.xlu0 %3624
  %3626 = vrot.lane.b32.xlu0 %v3536, 64
  %v3627 = vpop.permute.xlu0 %3626
  %3628 = vrot.lane.b32.xlu0 %v3537, 64
  %v3629 = vpop.permute.xlu0 %3628
  %3630 = vrot.lane.b32.xlu0 %v3538, 64
  %v3631 = vpop.permute.xlu0 %3630
  %3632 = vrot.lane.b32.xlu0 %v3539, 64
  %v3633 = vpop.permute.xlu0 %3632
  %3634 = vrot.lane.b32.xlu0 %v3540, 64
  %v3635 = vpop.permute.xlu0 %3634
  %3636 = vrot.lane.b32.xlu0 %v3541, 64
  %v3637 = vpop.permute.xlu0 %3636
  %3638 = vrot.lane.b32.xlu0 %v3542, 64
  %v3639 = vpop.permute.xlu0 %3638
  %3640 = vrot.lane.b32.xlu0 %v3543, 64
  %v3641 = vpop.permute.xlu0 %3640
  %3642 = vrot.lane.b32.xlu0 %v3544, 64
  %v3643 = vpop.permute.xlu0 %3642
  %3644 = vrot.lane.b32.xlu0 %v3545, 64
  %v3645 = vpop.permute.xlu0 %3644
  %3646 = vrot.lane.b32.xlu0 %v3546, 64
  %v3647 = vpop.permute.xlu0 %3646
  %v3648 = vsel %vm40, %v3599, 0
  %v3650 = vsel %vm40, %v3601, 0
  %v3652 = vsel %vm40, %v3603, 0
  %v3654 = vsel %vm40, %v3605, 0
  %v3656 = vsel %vm40, %v3607, 0
  %v3658 = vsel %vm40, %v3609, 0
  %v3660 = vsel %vm40, %v3611, 0
  %v3662 = vsel %vm40, %v3613, 0
  %v3664 = vsel %vm40, %v3615, 0
  %v3666 = vsel %vm40, %v3617, 0
  %v3668 = vsel %vm40, %v3619, 0
  %v3670 = vsel %vm40, %v3621, 0
  %v3672 = vsel %vm40, %v3623, 0
  %v3674 = vsel %vm40, %v3625, 0
  %v3676 = vsel %vm40, %v3627, 0
  %v3678 = vsel %vm40, %v3629, 0
  %v3680 = vsel %vm40, %v3631, 0
  %v3682 = vsel %vm40, %v3633, 0
  %v3684 = vsel %vm40, %v3635, 0
  %v3686 = vsel %vm40, %v3637, 0
  %v3688 = vsel %vm40, %v3639, 0
  %v3690 = vsel %vm40, %v3641, 0
  %v3692 = vsel %vm40, %v3643, 0
  %v3694 = vsel %vm40, %v3645, 0
  %v3696 = vsel %vm40, %v3647, 0
  %3698 = vmatpush.msra.mxu0 0.0
  %3699 = vmatpush.msra.mxu0 0.0
  %3700 = vmatpush.msra.mxu0 0.0
  %3701 = vmatpush.msra.mxu0 0.0
  %3702 = vmatpush.msra.mxu0 0.0
  %3703 = vmatpush.msra.mxu0 0.0
  %3704 = vmatpush.msra.mxu0 0.0
  %3705 = vmatpush.msra.mxu0 0.0
  %3706 = vmatpush.msra.mxu0 0.0
  %3707 = vmatpush.msra.mxu0 0.0
  %3708 = vmatpush.msra.mxu0 0.0
  %3709 = vmatpush.msra.mxu0 0.0
  %3710 = vmatpush.msra.mxu0 %v39
  %3711 = vmatpush.msra.mxu0 %v38
  %3712 = vmatpush.msra.mxu0 %v37
  %3713 = vmatpush.msra.mxu0 %v36
  %3714 = vmatmul.f32.gmra.mxu0 %v3648
  %v3715 = vpop.f32.mrf.mxu0
  %v3716 = vadd.f32 0.0, %v3715
  %3717 = vmatmul.f32.gmra.mxu0 %v3650
  %v3718 = vpop.f32.mrf.mxu0
  %v3719 = vadd.f32 0.0, %v3718
  %3720 = vmatmul.f32.gmra.mxu0 %v3652
  %v3721 = vpop.f32.mrf.mxu0
  %v3722 = vadd.f32 0.0, %v3721
  %3723 = vmatmul.f32.gmra.mxu0 %v3654
  %v3724 = vpop.f32.mrf.mxu0
  %v3725 = vadd.f32 0.0, %v3724
  %3726 = vmatmul.f32.gmra.mxu0 %v3656
  %v3727 = vpop.f32.mrf.mxu0
  %v3728 = vadd.f32 0.0, %v3727
  %3729 = vmatmul.f32.gmra.mxu0 %v3658
  %v3730 = vpop.f32.mrf.mxu0
  %v3731 = vadd.f32 0.0, %v3730
  %3732 = vmatmul.f32.gmra.mxu0 %v3660
  %v3733 = vpop.f32.mrf.mxu0
  %v3734 = vadd.f32 0.0, %v3733
  %3735 = vmatmul.f32.gmra.mxu0 %v3662
  %v3736 = vpop.f32.mrf.mxu0
  %v3737 = vadd.f32 0.0, %v3736
  %3738 = vmatmul.f32.gmra.mxu0 %v3664
  %v3739 = vpop.f32.mrf.mxu0
  %v3740 = vadd.f32 0.0, %v3739
  %3741 = vmatmul.f32.gmra.mxu0 %v3666
  %v3742 = vpop.f32.mrf.mxu0
  %v3743 = vadd.f32 0.0, %v3742
  %3744 = vmatmul.f32.gmra.mxu0 %v3668
  %v3745 = vpop.f32.mrf.mxu0
  %v3746 = vadd.f32 0.0, %v3745
  %3747 = vmatmul.f32.gmra.mxu0 %v3670
  %v3748 = vpop.f32.mrf.mxu0
  %v3749 = vadd.f32 0.0, %v3748
  %3750 = vmatmul.f32.gmra.mxu0 %v3672
  %v3751 = vpop.f32.mrf.mxu0
  %v3752 = vadd.f32 0.0, %v3751
  %3753 = vmatmul.f32.gmra.mxu0 %v3674
  %v3754 = vpop.f32.mrf.mxu0
  %v3755 = vadd.f32 0.0, %v3754
  %3756 = vmatmul.f32.gmra.mxu0 %v3676
  %v3757 = vpop.f32.mrf.mxu0
  %v3758 = vadd.f32 0.0, %v3757
  %3759 = vmatmul.f32.gmra.mxu0 %v3678
  %v3760 = vpop.f32.mrf.mxu0
  %v3761 = vadd.f32 0.0, %v3760
  %3762 = vmatmul.f32.gmra.mxu0 %v3680
  %v3763 = vpop.f32.mrf.mxu0
  %v3764 = vadd.f32 0.0, %v3763
  %3765 = vmatmul.f32.gmra.mxu0 %v3682
  %v3766 = vpop.f32.mrf.mxu0
  %v3767 = vadd.f32 0.0, %v3766
  %3768 = vmatmul.f32.gmra.mxu0 %v3684
  %v3769 = vpop.f32.mrf.mxu0
  %v3770 = vadd.f32 0.0, %v3769
  %3771 = vmatmul.f32.gmra.mxu0 %v3686
  %v3772 = vpop.f32.mrf.mxu0
  %v3773 = vadd.f32 0.0, %v3772
  %3774 = vmatmul.f32.gmra.mxu0 %v3688
  %v3775 = vpop.f32.mrf.mxu0
  %v3776 = vadd.f32 0.0, %v3775
  %3777 = vmatmul.f32.gmra.mxu0 %v3690
  %v3778 = vpop.f32.mrf.mxu0
  %v3779 = vadd.f32 0.0, %v3778
  %3780 = vmatmul.f32.gmra.mxu0 %v3692
  %v3781 = vpop.f32.mrf.mxu0
  %v3782 = vadd.f32 0.0, %v3781
  %3783 = vmatmul.f32.gmra.mxu0 %v3694
  %v3784 = vpop.f32.mrf.mxu0
  %v3785 = vadd.f32 0.0, %v3784
  %3786 = vmatmul.f32.gmra.mxu0 %v3696
  %v3787 = vpop.f32.mrf.mxu0
  %v3788 = vadd.f32 0.0, %v3787
  %3789 = vdwg.mxu0
  %v3790 = vadd.f32 %v3548, %v3716
  %v3791 = vadd.f32 %v3549, %v3719
  %v3792 = vadd.f32 %v3550, %v3722
  %v3793 = vadd.f32 %v3551, %v3725
  %v3794 = vadd.f32 %v3552, %v3728
  %v3795 = vadd.f32 %v3553, %v3731
  %v3796 = vadd.f32 %v3554, %v3734
  %v3797 = vadd.f32 %v3555, %v3737
  %v3798 = vadd.f32 %v3556, %v3740
  %v3799 = vadd.f32 %v3557, %v3743
  %v3800 = vadd.f32 %v3558, %v3746
  %v3801 = vadd.f32 %v3559, %v3749
  %v3802 = vadd.f32 %v3560, %v3752
  %v3803 = vadd.f32 %v3561, %v3755
  %v3804 = vadd.f32 %v3562, %v3758
  %v3805 = vadd.f32 %v3563, %v3761
  %v3806 = vadd.f32 %v3564, %v3764
  %v3807 = vadd.f32 %v3565, %v3767
  %v3808 = vadd.f32 %v3566, %v3770
  %v3809 = vadd.f32 %v3567, %v3773
  %v3810 = vadd.f32 %v3568, %v3776
  %v3811 = vadd.f32 %v3569, %v3779
  %v3812 = vadd.f32 %v3570, %v3782
  %v3813 = vadd.f32 %v3571, %v3785
  %v3814 = vadd.f32 %v3572, %v3788
  %v3815 = vxor.u32 %v3790, 2147483648
  %v3816 = vxor.u32 %v3791, 2147483648
  %v3817 = vxor.u32 %v3792, 2147483648
  %v3818 = vxor.u32 %v3793, 2147483648
  %v3819 = vxor.u32 %v3794, 2147483648
  %v3820 = vxor.u32 %v3795, 2147483648
  %v3821 = vxor.u32 %v3796, 2147483648
  %v3822 = vxor.u32 %v3797, 2147483648
  %v3823 = vxor.u32 %v3798, 2147483648
  %v3824 = vxor.u32 %v3799, 2147483648
  %v3825 = vxor.u32 %v3800, 2147483648
  %v3826 = vxor.u32 %v3801, 2147483648
  %v3827 = vxor.u32 %v3802, 2147483648
  %v3828 = vxor.u32 %v3803, 2147483648
  %v3829 = vxor.u32 %v3804, 2147483648
  %v3830 = vxor.u32 %v3805, 2147483648
  %v3831 = vxor.u32 %v3806, 2147483648
  %v3832 = vxor.u32 %v3807, 2147483648
  %v3833 = vxor.u32 %v3808, 2147483648
  %v3834 = vxor.u32 %v3809, 2147483648
  %v3835 = vxor.u32 %v3810, 2147483648
  %v3836 = vxor.u32 %v3811, 2147483648
  %v3837 = vxor.u32 %v3812, 2147483648
  %v3838 = vxor.u32 %v3813, 2147483648
  %v3839 = vxor.u32 %v3814, 2147483648
  %v3840 = vmul.f32 %v3815, 1.442695
  %v3841 = vpow.pop %v3840
  %v3842 = vmul.f32 %v3816, 1.442695
  %v3843 = vpow.pop %v3842
  %v3844 = vmul.f32 %v3817, 1.442695
  %v3845 = vpow.pop %v3844
  %v3846 = vmul.f32 %v3818, 1.442695
  %v3847 = vpow.pop %v3846
  %v3848 = vmul.f32 %v3819, 1.442695
  %v3849 = vpow.pop %v3848
  %v3850 = vmul.f32 %v3820, 1.442695
  %v3851 = vpow.pop %v3850
  %v3852 = vmul.f32 %v3821, 1.442695
  %v3853 = vpow.pop %v3852
  %v3854 = vmul.f32 %v3822, 1.442695
  %v3855 = vpow.pop %v3854
  %v3856 = vmul.f32 %v3823, 1.442695
  %v3857 = vpow.pop %v3856
  %v3858 = vmul.f32 %v3824, 1.442695
  %v3859 = vpow.pop %v3858
  %v3860 = vmul.f32 %v3825, 1.442695
  %v3861 = vpow.pop %v3860
  %v3862 = vmul.f32 %v3826, 1.442695
  %v3863 = vpow.pop %v3862
  %v3864 = vmul.f32 %v3827, 1.442695
  %v3865 = vpow.pop %v3864
  %v3866 = vmul.f32 %v3828, 1.442695
  %v3867 = vpow.pop %v3866
  %v3868 = vmul.f32 %v3829, 1.442695
  %v3869 = vpow.pop %v3868
  %v3870 = vmul.f32 %v3830, 1.442695
  %v3871 = vpow.pop %v3870
  %v3872 = vmul.f32 %v3831, 1.442695
  %v3873 = vpow.pop %v3872
  %v3874 = vmul.f32 %v3832, 1.442695
  %v3875 = vpow.pop %v3874
  %v3876 = vmul.f32 %v3833, 1.442695
  %v3877 = vpow.pop %v3876
  %v3878 = vmul.f32 %v3834, 1.442695
  %v3879 = vpow.pop %v3878
  %v3880 = vmul.f32 %v3835, 1.442695
  %v3881 = vpow.pop %v3880
  %v3882 = vmul.f32 %v3836, 1.442695
  %v3883 = vpow.pop %v3882
  %v3884 = vmul.f32 %v3837, 1.442695
  %v3885 = vpow.pop %v3884
  %v3886 = vmul.f32 %v3838, 1.442695
  %v3887 = vpow.pop %v3886
  %v3888 = vmul.f32 %v3839, 1.442695
  %v3889 = vpow.pop %v3888
  %v3890 = vadd.f32 %v3841, 1.0
  %v3891 = vadd.f32 %v3843, 1.0
  %v3892 = vadd.f32 %v3845, 1.0
  %v3893 = vadd.f32 %v3847, 1.0
  %v3894 = vadd.f32 %v3849, 1.0
  %v3895 = vadd.f32 %v3851, 1.0
  %v3896 = vadd.f32 %v3853, 1.0
  %v3897 = vadd.f32 %v3855, 1.0
  %v3898 = vadd.f32 %v3857, 1.0
  %v3899 = vadd.f32 %v3859, 1.0
  %v3900 = vadd.f32 %v3861, 1.0
  %v3901 = vadd.f32 %v3863, 1.0
  %v3902 = vadd.f32 %v3865, 1.0
  %v3903 = vadd.f32 %v3867, 1.0
  %v3904 = vadd.f32 %v3869, 1.0
  %v3905 = vadd.f32 %v3871, 1.0
  %v3906 = vadd.f32 %v3873, 1.0
  %v3907 = vadd.f32 %v3875, 1.0
  %v3908 = vadd.f32 %v3877, 1.0
  %v3909 = vadd.f32 %v3879, 1.0
  %v3910 = vadd.f32 %v3881, 1.0
  %v3911 = vadd.f32 %v3883, 1.0
  %v3912 = vadd.f32 %v3885, 1.0
  %v3913 = vadd.f32 %v3887, 1.0
  %v3914 = vadd.f32 %v3889, 1.0
  %v3915 = vrcp.pop %v3890
  %v3916 = vmul.f32 %v3890, %v3915
  %v3917 = vsub.f32 1.0, %v3916
  %v3918 = vmul.f32 %v3915, %v3917
  %v3919 = vadd.f32 %v3915, %v3918
  %vm3920 = vweird.f32 %v3890
  %vm3921 = vweird.f32 %v3915
  %vm3922 = vmor %vm3920, %vm3921
  %v3923 = vsel %vm3922, %v3915, %v3919
  %v3924 = vand.u32 2147483647, %v3890
  %vm3925 = vcmp.eq.f32.partialorder %v3924, 8.507059e+37
  %v3926 = vand.u32 %v3890, 2147483648
  %v3927 = vor.u32 1.1754944e-38, %v3926
  %v3928 = vsel %vm3925, %v3927, %v3923
  %v3929 = vmul.f32 1.0, %v3928
  %v3930 = vrcp.pop %v3891
  %v3931 = vmul.f32 %v3891, %v3930
  %v3932 = vsub.f32 1.0, %v3931
  %v3933 = vmul.f32 %v3930, %v3932
  %v3934 = vadd.f32 %v3930, %v3933
  %vm3935 = vweird.f32 %v3891
  %vm3936 = vweird.f32 %v3930
  %vm3937 = vmor %vm3935, %vm3936
  %v3938 = vsel %vm3937, %v3930, %v3934
  %v3939 = vand.u32 2147483647, %v3891
  %vm3940 = vcmp.eq.f32.partialorder %v3939, 8.507059e+37
  %v3941 = vand.u32 %v3891, 2147483648
  %v3942 = vor.u32 1.1754944e-38, %v3941
  %v3943 = vsel %vm3940, %v3942, %v3938
  %v3944 = vmul.f32 1.0, %v3943
  %v3945 = vrcp.pop %v3892
  %v3946 = vmul.f32 %v3892, %v3945
  %v3947 = vsub.f32 1.0, %v3946
  %v3948 = vmul.f32 %v3945, %v3947
  %v3949 = vadd.f32 %v3945, %v3948
  %vm3950 = vweird.f32 %v3892
  %vm3951 = vweird.f32 %v3945
  %vm3952 = vmor %vm3950, %vm3951
  %v3953 = vsel %vm3952, %v3945, %v3949
  %v3954 = vand.u32 2147483647, %v3892
  %vm3955 = vcmp.eq.f32.partialorder %v3954, 8.507059e+37
  %v3956 = vand.u32 %v3892, 2147483648
  %v3957 = vor.u32 1.1754944e-38, %v3956
  %v3958 = vsel %vm3955, %v3957, %v3953
  %v3959 = vmul.f32 1.0, %v3958
  %v3960 = vrcp.pop %v3893
  %v3961 = vmul.f32 %v3893, %v3960
  %v3962 = vsub.f32 1.0, %v3961
  %v3963 = vmul.f32 %v3960, %v3962
  %v3964 = vadd.f32 %v3960, %v3963
  %vm3965 = vweird.f32 %v3893
  %vm3966 = vweird.f32 %v3960
  %vm3967 = vmor %vm3965, %vm3966
  %v3968 = vsel %vm3967, %v3960, %v3964
  %v3969 = vand.u32 2147483647, %v3893
  %vm3970 = vcmp.eq.f32.partialorder %v3969, 8.507059e+37
  %v3971 = vand.u32 %v3893, 2147483648
  %v3972 = vor.u32 1.1754944e-38, %v3971
  %v3973 = vsel %vm3970, %v3972, %v3968
  %v3974 = vmul.f32 1.0, %v3973
  %v3975 = vrcp.pop %v3894
  %v3976 = vmul.f32 %v3894, %v3975
  %v3977 = vsub.f32 1.0, %v3976
  %v3978 = vmul.f32 %v3975, %v3977
  %v3979 = vadd.f32 %v3975, %v3978
  %vm3980 = vweird.f32 %v3894
  %vm3981 = vweird.f32 %v3975
  %vm3982 = vmor %vm3980, %vm3981
  %v3983 = vsel %vm3982, %v3975, %v3979
  %v3984 = vand.u32 2147483647, %v3894
  %vm3985 = vcmp.eq.f32.partialorder %v3984, 8.507059e+37
  %v3986 = vand.u32 %v3894, 2147483648
  %v3987 = vor.u32 1.1754944e-38, %v3986
  %v3988 = vsel %vm3985, %v3987, %v3983
  %v3989 = vmul.f32 1.0, %v3988
  %v3990 = vrcp.pop %v3895
  %v3991 = vmul.f32 %v3895, %v3990
  %v3992 = vsub.f32 1.0, %v3991
  %v3993 = vmul.f32 %v3990, %v3992
  %v3994 = vadd.f32 %v3990, %v3993
  %vm3995 = vweird.f32 %v3895
  %vm3996 = vweird.f32 %v3990
  %vm3997 = vmor %vm3995, %vm3996
  %v3998 = vsel %vm3997, %v3990, %v3994
  %v3999 = vand.u32 2147483647, %v3895
  %vm4000 = vcmp.eq.f32.partialorder %v3999, 8.507059e+37
  %v4001 = vand.u32 %v3895, 2147483648
  %v4002 = vor.u32 1.1754944e-38, %v4001
  %v4003 = vsel %vm4000, %v4002, %v3998
  %v4004 = vmul.f32 1.0, %v4003
  %v4005 = vrcp.pop %v3896
  %v4006 = vmul.f32 %v3896, %v4005
  %v4007 = vsub.f32 1.0, %v4006
  %v4008 = vmul.f32 %v4005, %v4007
  %v4009 = vadd.f32 %v4005, %v4008
  %vm4010 = vweird.f32 %v3896
  %vm4011 = vweird.f32 %v4005
  %vm4012 = vmor %vm4010, %vm4011
  %v4013 = vsel %vm4012, %v4005, %v4009
  %v4014 = vand.u32 2147483647, %v3896
  %vm4015 = vcmp.eq.f32.partialorder %v4014, 8.507059e+37
  %v4016 = vand.u32 %v3896, 2147483648
  %v4017 = vor.u32 1.1754944e-38, %v4016
  %v4018 = vsel %vm4015, %v4017, %v4013
  %v4019 = vmul.f32 1.0, %v4018
  %v4020 = vrcp.pop %v3897
  %v4021 = vmul.f32 %v3897, %v4020
  %v4022 = vsub.f32 1.0, %v4021
  %v4023 = vmul.f32 %v4020, %v4022
  %v4024 = vadd.f32 %v4020, %v4023
  %vm4025 = vweird.f32 %v3897
  %vm4026 = vweird.f32 %v4020
  %vm4027 = vmor %vm4025, %vm4026
  %v4028 = vsel %vm4027, %v4020, %v4024
  %v4029 = vand.u32 2147483647, %v3897
  %vm4030 = vcmp.eq.f32.partialorder %v4029, 8.507059e+37
  %v4031 = vand.u32 %v3897, 2147483648
  %v4032 = vor.u32 1.1754944e-38, %v4031
  %v4033 = vsel %vm4030, %v4032, %v4028
  %v4034 = vmul.f32 1.0, %v4033
  %v4035 = vrcp.pop %v3898
  %v4036 = vmul.f32 %v3898, %v4035
  %v4037 = vsub.f32 1.0, %v4036
  %v4038 = vmul.f32 %v4035, %v4037
  %v4039 = vadd.f32 %v4035, %v4038
  %vm4040 = vweird.f32 %v3898
  %vm4041 = vweird.f32 %v4035
  %vm4042 = vmor %vm4040, %vm4041
  %v4043 = vsel %vm4042, %v4035, %v4039
  %v4044 = vand.u32 2147483647, %v3898
  %vm4045 = vcmp.eq.f32.partialorder %v4044, 8.507059e+37
  %v4046 = vand.u32 %v3898, 2147483648
  %v4047 = vor.u32 1.1754944e-38, %v4046
  %v4048 = vsel %vm4045, %v4047, %v4043
  %v4049 = vmul.f32 1.0, %v4048
  %v4050 = vrcp.pop %v3899
  %v4051 = vmul.f32 %v3899, %v4050
  %v4052 = vsub.f32 1.0, %v4051
  %v4053 = vmul.f32 %v4050, %v4052
  %v4054 = vadd.f32 %v4050, %v4053
  %vm4055 = vweird.f32 %v3899
  %vm4056 = vweird.f32 %v4050
  %vm4057 = vmor %vm4055, %vm4056
  %v4058 = vsel %vm4057, %v4050, %v4054
  %v4059 = vand.u32 2147483647, %v3899
  %vm4060 = vcmp.eq.f32.partialorder %v4059, 8.507059e+37
  %v4061 = vand.u32 %v3899, 2147483648
  %v4062 = vor.u32 1.1754944e-38, %v4061
  %v4063 = vsel %vm4060, %v4062, %v4058
  %v4064 = vmul.f32 1.0, %v4063
  %v4065 = vrcp.pop %v3900
  %v4066 = vmul.f32 %v3900, %v4065
  %v4067 = vsub.f32 1.0, %v4066
  %v4068 = vmul.f32 %v4065, %v4067
  %v4069 = vadd.f32 %v4065, %v4068
  %vm4070 = vweird.f32 %v3900
  %vm4071 = vweird.f32 %v4065
  %vm4072 = vmor %vm4070, %vm4071
  %v4073 = vsel %vm4072, %v4065, %v4069
  %v4074 = vand.u32 2147483647, %v3900
  %vm4075 = vcmp.eq.f32.partialorder %v4074, 8.507059e+37
  %v4076 = vand.u32 %v3900, 2147483648
  %v4077 = vor.u32 1.1754944e-38, %v4076
  %v4078 = vsel %vm4075, %v4077, %v4073
  %v4079 = vmul.f32 1.0, %v4078
  %v4080 = vrcp.pop %v3901
  %v4081 = vmul.f32 %v3901, %v4080
  %v4082 = vsub.f32 1.0, %v4081
  %v4083 = vmul.f32 %v4080, %v4082
  %v4084 = vadd.f32 %v4080, %v4083
  %vm4085 = vweird.f32 %v3901
  %vm4086 = vweird.f32 %v4080
  %vm4087 = vmor %vm4085, %vm4086
  %v4088 = vsel %vm4087, %v4080, %v4084
  %v4089 = vand.u32 2147483647, %v3901
  %vm4090 = vcmp.eq.f32.partialorder %v4089, 8.507059e+37
  %v4091 = vand.u32 %v3901, 2147483648
  %v4092 = vor.u32 1.1754944e-38, %v4091
  %v4093 = vsel %vm4090, %v4092, %v4088
  %v4094 = vmul.f32 1.0, %v4093
  %v4095 = vrcp.pop %v3902
  %v4096 = vmul.f32 %v3902, %v4095
  %v4097 = vsub.f32 1.0, %v4096
  %v4098 = vmul.f32 %v4095, %v4097
  %v4099 = vadd.f32 %v4095, %v4098
  %vm4100 = vweird.f32 %v3902
  %vm4101 = vweird.f32 %v4095
  %vm4102 = vmor %vm4100, %vm4101
  %v4103 = vsel %vm4102, %v4095, %v4099
  %v4104 = vand.u32 2147483647, %v3902
  %vm4105 = vcmp.eq.f32.partialorder %v4104, 8.507059e+37
  %v4106 = vand.u32 %v3902, 2147483648
  %v4107 = vor.u32 1.1754944e-38, %v4106
  %v4108 = vsel %vm4105, %v4107, %v4103
  %v4109 = vmul.f32 1.0, %v4108
  %v4110 = vrcp.pop %v3903
  %v4111 = vmul.f32 %v3903, %v4110
  %v4112 = vsub.f32 1.0, %v4111
  %v4113 = vmul.f32 %v4110, %v4112
  %v4114 = vadd.f32 %v4110, %v4113
  %vm4115 = vweird.f32 %v3903
  %vm4116 = vweird.f32 %v4110
  %vm4117 = vmor %vm4115, %vm4116
  %v4118 = vsel %vm4117, %v4110, %v4114
  %v4119 = vand.u32 2147483647, %v3903
  %vm4120 = vcmp.eq.f32.partialorder %v4119, 8.507059e+37
  %v4121 = vand.u32 %v3903, 2147483648
  %v4122 = vor.u32 1.1754944e-38, %v4121
  %v4123 = vsel %vm4120, %v4122, %v4118
  %v4124 = vmul.f32 1.0, %v4123
  %v4125 = vrcp.pop %v3904
  %v4126 = vmul.f32 %v3904, %v4125
  %v4127 = vsub.f32 1.0, %v4126
  %v4128 = vmul.f32 %v4125, %v4127
  %v4129 = vadd.f32 %v4125, %v4128
  %vm4130 = vweird.f32 %v3904
  %vm4131 = vweird.f32 %v4125
  %vm4132 = vmor %vm4130, %vm4131
  %v4133 = vsel %vm4132, %v4125, %v4129
  %v4134 = vand.u32 2147483647, %v3904
  %vm4135 = vcmp.eq.f32.partialorder %v4134, 8.507059e+37
  %v4136 = vand.u32 %v3904, 2147483648
  %v4137 = vor.u32 1.1754944e-38, %v4136
  %v4138 = vsel %vm4135, %v4137, %v4133
  %v4139 = vmul.f32 1.0, %v4138
  %v4140 = vrcp.pop %v3905
  %v4141 = vmul.f32 %v3905, %v4140
  %v4142 = vsub.f32 1.0, %v4141
  %v4143 = vmul.f32 %v4140, %v4142
  %v4144 = vadd.f32 %v4140, %v4143
  %vm4145 = vweird.f32 %v3905
  %vm4146 = vweird.f32 %v4140
  %vm4147 = vmor %vm4145, %vm4146
  %v4148 = vsel %vm4147, %v4140, %v4144
  %v4149 = vand.u32 2147483647, %v3905
  %vm4150 = vcmp.eq.f32.partialorder %v4149, 8.507059e+37
  %v4151 = vand.u32 %v3905, 2147483648
  %v4152 = vor.u32 1.1754944e-38, %v4151
  %v4153 = vsel %vm4150, %v4152, %v4148
  %v4154 = vmul.f32 1.0, %v4153
  %v4155 = vrcp.pop %v3906
  %v4156 = vmul.f32 %v3906, %v4155
  %v4157 = vsub.f32 1.0, %v4156
  %v4158 = vmul.f32 %v4155, %v4157
  %v4159 = vadd.f32 %v4155, %v4158
  %vm4160 = vweird.f32 %v3906
  %vm4161 = vweird.f32 %v4155
  %vm4162 = vmor %vm4160, %vm4161
  %v4163 = vsel %vm4162, %v4155, %v4159
  %v4164 = vand.u32 2147483647, %v3906
  %vm4165 = vcmp.eq.f32.partialorder %v4164, 8.507059e+37
  %v4166 = vand.u32 %v3906, 2147483648
  %v4167 = vor.u32 1.1754944e-38, %v4166
  %v4168 = vsel %vm4165, %v4167, %v4163
  %v4169 = vmul.f32 1.0, %v4168
  %v4170 = vrcp.pop %v3907
  %v4171 = vmul.f32 %v3907, %v4170
  %v4172 = vsub.f32 1.0, %v4171
  %v4173 = vmul.f32 %v4170, %v4172
  %v4174 = vadd.f32 %v4170, %v4173
  %vm4175 = vweird.f32 %v3907
  %vm4176 = vweird.f32 %v4170
  %vm4177 = vmor %vm4175, %vm4176
  %v4178 = vsel %vm4177, %v4170, %v4174
  %v4179 = vand.u32 2147483647, %v3907
  %vm4180 = vcmp.eq.f32.partialorder %v4179, 8.507059e+37
  %v4181 = vand.u32 %v3907, 2147483648
  %v4182 = vor.u32 1.1754944e-38, %v4181
  %v4183 = vsel %vm4180, %v4182, %v4178
  %v4184 = vmul.f32 1.0, %v4183
  %v4185 = vrcp.pop %v3908
  %v4186 = vmul.f32 %v3908, %v4185
  %v4187 = vsub.f32 1.0, %v4186
  %v4188 = vmul.f32 %v4185, %v4187
  %v4189 = vadd.f32 %v4185, %v4188
  %vm4190 = vweird.f32 %v3908
  %vm4191 = vweird.f32 %v4185
  %vm4192 = vmor %vm4190, %vm4191
  %v4193 = vsel %vm4192, %v4185, %v4189
  %v4194 = vand.u32 2147483647, %v3908
  %vm4195 = vcmp.eq.f32.partialorder %v4194, 8.507059e+37
  %v4196 = vand.u32 %v3908, 2147483648
  %v4197 = vor.u32 1.1754944e-38, %v4196
  %v4198 = vsel %vm4195, %v4197, %v4193
  %v4199 = vmul.f32 1.0, %v4198
  %v4200 = vrcp.pop %v3909
  %v4201 = vmul.f32 %v3909, %v4200
  %v4202 = vsub.f32 1.0, %v4201
  %v4203 = vmul.f32 %v4200, %v4202
  %v4204 = vadd.f32 %v4200, %v4203
  %vm4205 = vweird.f32 %v3909
  %vm4206 = vweird.f32 %v4200
  %vm4207 = vmor %vm4205, %vm4206
  %v4208 = vsel %vm4207, %v4200, %v4204
  %v4209 = vand.u32 2147483647, %v3909
  %vm4210 = vcmp.eq.f32.partialorder %v4209, 8.507059e+37
  %v4211 = vand.u32 %v3909, 2147483648
  %v4212 = vor.u32 1.1754944e-38, %v4211
  %v4213 = vsel %vm4210, %v4212, %v4208
  %v4214 = vmul.f32 1.0, %v4213
  %v4215 = vrcp.pop %v3910
  %v4216 = vmul.f32 %v3910, %v4215
  %v4217 = vsub.f32 1.0, %v4216
  %v4218 = vmul.f32 %v4215, %v4217
  %v4219 = vadd.f32 %v4215, %v4218
  %vm4220 = vweird.f32 %v3910
  %vm4221 = vweird.f32 %v4215
  %vm4222 = vmor %vm4220, %vm4221
  %v4223 = vsel %vm4222, %v4215, %v4219
  %v4224 = vand.u32 2147483647, %v3910
  %vm4225 = vcmp.eq.f32.partialorder %v4224, 8.507059e+37
  %v4226 = vand.u32 %v3910, 2147483648
  %v4227 = vor.u32 1.1754944e-38, %v4226
  %v4228 = vsel %vm4225, %v4227, %v4223
  %v4229 = vmul.f32 1.0, %v4228
  %v4230 = vrcp.pop %v3911
  %v4231 = vmul.f32 %v3911, %v4230
  %v4232 = vsub.f32 1.0, %v4231
  %v4233 = vmul.f32 %v4230, %v4232
  %v4234 = vadd.f32 %v4230, %v4233
  %vm4235 = vweird.f32 %v3911
  %vm4236 = vweird.f32 %v4230
  %vm4237 = vmor %vm4235, %vm4236
  %v4238 = vsel %vm4237, %v4230, %v4234
  %v4239 = vand.u32 2147483647, %v3911
  %vm4240 = vcmp.eq.f32.partialorder %v4239, 8.507059e+37
  %v4241 = vand.u32 %v3911, 2147483648
  %v4242 = vor.u32 1.1754944e-38, %v4241
  %v4243 = vsel %vm4240, %v4242, %v4238
  %v4244 = vmul.f32 1.0, %v4243
  %v4245 = vrcp.pop %v3912
  %v4246 = vmul.f32 %v3912, %v4245
  %v4247 = vsub.f32 1.0, %v4246
  %v4248 = vmul.f32 %v4245, %v4247
  %v4249 = vadd.f32 %v4245, %v4248
  %vm4250 = vweird.f32 %v3912
  %vm4251 = vweird.f32 %v4245
  %vm4252 = vmor %vm4250, %vm4251
  %v4253 = vsel %vm4252, %v4245, %v4249
  %v4254 = vand.u32 2147483647, %v3912
  %vm4255 = vcmp.eq.f32.partialorder %v4254, 8.507059e+37
  %v4256 = vand.u32 %v3912, 2147483648
  %v4257 = vor.u32 1.1754944e-38, %v4256
  %v4258 = vsel %vm4255, %v4257, %v4253
  %v4259 = vmul.f32 1.0, %v4258
  %v4260 = vrcp.pop %v3913
  %v4261 = vmul.f32 %v3913, %v4260
  %v4262 = vsub.f32 1.0, %v4261
  %v4263 = vmul.f32 %v4260, %v4262
  %v4264 = vadd.f32 %v4260, %v4263
  %vm4265 = vweird.f32 %v3913
  %vm4266 = vweird.f32 %v4260
  %vm4267 = vmor %vm4265, %vm4266
  %v4268 = vsel %vm4267, %v4260, %v4264
  %v4269 = vand.u32 2147483647, %v3913
  %vm4270 = vcmp.eq.f32.partialorder %v4269, 8.507059e+37
  %v4271 = vand.u32 %v3913, 2147483648
  %v4272 = vor.u32 1.1754944e-38, %v4271
  %v4273 = vsel %vm4270, %v4272, %v4268
  %v4274 = vmul.f32 1.0, %v4273
  %v4275 = vrcp.pop %v3914
  %v4276 = vmul.f32 %v3914, %v4275
  %v4277 = vsub.f32 1.0, %v4276
  %v4278 = vmul.f32 %v4275, %v4277
  %v4279 = vadd.f32 %v4275, %v4278
  %vm4280 = vweird.f32 %v3914
  %vm4281 = vweird.f32 %v4275
  %vm4282 = vmor %vm4280, %vm4281
  %v4283 = vsel %vm4282, %v4275, %v4279
  %v4284 = vand.u32 2147483647, %v3914
  %vm4285 = vcmp.eq.f32.partialorder %v4284, 8.507059e+37
  %v4286 = vand.u32 %v3914, 2147483648
  %v4287 = vor.u32 1.1754944e-38, %v4286
  %v4288 = vsel %vm4285, %v4287, %v4283
  %v4289 = vmul.f32 1.0, %v4288
  %v4290 = vmul.f32 %v3929, 2.0
  %v4291 = vmul.f32 %v3944, 2.0
  %v4292 = vmul.f32 %v3959, 2.0
  %v4293 = vmul.f32 %v3974, 2.0
  %v4294 = vmul.f32 %v3989, 2.0
  %v4295 = vmul.f32 %v4004, 2.0
  %v4296 = vmul.f32 %v4019, 2.0
  %v4297 = vmul.f32 %v4034, 2.0
  %v4298 = vmul.f32 %v4049, 2.0
  %v4299 = vmul.f32 %v4064, 2.0
  %v4300 = vmul.f32 %v4079, 2.0
  %v4301 = vmul.f32 %v4094, 2.0
  %v4302 = vmul.f32 %v4109, 2.0
  %v4303 = vmul.f32 %v4124, 2.0
  %v4304 = vmul.f32 %v4139, 2.0
  %v4305 = vmul.f32 %v4154, 2.0
  %v4306 = vmul.f32 %v4169, 2.0
  %v4307 = vmul.f32 %v4184, 2.0
  %v4308 = vmul.f32 %v4199, 2.0
  %v4309 = vmul.f32 %v4214, 2.0
  %v4310 = vmul.f32 %v4229, 2.0
  %v4311 = vmul.f32 %v4244, 2.0
  %v4312 = vmul.f32 %v4259, 2.0
  %v4313 = vmul.f32 %v4274, 2.0
  %v4314 = vmul.f32 %v4289, 2.0
  %v4315 = vsub.f32 %v4290, 1.0
  %v4316 = vsub.f32 %v4291, 1.0
  %v4317 = vsub.f32 %v4292, 1.0
  %v4318 = vsub.f32 %v4293, 1.0
  %v4319 = vsub.f32 %v4294, 1.0
  %v4320 = vsub.f32 %v4295, 1.0
  %v4321 = vsub.f32 %v4296, 1.0
  %v4322 = vsub.f32 %v4297, 1.0
  %v4323 = vsub.f32 %v4298, 1.0
  %v4324 = vsub.f32 %v4299, 1.0
  %v4325 = vsub.f32 %v4300, 1.0
  %v4326 = vsub.f32 %v4301, 1.0
  %v4327 = vsub.f32 %v4302, 1.0
  %v4328 = vsub.f32 %v4303, 1.0
  %v4329 = vsub.f32 %v4304, 1.0
  %v4330 = vsub.f32 %v4305, 1.0
  %v4331 = vsub.f32 %v4306, 1.0
  %v4332 = vsub.f32 %v4307, 1.0
  %v4333 = vsub.f32 %v4308, 1.0
  %v4334 = vsub.f32 %v4309, 1.0
  %v4335 = vsub.f32 %v4310, 1.0
  %v4336 = vsub.f32 %v4311, 1.0
  %v4337 = vsub.f32 %v4312, 1.0
  %v4338 = vsub.f32 %v4313, 1.0
  %v4339 = vsub.f32 %v4314, 1.0
  %v4340 = vmul.f32 %v3929, %v3372
  %v4341 = vmul.f32 %v3944, %v3373
  %v4342 = vmul.f32 %v3959, %v3374
  %v4343 = vmul.f32 %v3974, %v3375
  %v4344 = vmul.f32 %v3989, %v3376
  %v4345 = vmul.f32 %v4004, %v3377
  %v4346 = vmul.f32 %v4019, %v3378
  %v4347 = vmul.f32 %v4034, %v3379
  %v4348 = vmul.f32 %v4049, %v3380
  %v4349 = vmul.f32 %v4064, %v3381
  %v4350 = vmul.f32 %v4079, %v3382
  %v4351 = vmul.f32 %v4094, %v3383
  %v4352 = vmul.f32 %v4109, %v3384
  %v4353 = vmul.f32 %v4124, %v3385
  %v4354 = vmul.f32 %v4139, %v3386
  %v4355 = vmul.f32 %v4154, %v3387
  %v4356 = vmul.f32 %v4169, %v3388
  %v4357 = vmul.f32 %v4184, %v3389
  %v4358 = vmul.f32 %v4199, %v3390
  %v4359 = vmul.f32 %v4214, %v3391
  %v4360 = vmul.f32 %v4229, %v3392
  %v4361 = vmul.f32 %v4244, %v3393
  %v4362 = vmul.f32 %v4259, %v3394
  %v4363 = vmul.f32 %v4274, %v3395
  %v4364 = vmul.f32 %v4289, %v3396
  %4390 = vrot.lane.b32.xlu0 %v4315, 32
  %v4391 = vpop.permute.xlu0 %4390
  %4392 = vrot.lane.b32.xlu0 %v4316, 32
  %v4393 = vpop.permute.xlu0 %4392
  %4394 = vrot.lane.b32.xlu0 %v4317, 32
  %v4395 = vpop.permute.xlu0 %4394
  %4396 = vrot.lane.b32.xlu0 %v4318, 32
  %v4397 = vpop.permute.xlu0 %4396
  %4398 = vrot.lane.b32.xlu0 %v4319, 32
  %v4399 = vpop.permute.xlu0 %4398
  %4400 = vrot.lane.b32.xlu0 %v4320, 32
  %v4401 = vpop.permute.xlu0 %4400
  %4402 = vrot.lane.b32.xlu0 %v4321, 32
  %v4403 = vpop.permute.xlu0 %4402
  %4404 = vrot.lane.b32.xlu0 %v4322, 32
  %v4405 = vpop.permute.xlu0 %4404
  %4406 = vrot.lane.b32.xlu0 %v4323, 32
  %v4407 = vpop.permute.xlu0 %4406
  %4408 = vrot.lane.b32.xlu0 %v4324, 32
  %v4409 = vpop.permute.xlu0 %4408
  %4410 = vrot.lane.b32.xlu0 %v4325, 32
  %v4411 = vpop.permute.xlu0 %4410
  %4412 = vrot.lane.b32.xlu0 %v4326, 32
  %v4413 = vpop.permute.xlu0 %4412
  %4414 = vrot.lane.b32.xlu0 %v4327, 32
  %v4415 = vpop.permute.xlu0 %4414
  %4416 = vrot.lane.b32.xlu0 %v4328, 32
  %v4417 = vpop.permute.xlu0 %4416
  %4418 = vrot.lane.b32.xlu0 %v4329, 32
  %v4419 = vpop.permute.xlu0 %4418
  %4420 = vrot.lane.b32.xlu0 %v4330, 32
  %v4421 = vpop.permute.xlu0 %4420
  %4422 = vrot.lane.b32.xlu0 %v4331, 32
  %v4423 = vpop.permute.xlu0 %4422
  %4424 = vrot.lane.b32.xlu0 %v4332, 32
  %v4425 = vpop.permute.xlu0 %4424
  %4426 = vrot.lane.b32.xlu0 %v4333, 32
  %v4427 = vpop.permute.xlu0 %4426
  %4428 = vrot.lane.b32.xlu0 %v4334, 32
  %v4429 = vpop.permute.xlu0 %4428
  %4430 = vrot.lane.b32.xlu0 %v4335, 32
  %v4431 = vpop.permute.xlu0 %4430
  %4432 = vrot.lane.b32.xlu0 %v4336, 32
  %v4433 = vpop.permute.xlu0 %4432
  %4434 = vrot.lane.b32.xlu0 %v4337, 32
  %v4435 = vpop.permute.xlu0 %4434
  %4436 = vrot.lane.b32.xlu0 %v4338, 32
  %v4437 = vpop.permute.xlu0 %4436
  %4438 = vrot.lane.b32.xlu0 %v4339, 32
  %v4439 = vpop.permute.xlu0 %4438
  %v4465 = vmul.f32 %v3929, %v4391
  %v4466 = vmul.f32 %v3944, %v4393
  %v4467 = vmul.f32 %v3959, %v4395
  %v4468 = vmul.f32 %v3974, %v4397
  %v4469 = vmul.f32 %v3989, %v4399
  %v4470 = vmul.f32 %v4004, %v4401
  %v4471 = vmul.f32 %v4019, %v4403
  %v4472 = vmul.f32 %v4034, %v4405
  %v4473 = vmul.f32 %v4049, %v4407
  %v4474 = vmul.f32 %v4064, %v4409
  %v4475 = vmul.f32 %v4079, %v4411
  %v4476 = vmul.f32 %v4094, %v4413
  %v4477 = vmul.f32 %v4109, %v4415
  %v4478 = vmul.f32 %v4124, %v4417
  %v4479 = vmul.f32 %v4139, %v4419
  %v4480 = vmul.f32 %v4154, %v4421
  %v4481 = vmul.f32 %v4169, %v4423
  %v4482 = vmul.f32 %v4184, %v4425
  %v4483 = vmul.f32 %v4199, %v4427
  %v4484 = vmul.f32 %v4214, %v4429
  %v4485 = vmul.f32 %v4229, %v4431
  %v4486 = vmul.f32 %v4244, %v4433
  %v4487 = vmul.f32 %v4259, %v4435
  %v4488 = vmul.f32 %v4274, %v4437
  %v4489 = vmul.f32 %v4289, %v4439
  %4515 = vrot.lane.b32.xlu0 %v4465, 32
  %v4516 = vpop.permute.xlu0 %4515
  %4517 = vrot.lane.b32.xlu0 %v4466, 32
  %v4518 = vpop.permute.xlu0 %4517
  %4519 = vrot.lane.b32.xlu0 %v4467, 32
  %v4520 = vpop.permute.xlu0 %4519
  %4521 = vrot.lane.b32.xlu0 %v4468, 32
  %v4522 = vpop.permute.xlu0 %4521
  %4523 = vrot.lane.b32.xlu0 %v4469, 32
  %v4524 = vpop.permute.xlu0 %4523
  %4525 = vrot.lane.b32.xlu0 %v4470, 32
  %v4526 = vpop.permute.xlu0 %4525
  %4527 = vrot.lane.b32.xlu0 %v4471, 32
  %v4528 = vpop.permute.xlu0 %4527
  %4529 = vrot.lane.b32.xlu0 %v4472, 32
  %v4530 = vpop.permute.xlu0 %4529
  %4531 = vrot.lane.b32.xlu0 %v4473, 32
  %v4532 = vpop.permute.xlu0 %4531
  %4533 = vrot.lane.b32.xlu0 %v4474, 32
  %v4534 = vpop.permute.xlu0 %4533
  %4535 = vrot.lane.b32.xlu0 %v4475, 32
  %v4536 = vpop.permute.xlu0 %4535
  %4537 = vrot.lane.b32.xlu0 %v4476, 32
  %v4538 = vpop.permute.xlu0 %4537
  %4539 = vrot.lane.b32.xlu0 %v4477, 32
  %v4540 = vpop.permute.xlu0 %4539
  %4541 = vrot.lane.b32.xlu0 %v4478, 32
  %v4542 = vpop.permute.xlu0 %4541
  %4543 = vrot.lane.b32.xlu0 %v4479, 32
  %v4544 = vpop.permute.xlu0 %4543
  %4545 = vrot.lane.b32.xlu0 %v4480, 32
  %v4546 = vpop.permute.xlu0 %4545
  %4547 = vrot.lane.b32.xlu0 %v4481, 32
  %v4548 = vpop.permute.xlu0 %4547
  %4549 = vrot.lane.b32.xlu0 %v4482, 32
  %v4550 = vpop.permute.xlu0 %4549
  %4551 = vrot.lane.b32.xlu0 %v4483, 32
  %v4552 = vpop.permute.xlu0 %4551
  %4553 = vrot.lane.b32.xlu0 %v4484, 32
  %v4554 = vpop.permute.xlu0 %4553
  %4555 = vrot.lane.b32.xlu0 %v4485, 32
  %v4556 = vpop.permute.xlu0 %4555
  %4557 = vrot.lane.b32.xlu0 %v4486, 32
  %v4558 = vpop.permute.xlu0 %4557
  %4559 = vrot.lane.b32.xlu0 %v4487, 32
  %v4560 = vpop.permute.xlu0 %4559
  %4561 = vrot.lane.b32.xlu0 %v4488, 32
  %v4562 = vpop.permute.xlu0 %4561
  %4563 = vrot.lane.b32.xlu0 %v4489, 32
  %v4564 = vpop.permute.xlu0 %4563
  %v4590 = vadd.f32 %v4340, %v4516
  %v4591 = vadd.f32 %v4341, %v4518
  %v4592 = vadd.f32 %v4342, %v4520
  %v4593 = vadd.f32 %v4343, %v4522
  %v4594 = vadd.f32 %v4344, %v4524
  %v4595 = vadd.f32 %v4345, %v4526
  %v4596 = vadd.f32 %v4346, %v4528
  %v4597 = vadd.f32 %v4347, %v4530
  %v4598 = vadd.f32 %v4348, %v4532
  %v4599 = vadd.f32 %v4349, %v4534
  %v4600 = vadd.f32 %v4350, %v4536
  %v4601 = vadd.f32 %v4351, %v4538
  %v4602 = vadd.f32 %v4352, %v4540
  %v4603 = vadd.f32 %v4353, %v4542
  %v4604 = vadd.f32 %v4354, %v4544
  %v4605 = vadd.f32 %v4355, %v4546
  %v4606 = vadd.f32 %v4356, %v4548
  %v4607 = vadd.f32 %v4357, %v4550
  %v4608 = vadd.f32 %v4358, %v4552
  %v4609 = vadd.f32 %v4359, %v4554
  %v4610 = vadd.f32 %v4360, %v4556
  %v4611 = vadd.f32 %v4361, %v4558
  %v4612 = vadd.f32 %v4362, %v4560
  %v4613 = vadd.f32 %v4363, %v4562
  %v4614 = vadd.f32 %v4364, %v4564
  %v4615 = vtanh.pop %v4590
  %v4616 = vtanh.pop %v4591
  %v4617 = vtanh.pop %v4592
  %v4618 = vtanh.pop %v4593
  %v4619 = vtanh.pop %v4594
  %v4620 = vtanh.pop %v4595
  %v4621 = vtanh.pop %v4596
  %v4622 = vtanh.pop %v4597
  %v4623 = vtanh.pop %v4598
  %v4624 = vtanh.pop %v4599
  %v4625 = vtanh.pop %v4600
  %v4626 = vtanh.pop %v4601
  %v4627 = vtanh.pop %v4602
  %v4628 = vtanh.pop %v4603
  %v4629 = vtanh.pop %v4604
  %v4630 = vtanh.pop %v4605
  %v4631 = vtanh.pop %v4606
  %v4632 = vtanh.pop %v4607
  %v4633 = vtanh.pop %v4608
  %v4634 = vtanh.pop %v4609
  %v4635 = vtanh.pop %v4610
  %v4636 = vtanh.pop %v4611
  %v4637 = vtanh.pop %v4612
  %v4638 = vtanh.pop %v4613
  %v4639 = vtanh.pop %v4614
  %4665 = vrot.lane.b32.xlu0 %v4615, 32
  %v4666 = vpop.permute.xlu0 %4665
  %4667 = vrot.lane.b32.xlu0 %v4616, 32
  %v4668 = vpop.permute.xlu0 %4667
  %4669 = vrot.lane.b32.xlu0 %v4617, 32
  %v4670 = vpop.permute.xlu0 %4669
  %4671 = vrot.lane.b32.xlu0 %v4618, 32
  %v4672 = vpop.permute.xlu0 %4671
  %4673 = vrot.lane.b32.xlu0 %v4619, 32
  %v4674 = vpop.permute.xlu0 %4673
  %4675 = vrot.lane.b32.xlu0 %v4620, 32
  %v4676 = vpop.permute.xlu0 %4675
  %4677 = vrot.lane.b32.xlu0 %v4621, 32
  %v4678 = vpop.permute.xlu0 %4677
  %4679 = vrot.lane.b32.xlu0 %v4622, 32
  %v4680 = vpop.permute.xlu0 %4679
  %4681 = vrot.lane.b32.xlu0 %v4623, 32
  %v4682 = vpop.permute.xlu0 %4681
  %4683 = vrot.lane.b32.xlu0 %v4624, 32
  %v4684 = vpop.permute.xlu0 %4683
  %4685 = vrot.lane.b32.xlu0 %v4625, 32
  %v4686 = vpop.permute.xlu0 %4685
  %4687 = vrot.lane.b32.xlu0 %v4626, 32
  %v4688 = vpop.permute.xlu0 %4687
  %4689 = vrot.lane.b32.xlu0 %v4627, 32
  %v4690 = vpop.permute.xlu0 %4689
  %4691 = vrot.lane.b32.xlu0 %v4628, 32
  %v4692 = vpop.permute.xlu0 %4691
  %4693 = vrot.lane.b32.xlu0 %v4629, 32
  %v4694 = vpop.permute.xlu0 %4693
  %4695 = vrot.lane.b32.xlu0 %v4630, 32
  %v4696 = vpop.permute.xlu0 %4695
  %4697 = vrot.lane.b32.xlu0 %v4631, 32
  %v4698 = vpop.permute.xlu0 %4697
  %4699 = vrot.lane.b32.xlu0 %v4632, 32
  %v4700 = vpop.permute.xlu0 %4699
  %4701 = vrot.lane.b32.xlu0 %v4633, 32
  %v4702 = vpop.permute.xlu0 %4701
  %4703 = vrot.lane.b32.xlu0 %v4634, 32
  %v4704 = vpop.permute.xlu0 %4703
  %4705 = vrot.lane.b32.xlu0 %v4635, 32
  %v4706 = vpop.permute.xlu0 %4705
  %4707 = vrot.lane.b32.xlu0 %v4636, 32
  %v4708 = vpop.permute.xlu0 %4707
  %4709 = vrot.lane.b32.xlu0 %v4637, 32
  %v4710 = vpop.permute.xlu0 %4709
  %4711 = vrot.lane.b32.xlu0 %v4638, 32
  %v4712 = vpop.permute.xlu0 %4711
  %4713 = vrot.lane.b32.xlu0 %v4639, 32
  %v4714 = vpop.permute.xlu0 %4713
  %v4740 = vmul.f32 %v3929, %v4666
  %v4741 = vmul.f32 %v3944, %v4668
  %v4742 = vmul.f32 %v3959, %v4670
  %v4743 = vmul.f32 %v3974, %v4672
  %v4744 = vmul.f32 %v3989, %v4674
  %v4745 = vmul.f32 %v4004, %v4676
  %v4746 = vmul.f32 %v4019, %v4678
  %v4747 = vmul.f32 %v4034, %v4680
  %v4748 = vmul.f32 %v4049, %v4682
  %v4749 = vmul.f32 %v4064, %v4684
  %v4750 = vmul.f32 %v4079, %v4686
  %v4751 = vmul.f32 %v4094, %v4688
  %v4752 = vmul.f32 %v4109, %v4690
  %v4753 = vmul.f32 %v4124, %v4692
  %v4754 = vmul.f32 %v4139, %v4694
  %v4755 = vmul.f32 %v4154, %v4696
  %v4756 = vmul.f32 %v4169, %v4698
  %v4757 = vmul.f32 %v4184, %v4700
  %v4758 = vmul.f32 %v4199, %v4702
  %v4759 = vmul.f32 %v4214, %v4704
  %v4760 = vmul.f32 %v4229, %v4706
  %v4761 = vmul.f32 %v4244, %v4708
  %v4762 = vmul.f32 %v4259, %v4710
  %v4763 = vmul.f32 %v4274, %v4712
  %v4764 = vmul.f32 %v4289, %v4714
  %s4765 = scalar_lea.vmem %s0, 800
  %v4766 = vld [vmem:[%s4765] sm:$0xff]
  %v4767 = vld [vmem:[%s4765 + $0x8] sm:$0xff]
  %v4768 = vld [vmem:[%s4765 + $0x10] sm:$0xff]
  %v4769 = vld [vmem:[%s4765 + $0x18] sm:$0xff]
  %v4770 = vld [vmem:[%s4765 + $0x20] sm:$0xff]
  %v4771 = vld [vmem:[%s4765 + $0x28] sm:$0xff]
  %v4772 = vld [vmem:[%s4765 + $0x30] sm:$0xff]
  %v4773 = vld [vmem:[%s4765 + $0x38] sm:$0xff]
  %v4774 = vld [vmem:[%s4765 + $0x40] sm:$0xff]
  %v4775 = vld [vmem:[%s4765 + $0x48] sm:$0xff]
  %v4776 = vld [vmem:[%s4765 + $0x50] sm:$0xff]
  %v4777 = vld [vmem:[%s4765 + $0x58] sm:$0xff]
  %v4778 = vld [vmem:[%s4765 + $0x60] sm:$0xff]
  %v4779 = vld [vmem:[%s4765 + $0x68] sm:$0xff]
  %v4780 = vld [vmem:[%s4765 + $0x70] sm:$0xff]
  %v4781 = vld [vmem:[%s4765 + $0x78] sm:$0xff]
  %v4782 = vld [vmem:[%s4765 + $0x80] sm:$0xff]
  %v4783 = vld [vmem:[%s4765 + $0x88] sm:$0xff]
  %v4784 = vld [vmem:[%s4765 + $0x90] sm:$0xff]
  %v4785 = vld [vmem:[%s4765 + $0x98] sm:$0xff]
  %v4786 = vld [vmem:[%s4765 + $0xa0] sm:$0xff]
  %v4787 = vld [vmem:[%s4765 + $0xa8] sm:$0xff]
  %v4788 = vld [vmem:[%s4765 + $0xb0] sm:$0xff]
  %v4789 = vld [vmem:[%s4765 + $0xb8] sm:$0xff]
  %v4790 = vld [vmem:[%s4765 + $0xc0] sm:$0xff]
  %4816 = vrot.lane.b32.xlu0 %v4740, 64
  %v4817 = vpop.permute.xlu0 %4816
  %4818 = vrot.lane.b32.xlu0 %v4741, 64
  %v4819 = vpop.permute.xlu0 %4818
  %4820 = vrot.lane.b32.xlu0 %v4742, 64
  %v4821 = vpop.permute.xlu0 %4820
  %4822 = vrot.lane.b32.xlu0 %v4743, 64
  %v4823 = vpop.permute.xlu0 %4822
  %4824 = vrot.lane.b32.xlu0 %v4744, 64
  %v4825 = vpop.permute.xlu0 %4824
  %4826 = vrot.lane.b32.xlu0 %v4745, 64
  %v4827 = vpop.permute.xlu0 %4826
  %4828 = vrot.lane.b32.xlu0 %v4746, 64
  %v4829 = vpop.permute.xlu0 %4828
  %4830 = vrot.lane.b32.xlu0 %v4747, 64
  %v4831 = vpop.permute.xlu0 %4830
  %4832 = vrot.lane.b32.xlu0 %v4748, 64
  %v4833 = vpop.permute.xlu0 %4832
  %4834 = vrot.lane.b32.xlu0 %v4749, 64
  %v4835 = vpop.permute.xlu0 %4834
  %4836 = vrot.lane.b32.xlu0 %v4750, 64
  %v4837 = vpop.permute.xlu0 %4836
  %4838 = vrot.lane.b32.xlu0 %v4751, 64
  %v4839 = vpop.permute.xlu0 %4838
  %4840 = vrot.lane.b32.xlu0 %v4752, 64
  %v4841 = vpop.permute.xlu0 %4840
  %4842 = vrot.lane.b32.xlu0 %v4753, 64
  %v4843 = vpop.permute.xlu0 %4842
  %4844 = vrot.lane.b32.xlu0 %v4754, 64
  %v4845 = vpop.permute.xlu0 %4844
  %4846 = vrot.lane.b32.xlu0 %v4755, 64
  %v4847 = vpop.permute.xlu0 %4846
  %4848 = vrot.lane.b32.xlu0 %v4756, 64
  %v4849 = vpop.permute.xlu0 %4848
  %4850 = vrot.lane.b32.xlu0 %v4757, 64
  %v4851 = vpop.permute.xlu0 %4850
  %4852 = vrot.lane.b32.xlu0 %v4758, 64
  %v4853 = vpop.permute.xlu0 %4852
  %4854 = vrot.lane.b32.xlu0 %v4759, 64
  %v4855 = vpop.permute.xlu0 %4854
  %4856 = vrot.lane.b32.xlu0 %v4760, 64
  %v4857 = vpop.permute.xlu0 %4856
  %4858 = vrot.lane.b32.xlu0 %v4761, 64
  %v4859 = vpop.permute.xlu0 %4858
  %4860 = vrot.lane.b32.xlu0 %v4762, 64
  %v4861 = vpop.permute.xlu0 %4860
  %4862 = vrot.lane.b32.xlu0 %v4763, 64
  %v4863 = vpop.permute.xlu0 %4862
  %4864 = vrot.lane.b32.xlu0 %v4764, 64
  %v4865 = vpop.permute.xlu0 %4864
  %v4866 = vsel %vm40, %v4817, 0
  %v4868 = vsel %vm40, %v4819, 0
  %v4870 = vsel %vm40, %v4821, 0
  %v4872 = vsel %vm40, %v4823, 0
  %v4874 = vsel %vm40, %v4825, 0
  %v4876 = vsel %vm40, %v4827, 0
  %v4878 = vsel %vm40, %v4829, 0
  %v4880 = vsel %vm40, %v4831, 0
  %v4882 = vsel %vm40, %v4833, 0
  %v4884 = vsel %vm40, %v4835, 0
  %v4886 = vsel %vm40, %v4837, 0
  %v4888 = vsel %vm40, %v4839, 0
  %v4890 = vsel %vm40, %v4841, 0
  %v4892 = vsel %vm40, %v4843, 0
  %v4894 = vsel %vm40, %v4845, 0
  %v4896 = vsel %vm40, %v4847, 0
  %v4898 = vsel %vm40, %v4849, 0
  %v4900 = vsel %vm40, %v4851, 0
  %v4902 = vsel %vm40, %v4853, 0
  %v4904 = vsel %vm40, %v4855, 0
  %v4906 = vsel %vm40, %v4857, 0
  %v4908 = vsel %vm40, %v4859, 0
  %v4910 = vsel %vm40, %v4861, 0
  %v4912 = vsel %vm40, %v4863, 0
  %v4914 = vsel %vm40, %v4865, 0
  %4916 = vmatpush.msra.mxu0 0.0
  %4917 = vmatpush.msra.mxu0 0.0
  %4918 = vmatpush.msra.mxu0 0.0
  %4919 = vmatpush.msra.mxu0 0.0
  %4920 = vmatpush.msra.mxu0 0.0
  %4921 = vmatpush.msra.mxu0 0.0
  %4922 = vmatpush.msra.mxu0 0.0
  %4923 = vmatpush.msra.mxu0 0.0
  %4924 = vmatpush.msra.mxu0 0.0
  %4925 = vmatpush.msra.mxu0 0.0
  %4926 = vmatpush.msra.mxu0 0.0
  %4927 = vmatpush.msra.mxu0 0.0
  %4928 = vmatpush.msra.mxu0 %v39
  %4929 = vmatpush.msra.mxu0 %v38
  %4930 = vmatpush.msra.mxu0 %v37
  %4931 = vmatpush.msra.mxu0 %v36
  %4932 = vmatmul.f32.gmra.mxu0 %v4866
  %v4933 = vpop.f32.mrf.mxu0
  %v4934 = vadd.f32 0.0, %v4933
  %4935 = vmatmul.f32.gmra.mxu0 %v4868
  %v4936 = vpop.f32.mrf.mxu0
  %v4937 = vadd.f32 0.0, %v4936
  %4938 = vmatmul.f32.gmra.mxu0 %v4870
  %v4939 = vpop.f32.mrf.mxu0
  %v4940 = vadd.f32 0.0, %v4939
  %4941 = vmatmul.f32.gmra.mxu0 %v4872
  %v4942 = vpop.f32.mrf.mxu0
  %v4943 = vadd.f32 0.0, %v4942
  %4944 = vmatmul.f32.gmra.mxu0 %v4874
  %v4945 = vpop.f32.mrf.mxu0
  %v4946 = vadd.f32 0.0, %v4945
  %4947 = vmatmul.f32.gmra.mxu0 %v4876
  %v4948 = vpop.f32.mrf.mxu0
  %v4949 = vadd.f32 0.0, %v4948
  %4950 = vmatmul.f32.gmra.mxu0 %v4878
  %v4951 = vpop.f32.mrf.mxu0
  %v4952 = vadd.f32 0.0, %v4951
  %4953 = vmatmul.f32.gmra.mxu0 %v4880
  %v4954 = vpop.f32.mrf.mxu0
  %v4955 = vadd.f32 0.0, %v4954
  %4956 = vmatmul.f32.gmra.mxu0 %v4882
  %v4957 = vpop.f32.mrf.mxu0
  %v4958 = vadd.f32 0.0, %v4957
  %4959 = vmatmul.f32.gmra.mxu0 %v4884
  %v4960 = vpop.f32.mrf.mxu0
  %v4961 = vadd.f32 0.0, %v4960
  %4962 = vmatmul.f32.gmra.mxu0 %v4886
  %v4963 = vpop.f32.mrf.mxu0
  %v4964 = vadd.f32 0.0, %v4963
  %4965 = vmatmul.f32.gmra.mxu0 %v4888
  %v4966 = vpop.f32.mrf.mxu0
  %v4967 = vadd.f32 0.0, %v4966
  %4968 = vmatmul.f32.gmra.mxu0 %v4890
  %v4969 = vpop.f32.mrf.mxu0
  %v4970 = vadd.f32 0.0, %v4969
  %4971 = vmatmul.f32.gmra.mxu0 %v4892
  %v4972 = vpop.f32.mrf.mxu0
  %v4973 = vadd.f32 0.0, %v4972
  %4974 = vmatmul.f32.gmra.mxu0 %v4894
  %v4975 = vpop.f32.mrf.mxu0
  %v4976 = vadd.f32 0.0, %v4975
  %4977 = vmatmul.f32.gmra.mxu0 %v4896
  %v4978 = vpop.f32.mrf.mxu0
  %v4979 = vadd.f32 0.0, %v4978
  %4980 = vmatmul.f32.gmra.mxu0 %v4898
  %v4981 = vpop.f32.mrf.mxu0
  %v4982 = vadd.f32 0.0, %v4981
  %4983 = vmatmul.f32.gmra.mxu0 %v4900
  %v4984 = vpop.f32.mrf.mxu0
  %v4985 = vadd.f32 0.0, %v4984
  %4986 = vmatmul.f32.gmra.mxu0 %v4902
  %v4987 = vpop.f32.mrf.mxu0
  %v4988 = vadd.f32 0.0, %v4987
  %4989 = vmatmul.f32.gmra.mxu0 %v4904
  %v4990 = vpop.f32.mrf.mxu0
  %v4991 = vadd.f32 0.0, %v4990
  %4992 = vmatmul.f32.gmra.mxu0 %v4906
  %v4993 = vpop.f32.mrf.mxu0
  %v4994 = vadd.f32 0.0, %v4993
  %4995 = vmatmul.f32.gmra.mxu0 %v4908
  %v4996 = vpop.f32.mrf.mxu0
  %v4997 = vadd.f32 0.0, %v4996
  %4998 = vmatmul.f32.gmra.mxu0 %v4910
  %v4999 = vpop.f32.mrf.mxu0
  %v5000 = vadd.f32 0.0, %v4999
  %5001 = vmatmul.f32.gmra.mxu0 %v4912
  %v5002 = vpop.f32.mrf.mxu0
  %v5003 = vadd.f32 0.0, %v5002
  %5004 = vmatmul.f32.gmra.mxu0 %v4914
  %v5005 = vpop.f32.mrf.mxu0
  %v5006 = vadd.f32 0.0, %v5005
  %5007 = vdwg.mxu0
  %v5008 = vadd.f32 %v4766, %v4934
  %v5009 = vadd.f32 %v4767, %v4937
  %v5010 = vadd.f32 %v4768, %v4940
  %v5011 = vadd.f32 %v4769, %v4943
  %v5012 = vadd.f32 %v4770, %v4946
  %v5013 = vadd.f32 %v4771, %v4949
  %v5014 = vadd.f32 %v4772, %v4952
  %v5015 = vadd.f32 %v4773, %v4955
  %v5016 = vadd.f32 %v4774, %v4958
  %v5017 = vadd.f32 %v4775, %v4961
  %v5018 = vadd.f32 %v4776, %v4964
  %v5019 = vadd.f32 %v4777, %v4967
  %v5020 = vadd.f32 %v4778, %v4970
  %v5021 = vadd.f32 %v4779, %v4973
  %v5022 = vadd.f32 %v4780, %v4976
  %v5023 = vadd.f32 %v4781, %v4979
  %v5024 = vadd.f32 %v4782, %v4982
  %v5025 = vadd.f32 %v4783, %v4985
  %v5026 = vadd.f32 %v4784, %v4988
  %v5027 = vadd.f32 %v4785, %v4991
  %v5028 = vadd.f32 %v4786, %v4994
  %v5029 = vadd.f32 %v4787, %v4997
  %v5030 = vadd.f32 %v4788, %v5000
  %v5031 = vadd.f32 %v4789, %v5003
  %v5032 = vadd.f32 %v4790, %v5006
  %v5033 = vxor.u32 %v5008, 2147483648
  %v5034 = vxor.u32 %v5009, 2147483648
  %v5035 = vxor.u32 %v5010, 2147483648
  %v5036 = vxor.u32 %v5011, 2147483648
  %v5037 = vxor.u32 %v5012, 2147483648
  %v5038 = vxor.u32 %v5013, 2147483648
  %v5039 = vxor.u32 %v5014, 2147483648
  %v5040 = vxor.u32 %v5015, 2147483648
  %v5041 = vxor.u32 %v5016, 2147483648
  %v5042 = vxor.u32 %v5017, 2147483648
  %v5043 = vxor.u32 %v5018, 2147483648
  %v5044 = vxor.u32 %v5019, 2147483648
  %v5045 = vxor.u32 %v5020, 2147483648
  %v5046 = vxor.u32 %v5021, 2147483648
  %v5047 = vxor.u32 %v5022, 2147483648
  %v5048 = vxor.u32 %v5023, 2147483648
  %v5049 = vxor.u32 %v5024, 2147483648
  %v5050 = vxor.u32 %v5025, 2147483648
  %v5051 = vxor.u32 %v5026, 2147483648
  %v5052 = vxor.u32 %v5027, 2147483648
  %v5053 = vxor.u32 %v5028, 2147483648
  %v5054 = vxor.u32 %v5029, 2147483648
  %v5055 = vxor.u32 %v5030, 2147483648
  %v5056 = vxor.u32 %v5031, 2147483648
  %v5057 = vxor.u32 %v5032, 2147483648
  %v5058 = vmul.f32 %v5033, 1.442695
  %v5059 = vpow.pop %v5058
  %v5060 = vmul.f32 %v5034, 1.442695
  %v5061 = vpow.pop %v5060
  %v5062 = vmul.f32 %v5035, 1.442695
  %v5063 = vpow.pop %v5062
  %v5064 = vmul.f32 %v5036, 1.442695
  %v5065 = vpow.pop %v5064
  %v5066 = vmul.f32 %v5037, 1.442695
  %v5067 = vpow.pop %v5066
  %v5068 = vmul.f32 %v5038, 1.442695
  %v5069 = vpow.pop %v5068
  %v5070 = vmul.f32 %v5039, 1.442695
  %v5071 = vpow.pop %v5070
  %v5072 = vmul.f32 %v5040, 1.442695
  %v5073 = vpow.pop %v5072
  %v5074 = vmul.f32 %v5041, 1.442695
  %v5075 = vpow.pop %v5074
  %v5076 = vmul.f32 %v5042, 1.442695
  %v5077 = vpow.pop %v5076
  %v5078 = vmul.f32 %v5043, 1.442695
  %v5079 = vpow.pop %v5078
  %v5080 = vmul.f32 %v5044, 1.442695
  %v5081 = vpow.pop %v5080
  %v5082 = vmul.f32 %v5045, 1.442695
  %v5083 = vpow.pop %v5082
  %v5084 = vmul.f32 %v5046, 1.442695
  %v5085 = vpow.pop %v5084
  %v5086 = vmul.f32 %v5047, 1.442695
  %v5087 = vpow.pop %v5086
  %v5088 = vmul.f32 %v5048, 1.442695
  %v5089 = vpow.pop %v5088
  %v5090 = vmul.f32 %v5049, 1.442695
  %v5091 = vpow.pop %v5090
  %v5092 = vmul.f32 %v5050, 1.442695
  %v5093 = vpow.pop %v5092
  %v5094 = vmul.f32 %v5051, 1.442695
  %v5095 = vpow.pop %v5094
  %v5096 = vmul.f32 %v5052, 1.442695
  %v5097 = vpow.pop %v5096
  %v5098 = vmul.f32 %v5053, 1.442695
  %v5099 = vpow.pop %v5098
  %v5100 = vmul.f32 %v5054, 1.442695
  %v5101 = vpow.pop %v5100
  %v5102 = vmul.f32 %v5055, 1.442695
  %v5103 = vpow.pop %v5102
  %v5104 = vmul.f32 %v5056, 1.442695
  %v5105 = vpow.pop %v5104
  %v5106 = vmul.f32 %v5057, 1.442695
  %v5107 = vpow.pop %v5106
  %v5108 = vadd.f32 %v5059, 1.0
  %v5109 = vadd.f32 %v5061, 1.0
  %v5110 = vadd.f32 %v5063, 1.0
  %v5111 = vadd.f32 %v5065, 1.0
  %v5112 = vadd.f32 %v5067, 1.0
  %v5113 = vadd.f32 %v5069, 1.0
  %v5114 = vadd.f32 %v5071, 1.0
  %v5115 = vadd.f32 %v5073, 1.0
  %v5116 = vadd.f32 %v5075, 1.0
  %v5117 = vadd.f32 %v5077, 1.0
  %v5118 = vadd.f32 %v5079, 1.0
  %v5119 = vadd.f32 %v5081, 1.0
  %v5120 = vadd.f32 %v5083, 1.0
  %v5121 = vadd.f32 %v5085, 1.0
  %v5122 = vadd.f32 %v5087, 1.0
  %v5123 = vadd.f32 %v5089, 1.0
  %v5124 = vadd.f32 %v5091, 1.0
  %v5125 = vadd.f32 %v5093, 1.0
  %v5126 = vadd.f32 %v5095, 1.0
  %v5127 = vadd.f32 %v5097, 1.0
  %v5128 = vadd.f32 %v5099, 1.0
  %v5129 = vadd.f32 %v5101, 1.0
  %v5130 = vadd.f32 %v5103, 1.0
  %v5131 = vadd.f32 %v5105, 1.0
  %v5132 = vadd.f32 %v5107, 1.0
  %v5133 = vrcp.pop %v5108
  %v5134 = vmul.f32 %v5108, %v5133
  %v5135 = vsub.f32 1.0, %v5134
  %v5136 = vmul.f32 %v5133, %v5135
  %v5137 = vadd.f32 %v5133, %v5136
  %vm5138 = vweird.f32 %v5108
  %vm5139 = vweird.f32 %v5133
  %vm5140 = vmor %vm5138, %vm5139
  %v5141 = vsel %vm5140, %v5133, %v5137
  %v5142 = vand.u32 2147483647, %v5108
  %vm5143 = vcmp.eq.f32.partialorder %v5142, 8.507059e+37
  %v5144 = vand.u32 %v5108, 2147483648
  %v5145 = vor.u32 1.1754944e-38, %v5144
  %v5146 = vsel %vm5143, %v5145, %v5141
  %v5147 = vmul.f32 1.0, %v5146
  %v5148 = vrcp.pop %v5109
  %v5149 = vmul.f32 %v5109, %v5148
  %v5150 = vsub.f32 1.0, %v5149
  %v5151 = vmul.f32 %v5148, %v5150
  %v5152 = vadd.f32 %v5148, %v5151
  %vm5153 = vweird.f32 %v5109
  %vm5154 = vweird.f32 %v5148
  %vm5155 = vmor %vm5153, %vm5154
  %v5156 = vsel %vm5155, %v5148, %v5152
  %v5157 = vand.u32 2147483647, %v5109
  %vm5158 = vcmp.eq.f32.partialorder %v5157, 8.507059e+37
  %v5159 = vand.u32 %v5109, 2147483648
  %v5160 = vor.u32 1.1754944e-38, %v5159
  %v5161 = vsel %vm5158, %v5160, %v5156
  %v5162 = vmul.f32 1.0, %v5161
  %v5163 = vrcp.pop %v5110
  %v5164 = vmul.f32 %v5110, %v5163
  %v5165 = vsub.f32 1.0, %v5164
  %v5166 = vmul.f32 %v5163, %v5165
  %v5167 = vadd.f32 %v5163, %v5166
  %vm5168 = vweird.f32 %v5110
  %vm5169 = vweird.f32 %v5163
  %vm5170 = vmor %vm5168, %vm5169
  %v5171 = vsel %vm5170, %v5163, %v5167
  %v5172 = vand.u32 2147483647, %v5110
  %vm5173 = vcmp.eq.f32.partialorder %v5172, 8.507059e+37
  %v5174 = vand.u32 %v5110, 2147483648
  %v5175 = vor.u32 1.1754944e-38, %v5174
  %v5176 = vsel %vm5173, %v5175, %v5171
  %v5177 = vmul.f32 1.0, %v5176
  %v5178 = vrcp.pop %v5111
  %v5179 = vmul.f32 %v5111, %v5178
  %v5180 = vsub.f32 1.0, %v5179
  %v5181 = vmul.f32 %v5178, %v5180
  %v5182 = vadd.f32 %v5178, %v5181
  %vm5183 = vweird.f32 %v5111
  %vm5184 = vweird.f32 %v5178
  %vm5185 = vmor %vm5183, %vm5184
  %v5186 = vsel %vm5185, %v5178, %v5182
  %v5187 = vand.u32 2147483647, %v5111
  %vm5188 = vcmp.eq.f32.partialorder %v5187, 8.507059e+37
  %v5189 = vand.u32 %v5111, 2147483648
  %v5190 = vor.u32 1.1754944e-38, %v5189
  %v5191 = vsel %vm5188, %v5190, %v5186
  %v5192 = vmul.f32 1.0, %v5191
  %v5193 = vrcp.pop %v5112
  %v5194 = vmul.f32 %v5112, %v5193
  %v5195 = vsub.f32 1.0, %v5194
  %v5196 = vmul.f32 %v5193, %v5195
  %v5197 = vadd.f32 %v5193, %v5196
  %vm5198 = vweird.f32 %v5112
  %vm5199 = vweird.f32 %v5193
  %vm5200 = vmor %vm5198, %vm5199
  %v5201 = vsel %vm5200, %v5193, %v5197
  %v5202 = vand.u32 2147483647, %v5112
  %vm5203 = vcmp.eq.f32.partialorder %v5202, 8.507059e+37
  %v5204 = vand.u32 %v5112, 2147483648
  %v5205 = vor.u32 1.1754944e-38, %v5204
  %v5206 = vsel %vm5203, %v5205, %v5201
  %v5207 = vmul.f32 1.0, %v5206
  %v5208 = vrcp.pop %v5113
  %v5209 = vmul.f32 %v5113, %v5208
  %v5210 = vsub.f32 1.0, %v5209
  %v5211 = vmul.f32 %v5208, %v5210
  %v5212 = vadd.f32 %v5208, %v5211
  %vm5213 = vweird.f32 %v5113
  %vm5214 = vweird.f32 %v5208
  %vm5215 = vmor %vm5213, %vm5214
  %v5216 = vsel %vm5215, %v5208, %v5212
  %v5217 = vand.u32 2147483647, %v5113
  %vm5218 = vcmp.eq.f32.partialorder %v5217, 8.507059e+37
  %v5219 = vand.u32 %v5113, 2147483648
  %v5220 = vor.u32 1.1754944e-38, %v5219
  %v5221 = vsel %vm5218, %v5220, %v5216
  %v5222 = vmul.f32 1.0, %v5221
  %v5223 = vrcp.pop %v5114
  %v5224 = vmul.f32 %v5114, %v5223
  %v5225 = vsub.f32 1.0, %v5224
  %v5226 = vmul.f32 %v5223, %v5225
  %v5227 = vadd.f32 %v5223, %v5226
  %vm5228 = vweird.f32 %v5114
  %vm5229 = vweird.f32 %v5223
  %vm5230 = vmor %vm5228, %vm5229
  %v5231 = vsel %vm5230, %v5223, %v5227
  %v5232 = vand.u32 2147483647, %v5114
  %vm5233 = vcmp.eq.f32.partialorder %v5232, 8.507059e+37
  %v5234 = vand.u32 %v5114, 2147483648
  %v5235 = vor.u32 1.1754944e-38, %v5234
  %v5236 = vsel %vm5233, %v5235, %v5231
  %v5237 = vmul.f32 1.0, %v5236
  %v5238 = vrcp.pop %v5115
  %v5239 = vmul.f32 %v5115, %v5238
  %v5240 = vsub.f32 1.0, %v5239
  %v5241 = vmul.f32 %v5238, %v5240
  %v5242 = vadd.f32 %v5238, %v5241
  %vm5243 = vweird.f32 %v5115
  %vm5244 = vweird.f32 %v5238
  %vm5245 = vmor %vm5243, %vm5244
  %v5246 = vsel %vm5245, %v5238, %v5242
  %v5247 = vand.u32 2147483647, %v5115
  %vm5248 = vcmp.eq.f32.partialorder %v5247, 8.507059e+37
  %v5249 = vand.u32 %v5115, 2147483648
  %v5250 = vor.u32 1.1754944e-38, %v5249
  %v5251 = vsel %vm5248, %v5250, %v5246
  %v5252 = vmul.f32 1.0, %v5251
  %v5253 = vrcp.pop %v5116
  %v5254 = vmul.f32 %v5116, %v5253
  %v5255 = vsub.f32 1.0, %v5254
  %v5256 = vmul.f32 %v5253, %v5255
  %v5257 = vadd.f32 %v5253, %v5256
  %vm5258 = vweird.f32 %v5116
  %vm5259 = vweird.f32 %v5253
  %vm5260 = vmor %vm5258, %vm5259
  %v5261 = vsel %vm5260, %v5253, %v5257
  %v5262 = vand.u32 2147483647, %v5116
  %vm5263 = vcmp.eq.f32.partialorder %v5262, 8.507059e+37
  %v5264 = vand.u32 %v5116, 2147483648
  %v5265 = vor.u32 1.1754944e-38, %v5264
  %v5266 = vsel %vm5263, %v5265, %v5261
  %v5267 = vmul.f32 1.0, %v5266
  %v5268 = vrcp.pop %v5117
  %v5269 = vmul.f32 %v5117, %v5268
  %v5270 = vsub.f32 1.0, %v5269
  %v5271 = vmul.f32 %v5268, %v5270
  %v5272 = vadd.f32 %v5268, %v5271
  %vm5273 = vweird.f32 %v5117
  %vm5274 = vweird.f32 %v5268
  %vm5275 = vmor %vm5273, %vm5274
  %v5276 = vsel %vm5275, %v5268, %v5272
  %v5277 = vand.u32 2147483647, %v5117
  %vm5278 = vcmp.eq.f32.partialorder %v5277, 8.507059e+37
  %v5279 = vand.u32 %v5117, 2147483648
  %v5280 = vor.u32 1.1754944e-38, %v5279
  %v5281 = vsel %vm5278, %v5280, %v5276
  %v5282 = vmul.f32 1.0, %v5281
  %v5283 = vrcp.pop %v5118
  %v5284 = vmul.f32 %v5118, %v5283
  %v5285 = vsub.f32 1.0, %v5284
  %v5286 = vmul.f32 %v5283, %v5285
  %v5287 = vadd.f32 %v5283, %v5286
  %vm5288 = vweird.f32 %v5118
  %vm5289 = vweird.f32 %v5283
  %vm5290 = vmor %vm5288, %vm5289
  %v5291 = vsel %vm5290, %v5283, %v5287
  %v5292 = vand.u32 2147483647, %v5118
  %vm5293 = vcmp.eq.f32.partialorder %v5292, 8.507059e+37
  %v5294 = vand.u32 %v5118, 2147483648
  %v5295 = vor.u32 1.1754944e-38, %v5294
  %v5296 = vsel %vm5293, %v5295, %v5291
  %v5297 = vmul.f32 1.0, %v5296
  %v5298 = vrcp.pop %v5119
  %v5299 = vmul.f32 %v5119, %v5298
  %v5300 = vsub.f32 1.0, %v5299
  %v5301 = vmul.f32 %v5298, %v5300
  %v5302 = vadd.f32 %v5298, %v5301
  %vm5303 = vweird.f32 %v5119
  %vm5304 = vweird.f32 %v5298
  %vm5305 = vmor %vm5303, %vm5304
  %v5306 = vsel %vm5305, %v5298, %v5302
  %v5307 = vand.u32 2147483647, %v5119
  %vm5308 = vcmp.eq.f32.partialorder %v5307, 8.507059e+37
  %v5309 = vand.u32 %v5119, 2147483648
  %v5310 = vor.u32 1.1754944e-38, %v5309
  %v5311 = vsel %vm5308, %v5310, %v5306
  %v5312 = vmul.f32 1.0, %v5311
  %v5313 = vrcp.pop %v5120
  %v5314 = vmul.f32 %v5120, %v5313
  %v5315 = vsub.f32 1.0, %v5314
  %v5316 = vmul.f32 %v5313, %v5315
  %v5317 = vadd.f32 %v5313, %v5316
  %vm5318 = vweird.f32 %v5120
  %vm5319 = vweird.f32 %v5313
  %vm5320 = vmor %vm5318, %vm5319
  %v5321 = vsel %vm5320, %v5313, %v5317
  %v5322 = vand.u32 2147483647, %v5120
  %vm5323 = vcmp.eq.f32.partialorder %v5322, 8.507059e+37
  %v5324 = vand.u32 %v5120, 2147483648
  %v5325 = vor.u32 1.1754944e-38, %v5324
  %v5326 = vsel %vm5323, %v5325, %v5321
  %v5327 = vmul.f32 1.0, %v5326
  %v5328 = vrcp.pop %v5121
  %v5329 = vmul.f32 %v5121, %v5328
  %v5330 = vsub.f32 1.0, %v5329
  %v5331 = vmul.f32 %v5328, %v5330
  %v5332 = vadd.f32 %v5328, %v5331
  %vm5333 = vweird.f32 %v5121
  %vm5334 = vweird.f32 %v5328
  %vm5335 = vmor %vm5333, %vm5334
  %v5336 = vsel %vm5335, %v5328, %v5332
  %v5337 = vand.u32 2147483647, %v5121
  %vm5338 = vcmp.eq.f32.partialorder %v5337, 8.507059e+37
  %v5339 = vand.u32 %v5121, 2147483648
  %v5340 = vor.u32 1.1754944e-38, %v5339
  %v5341 = vsel %vm5338, %v5340, %v5336
  %v5342 = vmul.f32 1.0, %v5341
  %v5343 = vrcp.pop %v5122
  %v5344 = vmul.f32 %v5122, %v5343
  %v5345 = vsub.f32 1.0, %v5344
  %v5346 = vmul.f32 %v5343, %v5345
  %v5347 = vadd.f32 %v5343, %v5346
  %vm5348 = vweird.f32 %v5122
  %vm5349 = vweird.f32 %v5343
  %vm5350 = vmor %vm5348, %vm5349
  %v5351 = vsel %vm5350, %v5343, %v5347
  %v5352 = vand.u32 2147483647, %v5122
  %vm5353 = vcmp.eq.f32.partialorder %v5352, 8.507059e+37
  %v5354 = vand.u32 %v5122, 2147483648
  %v5355 = vor.u32 1.1754944e-38, %v5354
  %v5356 = vsel %vm5353, %v5355, %v5351
  %v5357 = vmul.f32 1.0, %v5356
  %v5358 = vrcp.pop %v5123
  %v5359 = vmul.f32 %v5123, %v5358
  %v5360 = vsub.f32 1.0, %v5359
  %v5361 = vmul.f32 %v5358, %v5360
  %v5362 = vadd.f32 %v5358, %v5361
  %vm5363 = vweird.f32 %v5123
  %vm5364 = vweird.f32 %v5358
  %vm5365 = vmor %vm5363, %vm5364
  %v5366 = vsel %vm5365, %v5358, %v5362
  %v5367 = vand.u32 2147483647, %v5123
  %vm5368 = vcmp.eq.f32.partialorder %v5367, 8.507059e+37
  %v5369 = vand.u32 %v5123, 2147483648
  %v5370 = vor.u32 1.1754944e-38, %v5369
  %v5371 = vsel %vm5368, %v5370, %v5366
  %v5372 = vmul.f32 1.0, %v5371
  %v5373 = vrcp.pop %v5124
  %v5374 = vmul.f32 %v5124, %v5373
  %v5375 = vsub.f32 1.0, %v5374
  %v5376 = vmul.f32 %v5373, %v5375
  %v5377 = vadd.f32 %v5373, %v5376
  %vm5378 = vweird.f32 %v5124
  %vm5379 = vweird.f32 %v5373
  %vm5380 = vmor %vm5378, %vm5379
  %v5381 = vsel %vm5380, %v5373, %v5377
  %v5382 = vand.u32 2147483647, %v5124
  %vm5383 = vcmp.eq.f32.partialorder %v5382, 8.507059e+37
  %v5384 = vand.u32 %v5124, 2147483648
  %v5385 = vor.u32 1.1754944e-38, %v5384
  %v5386 = vsel %vm5383, %v5385, %v5381
  %v5387 = vmul.f32 1.0, %v5386
  %v5388 = vrcp.pop %v5125
  %v5389 = vmul.f32 %v5125, %v5388
  %v5390 = vsub.f32 1.0, %v5389
  %v5391 = vmul.f32 %v5388, %v5390
  %v5392 = vadd.f32 %v5388, %v5391
  %vm5393 = vweird.f32 %v5125
  %vm5394 = vweird.f32 %v5388
  %vm5395 = vmor %vm5393, %vm5394
  %v5396 = vsel %vm5395, %v5388, %v5392
  %v5397 = vand.u32 2147483647, %v5125
  %vm5398 = vcmp.eq.f32.partialorder %v5397, 8.507059e+37
  %v5399 = vand.u32 %v5125, 2147483648
  %v5400 = vor.u32 1.1754944e-38, %v5399
  %v5401 = vsel %vm5398, %v5400, %v5396
  %v5402 = vmul.f32 1.0, %v5401
  %v5403 = vrcp.pop %v5126
  %v5404 = vmul.f32 %v5126, %v5403
  %v5405 = vsub.f32 1.0, %v5404
  %v5406 = vmul.f32 %v5403, %v5405
  %v5407 = vadd.f32 %v5403, %v5406
  %vm5408 = vweird.f32 %v5126
  %vm5409 = vweird.f32 %v5403
  %vm5410 = vmor %vm5408, %vm5409
  %v5411 = vsel %vm5410, %v5403, %v5407
  %v5412 = vand.u32 2147483647, %v5126
  %vm5413 = vcmp.eq.f32.partialorder %v5412, 8.507059e+37
  %v5414 = vand.u32 %v5126, 2147483648
  %v5415 = vor.u32 1.1754944e-38, %v5414
  %v5416 = vsel %vm5413, %v5415, %v5411
  %v5417 = vmul.f32 1.0, %v5416
  %v5418 = vrcp.pop %v5127
  %v5419 = vmul.f32 %v5127, %v5418
  %v5420 = vsub.f32 1.0, %v5419
  %v5421 = vmul.f32 %v5418, %v5420
  %v5422 = vadd.f32 %v5418, %v5421
  %vm5423 = vweird.f32 %v5127
  %vm5424 = vweird.f32 %v5418
  %vm5425 = vmor %vm5423, %vm5424
  %v5426 = vsel %vm5425, %v5418, %v5422
  %v5427 = vand.u32 2147483647, %v5127
  %vm5428 = vcmp.eq.f32.partialorder %v5427, 8.507059e+37
  %v5429 = vand.u32 %v5127, 2147483648
  %v5430 = vor.u32 1.1754944e-38, %v5429
  %v5431 = vsel %vm5428, %v5430, %v5426
  %v5432 = vmul.f32 1.0, %v5431
  %v5433 = vrcp.pop %v5128
  %v5434 = vmul.f32 %v5128, %v5433
  %v5435 = vsub.f32 1.0, %v5434
  %v5436 = vmul.f32 %v5433, %v5435
  %v5437 = vadd.f32 %v5433, %v5436
  %vm5438 = vweird.f32 %v5128
  %vm5439 = vweird.f32 %v5433
  %vm5440 = vmor %vm5438, %vm5439
  %v5441 = vsel %vm5440, %v5433, %v5437
  %v5442 = vand.u32 2147483647, %v5128
  %vm5443 = vcmp.eq.f32.partialorder %v5442, 8.507059e+37
  %v5444 = vand.u32 %v5128, 2147483648
  %v5445 = vor.u32 1.1754944e-38, %v5444
  %v5446 = vsel %vm5443, %v5445, %v5441
  %v5447 = vmul.f32 1.0, %v5446
  %v5448 = vrcp.pop %v5129
  %v5449 = vmul.f32 %v5129, %v5448
  %v5450 = vsub.f32 1.0, %v5449
  %v5451 = vmul.f32 %v5448, %v5450
  %v5452 = vadd.f32 %v5448, %v5451
  %vm5453 = vweird.f32 %v5129
  %vm5454 = vweird.f32 %v5448
  %vm5455 = vmor %vm5453, %vm5454
  %v5456 = vsel %vm5455, %v5448, %v5452
  %v5457 = vand.u32 2147483647, %v5129
  %vm5458 = vcmp.eq.f32.partialorder %v5457, 8.507059e+37
  %v5459 = vand.u32 %v5129, 2147483648
  %v5460 = vor.u32 1.1754944e-38, %v5459
  %v5461 = vsel %vm5458, %v5460, %v5456
  %v5462 = vmul.f32 1.0, %v5461
  %v5463 = vrcp.pop %v5130
  %v5464 = vmul.f32 %v5130, %v5463
  %v5465 = vsub.f32 1.0, %v5464
  %v5466 = vmul.f32 %v5463, %v5465
  %v5467 = vadd.f32 %v5463, %v5466
  %vm5468 = vweird.f32 %v5130
  %vm5469 = vweird.f32 %v5463
  %vm5470 = vmor %vm5468, %vm5469
  %v5471 = vsel %vm5470, %v5463, %v5467
  %v5472 = vand.u32 2147483647, %v5130
  %vm5473 = vcmp.eq.f32.partialorder %v5472, 8.507059e+37
  %v5474 = vand.u32 %v5130, 2147483648
  %v5475 = vor.u32 1.1754944e-38, %v5474
  %v5476 = vsel %vm5473, %v5475, %v5471
  %v5477 = vmul.f32 1.0, %v5476
  %v5478 = vrcp.pop %v5131
  %v5479 = vmul.f32 %v5131, %v5478
  %v5480 = vsub.f32 1.0, %v5479
  %v5481 = vmul.f32 %v5478, %v5480
  %v5482 = vadd.f32 %v5478, %v5481
  %vm5483 = vweird.f32 %v5131
  %vm5484 = vweird.f32 %v5478
  %vm5485 = vmor %vm5483, %vm5484
  %v5486 = vsel %vm5485, %v5478, %v5482
  %v5487 = vand.u32 2147483647, %v5131
  %vm5488 = vcmp.eq.f32.partialorder %v5487, 8.507059e+37
  %v5489 = vand.u32 %v5131, 2147483648
  %v5490 = vor.u32 1.1754944e-38, %v5489
  %v5491 = vsel %vm5488, %v5490, %v5486
  %v5492 = vmul.f32 1.0, %v5491
  %v5493 = vrcp.pop %v5132
  %v5494 = vmul.f32 %v5132, %v5493
  %v5495 = vsub.f32 1.0, %v5494
  %v5496 = vmul.f32 %v5493, %v5495
  %v5497 = vadd.f32 %v5493, %v5496
  %vm5498 = vweird.f32 %v5132
  %vm5499 = vweird.f32 %v5493
  %vm5500 = vmor %vm5498, %vm5499
  %v5501 = vsel %vm5500, %v5493, %v5497
  %v5502 = vand.u32 2147483647, %v5132
  %vm5503 = vcmp.eq.f32.partialorder %v5502, 8.507059e+37
  %v5504 = vand.u32 %v5132, 2147483648
  %v5505 = vor.u32 1.1754944e-38, %v5504
  %v5506 = vsel %vm5503, %v5505, %v5501
  %v5507 = vmul.f32 1.0, %v5506
  %v5508 = vmul.f32 %v5147, 2.0
  %v5509 = vmul.f32 %v5162, 2.0
  %v5510 = vmul.f32 %v5177, 2.0
  %v5511 = vmul.f32 %v5192, 2.0
  %v5512 = vmul.f32 %v5207, 2.0
  %v5513 = vmul.f32 %v5222, 2.0
  %v5514 = vmul.f32 %v5237, 2.0
  %v5515 = vmul.f32 %v5252, 2.0
  %v5516 = vmul.f32 %v5267, 2.0
  %v5517 = vmul.f32 %v5282, 2.0
  %v5518 = vmul.f32 %v5297, 2.0
  %v5519 = vmul.f32 %v5312, 2.0
  %v5520 = vmul.f32 %v5327, 2.0
  %v5521 = vmul.f32 %v5342, 2.0
  %v5522 = vmul.f32 %v5357, 2.0
  %v5523 = vmul.f32 %v5372, 2.0
  %v5524 = vmul.f32 %v5387, 2.0
  %v5525 = vmul.f32 %v5402, 2.0
  %v5526 = vmul.f32 %v5417, 2.0
  %v5527 = vmul.f32 %v5432, 2.0
  %v5528 = vmul.f32 %v5447, 2.0
  %v5529 = vmul.f32 %v5462, 2.0
  %v5530 = vmul.f32 %v5477, 2.0
  %v5531 = vmul.f32 %v5492, 2.0
  %v5532 = vmul.f32 %v5507, 2.0
  %v5533 = vsub.f32 %v5508, 1.0
  %v5534 = vsub.f32 %v5509, 1.0
  %v5535 = vsub.f32 %v5510, 1.0
  %v5536 = vsub.f32 %v5511, 1.0
  %v5537 = vsub.f32 %v5512, 1.0
  %v5538 = vsub.f32 %v5513, 1.0
  %v5539 = vsub.f32 %v5514, 1.0
  %v5540 = vsub.f32 %v5515, 1.0
  %v5541 = vsub.f32 %v5516, 1.0
  %v5542 = vsub.f32 %v5517, 1.0
  %v5543 = vsub.f32 %v5518, 1.0
  %v5544 = vsub.f32 %v5519, 1.0
  %v5545 = vsub.f32 %v5520, 1.0
  %v5546 = vsub.f32 %v5521, 1.0
  %v5547 = vsub.f32 %v5522, 1.0
  %v5548 = vsub.f32 %v5523, 1.0
  %v5549 = vsub.f32 %v5524, 1.0
  %v5550 = vsub.f32 %v5525, 1.0
  %v5551 = vsub.f32 %v5526, 1.0
  %v5552 = vsub.f32 %v5527, 1.0
  %v5553 = vsub.f32 %v5528, 1.0
  %v5554 = vsub.f32 %v5529, 1.0
  %v5555 = vsub.f32 %v5530, 1.0
  %v5556 = vsub.f32 %v5531, 1.0
  %v5557 = vsub.f32 %v5532, 1.0
  %v5558 = vmul.f32 %v5147, %v4590
  %v5559 = vmul.f32 %v5162, %v4591
  %v5560 = vmul.f32 %v5177, %v4592
  %v5561 = vmul.f32 %v5192, %v4593
  %v5562 = vmul.f32 %v5207, %v4594
  %v5563 = vmul.f32 %v5222, %v4595
  %v5564 = vmul.f32 %v5237, %v4596
  %v5565 = vmul.f32 %v5252, %v4597
  %v5566 = vmul.f32 %v5267, %v4598
  %v5567 = vmul.f32 %v5282, %v4599
  %v5568 = vmul.f32 %v5297, %v4600
  %v5569 = vmul.f32 %v5312, %v4601
  %v5570 = vmul.f32 %v5327, %v4602
  %v5571 = vmul.f32 %v5342, %v4603
  %v5572 = vmul.f32 %v5357, %v4604
  %v5573 = vmul.f32 %v5372, %v4605
  %v5574 = vmul.f32 %v5387, %v4606
  %v5575 = vmul.f32 %v5402, %v4607
  %v5576 = vmul.f32 %v5417, %v4608
  %v5577 = vmul.f32 %v5432, %v4609
  %v5578 = vmul.f32 %v5447, %v4610
  %v5579 = vmul.f32 %v5462, %v4611
  %v5580 = vmul.f32 %v5477, %v4612
  %v5581 = vmul.f32 %v5492, %v4613
  %v5582 = vmul.f32 %v5507, %v4614
  %5608 = vrot.lane.b32.xlu0 %v5533, 32
  %v5609 = vpop.permute.xlu0 %5608
  %5610 = vrot.lane.b32.xlu0 %v5534, 32
  %v5611 = vpop.permute.xlu0 %5610
  %5612 = vrot.lane.b32.xlu0 %v5535, 32
  %v5613 = vpop.permute.xlu0 %5612
  %5614 = vrot.lane.b32.xlu0 %v5536, 32
  %v5615 = vpop.permute.xlu0 %5614
  %5616 = vrot.lane.b32.xlu0 %v5537, 32
  %v5617 = vpop.permute.xlu0 %5616
  %5618 = vrot.lane.b32.xlu0 %v5538, 32
  %v5619 = vpop.permute.xlu0 %5618
  %5620 = vrot.lane.b32.xlu0 %v5539, 32
  %v5621 = vpop.permute.xlu0 %5620
  %5622 = vrot.lane.b32.xlu0 %v5540, 32
  %v5623 = vpop.permute.xlu0 %5622
  %5624 = vrot.lane.b32.xlu0 %v5541, 32
  %v5625 = vpop.permute.xlu0 %5624
  %5626 = vrot.lane.b32.xlu0 %v5542, 32
  %v5627 = vpop.permute.xlu0 %5626
  %5628 = vrot.lane.b32.xlu0 %v5543, 32
  %v5629 = vpop.permute.xlu0 %5628
  %5630 = vrot.lane.b32.xlu0 %v5544, 32
  %v5631 = vpop.permute.xlu0 %5630
  %5632 = vrot.lane.b32.xlu0 %v5545, 32
  %v5633 = vpop.permute.xlu0 %5632
  %5634 = vrot.lane.b32.xlu0 %v5546, 32
  %v5635 = vpop.permute.xlu0 %5634
  %5636 = vrot.lane.b32.xlu0 %v5547, 32
  %v5637 = vpop.permute.xlu0 %5636
  %5638 = vrot.lane.b32.xlu0 %v5548, 32
  %v5639 = vpop.permute.xlu0 %5638
  %5640 = vrot.lane.b32.xlu0 %v5549, 32
  %v5641 = vpop.permute.xlu0 %5640
  %5642 = vrot.lane.b32.xlu0 %v5550, 32
  %v5643 = vpop.permute.xlu0 %5642
  %5644 = vrot.lane.b32.xlu0 %v5551, 32
  %v5645 = vpop.permute.xlu0 %5644
  %5646 = vrot.lane.b32.xlu0 %v5552, 32
  %v5647 = vpop.permute.xlu0 %5646
  %5648 = vrot.lane.b32.xlu0 %v5553, 32
  %v5649 = vpop.permute.xlu0 %5648
  %5650 = vrot.lane.b32.xlu0 %v5554, 32
  %v5651 = vpop.permute.xlu0 %5650
  %5652 = vrot.lane.b32.xlu0 %v5555, 32
  %v5653 = vpop.permute.xlu0 %5652
  %5654 = vrot.lane.b32.xlu0 %v5556, 32
  %v5655 = vpop.permute.xlu0 %5654
  %5656 = vrot.lane.b32.xlu0 %v5557, 32
  %v5657 = vpop.permute.xlu0 %5656
  %v5683 = vmul.f32 %v5147, %v5609
  %v5684 = vmul.f32 %v5162, %v5611
  %v5685 = vmul.f32 %v5177, %v5613
  %v5686 = vmul.f32 %v5192, %v5615
  %v5687 = vmul.f32 %v5207, %v5617
  %v5688 = vmul.f32 %v5222, %v5619
  %v5689 = vmul.f32 %v5237, %v5621
  %v5690 = vmul.f32 %v5252, %v5623
  %v5691 = vmul.f32 %v5267, %v5625
  %v5692 = vmul.f32 %v5282, %v5627
  %v5693 = vmul.f32 %v5297, %v5629
  %v5694 = vmul.f32 %v5312, %v5631
  %v5695 = vmul.f32 %v5327, %v5633
  %v5696 = vmul.f32 %v5342, %v5635
  %v5697 = vmul.f32 %v5357, %v5637
  %v5698 = vmul.f32 %v5372, %v5639
  %v5699 = vmul.f32 %v5387, %v5641
  %v5700 = vmul.f32 %v5402, %v5643
  %v5701 = vmul.f32 %v5417, %v5645
  %v5702 = vmul.f32 %v5432, %v5647
  %v5703 = vmul.f32 %v5447, %v5649
  %v5704 = vmul.f32 %v5462, %v5651
  %v5705 = vmul.f32 %v5477, %v5653
  %v5706 = vmul.f32 %v5492, %v5655
  %v5707 = vmul.f32 %v5507, %v5657
  %5733 = vrot.lane.b32.xlu0 %v5683, 32
  %v5734 = vpop.permute.xlu0 %5733
  %5735 = vrot.lane.b32.xlu0 %v5684, 32
  %v5736 = vpop.permute.xlu0 %5735
  %5737 = vrot.lane.b32.xlu0 %v5685, 32
  %v5738 = vpop.permute.xlu0 %5737
  %5739 = vrot.lane.b32.xlu0 %v5686, 32
  %v5740 = vpop.permute.xlu0 %5739
  %5741 = vrot.lane.b32.xlu0 %v5687, 32
  %v5742 = vpop.permute.xlu0 %5741
  %5743 = vrot.lane.b32.xlu0 %v5688, 32
  %v5744 = vpop.permute.xlu0 %5743
  %5745 = vrot.lane.b32.xlu0 %v5689, 32
  %v5746 = vpop.permute.xlu0 %5745
  %5747 = vrot.lane.b32.xlu0 %v5690, 32
  %v5748 = vpop.permute.xlu0 %5747
  %5749 = vrot.lane.b32.xlu0 %v5691, 32
  %v5750 = vpop.permute.xlu0 %5749
  %5751 = vrot.lane.b32.xlu0 %v5692, 32
  %v5752 = vpop.permute.xlu0 %5751
  %5753 = vrot.lane.b32.xlu0 %v5693, 32
  %v5754 = vpop.permute.xlu0 %5753
  %5755 = vrot.lane.b32.xlu0 %v5694, 32
  %v5756 = vpop.permute.xlu0 %5755
  %5757 = vrot.lane.b32.xlu0 %v5695, 32
  %v5758 = vpop.permute.xlu0 %5757
  %5759 = vrot.lane.b32.xlu0 %v5696, 32
  %v5760 = vpop.permute.xlu0 %5759
  %5761 = vrot.lane.b32.xlu0 %v5697, 32
  %v5762 = vpop.permute.xlu0 %5761
  %5763 = vrot.lane.b32.xlu0 %v5698, 32
  %v5764 = vpop.permute.xlu0 %5763
  %5765 = vrot.lane.b32.xlu0 %v5699, 32
  %v5766 = vpop.permute.xlu0 %5765
  %5767 = vrot.lane.b32.xlu0 %v5700, 32
  %v5768 = vpop.permute.xlu0 %5767
  %5769 = vrot.lane.b32.xlu0 %v5701, 32
  %v5770 = vpop.permute.xlu0 %5769
  %5771 = vrot.lane.b32.xlu0 %v5702, 32
  %v5772 = vpop.permute.xlu0 %5771
  %5773 = vrot.lane.b32.xlu0 %v5703, 32
  %v5774 = vpop.permute.xlu0 %5773
  %5775 = vrot.lane.b32.xlu0 %v5704, 32
  %v5776 = vpop.permute.xlu0 %5775
  %5777 = vrot.lane.b32.xlu0 %v5705, 32
  %v5778 = vpop.permute.xlu0 %5777
  %5779 = vrot.lane.b32.xlu0 %v5706, 32
  %v5780 = vpop.permute.xlu0 %5779
  %5781 = vrot.lane.b32.xlu0 %v5707, 32
  %v5782 = vpop.permute.xlu0 %5781
  %v5808 = vadd.f32 %v5558, %v5734
  %v5809 = vadd.f32 %v5559, %v5736
  %v5810 = vadd.f32 %v5560, %v5738
  %v5811 = vadd.f32 %v5561, %v5740
  %v5812 = vadd.f32 %v5562, %v5742
  %v5813 = vadd.f32 %v5563, %v5744
  %v5814 = vadd.f32 %v5564, %v5746
  %v5815 = vadd.f32 %v5565, %v5748
  %v5816 = vadd.f32 %v5566, %v5750
  %v5817 = vadd.f32 %v5567, %v5752
  %v5818 = vadd.f32 %v5568, %v5754
  %v5819 = vadd.f32 %v5569, %v5756
  %v5820 = vadd.f32 %v5570, %v5758
  %v5821 = vadd.f32 %v5571, %v5760
  %v5822 = vadd.f32 %v5572, %v5762
  %v5823 = vadd.f32 %v5573, %v5764
  %v5824 = vadd.f32 %v5574, %v5766
  %v5825 = vadd.f32 %v5575, %v5768
  %v5826 = vadd.f32 %v5576, %v5770
  %v5827 = vadd.f32 %v5577, %v5772
  %v5828 = vadd.f32 %v5578, %v5774
  %v5829 = vadd.f32 %v5579, %v5776
  %v5830 = vadd.f32 %v5580, %v5778
  %v5831 = vadd.f32 %v5581, %v5780
  %v5832 = vadd.f32 %v5582, %v5782
  %v5833 = vtanh.pop %v5808
  %v5834 = vtanh.pop %v5809
  %v5835 = vtanh.pop %v5810
  %v5836 = vtanh.pop %v5811
  %v5837 = vtanh.pop %v5812
  %v5838 = vtanh.pop %v5813
  %v5839 = vtanh.pop %v5814
  %v5840 = vtanh.pop %v5815
  %v5841 = vtanh.pop %v5816
  %v5842 = vtanh.pop %v5817
  %v5843 = vtanh.pop %v5818
  %v5844 = vtanh.pop %v5819
  %v5845 = vtanh.pop %v5820
  %v5846 = vtanh.pop %v5821
  %v5847 = vtanh.pop %v5822
  %v5848 = vtanh.pop %v5823
  %v5849 = vtanh.pop %v5824
  %v5850 = vtanh.pop %v5825
  %v5851 = vtanh.pop %v5826
  %v5852 = vtanh.pop %v5827
  %v5853 = vtanh.pop %v5828
  %v5854 = vtanh.pop %v5829
  %v5855 = vtanh.pop %v5830
  %v5856 = vtanh.pop %v5831
  %v5857 = vtanh.pop %v5832
  %5883 = vrot.lane.b32.xlu0 %v5833, 32
  %v5884 = vpop.permute.xlu0 %5883
  %5885 = vrot.lane.b32.xlu0 %v5834, 32
  %v5886 = vpop.permute.xlu0 %5885
  %5887 = vrot.lane.b32.xlu0 %v5835, 32
  %v5888 = vpop.permute.xlu0 %5887
  %5889 = vrot.lane.b32.xlu0 %v5836, 32
  %v5890 = vpop.permute.xlu0 %5889
  %5891 = vrot.lane.b32.xlu0 %v5837, 32
  %v5892 = vpop.permute.xlu0 %5891
  %5893 = vrot.lane.b32.xlu0 %v5838, 32
  %v5894 = vpop.permute.xlu0 %5893
  %5895 = vrot.lane.b32.xlu0 %v5839, 32
  %v5896 = vpop.permute.xlu0 %5895
  %5897 = vrot.lane.b32.xlu0 %v5840, 32
  %v5898 = vpop.permute.xlu0 %5897
  %5899 = vrot.lane.b32.xlu0 %v5841, 32
  %v5900 = vpop.permute.xlu0 %5899
  %5901 = vrot.lane.b32.xlu0 %v5842, 32
  %v5902 = vpop.permute.xlu0 %5901
  %5903 = vrot.lane.b32.xlu0 %v5843, 32
  %v5904 = vpop.permute.xlu0 %5903
  %5905 = vrot.lane.b32.xlu0 %v5844, 32
  %v5906 = vpop.permute.xlu0 %5905
  %5907 = vrot.lane.b32.xlu0 %v5845, 32
  %v5908 = vpop.permute.xlu0 %5907
  %5909 = vrot.lane.b32.xlu0 %v5846, 32
  %v5910 = vpop.permute.xlu0 %5909
  %5911 = vrot.lane.b32.xlu0 %v5847, 32
  %v5912 = vpop.permute.xlu0 %5911
  %5913 = vrot.lane.b32.xlu0 %v5848, 32
  %v5914 = vpop.permute.xlu0 %5913
  %5915 = vrot.lane.b32.xlu0 %v5849, 32
  %v5916 = vpop.permute.xlu0 %5915
  %5917 = vrot.lane.b32.xlu0 %v5850, 32
  %v5918 = vpop.permute.xlu0 %5917
  %5919 = vrot.lane.b32.xlu0 %v5851, 32
  %v5920 = vpop.permute.xlu0 %5919
  %5921 = vrot.lane.b32.xlu0 %v5852, 32
  %v5922 = vpop.permute.xlu0 %5921
  %5923 = vrot.lane.b32.xlu0 %v5853, 32
  %v5924 = vpop.permute.xlu0 %5923
  %5925 = vrot.lane.b32.xlu0 %v5854, 32
  %v5926 = vpop.permute.xlu0 %5925
  %5927 = vrot.lane.b32.xlu0 %v5855, 32
  %v5928 = vpop.permute.xlu0 %5927
  %5929 = vrot.lane.b32.xlu0 %v5856, 32
  %v5930 = vpop.permute.xlu0 %5929
  %5931 = vrot.lane.b32.xlu0 %v5857, 32
  %v5932 = vpop.permute.xlu0 %5931
  %v5958 = vmul.f32 %v5147, %v5884
  %v5959 = vmul.f32 %v5162, %v5886
  %v5960 = vmul.f32 %v5177, %v5888
  %v5961 = vmul.f32 %v5192, %v5890
  %v5962 = vmul.f32 %v5207, %v5892
  %v5963 = vmul.f32 %v5222, %v5894
  %v5964 = vmul.f32 %v5237, %v5896
  %v5965 = vmul.f32 %v5252, %v5898
  %v5966 = vmul.f32 %v5267, %v5900
  %v5967 = vmul.f32 %v5282, %v5902
  %v5968 = vmul.f32 %v5297, %v5904
  %v5969 = vmul.f32 %v5312, %v5906
  %v5970 = vmul.f32 %v5327, %v5908
  %v5971 = vmul.f32 %v5342, %v5910
  %v5972 = vmul.f32 %v5357, %v5912
  %v5973 = vmul.f32 %v5372, %v5914
  %v5974 = vmul.f32 %v5387, %v5916
  %v5975 = vmul.f32 %v5402, %v5918
  %v5976 = vmul.f32 %v5417, %v5920
  %v5977 = vmul.f32 %v5432, %v5922
  %v5978 = vmul.f32 %v5447, %v5924
  %v5979 = vmul.f32 %v5462, %v5926
  %v5980 = vmul.f32 %v5477, %v5928
  %v5981 = vmul.f32 %v5492, %v5930
  %v5982 = vmul.f32 %v5507, %v5932
  %s5983 = scalar_lea.vmem %s0, 1000
  %v5984 = vld [vmem:[%s5983] sm:$0xff]
  %v5985 = vld [vmem:[%s5983 + $0x8] sm:$0xff]
  %v5986 = vld [vmem:[%s5983 + $0x10] sm:$0xff]
  %v5987 = vld [vmem:[%s5983 + $0x18] sm:$0xff]
  %v5988 = vld [vmem:[%s5983 + $0x20] sm:$0xff]
  %v5989 = vld [vmem:[%s5983 + $0x28] sm:$0xff]
  %v5990 = vld [vmem:[%s5983 + $0x30] sm:$0xff]
  %v5991 = vld [vmem:[%s5983 + $0x38] sm:$0xff]
  %v5992 = vld [vmem:[%s5983 + $0x40] sm:$0xff]
  %v5993 = vld [vmem:[%s5983 + $0x48] sm:$0xff]
  %v5994 = vld [vmem:[%s5983 + $0x50] sm:$0xff]
  %v5995 = vld [vmem:[%s5983 + $0x58] sm:$0xff]
  %v5996 = vld [vmem:[%s5983 + $0x60] sm:$0xff]
  %v5997 = vld [vmem:[%s5983 + $0x68] sm:$0xff]
  %v5998 = vld [vmem:[%s5983 + $0x70] sm:$0xff]
  %v5999 = vld [vmem:[%s5983 + $0x78] sm:$0xff]
  %v6000 = vld [vmem:[%s5983 + $0x80] sm:$0xff]
  %v6001 = vld [vmem:[%s5983 + $0x88] sm:$0xff]
  %v6002 = vld [vmem:[%s5983 + $0x90] sm:$0xff]
  %v6003 = vld [vmem:[%s5983 + $0x98] sm:$0xff]
  %v6004 = vld [vmem:[%s5983 + $0xa0] sm:$0xff]
  %v6005 = vld [vmem:[%s5983 + $0xa8] sm:$0xff]
  %v6006 = vld [vmem:[%s5983 + $0xb0] sm:$0xff]
  %v6007 = vld [vmem:[%s5983 + $0xb8] sm:$0xff]
  %v6008 = vld [vmem:[%s5983 + $0xc0] sm:$0xff]
  %6034 = vrot.lane.b32.xlu0 %v5958, 64
  %v6035 = vpop.permute.xlu0 %6034
  %6036 = vrot.lane.b32.xlu0 %v5959, 64
  %v6037 = vpop.permute.xlu0 %6036
  %6038 = vrot.lane.b32.xlu0 %v5960, 64
  %v6039 = vpop.permute.xlu0 %6038
  %6040 = vrot.lane.b32.xlu0 %v5961, 64
  %v6041 = vpop.permute.xlu0 %6040
  %6042 = vrot.lane.b32.xlu0 %v5962, 64
  %v6043 = vpop.permute.xlu0 %6042
  %6044 = vrot.lane.b32.xlu0 %v5963, 64
  %v6045 = vpop.permute.xlu0 %6044
  %6046 = vrot.lane.b32.xlu0 %v5964, 64
  %v6047 = vpop.permute.xlu0 %6046
  %6048 = vrot.lane.b32.xlu0 %v5965, 64
  %v6049 = vpop.permute.xlu0 %6048
  %6050 = vrot.lane.b32.xlu0 %v5966, 64
  %v6051 = vpop.permute.xlu0 %6050
  %6052 = vrot.lane.b32.xlu0 %v5967, 64
  %v6053 = vpop.permute.xlu0 %6052
  %6054 = vrot.lane.b32.xlu0 %v5968, 64
  %v6055 = vpop.permute.xlu0 %6054
  %6056 = vrot.lane.b32.xlu0 %v5969, 64
  %v6057 = vpop.permute.xlu0 %6056
  %6058 = vrot.lane.b32.xlu0 %v5970, 64
  %v6059 = vpop.permute.xlu0 %6058
  %6060 = vrot.lane.b32.xlu0 %v5971, 64
  %v6061 = vpop.permute.xlu0 %6060
  %6062 = vrot.lane.b32.xlu0 %v5972, 64
  %v6063 = vpop.permute.xlu0 %6062
  %6064 = vrot.lane.b32.xlu0 %v5973, 64
  %v6065 = vpop.permute.xlu0 %6064
  %6066 = vrot.lane.b32.xlu0 %v5974, 64
  %v6067 = vpop.permute.xlu0 %6066
  %6068 = vrot.lane.b32.xlu0 %v5975, 64
  %v6069 = vpop.permute.xlu0 %6068
  %6070 = vrot.lane.b32.xlu0 %v5976, 64
  %v6071 = vpop.permute.xlu0 %6070
  %6072 = vrot.lane.b32.xlu0 %v5977, 64
  %v6073 = vpop.permute.xlu0 %6072
  %6074 = vrot.lane.b32.xlu0 %v5978, 64
  %v6075 = vpop.permute.xlu0 %6074
  %6076 = vrot.lane.b32.xlu0 %v5979, 64
  %v6077 = vpop.permute.xlu0 %6076
  %6078 = vrot.lane.b32.xlu0 %v5980, 64
  %v6079 = vpop.permute.xlu0 %6078
  %6080 = vrot.lane.b32.xlu0 %v5981, 64
  %v6081 = vpop.permute.xlu0 %6080
  %6082 = vrot.lane.b32.xlu0 %v5982, 64
  %v6083 = vpop.permute.xlu0 %6082
  %v6084 = vsel %vm40, %v6035, 0
  %v6086 = vsel %vm40, %v6037, 0
  %v6088 = vsel %vm40, %v6039, 0
  %v6090 = vsel %vm40, %v6041, 0
  %v6092 = vsel %vm40, %v6043, 0
  %v6094 = vsel %vm40, %v6045, 0
  %v6096 = vsel %vm40, %v6047, 0
  %v6098 = vsel %vm40, %v6049, 0
  %v6100 = vsel %vm40, %v6051, 0
  %v6102 = vsel %vm40, %v6053, 0
  %v6104 = vsel %vm40, %v6055, 0
  %v6106 = vsel %vm40, %v6057, 0
  %v6108 = vsel %vm40, %v6059, 0
  %v6110 = vsel %vm40, %v6061, 0
  %v6112 = vsel %vm40, %v6063, 0
  %v6114 = vsel %vm40, %v6065, 0
  %v6116 = vsel %vm40, %v6067, 0
  %v6118 = vsel %vm40, %v6069, 0
  %v6120 = vsel %vm40, %v6071, 0
  %v6122 = vsel %vm40, %v6073, 0
  %v6124 = vsel %vm40, %v6075, 0
  %v6126 = vsel %vm40, %v6077, 0
  %v6128 = vsel %vm40, %v6079, 0
  %v6130 = vsel %vm40, %v6081, 0
  %v6132 = vsel %vm40, %v6083, 0
  %6134 = vmatpush.msra.mxu0 0.0
  %6135 = vmatpush.msra.mxu0 0.0
  %6136 = vmatpush.msra.mxu0 0.0
  %6137 = vmatpush.msra.mxu0 0.0
  %6138 = vmatpush.msra.mxu0 0.0
  %6139 = vmatpush.msra.mxu0 0.0
  %6140 = vmatpush.msra.mxu0 0.0
  %6141 = vmatpush.msra.mxu0 0.0
  %6142 = vmatpush.msra.mxu0 0.0
  %6143 = vmatpush.msra.mxu0 0.0
  %6144 = vmatpush.msra.mxu0 0.0
  %6145 = vmatpush.msra.mxu0 0.0
  %6146 = vmatpush.msra.mxu0 %v39
  %6147 = vmatpush.msra.mxu0 %v38
  %6148 = vmatpush.msra.mxu0 %v37
  %6149 = vmatpush.msra.mxu0 %v36
  %6150 = vmatmul.f32.gmra.mxu0 %v6084
  %v6151 = vpop.f32.mrf.mxu0
  %v6152 = vadd.f32 0.0, %v6151
  %6153 = vmatmul.f32.gmra.mxu0 %v6086
  %v6154 = vpop.f32.mrf.mxu0
  %v6155 = vadd.f32 0.0, %v6154
  %6156 = vmatmul.f32.gmra.mxu0 %v6088
  %v6157 = vpop.f32.mrf.mxu0
  %v6158 = vadd.f32 0.0, %v6157
  %6159 = vmatmul.f32.gmra.mxu0 %v6090
  %v6160 = vpop.f32.mrf.mxu0
  %v6161 = vadd.f32 0.0, %v6160
  %6162 = vmatmul.f32.gmra.mxu0 %v6092
  %v6163 = vpop.f32.mrf.mxu0
  %v6164 = vadd.f32 0.0, %v6163
  %6165 = vmatmul.f32.gmra.mxu0 %v6094
  %v6166 = vpop.f32.mrf.mxu0
  %v6167 = vadd.f32 0.0, %v6166
  %6168 = vmatmul.f32.gmra.mxu0 %v6096
  %v6169 = vpop.f32.mrf.mxu0
  %v6170 = vadd.f32 0.0, %v6169
  %6171 = vmatmul.f32.gmra.mxu0 %v6098
  %v6172 = vpop.f32.mrf.mxu0
  %v6173 = vadd.f32 0.0, %v6172
  %6174 = vmatmul.f32.gmra.mxu0 %v6100
  %v6175 = vpop.f32.mrf.mxu0
  %v6176 = vadd.f32 0.0, %v6175
  %6177 = vmatmul.f32.gmra.mxu0 %v6102
  %v6178 = vpop.f32.mrf.mxu0
  %v6179 = vadd.f32 0.0, %v6178
  %6180 = vmatmul.f32.gmra.mxu0 %v6104
  %v6181 = vpop.f32.mrf.mxu0
  %v6182 = vadd.f32 0.0, %v6181
  %6183 = vmatmul.f32.gmra.mxu0 %v6106
  %v6184 = vpop.f32.mrf.mxu0
  %v6185 = vadd.f32 0.0, %v6184
  %6186 = vmatmul.f32.gmra.mxu0 %v6108
  %v6187 = vpop.f32.mrf.mxu0
  %v6188 = vadd.f32 0.0, %v6187
  %6189 = vmatmul.f32.gmra.mxu0 %v6110
  %v6190 = vpop.f32.mrf.mxu0
  %v6191 = vadd.f32 0.0, %v6190
  %6192 = vmatmul.f32.gmra.mxu0 %v6112
  %v6193 = vpop.f32.mrf.mxu0
  %v6194 = vadd.f32 0.0, %v6193
  %6195 = vmatmul.f32.gmra.mxu0 %v6114
  %v6196 = vpop.f32.mrf.mxu0
  %v6197 = vadd.f32 0.0, %v6196
  %6198 = vmatmul.f32.gmra.mxu0 %v6116
  %v6199 = vpop.f32.mrf.mxu0
  %v6200 = vadd.f32 0.0, %v6199
  %6201 = vmatmul.f32.gmra.mxu0 %v6118
  %v6202 = vpop.f32.mrf.mxu0
  %v6203 = vadd.f32 0.0, %v6202
  %6204 = vmatmul.f32.gmra.mxu0 %v6120
  %v6205 = vpop.f32.mrf.mxu0
  %v6206 = vadd.f32 0.0, %v6205
  %6207 = vmatmul.f32.gmra.mxu0 %v6122
  %v6208 = vpop.f32.mrf.mxu0
  %v6209 = vadd.f32 0.0, %v6208
  %6210 = vmatmul.f32.gmra.mxu0 %v6124
  %v6211 = vpop.f32.mrf.mxu0
  %v6212 = vadd.f32 0.0, %v6211
  %6213 = vmatmul.f32.gmra.mxu0 %v6126
  %v6214 = vpop.f32.mrf.mxu0
  %v6215 = vadd.f32 0.0, %v6214
  %6216 = vmatmul.f32.gmra.mxu0 %v6128
  %v6217 = vpop.f32.mrf.mxu0
  %v6218 = vadd.f32 0.0, %v6217
  %6219 = vmatmul.f32.gmra.mxu0 %v6130
  %v6220 = vpop.f32.mrf.mxu0
  %v6221 = vadd.f32 0.0, %v6220
  %6222 = vmatmul.f32.gmra.mxu0 %v6132
  %v6223 = vpop.f32.mrf.mxu0
  %v6224 = vadd.f32 0.0, %v6223
  %6225 = vdwg.mxu0
  %v6226 = vadd.f32 %v5984, %v6152
  %v6227 = vadd.f32 %v5985, %v6155
  %v6228 = vadd.f32 %v5986, %v6158
  %v6229 = vadd.f32 %v5987, %v6161
  %v6230 = vadd.f32 %v5988, %v6164
  %v6231 = vadd.f32 %v5989, %v6167
  %v6232 = vadd.f32 %v5990, %v6170
  %v6233 = vadd.f32 %v5991, %v6173
  %v6234 = vadd.f32 %v5992, %v6176
  %v6235 = vadd.f32 %v5993, %v6179
  %v6236 = vadd.f32 %v5994, %v6182
  %v6237 = vadd.f32 %v5995, %v6185
  %v6238 = vadd.f32 %v5996, %v6188
  %v6239 = vadd.f32 %v5997, %v6191
  %v6240 = vadd.f32 %v5998, %v6194
  %v6241 = vadd.f32 %v5999, %v6197
  %v6242 = vadd.f32 %v6000, %v6200
  %v6243 = vadd.f32 %v6001, %v6203
  %v6244 = vadd.f32 %v6002, %v6206
  %v6245 = vadd.f32 %v6003, %v6209
  %v6246 = vadd.f32 %v6004, %v6212
  %v6247 = vadd.f32 %v6005, %v6215
  %v6248 = vadd.f32 %v6006, %v6218
  %v6249 = vadd.f32 %v6007, %v6221
  %v6250 = vadd.f32 %v6008, %v6224
  %v6251 = vxor.u32 %v6226, 2147483648
  %v6252 = vxor.u32 %v6227, 2147483648
  %v6253 = vxor.u32 %v6228, 2147483648
  %v6254 = vxor.u32 %v6229, 2147483648
  %v6255 = vxor.u32 %v6230, 2147483648
  %v6256 = vxor.u32 %v6231, 2147483648
  %v6257 = vxor.u32 %v6232, 2147483648
  %v6258 = vxor.u32 %v6233, 2147483648
  %v6259 = vxor.u32 %v6234, 2147483648
  %v6260 = vxor.u32 %v6235, 2147483648
  %v6261 = vxor.u32 %v6236, 2147483648
  %v6262 = vxor.u32 %v6237, 2147483648
  %v6263 = vxor.u32 %v6238, 2147483648
  %v6264 = vxor.u32 %v6239, 2147483648
  %v6265 = vxor.u32 %v6240, 2147483648
  %v6266 = vxor.u32 %v6241, 2147483648
  %v6267 = vxor.u32 %v6242, 2147483648
  %v6268 = vxor.u32 %v6243, 2147483648
  %v6269 = vxor.u32 %v6244, 2147483648
  %v6270 = vxor.u32 %v6245, 2147483648
  %v6271 = vxor.u32 %v6246, 2147483648
  %v6272 = vxor.u32 %v6247, 2147483648
  %v6273 = vxor.u32 %v6248, 2147483648
  %v6274 = vxor.u32 %v6249, 2147483648
  %v6275 = vxor.u32 %v6250, 2147483648
  %v6276 = vmul.f32 %v6251, 1.442695
  %v6277 = vpow.pop %v6276
  %v6278 = vmul.f32 %v6252, 1.442695
  %v6279 = vpow.pop %v6278
  %v6280 = vmul.f32 %v6253, 1.442695
  %v6281 = vpow.pop %v6280
  %v6282 = vmul.f32 %v6254, 1.442695
  %v6283 = vpow.pop %v6282
  %v6284 = vmul.f32 %v6255, 1.442695
  %v6285 = vpow.pop %v6284
  %v6286 = vmul.f32 %v6256, 1.442695
  %v6287 = vpow.pop %v6286
  %v6288 = vmul.f32 %v6257, 1.442695
  %v6289 = vpow.pop %v6288
  %v6290 = vmul.f32 %v6258, 1.442695
  %v6291 = vpow.pop %v6290
  %v6292 = vmul.f32 %v6259, 1.442695
  %v6293 = vpow.pop %v6292
  %v6294 = vmul.f32 %v6260, 1.442695
  %v6295 = vpow.pop %v6294
  %v6296 = vmul.f32 %v6261, 1.442695
  %v6297 = vpow.pop %v6296
  %v6298 = vmul.f32 %v6262, 1.442695
  %v6299 = vpow.pop %v6298
  %v6300 = vmul.f32 %v6263, 1.442695
  %v6301 = vpow.pop %v6300
  %v6302 = vmul.f32 %v6264, 1.442695
  %v6303 = vpow.pop %v6302
  %v6304 = vmul.f32 %v6265, 1.442695
  %v6305 = vpow.pop %v6304
  %v6306 = vmul.f32 %v6266, 1.442695
  %v6307 = vpow.pop %v6306
  %v6308 = vmul.f32 %v6267, 1.442695
  %v6309 = vpow.pop %v6308
  %v6310 = vmul.f32 %v6268, 1.442695
  %v6311 = vpow.pop %v6310
  %v6312 = vmul.f32 %v6269, 1.442695
  %v6313 = vpow.pop %v6312
  %v6314 = vmul.f32 %v6270, 1.442695
  %v6315 = vpow.pop %v6314
  %v6316 = vmul.f32 %v6271, 1.442695
  %v6317 = vpow.pop %v6316
  %v6318 = vmul.f32 %v6272, 1.442695
  %v6319 = vpow.pop %v6318
  %v6320 = vmul.f32 %v6273, 1.442695
  %v6321 = vpow.pop %v6320
  %v6322 = vmul.f32 %v6274, 1.442695
  %v6323 = vpow.pop %v6322
  %v6324 = vmul.f32 %v6275, 1.442695
  %v6325 = vpow.pop %v6324
  %v6326 = vadd.f32 %v6277, 1.0
  %v6327 = vadd.f32 %v6279, 1.0
  %v6328 = vadd.f32 %v6281, 1.0
  %v6329 = vadd.f32 %v6283, 1.0
  %v6330 = vadd.f32 %v6285, 1.0
  %v6331 = vadd.f32 %v6287, 1.0
  %v6332 = vadd.f32 %v6289, 1.0
  %v6333 = vadd.f32 %v6291, 1.0
  %v6334 = vadd.f32 %v6293, 1.0
  %v6335 = vadd.f32 %v6295, 1.0
  %v6336 = vadd.f32 %v6297, 1.0
  %v6337 = vadd.f32 %v6299, 1.0
  %v6338 = vadd.f32 %v6301, 1.0
  %v6339 = vadd.f32 %v6303, 1.0
  %v6340 = vadd.f32 %v6305, 1.0
  %v6341 = vadd.f32 %v6307, 1.0
  %v6342 = vadd.f32 %v6309, 1.0
  %v6343 = vadd.f32 %v6311, 1.0
  %v6344 = vadd.f32 %v6313, 1.0
  %v6345 = vadd.f32 %v6315, 1.0
  %v6346 = vadd.f32 %v6317, 1.0
  %v6347 = vadd.f32 %v6319, 1.0
  %v6348 = vadd.f32 %v6321, 1.0
  %v6349 = vadd.f32 %v6323, 1.0
  %v6350 = vadd.f32 %v6325, 1.0
  %v6351 = vrcp.pop %v6326
  %v6352 = vmul.f32 %v6326, %v6351
  %v6353 = vsub.f32 1.0, %v6352
  %v6354 = vmul.f32 %v6351, %v6353
  %v6355 = vadd.f32 %v6351, %v6354
  %vm6356 = vweird.f32 %v6326
  %vm6357 = vweird.f32 %v6351
  %vm6358 = vmor %vm6356, %vm6357
  %v6359 = vsel %vm6358, %v6351, %v6355
  %v6360 = vand.u32 2147483647, %v6326
  %vm6361 = vcmp.eq.f32.partialorder %v6360, 8.507059e+37
  %v6362 = vand.u32 %v6326, 2147483648
  %v6363 = vor.u32 1.1754944e-38, %v6362
  %v6364 = vsel %vm6361, %v6363, %v6359
  %v6365 = vmul.f32 1.0, %v6364
  %v6366 = vrcp.pop %v6327
  %v6367 = vmul.f32 %v6327, %v6366
  %v6368 = vsub.f32 1.0, %v6367
  %v6369 = vmul.f32 %v6366, %v6368
  %v6370 = vadd.f32 %v6366, %v6369
  %vm6371 = vweird.f32 %v6327
  %vm6372 = vweird.f32 %v6366
  %vm6373 = vmor %vm6371, %vm6372
  %v6374 = vsel %vm6373, %v6366, %v6370
  %v6375 = vand.u32 2147483647, %v6327
  %vm6376 = vcmp.eq.f32.partialorder %v6375, 8.507059e+37
  %v6377 = vand.u32 %v6327, 2147483648
  %v6378 = vor.u32 1.1754944e-38, %v6377
  %v6379 = vsel %vm6376, %v6378, %v6374
  %v6380 = vmul.f32 1.0, %v6379
  %v6381 = vrcp.pop %v6328
  %v6382 = vmul.f32 %v6328, %v6381
  %v6383 = vsub.f32 1.0, %v6382
  %v6384 = vmul.f32 %v6381, %v6383
  %v6385 = vadd.f32 %v6381, %v6384
  %vm6386 = vweird.f32 %v6328
  %vm6387 = vweird.f32 %v6381
  %vm6388 = vmor %vm6386, %vm6387
  %v6389 = vsel %vm6388, %v6381, %v6385
  %v6390 = vand.u32 2147483647, %v6328
  %vm6391 = vcmp.eq.f32.partialorder %v6390, 8.507059e+37
  %v6392 = vand.u32 %v6328, 2147483648
  %v6393 = vor.u32 1.1754944e-38, %v6392
  %v6394 = vsel %vm6391, %v6393, %v6389
  %v6395 = vmul.f32 1.0, %v6394
  %v6396 = vrcp.pop %v6329
  %v6397 = vmul.f32 %v6329, %v6396
  %v6398 = vsub.f32 1.0, %v6397
  %v6399 = vmul.f32 %v6396, %v6398
  %v6400 = vadd.f32 %v6396, %v6399
  %vm6401 = vweird.f32 %v6329
  %vm6402 = vweird.f32 %v6396
  %vm6403 = vmor %vm6401, %vm6402
  %v6404 = vsel %vm6403, %v6396, %v6400
  %v6405 = vand.u32 2147483647, %v6329
  %vm6406 = vcmp.eq.f32.partialorder %v6405, 8.507059e+37
  %v6407 = vand.u32 %v6329, 2147483648
  %v6408 = vor.u32 1.1754944e-38, %v6407
  %v6409 = vsel %vm6406, %v6408, %v6404
  %v6410 = vmul.f32 1.0, %v6409
  %v6411 = vrcp.pop %v6330
  %v6412 = vmul.f32 %v6330, %v6411
  %v6413 = vsub.f32 1.0, %v6412
  %v6414 = vmul.f32 %v6411, %v6413
  %v6415 = vadd.f32 %v6411, %v6414
  %vm6416 = vweird.f32 %v6330
  %vm6417 = vweird.f32 %v6411
  %vm6418 = vmor %vm6416, %vm6417
  %v6419 = vsel %vm6418, %v6411, %v6415
  %v6420 = vand.u32 2147483647, %v6330
  %vm6421 = vcmp.eq.f32.partialorder %v6420, 8.507059e+37
  %v6422 = vand.u32 %v6330, 2147483648
  %v6423 = vor.u32 1.1754944e-38, %v6422
  %v6424 = vsel %vm6421, %v6423, %v6419
  %v6425 = vmul.f32 1.0, %v6424
  %v6426 = vrcp.pop %v6331
  %v6427 = vmul.f32 %v6331, %v6426
  %v6428 = vsub.f32 1.0, %v6427
  %v6429 = vmul.f32 %v6426, %v6428
  %v6430 = vadd.f32 %v6426, %v6429
  %vm6431 = vweird.f32 %v6331
  %vm6432 = vweird.f32 %v6426
  %vm6433 = vmor %vm6431, %vm6432
  %v6434 = vsel %vm6433, %v6426, %v6430
  %v6435 = vand.u32 2147483647, %v6331
  %vm6436 = vcmp.eq.f32.partialorder %v6435, 8.507059e+37
  %v6437 = vand.u32 %v6331, 2147483648
  %v6438 = vor.u32 1.1754944e-38, %v6437
  %v6439 = vsel %vm6436, %v6438, %v6434
  %v6440 = vmul.f32 1.0, %v6439
  %v6441 = vrcp.pop %v6332
  %v6442 = vmul.f32 %v6332, %v6441
  %v6443 = vsub.f32 1.0, %v6442
  %v6444 = vmul.f32 %v6441, %v6443
  %v6445 = vadd.f32 %v6441, %v6444
  %vm6446 = vweird.f32 %v6332
  %vm6447 = vweird.f32 %v6441
  %vm6448 = vmor %vm6446, %vm6447
  %v6449 = vsel %vm6448, %v6441, %v6445
  %v6450 = vand.u32 2147483647, %v6332
  %vm6451 = vcmp.eq.f32.partialorder %v6450, 8.507059e+37
  %v6452 = vand.u32 %v6332, 2147483648
  %v6453 = vor.u32 1.1754944e-38, %v6452
  %v6454 = vsel %vm6451, %v6453, %v6449
  %v6455 = vmul.f32 1.0, %v6454
  %v6456 = vrcp.pop %v6333
  %v6457 = vmul.f32 %v6333, %v6456
  %v6458 = vsub.f32 1.0, %v6457
  %v6459 = vmul.f32 %v6456, %v6458
  %v6460 = vadd.f32 %v6456, %v6459
  %vm6461 = vweird.f32 %v6333
  %vm6462 = vweird.f32 %v6456
  %vm6463 = vmor %vm6461, %vm6462
  %v6464 = vsel %vm6463, %v6456, %v6460
  %v6465 = vand.u32 2147483647, %v6333
  %vm6466 = vcmp.eq.f32.partialorder %v6465, 8.507059e+37
  %v6467 = vand.u32 %v6333, 2147483648
  %v6468 = vor.u32 1.1754944e-38, %v6467
  %v6469 = vsel %vm6466, %v6468, %v6464
  %v6470 = vmul.f32 1.0, %v6469
  %v6471 = vrcp.pop %v6334
  %v6472 = vmul.f32 %v6334, %v6471
  %v6473 = vsub.f32 1.0, %v6472
  %v6474 = vmul.f32 %v6471, %v6473
  %v6475 = vadd.f32 %v6471, %v6474
  %vm6476 = vweird.f32 %v6334
  %vm6477 = vweird.f32 %v6471
  %vm6478 = vmor %vm6476, %vm6477
  %v6479 = vsel %vm6478, %v6471, %v6475
  %v6480 = vand.u32 2147483647, %v6334
  %vm6481 = vcmp.eq.f32.partialorder %v6480, 8.507059e+37
  %v6482 = vand.u32 %v6334, 2147483648
  %v6483 = vor.u32 1.1754944e-38, %v6482
  %v6484 = vsel %vm6481, %v6483, %v6479
  %v6485 = vmul.f32 1.0, %v6484
  %v6486 = vrcp.pop %v6335
  %v6487 = vmul.f32 %v6335, %v6486
  %v6488 = vsub.f32 1.0, %v6487
  %v6489 = vmul.f32 %v6486, %v6488
  %v6490 = vadd.f32 %v6486, %v6489
  %vm6491 = vweird.f32 %v6335
  %vm6492 = vweird.f32 %v6486
  %vm6493 = vmor %vm6491, %vm6492
  %v6494 = vsel %vm6493, %v6486, %v6490
  %v6495 = vand.u32 2147483647, %v6335
  %vm6496 = vcmp.eq.f32.partialorder %v6495, 8.507059e+37
  %v6497 = vand.u32 %v6335, 2147483648
  %v6498 = vor.u32 1.1754944e-38, %v6497
  %v6499 = vsel %vm6496, %v6498, %v6494
  %v6500 = vmul.f32 1.0, %v6499
  %v6501 = vrcp.pop %v6336
  %v6502 = vmul.f32 %v6336, %v6501
  %v6503 = vsub.f32 1.0, %v6502
  %v6504 = vmul.f32 %v6501, %v6503
  %v6505 = vadd.f32 %v6501, %v6504
  %vm6506 = vweird.f32 %v6336
  %vm6507 = vweird.f32 %v6501
  %vm6508 = vmor %vm6506, %vm6507
  %v6509 = vsel %vm6508, %v6501, %v6505
  %v6510 = vand.u32 2147483647, %v6336
  %vm6511 = vcmp.eq.f32.partialorder %v6510, 8.507059e+37
  %v6512 = vand.u32 %v6336, 2147483648
  %v6513 = vor.u32 1.1754944e-38, %v6512
  %v6514 = vsel %vm6511, %v6513, %v6509
  %v6515 = vmul.f32 1.0, %v6514
  %v6516 = vrcp.pop %v6337
  %v6517 = vmul.f32 %v6337, %v6516
  %v6518 = vsub.f32 1.0, %v6517
  %v6519 = vmul.f32 %v6516, %v6518
  %v6520 = vadd.f32 %v6516, %v6519
  %vm6521 = vweird.f32 %v6337
  %vm6522 = vweird.f32 %v6516
  %vm6523 = vmor %vm6521, %vm6522
  %v6524 = vsel %vm6523, %v6516, %v6520
  %v6525 = vand.u32 2147483647, %v6337
  %vm6526 = vcmp.eq.f32.partialorder %v6525, 8.507059e+37
  %v6527 = vand.u32 %v6337, 2147483648
  %v6528 = vor.u32 1.1754944e-38, %v6527
  %v6529 = vsel %vm6526, %v6528, %v6524
  %v6530 = vmul.f32 1.0, %v6529
  %v6531 = vrcp.pop %v6338
  %v6532 = vmul.f32 %v6338, %v6531
  %v6533 = vsub.f32 1.0, %v6532
  %v6534 = vmul.f32 %v6531, %v6533
  %v6535 = vadd.f32 %v6531, %v6534
  %vm6536 = vweird.f32 %v6338
  %vm6537 = vweird.f32 %v6531
  %vm6538 = vmor %vm6536, %vm6537
  %v6539 = vsel %vm6538, %v6531, %v6535
  %v6540 = vand.u32 2147483647, %v6338
  %vm6541 = vcmp.eq.f32.partialorder %v6540, 8.507059e+37
  %v6542 = vand.u32 %v6338, 2147483648
  %v6543 = vor.u32 1.1754944e-38, %v6542
  %v6544 = vsel %vm6541, %v6543, %v6539
  %v6545 = vmul.f32 1.0, %v6544
  %v6546 = vrcp.pop %v6339
  %v6547 = vmul.f32 %v6339, %v6546
  %v6548 = vsub.f32 1.0, %v6547
  %v6549 = vmul.f32 %v6546, %v6548
  %v6550 = vadd.f32 %v6546, %v6549
  %vm6551 = vweird.f32 %v6339
  %vm6552 = vweird.f32 %v6546
  %vm6553 = vmor %vm6551, %vm6552
  %v6554 = vsel %vm6553, %v6546, %v6550
  %v6555 = vand.u32 2147483647, %v6339
  %vm6556 = vcmp.eq.f32.partialorder %v6555, 8.507059e+37
  %v6557 = vand.u32 %v6339, 2147483648
  %v6558 = vor.u32 1.1754944e-38, %v6557
  %v6559 = vsel %vm6556, %v6558, %v6554
  %v6560 = vmul.f32 1.0, %v6559
  %v6561 = vrcp.pop %v6340
  %v6562 = vmul.f32 %v6340, %v6561
  %v6563 = vsub.f32 1.0, %v6562
  %v6564 = vmul.f32 %v6561, %v6563
  %v6565 = vadd.f32 %v6561, %v6564
  %vm6566 = vweird.f32 %v6340
  %vm6567 = vweird.f32 %v6561
  %vm6568 = vmor %vm6566, %vm6567
  %v6569 = vsel %vm6568, %v6561, %v6565
  %v6570 = vand.u32 2147483647, %v6340
  %vm6571 = vcmp.eq.f32.partialorder %v6570, 8.507059e+37
  %v6572 = vand.u32 %v6340, 2147483648
  %v6573 = vor.u32 1.1754944e-38, %v6572
  %v6574 = vsel %vm6571, %v6573, %v6569
  %v6575 = vmul.f32 1.0, %v6574
  %v6576 = vrcp.pop %v6341
  %v6577 = vmul.f32 %v6341, %v6576
  %v6578 = vsub.f32 1.0, %v6577
  %v6579 = vmul.f32 %v6576, %v6578
  %v6580 = vadd.f32 %v6576, %v6579
  %vm6581 = vweird.f32 %v6341
  %vm6582 = vweird.f32 %v6576
  %vm6583 = vmor %vm6581, %vm6582
  %v6584 = vsel %vm6583, %v6576, %v6580
  %v6585 = vand.u32 2147483647, %v6341
  %vm6586 = vcmp.eq.f32.partialorder %v6585, 8.507059e+37
  %v6587 = vand.u32 %v6341, 2147483648
  %v6588 = vor.u32 1.1754944e-38, %v6587
  %v6589 = vsel %vm6586, %v6588, %v6584
  %v6590 = vmul.f32 1.0, %v6589
  %v6591 = vrcp.pop %v6342
  %v6592 = vmul.f32 %v6342, %v6591
  %v6593 = vsub.f32 1.0, %v6592
  %v6594 = vmul.f32 %v6591, %v6593
  %v6595 = vadd.f32 %v6591, %v6594
  %vm6596 = vweird.f32 %v6342
  %vm6597 = vweird.f32 %v6591
  %vm6598 = vmor %vm6596, %vm6597
  %v6599 = vsel %vm6598, %v6591, %v6595
  %v6600 = vand.u32 2147483647, %v6342
  %vm6601 = vcmp.eq.f32.partialorder %v6600, 8.507059e+37
  %v6602 = vand.u32 %v6342, 2147483648
  %v6603 = vor.u32 1.1754944e-38, %v6602
  %v6604 = vsel %vm6601, %v6603, %v6599
  %v6605 = vmul.f32 1.0, %v6604
  %v6606 = vrcp.pop %v6343
  %v6607 = vmul.f32 %v6343, %v6606
  %v6608 = vsub.f32 1.0, %v6607
  %v6609 = vmul.f32 %v6606, %v6608
  %v6610 = vadd.f32 %v6606, %v6609
  %vm6611 = vweird.f32 %v6343
  %vm6612 = vweird.f32 %v6606
  %vm6613 = vmor %vm6611, %vm6612
  %v6614 = vsel %vm6613, %v6606, %v6610
  %v6615 = vand.u32 2147483647, %v6343
  %vm6616 = vcmp.eq.f32.partialorder %v6615, 8.507059e+37
  %v6617 = vand.u32 %v6343, 2147483648
  %v6618 = vor.u32 1.1754944e-38, %v6617
  %v6619 = vsel %vm6616, %v6618, %v6614
  %v6620 = vmul.f32 1.0, %v6619
  %v6621 = vrcp.pop %v6344
  %v6622 = vmul.f32 %v6344, %v6621
  %v6623 = vsub.f32 1.0, %v6622
  %v6624 = vmul.f32 %v6621, %v6623
  %v6625 = vadd.f32 %v6621, %v6624
  %vm6626 = vweird.f32 %v6344
  %vm6627 = vweird.f32 %v6621
  %vm6628 = vmor %vm6626, %vm6627
  %v6629 = vsel %vm6628, %v6621, %v6625
  %v6630 = vand.u32 2147483647, %v6344
  %vm6631 = vcmp.eq.f32.partialorder %v6630, 8.507059e+37
  %v6632 = vand.u32 %v6344, 2147483648
  %v6633 = vor.u32 1.1754944e-38, %v6632
  %v6634 = vsel %vm6631, %v6633, %v6629
  %v6635 = vmul.f32 1.0, %v6634
  %v6636 = vrcp.pop %v6345
  %v6637 = vmul.f32 %v6345, %v6636
  %v6638 = vsub.f32 1.0, %v6637
  %v6639 = vmul.f32 %v6636, %v6638
  %v6640 = vadd.f32 %v6636, %v6639
  %vm6641 = vweird.f32 %v6345
  %vm6642 = vweird.f32 %v6636
  %vm6643 = vmor %vm6641, %vm6642
  %v6644 = vsel %vm6643, %v6636, %v6640
  %v6645 = vand.u32 2147483647, %v6345
  %vm6646 = vcmp.eq.f32.partialorder %v6645, 8.507059e+37
  %v6647 = vand.u32 %v6345, 2147483648
  %v6648 = vor.u32 1.1754944e-38, %v6647
  %v6649 = vsel %vm6646, %v6648, %v6644
  %v6650 = vmul.f32 1.0, %v6649
  %v6651 = vrcp.pop %v6346
  %v6652 = vmul.f32 %v6346, %v6651
  %v6653 = vsub.f32 1.0, %v6652
  %v6654 = vmul.f32 %v6651, %v6653
  %v6655 = vadd.f32 %v6651, %v6654
  %vm6656 = vweird.f32 %v6346
  %vm6657 = vweird.f32 %v6651
  %vm6658 = vmor %vm6656, %vm6657
  %v6659 = vsel %vm6658, %v6651, %v6655
  %v6660 = vand.u32 2147483647, %v6346
  %vm6661 = vcmp.eq.f32.partialorder %v6660, 8.507059e+37
  %v6662 = vand.u32 %v6346, 2147483648
  %v6663 = vor.u32 1.1754944e-38, %v6662
  %v6664 = vsel %vm6661, %v6663, %v6659
  %v6665 = vmul.f32 1.0, %v6664
  %v6666 = vrcp.pop %v6347
  %v6667 = vmul.f32 %v6347, %v6666
  %v6668 = vsub.f32 1.0, %v6667
  %v6669 = vmul.f32 %v6666, %v6668
  %v6670 = vadd.f32 %v6666, %v6669
  %vm6671 = vweird.f32 %v6347
  %vm6672 = vweird.f32 %v6666
  %vm6673 = vmor %vm6671, %vm6672
  %v6674 = vsel %vm6673, %v6666, %v6670
  %v6675 = vand.u32 2147483647, %v6347
  %vm6676 = vcmp.eq.f32.partialorder %v6675, 8.507059e+37
  %v6677 = vand.u32 %v6347, 2147483648
  %v6678 = vor.u32 1.1754944e-38, %v6677
  %v6679 = vsel %vm6676, %v6678, %v6674
  %v6680 = vmul.f32 1.0, %v6679
  %v6681 = vrcp.pop %v6348
  %v6682 = vmul.f32 %v6348, %v6681
  %v6683 = vsub.f32 1.0, %v6682
  %v6684 = vmul.f32 %v6681, %v6683
  %v6685 = vadd.f32 %v6681, %v6684
  %vm6686 = vweird.f32 %v6348
  %vm6687 = vweird.f32 %v6681
  %vm6688 = vmor %vm6686, %vm6687
  %v6689 = vsel %vm6688, %v6681, %v6685
  %v6690 = vand.u32 2147483647, %v6348
  %vm6691 = vcmp.eq.f32.partialorder %v6690, 8.507059e+37
  %v6692 = vand.u32 %v6348, 2147483648
  %v6693 = vor.u32 1.1754944e-38, %v6692
  %v6694 = vsel %vm6691, %v6693, %v6689
  %v6695 = vmul.f32 1.0, %v6694
  %v6696 = vrcp.pop %v6349
  %v6697 = vmul.f32 %v6349, %v6696
  %v6698 = vsub.f32 1.0, %v6697
  %v6699 = vmul.f32 %v6696, %v6698
  %v6700 = vadd.f32 %v6696, %v6699
  %vm6701 = vweird.f32 %v6349
  %vm6702 = vweird.f32 %v6696
  %vm6703 = vmor %vm6701, %vm6702
  %v6704 = vsel %vm6703, %v6696, %v6700
  %v6705 = vand.u32 2147483647, %v6349
  %vm6706 = vcmp.eq.f32.partialorder %v6705, 8.507059e+37
  %v6707 = vand.u32 %v6349, 2147483648
  %v6708 = vor.u32 1.1754944e-38, %v6707
  %v6709 = vsel %vm6706, %v6708, %v6704
  %v6710 = vmul.f32 1.0, %v6709
  %v6711 = vrcp.pop %v6350
  %v6712 = vmul.f32 %v6350, %v6711
  %v6713 = vsub.f32 1.0, %v6712
  %v6714 = vmul.f32 %v6711, %v6713
  %v6715 = vadd.f32 %v6711, %v6714
  %vm6716 = vweird.f32 %v6350
  %vm6717 = vweird.f32 %v6711
  %vm6718 = vmor %vm6716, %vm6717
  %v6719 = vsel %vm6718, %v6711, %v6715
  %v6720 = vand.u32 2147483647, %v6350
  %vm6721 = vcmp.eq.f32.partialorder %v6720, 8.507059e+37
  %v6722 = vand.u32 %v6350, 2147483648
  %v6723 = vor.u32 1.1754944e-38, %v6722
  %v6724 = vsel %vm6721, %v6723, %v6719
  %v6725 = vmul.f32 1.0, %v6724
  %v6726 = vmul.f32 %v6365, 2.0
  %v6727 = vmul.f32 %v6380, 2.0
  %v6728 = vmul.f32 %v6395, 2.0
  %v6729 = vmul.f32 %v6410, 2.0
  %v6730 = vmul.f32 %v6425, 2.0
  %v6731 = vmul.f32 %v6440, 2.0
  %v6732 = vmul.f32 %v6455, 2.0
  %v6733 = vmul.f32 %v6470, 2.0
  %v6734 = vmul.f32 %v6485, 2.0
  %v6735 = vmul.f32 %v6500, 2.0
  %v6736 = vmul.f32 %v6515, 2.0
  %v6737 = vmul.f32 %v6530, 2.0
  %v6738 = vmul.f32 %v6545, 2.0
  %v6739 = vmul.f32 %v6560, 2.0
  %v6740 = vmul.f32 %v6575, 2.0
  %v6741 = vmul.f32 %v6590, 2.0
  %v6742 = vmul.f32 %v6605, 2.0
  %v6743 = vmul.f32 %v6620, 2.0
  %v6744 = vmul.f32 %v6635, 2.0
  %v6745 = vmul.f32 %v6650, 2.0
  %v6746 = vmul.f32 %v6665, 2.0
  %v6747 = vmul.f32 %v6680, 2.0
  %v6748 = vmul.f32 %v6695, 2.0
  %v6749 = vmul.f32 %v6710, 2.0
  %v6750 = vmul.f32 %v6725, 2.0
  %v6751 = vsub.f32 %v6726, 1.0
  %v6752 = vsub.f32 %v6727, 1.0
  %v6753 = vsub.f32 %v6728, 1.0
  %v6754 = vsub.f32 %v6729, 1.0
  %v6755 = vsub.f32 %v6730, 1.0
  %v6756 = vsub.f32 %v6731, 1.0
  %v6757 = vsub.f32 %v6732, 1.0
  %v6758 = vsub.f32 %v6733, 1.0
  %v6759 = vsub.f32 %v6734, 1.0
  %v6760 = vsub.f32 %v6735, 1.0
  %v6761 = vsub.f32 %v6736, 1.0
  %v6762 = vsub.f32 %v6737, 1.0
  %v6763 = vsub.f32 %v6738, 1.0
  %v6764 = vsub.f32 %v6739, 1.0
  %v6765 = vsub.f32 %v6740, 1.0
  %v6766 = vsub.f32 %v6741, 1.0
  %v6767 = vsub.f32 %v6742, 1.0
  %v6768 = vsub.f32 %v6743, 1.0
  %v6769 = vsub.f32 %v6744, 1.0
  %v6770 = vsub.f32 %v6745, 1.0
  %v6771 = vsub.f32 %v6746, 1.0
  %v6772 = vsub.f32 %v6747, 1.0
  %v6773 = vsub.f32 %v6748, 1.0
  %v6774 = vsub.f32 %v6749, 1.0
  %v6775 = vsub.f32 %v6750, 1.0
  %v6776 = vmul.f32 %v6365, %v5808
  %v6777 = vmul.f32 %v6380, %v5809
  %v6778 = vmul.f32 %v6395, %v5810
  %v6779 = vmul.f32 %v6410, %v5811
  %v6780 = vmul.f32 %v6425, %v5812
  %v6781 = vmul.f32 %v6440, %v5813
  %v6782 = vmul.f32 %v6455, %v5814
  %v6783 = vmul.f32 %v6470, %v5815
  %v6784 = vmul.f32 %v6485, %v5816
  %v6785 = vmul.f32 %v6500, %v5817
  %v6786 = vmul.f32 %v6515, %v5818
  %v6787 = vmul.f32 %v6530, %v5819
  %v6788 = vmul.f32 %v6545, %v5820
  %v6789 = vmul.f32 %v6560, %v5821
  %v6790 = vmul.f32 %v6575, %v5822
  %v6791 = vmul.f32 %v6590, %v5823
  %v6792 = vmul.f32 %v6605, %v5824
  %v6793 = vmul.f32 %v6620, %v5825
  %v6794 = vmul.f32 %v6635, %v5826
  %v6795 = vmul.f32 %v6650, %v5827
  %v6796 = vmul.f32 %v6665, %v5828
  %v6797 = vmul.f32 %v6680, %v5829
  %v6798 = vmul.f32 %v6695, %v5830
  %v6799 = vmul.f32 %v6710, %v5831
  %v6800 = vmul.f32 %v6725, %v5832
  %6826 = vrot.lane.b32.xlu0 %v6751, 32
  %v6827 = vpop.permute.xlu0 %6826
  %6828 = vrot.lane.b32.xlu0 %v6752, 32
  %v6829 = vpop.permute.xlu0 %6828
  %6830 = vrot.lane.b32.xlu0 %v6753, 32
  %v6831 = vpop.permute.xlu0 %6830
  %6832 = vrot.lane.b32.xlu0 %v6754, 32
  %v6833 = vpop.permute.xlu0 %6832
  %6834 = vrot.lane.b32.xlu0 %v6755, 32
  %v6835 = vpop.permute.xlu0 %6834
  %6836 = vrot.lane.b32.xlu0 %v6756, 32
  %v6837 = vpop.permute.xlu0 %6836
  %6838 = vrot.lane.b32.xlu0 %v6757, 32
  %v6839 = vpop.permute.xlu0 %6838
  %6840 = vrot.lane.b32.xlu0 %v6758, 32
  %v6841 = vpop.permute.xlu0 %6840
  %6842 = vrot.lane.b32.xlu0 %v6759, 32
  %v6843 = vpop.permute.xlu0 %6842
  %6844 = vrot.lane.b32.xlu0 %v6760, 32
  %v6845 = vpop.permute.xlu0 %6844
  %6846 = vrot.lane.b32.xlu0 %v6761, 32
  %v6847 = vpop.permute.xlu0 %6846
  %6848 = vrot.lane.b32.xlu0 %v6762, 32
  %v6849 = vpop.permute.xlu0 %6848
  %6850 = vrot.lane.b32.xlu0 %v6763, 32
  %v6851 = vpop.permute.xlu0 %6850
  %6852 = vrot.lane.b32.xlu0 %v6764, 32
  %v6853 = vpop.permute.xlu0 %6852
  %6854 = vrot.lane.b32.xlu0 %v6765, 32
  %v6855 = vpop.permute.xlu0 %6854
  %6856 = vrot.lane.b32.xlu0 %v6766, 32
  %v6857 = vpop.permute.xlu0 %6856
  %6858 = vrot.lane.b32.xlu0 %v6767, 32
  %v6859 = vpop.permute.xlu0 %6858
  %6860 = vrot.lane.b32.xlu0 %v6768, 32
  %v6861 = vpop.permute.xlu0 %6860
  %6862 = vrot.lane.b32.xlu0 %v6769, 32
  %v6863 = vpop.permute.xlu0 %6862
  %6864 = vrot.lane.b32.xlu0 %v6770, 32
  %v6865 = vpop.permute.xlu0 %6864
  %6866 = vrot.lane.b32.xlu0 %v6771, 32
  %v6867 = vpop.permute.xlu0 %6866
  %6868 = vrot.lane.b32.xlu0 %v6772, 32
  %v6869 = vpop.permute.xlu0 %6868
  %6870 = vrot.lane.b32.xlu0 %v6773, 32
  %v6871 = vpop.permute.xlu0 %6870
  %6872 = vrot.lane.b32.xlu0 %v6774, 32
  %v6873 = vpop.permute.xlu0 %6872
  %6874 = vrot.lane.b32.xlu0 %v6775, 32
  %v6875 = vpop.permute.xlu0 %6874
  %v6901 = vmul.f32 %v6365, %v6827
  %v6902 = vmul.f32 %v6380, %v6829
  %v6903 = vmul.f32 %v6395, %v6831
  %v6904 = vmul.f32 %v6410, %v6833
  %v6905 = vmul.f32 %v6425, %v6835
  %v6906 = vmul.f32 %v6440, %v6837
  %v6907 = vmul.f32 %v6455, %v6839
  %v6908 = vmul.f32 %v6470, %v6841
  %v6909 = vmul.f32 %v6485, %v6843
  %v6910 = vmul.f32 %v6500, %v6845
  %v6911 = vmul.f32 %v6515, %v6847
  %v6912 = vmul.f32 %v6530, %v6849
  %v6913 = vmul.f32 %v6545, %v6851
  %v6914 = vmul.f32 %v6560, %v6853
  %v6915 = vmul.f32 %v6575, %v6855
  %v6916 = vmul.f32 %v6590, %v6857
  %v6917 = vmul.f32 %v6605, %v6859
  %v6918 = vmul.f32 %v6620, %v6861
  %v6919 = vmul.f32 %v6635, %v6863
  %v6920 = vmul.f32 %v6650, %v6865
  %v6921 = vmul.f32 %v6665, %v6867
  %v6922 = vmul.f32 %v6680, %v6869
  %v6923 = vmul.f32 %v6695, %v6871
  %v6924 = vmul.f32 %v6710, %v6873
  %v6925 = vmul.f32 %v6725, %v6875
  %6951 = vrot.lane.b32.xlu0 %v6901, 32
  %v6952 = vpop.permute.xlu0 %6951
  %6953 = vrot.lane.b32.xlu0 %v6902, 32
  %v6954 = vpop.permute.xlu0 %6953
  %6955 = vrot.lane.b32.xlu0 %v6903, 32
  %v6956 = vpop.permute.xlu0 %6955
  %6957 = vrot.lane.b32.xlu0 %v6904, 32
  %v6958 = vpop.permute.xlu0 %6957
  %6959 = vrot.lane.b32.xlu0 %v6905, 32
  %v6960 = vpop.permute.xlu0 %6959
  %6961 = vrot.lane.b32.xlu0 %v6906, 32
  %v6962 = vpop.permute.xlu0 %6961
  %6963 = vrot.lane.b32.xlu0 %v6907, 32
  %v6964 = vpop.permute.xlu0 %6963
  %6965 = vrot.lane.b32.xlu0 %v6908, 32
  %v6966 = vpop.permute.xlu0 %6965
  %6967 = vrot.lane.b32.xlu0 %v6909, 32
  %v6968 = vpop.permute.xlu0 %6967
  %6969 = vrot.lane.b32.xlu0 %v6910, 32
  %v6970 = vpop.permute.xlu0 %6969
  %6971 = vrot.lane.b32.xlu0 %v6911, 32
  %v6972 = vpop.permute.xlu0 %6971
  %6973 = vrot.lane.b32.xlu0 %v6912, 32
  %v6974 = vpop.permute.xlu0 %6973
  %6975 = vrot.lane.b32.xlu0 %v6913, 32
  %v6976 = vpop.permute.xlu0 %6975
  %6977 = vrot.lane.b32.xlu0 %v6914, 32
  %v6978 = vpop.permute.xlu0 %6977
  %6979 = vrot.lane.b32.xlu0 %v6915, 32
  %v6980 = vpop.permute.xlu0 %6979
  %6981 = vrot.lane.b32.xlu0 %v6916, 32
  %v6982 = vpop.permute.xlu0 %6981
  %6983 = vrot.lane.b32.xlu0 %v6917, 32
  %v6984 = vpop.permute.xlu0 %6983
  %6985 = vrot.lane.b32.xlu0 %v6918, 32
  %v6986 = vpop.permute.xlu0 %6985
  %6987 = vrot.lane.b32.xlu0 %v6919, 32
  %v6988 = vpop.permute.xlu0 %6987
  %6989 = vrot.lane.b32.xlu0 %v6920, 32
  %v6990 = vpop.permute.xlu0 %6989
  %6991 = vrot.lane.b32.xlu0 %v6921, 32
  %v6992 = vpop.permute.xlu0 %6991
  %6993 = vrot.lane.b32.xlu0 %v6922, 32
  %v6994 = vpop.permute.xlu0 %6993
  %6995 = vrot.lane.b32.xlu0 %v6923, 32
  %v6996 = vpop.permute.xlu0 %6995
  %6997 = vrot.lane.b32.xlu0 %v6924, 32
  %v6998 = vpop.permute.xlu0 %6997
  %6999 = vrot.lane.b32.xlu0 %v6925, 32
  %v7000 = vpop.permute.xlu0 %6999
  %v7026 = vadd.f32 %v6776, %v6952
  %v7027 = vadd.f32 %v6777, %v6954
  %v7028 = vadd.f32 %v6778, %v6956
  %v7029 = vadd.f32 %v6779, %v6958
  %v7030 = vadd.f32 %v6780, %v6960
  %v7031 = vadd.f32 %v6781, %v6962
  %v7032 = vadd.f32 %v6782, %v6964
  %v7033 = vadd.f32 %v6783, %v6966
  %v7034 = vadd.f32 %v6784, %v6968
  %v7035 = vadd.f32 %v6785, %v6970
  %v7036 = vadd.f32 %v6786, %v6972
  %v7037 = vadd.f32 %v6787, %v6974
  %v7038 = vadd.f32 %v6788, %v6976
  %v7039 = vadd.f32 %v6789, %v6978
  %v7040 = vadd.f32 %v6790, %v6980
  %v7041 = vadd.f32 %v6791, %v6982
  %v7042 = vadd.f32 %v6792, %v6984
  %v7043 = vadd.f32 %v6793, %v6986
  %v7044 = vadd.f32 %v6794, %v6988
  %v7045 = vadd.f32 %v6795, %v6990
  %v7046 = vadd.f32 %v6796, %v6992
  %v7047 = vadd.f32 %v6797, %v6994
  %v7048 = vadd.f32 %v6798, %v6996
  %v7049 = vadd.f32 %v6799, %v6998
  %v7050 = vadd.f32 %v6800, %v7000
  %v7051 = vtanh.pop %v7026
  %v7052 = vtanh.pop %v7027
  %v7053 = vtanh.pop %v7028
  %v7054 = vtanh.pop %v7029
  %v7055 = vtanh.pop %v7030
  %v7056 = vtanh.pop %v7031
  %v7057 = vtanh.pop %v7032
  %v7058 = vtanh.pop %v7033
  %v7059 = vtanh.pop %v7034
  %v7060 = vtanh.pop %v7035
  %v7061 = vtanh.pop %v7036
  %v7062 = vtanh.pop %v7037
  %v7063 = vtanh.pop %v7038
  %v7064 = vtanh.pop %v7039
  %v7065 = vtanh.pop %v7040
  %v7066 = vtanh.pop %v7041
  %v7067 = vtanh.pop %v7042
  %v7068 = vtanh.pop %v7043
  %v7069 = vtanh.pop %v7044
  %v7070 = vtanh.pop %v7045
  %v7071 = vtanh.pop %v7046
  %v7072 = vtanh.pop %v7047
  %v7073 = vtanh.pop %v7048
  %v7074 = vtanh.pop %v7049
  %v7075 = vtanh.pop %v7050
  %7101 = vrot.lane.b32.xlu0 %v7051, 32
  %v7102 = vpop.permute.xlu0 %7101
  %7103 = vrot.lane.b32.xlu0 %v7052, 32
  %v7104 = vpop.permute.xlu0 %7103
  %7105 = vrot.lane.b32.xlu0 %v7053, 32
  %v7106 = vpop.permute.xlu0 %7105
  %7107 = vrot.lane.b32.xlu0 %v7054, 32
  %v7108 = vpop.permute.xlu0 %7107
  %7109 = vrot.lane.b32.xlu0 %v7055, 32
  %v7110 = vpop.permute.xlu0 %7109
  %7111 = vrot.lane.b32.xlu0 %v7056, 32
  %v7112 = vpop.permute.xlu0 %7111
  %7113 = vrot.lane.b32.xlu0 %v7057, 32
  %v7114 = vpop.permute.xlu0 %7113
  %7115 = vrot.lane.b32.xlu0 %v7058, 32
  %v7116 = vpop.permute.xlu0 %7115
  %7117 = vrot.lane.b32.xlu0 %v7059, 32
  %v7118 = vpop.permute.xlu0 %7117
  %7119 = vrot.lane.b32.xlu0 %v7060, 32
  %v7120 = vpop.permute.xlu0 %7119
  %7121 = vrot.lane.b32.xlu0 %v7061, 32
  %v7122 = vpop.permute.xlu0 %7121
  %7123 = vrot.lane.b32.xlu0 %v7062, 32
  %v7124 = vpop.permute.xlu0 %7123
  %7125 = vrot.lane.b32.xlu0 %v7063, 32
  %v7126 = vpop.permute.xlu0 %7125
  %7127 = vrot.lane.b32.xlu0 %v7064, 32
  %v7128 = vpop.permute.xlu0 %7127
  %7129 = vrot.lane.b32.xlu0 %v7065, 32
  %v7130 = vpop.permute.xlu0 %7129
  %7131 = vrot.lane.b32.xlu0 %v7066, 32
  %v7132 = vpop.permute.xlu0 %7131
  %7133 = vrot.lane.b32.xlu0 %v7067, 32
  %v7134 = vpop.permute.xlu0 %7133
  %7135 = vrot.lane.b32.xlu0 %v7068, 32
  %v7136 = vpop.permute.xlu0 %7135
  %7137 = vrot.lane.b32.xlu0 %v7069, 32
  %v7138 = vpop.permute.xlu0 %7137
  %7139 = vrot.lane.b32.xlu0 %v7070, 32
  %v7140 = vpop.permute.xlu0 %7139
  %7141 = vrot.lane.b32.xlu0 %v7071, 32
  %v7142 = vpop.permute.xlu0 %7141
  %7143 = vrot.lane.b32.xlu0 %v7072, 32
  %v7144 = vpop.permute.xlu0 %7143
  %7145 = vrot.lane.b32.xlu0 %v7073, 32
  %v7146 = vpop.permute.xlu0 %7145
  %7147 = vrot.lane.b32.xlu0 %v7074, 32
  %v7148 = vpop.permute.xlu0 %7147
  %7149 = vrot.lane.b32.xlu0 %v7075, 32
  %v7150 = vpop.permute.xlu0 %7149
  %v7176 = vmul.f32 %v6365, %v7102
  %v7177 = vmul.f32 %v6380, %v7104
  %v7178 = vmul.f32 %v6395, %v7106
  %v7179 = vmul.f32 %v6410, %v7108
  %v7180 = vmul.f32 %v6425, %v7110
  %v7181 = vmul.f32 %v6440, %v7112
  %v7182 = vmul.f32 %v6455, %v7114
  %v7183 = vmul.f32 %v6470, %v7116
  %v7184 = vmul.f32 %v6485, %v7118
  %v7185 = vmul.f32 %v6500, %v7120
  %v7186 = vmul.f32 %v6515, %v7122
  %v7187 = vmul.f32 %v6530, %v7124
  %v7188 = vmul.f32 %v6545, %v7126
  %v7189 = vmul.f32 %v6560, %v7128
  %v7190 = vmul.f32 %v6575, %v7130
  %v7191 = vmul.f32 %v6590, %v7132
  %v7192 = vmul.f32 %v6605, %v7134
  %v7193 = vmul.f32 %v6620, %v7136
  %v7194 = vmul.f32 %v6635, %v7138
  %v7195 = vmul.f32 %v6650, %v7140
  %v7196 = vmul.f32 %v6665, %v7142
  %v7197 = vmul.f32 %v6680, %v7144
  %v7198 = vmul.f32 %v6695, %v7146
  %v7199 = vmul.f32 %v6710, %v7148
  %v7200 = vmul.f32 %v6725, %v7150
  %s7201 = scalar_lea.vmem %s0, 1200
  %v7202 = vld [vmem:[%s7201] sm:$0xff]
  %v7203 = vld [vmem:[%s7201 + $0x8] sm:$0xff]
  %v7204 = vld [vmem:[%s7201 + $0x10] sm:$0xff]
  %v7205 = vld [vmem:[%s7201 + $0x18] sm:$0xff]
  %v7206 = vld [vmem:[%s7201 + $0x20] sm:$0xff]
  %v7207 = vld [vmem:[%s7201 + $0x28] sm:$0xff]
  %v7208 = vld [vmem:[%s7201 + $0x30] sm:$0xff]
  %v7209 = vld [vmem:[%s7201 + $0x38] sm:$0xff]
  %v7210 = vld [vmem:[%s7201 + $0x40] sm:$0xff]
  %v7211 = vld [vmem:[%s7201 + $0x48] sm:$0xff]
  %v7212 = vld [vmem:[%s7201 + $0x50] sm:$0xff]
  %v7213 = vld [vmem:[%s7201 + $0x58] sm:$0xff]
  %v7214 = vld [vmem:[%s7201 + $0x60] sm:$0xff]
  %v7215 = vld [vmem:[%s7201 + $0x68] sm:$0xff]
  %v7216 = vld [vmem:[%s7201 + $0x70] sm:$0xff]
  %v7217 = vld [vmem:[%s7201 + $0x78] sm:$0xff]
  %v7218 = vld [vmem:[%s7201 + $0x80] sm:$0xff]
  %v7219 = vld [vmem:[%s7201 + $0x88] sm:$0xff]
  %v7220 = vld [vmem:[%s7201 + $0x90] sm:$0xff]
  %v7221 = vld [vmem:[%s7201 + $0x98] sm:$0xff]
  %v7222 = vld [vmem:[%s7201 + $0xa0] sm:$0xff]
  %v7223 = vld [vmem:[%s7201 + $0xa8] sm:$0xff]
  %v7224 = vld [vmem:[%s7201 + $0xb0] sm:$0xff]
  %v7225 = vld [vmem:[%s7201 + $0xb8] sm:$0xff]
  %v7226 = vld [vmem:[%s7201 + $0xc0] sm:$0xff]
  %7252 = vrot.lane.b32.xlu0 %v7176, 64
  %v7253 = vpop.permute.xlu0 %7252
  %7254 = vrot.lane.b32.xlu0 %v7177, 64
  %v7255 = vpop.permute.xlu0 %7254
  %7256 = vrot.lane.b32.xlu0 %v7178, 64
  %v7257 = vpop.permute.xlu0 %7256
  %7258 = vrot.lane.b32.xlu0 %v7179, 64
  %v7259 = vpop.permute.xlu0 %7258
  %7260 = vrot.lane.b32.xlu0 %v7180, 64
  %v7261 = vpop.permute.xlu0 %7260
  %7262 = vrot.lane.b32.xlu0 %v7181, 64
  %v7263 = vpop.permute.xlu0 %7262
  %7264 = vrot.lane.b32.xlu0 %v7182, 64
  %v7265 = vpop.permute.xlu0 %7264
  %7266 = vrot.lane.b32.xlu0 %v7183, 64
  %v7267 = vpop.permute.xlu0 %7266
  %7268 = vrot.lane.b32.xlu0 %v7184, 64
  %v7269 = vpop.permute.xlu0 %7268
  %7270 = vrot.lane.b32.xlu0 %v7185, 64
  %v7271 = vpop.permute.xlu0 %7270
  %7272 = vrot.lane.b32.xlu0 %v7186, 64
  %v7273 = vpop.permute.xlu0 %7272
  %7274 = vrot.lane.b32.xlu0 %v7187, 64
  %v7275 = vpop.permute.xlu0 %7274
  %7276 = vrot.lane.b32.xlu0 %v7188, 64
  %v7277 = vpop.permute.xlu0 %7276
  %7278 = vrot.lane.b32.xlu0 %v7189, 64
  %v7279 = vpop.permute.xlu0 %7278
  %7280 = vrot.lane.b32.xlu0 %v7190, 64
  %v7281 = vpop.permute.xlu0 %7280
  %7282 = vrot.lane.b32.xlu0 %v7191, 64
  %v7283 = vpop.permute.xlu0 %7282
  %7284 = vrot.lane.b32.xlu0 %v7192, 64
  %v7285 = vpop.permute.xlu0 %7284
  %7286 = vrot.lane.b32.xlu0 %v7193, 64
  %v7287 = vpop.permute.xlu0 %7286
  %7288 = vrot.lane.b32.xlu0 %v7194, 64
  %v7289 = vpop.permute.xlu0 %7288
  %7290 = vrot.lane.b32.xlu0 %v7195, 64
  %v7291 = vpop.permute.xlu0 %7290
  %7292 = vrot.lane.b32.xlu0 %v7196, 64
  %v7293 = vpop.permute.xlu0 %7292
  %7294 = vrot.lane.b32.xlu0 %v7197, 64
  %v7295 = vpop.permute.xlu0 %7294
  %7296 = vrot.lane.b32.xlu0 %v7198, 64
  %v7297 = vpop.permute.xlu0 %7296
  %7298 = vrot.lane.b32.xlu0 %v7199, 64
  %v7299 = vpop.permute.xlu0 %7298
  %7300 = vrot.lane.b32.xlu0 %v7200, 64
  %v7301 = vpop.permute.xlu0 %7300
  %v7302 = vsel %vm40, %v7253, 0
  %v7304 = vsel %vm40, %v7255, 0
  %v7306 = vsel %vm40, %v7257, 0
  %v7308 = vsel %vm40, %v7259, 0
  %v7310 = vsel %vm40, %v7261, 0
  %v7312 = vsel %vm40, %v7263, 0
  %v7314 = vsel %vm40, %v7265, 0
  %v7316 = vsel %vm40, %v7267, 0
  %v7318 = vsel %vm40, %v7269, 0
  %v7320 = vsel %vm40, %v7271, 0
  %v7322 = vsel %vm40, %v7273, 0
  %v7324 = vsel %vm40, %v7275, 0
  %v7326 = vsel %vm40, %v7277, 0
  %v7328 = vsel %vm40, %v7279, 0
  %v7330 = vsel %vm40, %v7281, 0
  %v7332 = vsel %vm40, %v7283, 0
  %v7334 = vsel %vm40, %v7285, 0
  %v7336 = vsel %vm40, %v7287, 0
  %v7338 = vsel %vm40, %v7289, 0
  %v7340 = vsel %vm40, %v7291, 0
  %v7342 = vsel %vm40, %v7293, 0
  %v7344 = vsel %vm40, %v7295, 0
  %v7346 = vsel %vm40, %v7297, 0
  %v7348 = vsel %vm40, %v7299, 0
  %v7350 = vsel %vm40, %v7301, 0
  %7352 = vmatpush.msra.mxu0 0.0
  %7353 = vmatpush.msra.mxu0 0.0
  %7354 = vmatpush.msra.mxu0 0.0
  %7355 = vmatpush.msra.mxu0 0.0
  %7356 = vmatpush.msra.mxu0 0.0
  %7357 = vmatpush.msra.mxu0 0.0
  %7358 = vmatpush.msra.mxu0 0.0
  %7359 = vmatpush.msra.mxu0 0.0
  %7360 = vmatpush.msra.mxu0 0.0
  %7361 = vmatpush.msra.mxu0 0.0
  %7362 = vmatpush.msra.mxu0 0.0
  %7363 = vmatpush.msra.mxu0 0.0
  %7364 = vmatpush.msra.mxu0 %v39
  %7365 = vmatpush.msra.mxu0 %v38
  %7366 = vmatpush.msra.mxu0 %v37
  %7367 = vmatpush.msra.mxu0 %v36
  %7368 = vmatmul.f32.gmra.mxu0 %v7302
  %v7369 = vpop.f32.mrf.mxu0
  %v7370 = vadd.f32 0.0, %v7369
  %7371 = vmatmul.f32.gmra.mxu0 %v7304
  %v7372 = vpop.f32.mrf.mxu0
  %v7373 = vadd.f32 0.0, %v7372
  %7374 = vmatmul.f32.gmra.mxu0 %v7306
  %v7375 = vpop.f32.mrf.mxu0
  %v7376 = vadd.f32 0.0, %v7375
  %7377 = vmatmul.f32.gmra.mxu0 %v7308
  %v7378 = vpop.f32.mrf.mxu0
  %v7379 = vadd.f32 0.0, %v7378
  %7380 = vmatmul.f32.gmra.mxu0 %v7310
  %v7381 = vpop.f32.mrf.mxu0
  %v7382 = vadd.f32 0.0, %v7381
  %7383 = vmatmul.f32.gmra.mxu0 %v7312
  %v7384 = vpop.f32.mrf.mxu0
  %v7385 = vadd.f32 0.0, %v7384
  %7386 = vmatmul.f32.gmra.mxu0 %v7314
  %v7387 = vpop.f32.mrf.mxu0
  %v7388 = vadd.f32 0.0, %v7387
  %7389 = vmatmul.f32.gmra.mxu0 %v7316
  %v7390 = vpop.f32.mrf.mxu0
  %v7391 = vadd.f32 0.0, %v7390
  %7392 = vmatmul.f32.gmra.mxu0 %v7318
  %v7393 = vpop.f32.mrf.mxu0
  %v7394 = vadd.f32 0.0, %v7393
  %7395 = vmatmul.f32.gmra.mxu0 %v7320
  %v7396 = vpop.f32.mrf.mxu0
  %v7397 = vadd.f32 0.0, %v7396
  %7398 = vmatmul.f32.gmra.mxu0 %v7322
  %v7399 = vpop.f32.mrf.mxu0
  %v7400 = vadd.f32 0.0, %v7399
  %7401 = vmatmul.f32.gmra.mxu0 %v7324
  %v7402 = vpop.f32.mrf.mxu0
  %v7403 = vadd.f32 0.0, %v7402
  %7404 = vmatmul.f32.gmra.mxu0 %v7326
  %v7405 = vpop.f32.mrf.mxu0
  %v7406 = vadd.f32 0.0, %v7405
  %7407 = vmatmul.f32.gmra.mxu0 %v7328
  %v7408 = vpop.f32.mrf.mxu0
  %v7409 = vadd.f32 0.0, %v7408
  %7410 = vmatmul.f32.gmra.mxu0 %v7330
  %v7411 = vpop.f32.mrf.mxu0
  %v7412 = vadd.f32 0.0, %v7411
  %7413 = vmatmul.f32.gmra.mxu0 %v7332
  %v7414 = vpop.f32.mrf.mxu0
  %v7415 = vadd.f32 0.0, %v7414
  %7416 = vmatmul.f32.gmra.mxu0 %v7334
  %v7417 = vpop.f32.mrf.mxu0
  %v7418 = vadd.f32 0.0, %v7417
  %7419 = vmatmul.f32.gmra.mxu0 %v7336
  %v7420 = vpop.f32.mrf.mxu0
  %v7421 = vadd.f32 0.0, %v7420
  %7422 = vmatmul.f32.gmra.mxu0 %v7338
  %v7423 = vpop.f32.mrf.mxu0
  %v7424 = vadd.f32 0.0, %v7423
  %7425 = vmatmul.f32.gmra.mxu0 %v7340
  %v7426 = vpop.f32.mrf.mxu0
  %v7427 = vadd.f32 0.0, %v7426
  %7428 = vmatmul.f32.gmra.mxu0 %v7342
  %v7429 = vpop.f32.mrf.mxu0
  %v7430 = vadd.f32 0.0, %v7429
  %7431 = vmatmul.f32.gmra.mxu0 %v7344
  %v7432 = vpop.f32.mrf.mxu0
  %v7433 = vadd.f32 0.0, %v7432
  %7434 = vmatmul.f32.gmra.mxu0 %v7346
  %v7435 = vpop.f32.mrf.mxu0
  %v7436 = vadd.f32 0.0, %v7435
  %7437 = vmatmul.f32.gmra.mxu0 %v7348
  %v7438 = vpop.f32.mrf.mxu0
  %v7439 = vadd.f32 0.0, %v7438
  %7440 = vmatmul.f32.gmra.mxu0 %v7350
  %v7441 = vpop.f32.mrf.mxu0
  %v7442 = vadd.f32 0.0, %v7441
  %7443 = vdwg.mxu0
  %v7444 = vadd.f32 %v7202, %v7370
  %v7445 = vadd.f32 %v7203, %v7373
  %v7446 = vadd.f32 %v7204, %v7376
  %v7447 = vadd.f32 %v7205, %v7379
  %v7448 = vadd.f32 %v7206, %v7382
  %v7449 = vadd.f32 %v7207, %v7385
  %v7450 = vadd.f32 %v7208, %v7388
  %v7451 = vadd.f32 %v7209, %v7391
  %v7452 = vadd.f32 %v7210, %v7394
  %v7453 = vadd.f32 %v7211, %v7397
  %v7454 = vadd.f32 %v7212, %v7400
  %v7455 = vadd.f32 %v7213, %v7403
  %v7456 = vadd.f32 %v7214, %v7406
  %v7457 = vadd.f32 %v7215, %v7409
  %v7458 = vadd.f32 %v7216, %v7412
  %v7459 = vadd.f32 %v7217, %v7415
  %v7460 = vadd.f32 %v7218, %v7418
  %v7461 = vadd.f32 %v7219, %v7421
  %v7462 = vadd.f32 %v7220, %v7424
  %v7463 = vadd.f32 %v7221, %v7427
  %v7464 = vadd.f32 %v7222, %v7430
  %v7465 = vadd.f32 %v7223, %v7433
  %v7466 = vadd.f32 %v7224, %v7436
  %v7467 = vadd.f32 %v7225, %v7439
  %v7468 = vadd.f32 %v7226, %v7442
  %v7469 = vxor.u32 %v7444, 2147483648
  %v7470 = vxor.u32 %v7445, 2147483648
  %v7471 = vxor.u32 %v7446, 2147483648
  %v7472 = vxor.u32 %v7447, 2147483648
  %v7473 = vxor.u32 %v7448, 2147483648
  %v7474 = vxor.u32 %v7449, 2147483648
  %v7475 = vxor.u32 %v7450, 2147483648
  %v7476 = vxor.u32 %v7451, 2147483648
  %v7477 = vxor.u32 %v7452, 2147483648
  %v7478 = vxor.u32 %v7453, 2147483648
  %v7479 = vxor.u32 %v7454, 2147483648
  %v7480 = vxor.u32 %v7455, 2147483648
  %v7481 = vxor.u32 %v7456, 2147483648
  %v7482 = vxor.u32 %v7457, 2147483648
  %v7483 = vxor.u32 %v7458, 2147483648
  %v7484 = vxor.u32 %v7459, 2147483648
  %v7485 = vxor.u32 %v7460, 2147483648
  %v7486 = vxor.u32 %v7461, 2147483648
  %v7487 = vxor.u32 %v7462, 2147483648
  %v7488 = vxor.u32 %v7463, 2147483648
  %v7489 = vxor.u32 %v7464, 2147483648
  %v7490 = vxor.u32 %v7465, 2147483648
  %v7491 = vxor.u32 %v7466, 2147483648
  %v7492 = vxor.u32 %v7467, 2147483648
  %v7493 = vxor.u32 %v7468, 2147483648
  %v7494 = vmul.f32 %v7469, 1.442695
  %v7495 = vpow.pop %v7494
  %v7496 = vmul.f32 %v7470, 1.442695
  %v7497 = vpow.pop %v7496
  %v7498 = vmul.f32 %v7471, 1.442695
  %v7499 = vpow.pop %v7498
  %v7500 = vmul.f32 %v7472, 1.442695
  %v7501 = vpow.pop %v7500
  %v7502 = vmul.f32 %v7473, 1.442695
  %v7503 = vpow.pop %v7502
  %v7504 = vmul.f32 %v7474, 1.442695
  %v7505 = vpow.pop %v7504
  %v7506 = vmul.f32 %v7475, 1.442695
  %v7507 = vpow.pop %v7506
  %v7508 = vmul.f32 %v7476, 1.442695
  %v7509 = vpow.pop %v7508
  %v7510 = vmul.f32 %v7477, 1.442695
  %v7511 = vpow.pop %v7510
  %v7512 = vmul.f32 %v7478, 1.442695
  %v7513 = vpow.pop %v7512
  %v7514 = vmul.f32 %v7479, 1.442695
  %v7515 = vpow.pop %v7514
  %v7516 = vmul.f32 %v7480, 1.442695
  %v7517 = vpow.pop %v7516
  %v7518 = vmul.f32 %v7481, 1.442695
  %v7519 = vpow.pop %v7518
  %v7520 = vmul.f32 %v7482, 1.442695
  %v7521 = vpow.pop %v7520
  %v7522 = vmul.f32 %v7483, 1.442695
  %v7523 = vpow.pop %v7522
  %v7524 = vmul.f32 %v7484, 1.442695
  %v7525 = vpow.pop %v7524
  %v7526 = vmul.f32 %v7485, 1.442695
  %v7527 = vpow.pop %v7526
  %v7528 = vmul.f32 %v7486, 1.442695
  %v7529 = vpow.pop %v7528
  %v7530 = vmul.f32 %v7487, 1.442695
  %v7531 = vpow.pop %v7530
  %v7532 = vmul.f32 %v7488, 1.442695
  %v7533 = vpow.pop %v7532
  %v7534 = vmul.f32 %v7489, 1.442695
  %v7535 = vpow.pop %v7534
  %v7536 = vmul.f32 %v7490, 1.442695
  %v7537 = vpow.pop %v7536
  %v7538 = vmul.f32 %v7491, 1.442695
  %v7539 = vpow.pop %v7538
  %v7540 = vmul.f32 %v7492, 1.442695
  %v7541 = vpow.pop %v7540
  %v7542 = vmul.f32 %v7493, 1.442695
  %v7543 = vpow.pop %v7542
  %v7544 = vadd.f32 %v7495, 1.0
  %v7545 = vadd.f32 %v7497, 1.0
  %v7546 = vadd.f32 %v7499, 1.0
  %v7547 = vadd.f32 %v7501, 1.0
  %v7548 = vadd.f32 %v7503, 1.0
  %v7549 = vadd.f32 %v7505, 1.0
  %v7550 = vadd.f32 %v7507, 1.0
  %v7551 = vadd.f32 %v7509, 1.0
  %v7552 = vadd.f32 %v7511, 1.0
  %v7553 = vadd.f32 %v7513, 1.0
  %v7554 = vadd.f32 %v7515, 1.0
  %v7555 = vadd.f32 %v7517, 1.0
  %v7556 = vadd.f32 %v7519, 1.0
  %v7557 = vadd.f32 %v7521, 1.0
  %v7558 = vadd.f32 %v7523, 1.0
  %v7559 = vadd.f32 %v7525, 1.0
  %v7560 = vadd.f32 %v7527, 1.0
  %v7561 = vadd.f32 %v7529, 1.0
  %v7562 = vadd.f32 %v7531, 1.0
  %v7563 = vadd.f32 %v7533, 1.0
  %v7564 = vadd.f32 %v7535, 1.0
  %v7565 = vadd.f32 %v7537, 1.0
  %v7566 = vadd.f32 %v7539, 1.0
  %v7567 = vadd.f32 %v7541, 1.0
  %v7568 = vadd.f32 %v7543, 1.0
  %v7569 = vrcp.pop %v7544
  %v7570 = vmul.f32 %v7544, %v7569
  %v7571 = vsub.f32 1.0, %v7570
  %v7572 = vmul.f32 %v7569, %v7571
  %v7573 = vadd.f32 %v7569, %v7572
  %vm7574 = vweird.f32 %v7544
  %vm7575 = vweird.f32 %v7569
  %vm7576 = vmor %vm7574, %vm7575
  %v7577 = vsel %vm7576, %v7569, %v7573
  %v7578 = vand.u32 2147483647, %v7544
  %vm7579 = vcmp.eq.f32.partialorder %v7578, 8.507059e+37
  %v7580 = vand.u32 %v7544, 2147483648
  %v7581 = vor.u32 1.1754944e-38, %v7580
  %v7582 = vsel %vm7579, %v7581, %v7577
  %v7583 = vmul.f32 1.0, %v7582
  %v7584 = vrcp.pop %v7545
  %v7585 = vmul.f32 %v7545, %v7584
  %v7586 = vsub.f32 1.0, %v7585
  %v7587 = vmul.f32 %v7584, %v7586
  %v7588 = vadd.f32 %v7584, %v7587
  %vm7589 = vweird.f32 %v7545
  %vm7590 = vweird.f32 %v7584
  %vm7591 = vmor %vm7589, %vm7590
  %v7592 = vsel %vm7591, %v7584, %v7588
  %v7593 = vand.u32 2147483647, %v7545
  %vm7594 = vcmp.eq.f32.partialorder %v7593, 8.507059e+37
  %v7595 = vand.u32 %v7545, 2147483648
  %v7596 = vor.u32 1.1754944e-38, %v7595
  %v7597 = vsel %vm7594, %v7596, %v7592
  %v7598 = vmul.f32 1.0, %v7597
  %v7599 = vrcp.pop %v7546
  %v7600 = vmul.f32 %v7546, %v7599
  %v7601 = vsub.f32 1.0, %v7600
  %v7602 = vmul.f32 %v7599, %v7601
  %v7603 = vadd.f32 %v7599, %v7602
  %vm7604 = vweird.f32 %v7546
  %vm7605 = vweird.f32 %v7599
  %vm7606 = vmor %vm7604, %vm7605
  %v7607 = vsel %vm7606, %v7599, %v7603
  %v7608 = vand.u32 2147483647, %v7546
  %vm7609 = vcmp.eq.f32.partialorder %v7608, 8.507059e+37
  %v7610 = vand.u32 %v7546, 2147483648
  %v7611 = vor.u32 1.1754944e-38, %v7610
  %v7612 = vsel %vm7609, %v7611, %v7607
  %v7613 = vmul.f32 1.0, %v7612
  %v7614 = vrcp.pop %v7547
  %v7615 = vmul.f32 %v7547, %v7614
  %v7616 = vsub.f32 1.0, %v7615
  %v7617 = vmul.f32 %v7614, %v7616
  %v7618 = vadd.f32 %v7614, %v7617
  %vm7619 = vweird.f32 %v7547
  %vm7620 = vweird.f32 %v7614
  %vm7621 = vmor %vm7619, %vm7620
  %v7622 = vsel %vm7621, %v7614, %v7618
  %v7623 = vand.u32 2147483647, %v7547
  %vm7624 = vcmp.eq.f32.partialorder %v7623, 8.507059e+37
  %v7625 = vand.u32 %v7547, 2147483648
  %v7626 = vor.u32 1.1754944e-38, %v7625
  %v7627 = vsel %vm7624, %v7626, %v7622
  %v7628 = vmul.f32 1.0, %v7627
  %v7629 = vrcp.pop %v7548
  %v7630 = vmul.f32 %v7548, %v7629
  %v7631 = vsub.f32 1.0, %v7630
  %v7632 = vmul.f32 %v7629, %v7631
  %v7633 = vadd.f32 %v7629, %v7632
  %vm7634 = vweird.f32 %v7548
  %vm7635 = vweird.f32 %v7629
  %vm7636 = vmor %vm7634, %vm7635
  %v7637 = vsel %vm7636, %v7629, %v7633
  %v7638 = vand.u32 2147483647, %v7548
  %vm7639 = vcmp.eq.f32.partialorder %v7638, 8.507059e+37
  %v7640 = vand.u32 %v7548, 2147483648
  %v7641 = vor.u32 1.1754944e-38, %v7640
  %v7642 = vsel %vm7639, %v7641, %v7637
  %v7643 = vmul.f32 1.0, %v7642
  %v7644 = vrcp.pop %v7549
  %v7645 = vmul.f32 %v7549, %v7644
  %v7646 = vsub.f32 1.0, %v7645
  %v7647 = vmul.f32 %v7644, %v7646
  %v7648 = vadd.f32 %v7644, %v7647
  %vm7649 = vweird.f32 %v7549
  %vm7650 = vweird.f32 %v7644
  %vm7651 = vmor %vm7649, %vm7650
  %v7652 = vsel %vm7651, %v7644, %v7648
  %v7653 = vand.u32 2147483647, %v7549
  %vm7654 = vcmp.eq.f32.partialorder %v7653, 8.507059e+37
  %v7655 = vand.u32 %v7549, 2147483648
  %v7656 = vor.u32 1.1754944e-38, %v7655
  %v7657 = vsel %vm7654, %v7656, %v7652
  %v7658 = vmul.f32 1.0, %v7657
  %v7659 = vrcp.pop %v7550
  %v7660 = vmul.f32 %v7550, %v7659
  %v7661 = vsub.f32 1.0, %v7660
  %v7662 = vmul.f32 %v7659, %v7661
  %v7663 = vadd.f32 %v7659, %v7662
  %vm7664 = vweird.f32 %v7550
  %vm7665 = vweird.f32 %v7659
  %vm7666 = vmor %vm7664, %vm7665
  %v7667 = vsel %vm7666, %v7659, %v7663
  %v7668 = vand.u32 2147483647, %v7550
  %vm7669 = vcmp.eq.f32.partialorder %v7668, 8.507059e+37
  %v7670 = vand.u32 %v7550, 2147483648
  %v7671 = vor.u32 1.1754944e-38, %v7670
  %v7672 = vsel %vm7669, %v7671, %v7667
  %v7673 = vmul.f32 1.0, %v7672
  %v7674 = vrcp.pop %v7551
  %v7675 = vmul.f32 %v7551, %v7674
  %v7676 = vsub.f32 1.0, %v7675
  %v7677 = vmul.f32 %v7674, %v7676
  %v7678 = vadd.f32 %v7674, %v7677
  %vm7679 = vweird.f32 %v7551
  %vm7680 = vweird.f32 %v7674
  %vm7681 = vmor %vm7679, %vm7680
  %v7682 = vsel %vm7681, %v7674, %v7678
  %v7683 = vand.u32 2147483647, %v7551
  %vm7684 = vcmp.eq.f32.partialorder %v7683, 8.507059e+37
  %v7685 = vand.u32 %v7551, 2147483648
  %v7686 = vor.u32 1.1754944e-38, %v7685
  %v7687 = vsel %vm7684, %v7686, %v7682
  %v7688 = vmul.f32 1.0, %v7687
  %v7689 = vrcp.pop %v7552
  %v7690 = vmul.f32 %v7552, %v7689
  %v7691 = vsub.f32 1.0, %v7690
  %v7692 = vmul.f32 %v7689, %v7691
  %v7693 = vadd.f32 %v7689, %v7692
  %vm7694 = vweird.f32 %v7552
  %vm7695 = vweird.f32 %v7689
  %vm7696 = vmor %vm7694, %vm7695
  %v7697 = vsel %vm7696, %v7689, %v7693
  %v7698 = vand.u32 2147483647, %v7552
  %vm7699 = vcmp.eq.f32.partialorder %v7698, 8.507059e+37
  %v7700 = vand.u32 %v7552, 2147483648
  %v7701 = vor.u32 1.1754944e-38, %v7700
  %v7702 = vsel %vm7699, %v7701, %v7697
  %v7703 = vmul.f32 1.0, %v7702
  %v7704 = vrcp.pop %v7553
  %v7705 = vmul.f32 %v7553, %v7704
  %v7706 = vsub.f32 1.0, %v7705
  %v7707 = vmul.f32 %v7704, %v7706
  %v7708 = vadd.f32 %v7704, %v7707
  %vm7709 = vweird.f32 %v7553
  %vm7710 = vweird.f32 %v7704
  %vm7711 = vmor %vm7709, %vm7710
  %v7712 = vsel %vm7711, %v7704, %v7708
  %v7713 = vand.u32 2147483647, %v7553
  %vm7714 = vcmp.eq.f32.partialorder %v7713, 8.507059e+37
  %v7715 = vand.u32 %v7553, 2147483648
  %v7716 = vor.u32 1.1754944e-38, %v7715
  %v7717 = vsel %vm7714, %v7716, %v7712
  %v7718 = vmul.f32 1.0, %v7717
  %v7719 = vrcp.pop %v7554
  %v7720 = vmul.f32 %v7554, %v7719
  %v7721 = vsub.f32 1.0, %v7720
  %v7722 = vmul.f32 %v7719, %v7721
  %v7723 = vadd.f32 %v7719, %v7722
  %vm7724 = vweird.f32 %v7554
  %vm7725 = vweird.f32 %v7719
  %vm7726 = vmor %vm7724, %vm7725
  %v7727 = vsel %vm7726, %v7719, %v7723
  %v7728 = vand.u32 2147483647, %v7554
  %vm7729 = vcmp.eq.f32.partialorder %v7728, 8.507059e+37
  %v7730 = vand.u32 %v7554, 2147483648
  %v7731 = vor.u32 1.1754944e-38, %v7730
  %v7732 = vsel %vm7729, %v7731, %v7727
  %v7733 = vmul.f32 1.0, %v7732
  %v7734 = vrcp.pop %v7555
  %v7735 = vmul.f32 %v7555, %v7734
  %v7736 = vsub.f32 1.0, %v7735
  %v7737 = vmul.f32 %v7734, %v7736
  %v7738 = vadd.f32 %v7734, %v7737
  %vm7739 = vweird.f32 %v7555
  %vm7740 = vweird.f32 %v7734
  %vm7741 = vmor %vm7739, %vm7740
  %v7742 = vsel %vm7741, %v7734, %v7738
  %v7743 = vand.u32 2147483647, %v7555
  %vm7744 = vcmp.eq.f32.partialorder %v7743, 8.507059e+37
  %v7745 = vand.u32 %v7555, 2147483648
  %v7746 = vor.u32 1.1754944e-38, %v7745
  %v7747 = vsel %vm7744, %v7746, %v7742
  %v7748 = vmul.f32 1.0, %v7747
  %v7749 = vrcp.pop %v7556
  %v7750 = vmul.f32 %v7556, %v7749
  %v7751 = vsub.f32 1.0, %v7750
  %v7752 = vmul.f32 %v7749, %v7751
  %v7753 = vadd.f32 %v7749, %v7752
  %vm7754 = vweird.f32 %v7556
  %vm7755 = vweird.f32 %v7749
  %vm7756 = vmor %vm7754, %vm7755
  %v7757 = vsel %vm7756, %v7749, %v7753
  %v7758 = vand.u32 2147483647, %v7556
  %vm7759 = vcmp.eq.f32.partialorder %v7758, 8.507059e+37
  %v7760 = vand.u32 %v7556, 2147483648
  %v7761 = vor.u32 1.1754944e-38, %v7760
  %v7762 = vsel %vm7759, %v7761, %v7757
  %v7763 = vmul.f32 1.0, %v7762
  %v7764 = vrcp.pop %v7557
  %v7765 = vmul.f32 %v7557, %v7764
  %v7766 = vsub.f32 1.0, %v7765
  %v7767 = vmul.f32 %v7764, %v7766
  %v7768 = vadd.f32 %v7764, %v7767
  %vm7769 = vweird.f32 %v7557
  %vm7770 = vweird.f32 %v7764
  %vm7771 = vmor %vm7769, %vm7770
  %v7772 = vsel %vm7771, %v7764, %v7768
  %v7773 = vand.u32 2147483647, %v7557
  %vm7774 = vcmp.eq.f32.partialorder %v7773, 8.507059e+37
  %v7775 = vand.u32 %v7557, 2147483648
  %v7776 = vor.u32 1.1754944e-38, %v7775
  %v7777 = vsel %vm7774, %v7776, %v7772
  %v7778 = vmul.f32 1.0, %v7777
  %v7779 = vrcp.pop %v7558
  %v7780 = vmul.f32 %v7558, %v7779
  %v7781 = vsub.f32 1.0, %v7780
  %v7782 = vmul.f32 %v7779, %v7781
  %v7783 = vadd.f32 %v7779, %v7782
  %vm7784 = vweird.f32 %v7558
  %vm7785 = vweird.f32 %v7779
  %vm7786 = vmor %vm7784, %vm7785
  %v7787 = vsel %vm7786, %v7779, %v7783
  %v7788 = vand.u32 2147483647, %v7558
  %vm7789 = vcmp.eq.f32.partialorder %v7788, 8.507059e+37
  %v7790 = vand.u32 %v7558, 2147483648
  %v7791 = vor.u32 1.1754944e-38, %v7790
  %v7792 = vsel %vm7789, %v7791, %v7787
  %v7793 = vmul.f32 1.0, %v7792
  %v7794 = vrcp.pop %v7559
  %v7795 = vmul.f32 %v7559, %v7794
  %v7796 = vsub.f32 1.0, %v7795
  %v7797 = vmul.f32 %v7794, %v7796
  %v7798 = vadd.f32 %v7794, %v7797
  %vm7799 = vweird.f32 %v7559
  %vm7800 = vweird.f32 %v7794
  %vm7801 = vmor %vm7799, %vm7800
  %v7802 = vsel %vm7801, %v7794, %v7798
  %v7803 = vand.u32 2147483647, %v7559
  %vm7804 = vcmp.eq.f32.partialorder %v7803, 8.507059e+37
  %v7805 = vand.u32 %v7559, 2147483648
  %v7806 = vor.u32 1.1754944e-38, %v7805
  %v7807 = vsel %vm7804, %v7806, %v7802
  %v7808 = vmul.f32 1.0, %v7807
  %v7809 = vrcp.pop %v7560
  %v7810 = vmul.f32 %v7560, %v7809
  %v7811 = vsub.f32 1.0, %v7810
  %v7812 = vmul.f32 %v7809, %v7811
  %v7813 = vadd.f32 %v7809, %v7812
  %vm7814 = vweird.f32 %v7560
  %vm7815 = vweird.f32 %v7809
  %vm7816 = vmor %vm7814, %vm7815
  %v7817 = vsel %vm7816, %v7809, %v7813
  %v7818 = vand.u32 2147483647, %v7560
  %vm7819 = vcmp.eq.f32.partialorder %v7818, 8.507059e+37
  %v7820 = vand.u32 %v7560, 2147483648
  %v7821 = vor.u32 1.1754944e-38, %v7820
  %v7822 = vsel %vm7819, %v7821, %v7817
  %v7823 = vmul.f32 1.0, %v7822
  %v7824 = vrcp.pop %v7561
  %v7825 = vmul.f32 %v7561, %v7824
  %v7826 = vsub.f32 1.0, %v7825
  %v7827 = vmul.f32 %v7824, %v7826
  %v7828 = vadd.f32 %v7824, %v7827
  %vm7829 = vweird.f32 %v7561
  %vm7830 = vweird.f32 %v7824
  %vm7831 = vmor %vm7829, %vm7830
  %v7832 = vsel %vm7831, %v7824, %v7828
  %v7833 = vand.u32 2147483647, %v7561
  %vm7834 = vcmp.eq.f32.partialorder %v7833, 8.507059e+37
  %v7835 = vand.u32 %v7561, 2147483648
  %v7836 = vor.u32 1.1754944e-38, %v7835
  %v7837 = vsel %vm7834, %v7836, %v7832
  %v7838 = vmul.f32 1.0, %v7837
  %v7839 = vrcp.pop %v7562
  %v7840 = vmul.f32 %v7562, %v7839
  %v7841 = vsub.f32 1.0, %v7840
  %v7842 = vmul.f32 %v7839, %v7841
  %v7843 = vadd.f32 %v7839, %v7842
  %vm7844 = vweird.f32 %v7562
  %vm7845 = vweird.f32 %v7839
  %vm7846 = vmor %vm7844, %vm7845
  %v7847 = vsel %vm7846, %v7839, %v7843
  %v7848 = vand.u32 2147483647, %v7562
  %vm7849 = vcmp.eq.f32.partialorder %v7848, 8.507059e+37
  %v7850 = vand.u32 %v7562, 2147483648
  %v7851 = vor.u32 1.1754944e-38, %v7850
  %v7852 = vsel %vm7849, %v7851, %v7847
  %v7853 = vmul.f32 1.0, %v7852
  %v7854 = vrcp.pop %v7563
  %v7855 = vmul.f32 %v7563, %v7854
  %v7856 = vsub.f32 1.0, %v7855
  %v7857 = vmul.f32 %v7854, %v7856
  %v7858 = vadd.f32 %v7854, %v7857
  %vm7859 = vweird.f32 %v7563
  %vm7860 = vweird.f32 %v7854
  %vm7861 = vmor %vm7859, %vm7860
  %v7862 = vsel %vm7861, %v7854, %v7858
  %v7863 = vand.u32 2147483647, %v7563
  %vm7864 = vcmp.eq.f32.partialorder %v7863, 8.507059e+37
  %v7865 = vand.u32 %v7563, 2147483648
  %v7866 = vor.u32 1.1754944e-38, %v7865
  %v7867 = vsel %vm7864, %v7866, %v7862
  %v7868 = vmul.f32 1.0, %v7867
  %v7869 = vrcp.pop %v7564
  %v7870 = vmul.f32 %v7564, %v7869
  %v7871 = vsub.f32 1.0, %v7870
  %v7872 = vmul.f32 %v7869, %v7871
  %v7873 = vadd.f32 %v7869, %v7872
  %vm7874 = vweird.f32 %v7564
  %vm7875 = vweird.f32 %v7869
  %vm7876 = vmor %vm7874, %vm7875
  %v7877 = vsel %vm7876, %v7869, %v7873
  %v7878 = vand.u32 2147483647, %v7564
  %vm7879 = vcmp.eq.f32.partialorder %v7878, 8.507059e+37
  %v7880 = vand.u32 %v7564, 2147483648
  %v7881 = vor.u32 1.1754944e-38, %v7880
  %v7882 = vsel %vm7879, %v7881, %v7877
  %v7883 = vmul.f32 1.0, %v7882
  %v7884 = vrcp.pop %v7565
  %v7885 = vmul.f32 %v7565, %v7884
  %v7886 = vsub.f32 1.0, %v7885
  %v7887 = vmul.f32 %v7884, %v7886
  %v7888 = vadd.f32 %v7884, %v7887
  %vm7889 = vweird.f32 %v7565
  %vm7890 = vweird.f32 %v7884
  %vm7891 = vmor %vm7889, %vm7890
  %v7892 = vsel %vm7891, %v7884, %v7888
  %v7893 = vand.u32 2147483647, %v7565
  %vm7894 = vcmp.eq.f32.partialorder %v7893, 8.507059e+37
  %v7895 = vand.u32 %v7565, 2147483648
  %v7896 = vor.u32 1.1754944e-38, %v7895
  %v7897 = vsel %vm7894, %v7896, %v7892
  %v7898 = vmul.f32 1.0, %v7897
  %v7899 = vrcp.pop %v7566
  %v7900 = vmul.f32 %v7566, %v7899
  %v7901 = vsub.f32 1.0, %v7900
  %v7902 = vmul.f32 %v7899, %v7901
  %v7903 = vadd.f32 %v7899, %v7902
  %vm7904 = vweird.f32 %v7566
  %vm7905 = vweird.f32 %v7899
  %vm7906 = vmor %vm7904, %vm7905
  %v7907 = vsel %vm7906, %v7899, %v7903
  %v7908 = vand.u32 2147483647, %v7566
  %vm7909 = vcmp.eq.f32.partialorder %v7908, 8.507059e+37
  %v7910 = vand.u32 %v7566, 2147483648
  %v7911 = vor.u32 1.1754944e-38, %v7910
  %v7912 = vsel %vm7909, %v7911, %v7907
  %v7913 = vmul.f32 1.0, %v7912
  %v7914 = vrcp.pop %v7567
  %v7915 = vmul.f32 %v7567, %v7914
  %v7916 = vsub.f32 1.0, %v7915
  %v7917 = vmul.f32 %v7914, %v7916
  %v7918 = vadd.f32 %v7914, %v7917
  %vm7919 = vweird.f32 %v7567
  %vm7920 = vweird.f32 %v7914
  %vm7921 = vmor %vm7919, %vm7920
  %v7922 = vsel %vm7921, %v7914, %v7918
  %v7923 = vand.u32 2147483647, %v7567
  %vm7924 = vcmp.eq.f32.partialorder %v7923, 8.507059e+37
  %v7925 = vand.u32 %v7567, 2147483648
  %v7926 = vor.u32 1.1754944e-38, %v7925
  %v7927 = vsel %vm7924, %v7926, %v7922
  %v7928 = vmul.f32 1.0, %v7927
  %v7929 = vrcp.pop %v7568
  %v7930 = vmul.f32 %v7568, %v7929
  %v7931 = vsub.f32 1.0, %v7930
  %v7932 = vmul.f32 %v7929, %v7931
  %v7933 = vadd.f32 %v7929, %v7932
  %vm7934 = vweird.f32 %v7568
  %vm7935 = vweird.f32 %v7929
  %vm7936 = vmor %vm7934, %vm7935
  %v7937 = vsel %vm7936, %v7929, %v7933
  %v7938 = vand.u32 2147483647, %v7568
  %vm7939 = vcmp.eq.f32.partialorder %v7938, 8.507059e+37
  %v7940 = vand.u32 %v7568, 2147483648
  %v7941 = vor.u32 1.1754944e-38, %v7940
  %v7942 = vsel %vm7939, %v7941, %v7937
  %v7943 = vmul.f32 1.0, %v7942
  %v7944 = vmul.f32 %v7583, 2.0
  %v7945 = vmul.f32 %v7598, 2.0
  %v7946 = vmul.f32 %v7613, 2.0
  %v7947 = vmul.f32 %v7628, 2.0
  %v7948 = vmul.f32 %v7643, 2.0
  %v7949 = vmul.f32 %v7658, 2.0
  %v7950 = vmul.f32 %v7673, 2.0
  %v7951 = vmul.f32 %v7688, 2.0
  %v7952 = vmul.f32 %v7703, 2.0
  %v7953 = vmul.f32 %v7718, 2.0
  %v7954 = vmul.f32 %v7733, 2.0
  %v7955 = vmul.f32 %v7748, 2.0
  %v7956 = vmul.f32 %v7763, 2.0
  %v7957 = vmul.f32 %v7778, 2.0
  %v7958 = vmul.f32 %v7793, 2.0
  %v7959 = vmul.f32 %v7808, 2.0
  %v7960 = vmul.f32 %v7823, 2.0
  %v7961 = vmul.f32 %v7838, 2.0
  %v7962 = vmul.f32 %v7853, 2.0
  %v7963 = vmul.f32 %v7868, 2.0
  %v7964 = vmul.f32 %v7883, 2.0
  %v7965 = vmul.f32 %v7898, 2.0
  %v7966 = vmul.f32 %v7913, 2.0
  %v7967 = vmul.f32 %v7928, 2.0
  %v7968 = vmul.f32 %v7943, 2.0
  %v7969 = vsub.f32 %v7944, 1.0
  %v7970 = vsub.f32 %v7945, 1.0
  %v7971 = vsub.f32 %v7946, 1.0
  %v7972 = vsub.f32 %v7947, 1.0
  %v7973 = vsub.f32 %v7948, 1.0
  %v7974 = vsub.f32 %v7949, 1.0
  %v7975 = vsub.f32 %v7950, 1.0
  %v7976 = vsub.f32 %v7951, 1.0
  %v7977 = vsub.f32 %v7952, 1.0
  %v7978 = vsub.f32 %v7953, 1.0
  %v7979 = vsub.f32 %v7954, 1.0
  %v7980 = vsub.f32 %v7955, 1.0
  %v7981 = vsub.f32 %v7956, 1.0
  %v7982 = vsub.f32 %v7957, 1.0
  %v7983 = vsub.f32 %v7958, 1.0
  %v7984 = vsub.f32 %v7959, 1.0
  %v7985 = vsub.f32 %v7960, 1.0
  %v7986 = vsub.f32 %v7961, 1.0
  %v7987 = vsub.f32 %v7962, 1.0
  %v7988 = vsub.f32 %v7963, 1.0
  %v7989 = vsub.f32 %v7964, 1.0
  %v7990 = vsub.f32 %v7965, 1.0
  %v7991 = vsub.f32 %v7966, 1.0
  %v7992 = vsub.f32 %v7967, 1.0
  %v7993 = vsub.f32 %v7968, 1.0
  %v7994 = vmul.f32 %v7583, %v7026
  %v7995 = vmul.f32 %v7598, %v7027
  %v7996 = vmul.f32 %v7613, %v7028
  %v7997 = vmul.f32 %v7628, %v7029
  %v7998 = vmul.f32 %v7643, %v7030
  %v7999 = vmul.f32 %v7658, %v7031
  %v8000 = vmul.f32 %v7673, %v7032
  %v8001 = vmul.f32 %v7688, %v7033
  %v8002 = vmul.f32 %v7703, %v7034
  %v8003 = vmul.f32 %v7718, %v7035
  %v8004 = vmul.f32 %v7733, %v7036
  %v8005 = vmul.f32 %v7748, %v7037
  %v8006 = vmul.f32 %v7763, %v7038
  %v8007 = vmul.f32 %v7778, %v7039
  %v8008 = vmul.f32 %v7793, %v7040
  %v8009 = vmul.f32 %v7808, %v7041
  %v8010 = vmul.f32 %v7823, %v7042
  %v8011 = vmul.f32 %v7838, %v7043
  %v8012 = vmul.f32 %v7853, %v7044
  %v8013 = vmul.f32 %v7868, %v7045
  %v8014 = vmul.f32 %v7883, %v7046
  %v8015 = vmul.f32 %v7898, %v7047
  %v8016 = vmul.f32 %v7913, %v7048
  %v8017 = vmul.f32 %v7928, %v7049
  %v8018 = vmul.f32 %v7943, %v7050
  %8044 = vrot.lane.b32.xlu0 %v7969, 32
  %v8045 = vpop.permute.xlu0 %8044
  %8046 = vrot.lane.b32.xlu0 %v7970, 32
  %v8047 = vpop.permute.xlu0 %8046
  %8048 = vrot.lane.b32.xlu0 %v7971, 32
  %v8049 = vpop.permute.xlu0 %8048
  %8050 = vrot.lane.b32.xlu0 %v7972, 32
  %v8051 = vpop.permute.xlu0 %8050
  %8052 = vrot.lane.b32.xlu0 %v7973, 32
  %v8053 = vpop.permute.xlu0 %8052
  %8054 = vrot.lane.b32.xlu0 %v7974, 32
  %v8055 = vpop.permute.xlu0 %8054
  %8056 = vrot.lane.b32.xlu0 %v7975, 32
  %v8057 = vpop.permute.xlu0 %8056
  %8058 = vrot.lane.b32.xlu0 %v7976, 32
  %v8059 = vpop.permute.xlu0 %8058
  %8060 = vrot.lane.b32.xlu0 %v7977, 32
  %v8061 = vpop.permute.xlu0 %8060
  %8062 = vrot.lane.b32.xlu0 %v7978, 32
  %v8063 = vpop.permute.xlu0 %8062
  %8064 = vrot.lane.b32.xlu0 %v7979, 32
  %v8065 = vpop.permute.xlu0 %8064
  %8066 = vrot.lane.b32.xlu0 %v7980, 32
  %v8067 = vpop.permute.xlu0 %8066
  %8068 = vrot.lane.b32.xlu0 %v7981, 32
  %v8069 = vpop.permute.xlu0 %8068
  %8070 = vrot.lane.b32.xlu0 %v7982, 32
  %v8071 = vpop.permute.xlu0 %8070
  %8072 = vrot.lane.b32.xlu0 %v7983, 32
  %v8073 = vpop.permute.xlu0 %8072
  %8074 = vrot.lane.b32.xlu0 %v7984, 32
  %v8075 = vpop.permute.xlu0 %8074
  %8076 = vrot.lane.b32.xlu0 %v7985, 32
  %v8077 = vpop.permute.xlu0 %8076
  %8078 = vrot.lane.b32.xlu0 %v7986, 32
  %v8079 = vpop.permute.xlu0 %8078
  %8080 = vrot.lane.b32.xlu0 %v7987, 32
  %v8081 = vpop.permute.xlu0 %8080
  %8082 = vrot.lane.b32.xlu0 %v7988, 32
  %v8083 = vpop.permute.xlu0 %8082
  %8084 = vrot.lane.b32.xlu0 %v7989, 32
  %v8085 = vpop.permute.xlu0 %8084
  %8086 = vrot.lane.b32.xlu0 %v7990, 32
  %v8087 = vpop.permute.xlu0 %8086
  %8088 = vrot.lane.b32.xlu0 %v7991, 32
  %v8089 = vpop.permute.xlu0 %8088
  %8090 = vrot.lane.b32.xlu0 %v7992, 32
  %v8091 = vpop.permute.xlu0 %8090
  %8092 = vrot.lane.b32.xlu0 %v7993, 32
  %v8093 = vpop.permute.xlu0 %8092
  %v8119 = vmul.f32 %v7583, %v8045
  %v8120 = vmul.f32 %v7598, %v8047
  %v8121 = vmul.f32 %v7613, %v8049
  %v8122 = vmul.f32 %v7628, %v8051
  %v8123 = vmul.f32 %v7643, %v8053
  %v8124 = vmul.f32 %v7658, %v8055
  %v8125 = vmul.f32 %v7673, %v8057
  %v8126 = vmul.f32 %v7688, %v8059
  %v8127 = vmul.f32 %v7703, %v8061
  %v8128 = vmul.f32 %v7718, %v8063
  %v8129 = vmul.f32 %v7733, %v8065
  %v8130 = vmul.f32 %v7748, %v8067
  %v8131 = vmul.f32 %v7763, %v8069
  %v8132 = vmul.f32 %v7778, %v8071
  %v8133 = vmul.f32 %v7793, %v8073
  %v8134 = vmul.f32 %v7808, %v8075
  %v8135 = vmul.f32 %v7823, %v8077
  %v8136 = vmul.f32 %v7838, %v8079
  %v8137 = vmul.f32 %v7853, %v8081
  %v8138 = vmul.f32 %v7868, %v8083
  %v8139 = vmul.f32 %v7883, %v8085
  %v8140 = vmul.f32 %v7898, %v8087
  %v8141 = vmul.f32 %v7913, %v8089
  %v8142 = vmul.f32 %v7928, %v8091
  %v8143 = vmul.f32 %v7943, %v8093
  %8169 = vrot.lane.b32.xlu0 %v8119, 32
  %v8170 = vpop.permute.xlu0 %8169
  %8171 = vrot.lane.b32.xlu0 %v8120, 32
  %v8172 = vpop.permute.xlu0 %8171
  %8173 = vrot.lane.b32.xlu0 %v8121, 32
  %v8174 = vpop.permute.xlu0 %8173
  %8175 = vrot.lane.b32.xlu0 %v8122, 32
  %v8176 = vpop.permute.xlu0 %8175
  %8177 = vrot.lane.b32.xlu0 %v8123, 32
  %v8178 = vpop.permute.xlu0 %8177
  %8179 = vrot.lane.b32.xlu0 %v8124, 32
  %v8180 = vpop.permute.xlu0 %8179
  %8181 = vrot.lane.b32.xlu0 %v8125, 32
  %v8182 = vpop.permute.xlu0 %8181
  %8183 = vrot.lane.b32.xlu0 %v8126, 32
  %v8184 = vpop.permute.xlu0 %8183
  %8185 = vrot.lane.b32.xlu0 %v8127, 32
  %v8186 = vpop.permute.xlu0 %8185
  %8187 = vrot.lane.b32.xlu0 %v8128, 32
  %v8188 = vpop.permute.xlu0 %8187
  %8189 = vrot.lane.b32.xlu0 %v8129, 32
  %v8190 = vpop.permute.xlu0 %8189
  %8191 = vrot.lane.b32.xlu0 %v8130, 32
  %v8192 = vpop.permute.xlu0 %8191
  %8193 = vrot.lane.b32.xlu0 %v8131, 32
  %v8194 = vpop.permute.xlu0 %8193
  %8195 = vrot.lane.b32.xlu0 %v8132, 32
  %v8196 = vpop.permute.xlu0 %8195
  %8197 = vrot.lane.b32.xlu0 %v8133, 32
  %v8198 = vpop.permute.xlu0 %8197
  %8199 = vrot.lane.b32.xlu0 %v8134, 32
  %v8200 = vpop.permute.xlu0 %8199
  %8201 = vrot.lane.b32.xlu0 %v8135, 32
  %v8202 = vpop.permute.xlu0 %8201
  %8203 = vrot.lane.b32.xlu0 %v8136, 32
  %v8204 = vpop.permute.xlu0 %8203
  %8205 = vrot.lane.b32.xlu0 %v8137, 32
  %v8206 = vpop.permute.xlu0 %8205
  %8207 = vrot.lane.b32.xlu0 %v8138, 32
  %v8208 = vpop.permute.xlu0 %8207
  %8209 = vrot.lane.b32.xlu0 %v8139, 32
  %v8210 = vpop.permute.xlu0 %8209
  %8211 = vrot.lane.b32.xlu0 %v8140, 32
  %v8212 = vpop.permute.xlu0 %8211
  %8213 = vrot.lane.b32.xlu0 %v8141, 32
  %v8214 = vpop.permute.xlu0 %8213
  %8215 = vrot.lane.b32.xlu0 %v8142, 32
  %v8216 = vpop.permute.xlu0 %8215
  %8217 = vrot.lane.b32.xlu0 %v8143, 32
  %v8218 = vpop.permute.xlu0 %8217
  %v8244 = vadd.f32 %v7994, %v8170
  %v8245 = vadd.f32 %v7995, %v8172
  %v8246 = vadd.f32 %v7996, %v8174
  %v8247 = vadd.f32 %v7997, %v8176
  %v8248 = vadd.f32 %v7998, %v8178
  %v8249 = vadd.f32 %v7999, %v8180
  %v8250 = vadd.f32 %v8000, %v8182
  %v8251 = vadd.f32 %v8001, %v8184
  %v8252 = vadd.f32 %v8002, %v8186
  %v8253 = vadd.f32 %v8003, %v8188
  %v8254 = vadd.f32 %v8004, %v8190
  %v8255 = vadd.f32 %v8005, %v8192
  %v8256 = vadd.f32 %v8006, %v8194
  %v8257 = vadd.f32 %v8007, %v8196
  %v8258 = vadd.f32 %v8008, %v8198
  %v8259 = vadd.f32 %v8009, %v8200
  %v8260 = vadd.f32 %v8010, %v8202
  %v8261 = vadd.f32 %v8011, %v8204
  %v8262 = vadd.f32 %v8012, %v8206
  %v8263 = vadd.f32 %v8013, %v8208
  %v8264 = vadd.f32 %v8014, %v8210
  %v8265 = vadd.f32 %v8015, %v8212
  %v8266 = vadd.f32 %v8016, %v8214
  %v8267 = vadd.f32 %v8017, %v8216
  %v8268 = vadd.f32 %v8018, %v8218
  %v8269 = vtanh.pop %v8244
  %v8270 = vtanh.pop %v8245
  %v8271 = vtanh.pop %v8246
  %v8272 = vtanh.pop %v8247
  %v8273 = vtanh.pop %v8248
  %v8274 = vtanh.pop %v8249
  %v8275 = vtanh.pop %v8250
  %v8276 = vtanh.pop %v8251
  %v8277 = vtanh.pop %v8252
  %v8278 = vtanh.pop %v8253
  %v8279 = vtanh.pop %v8254
  %v8280 = vtanh.pop %v8255
  %v8281 = vtanh.pop %v8256
  %v8282 = vtanh.pop %v8257
  %v8283 = vtanh.pop %v8258
  %v8284 = vtanh.pop %v8259
  %v8285 = vtanh.pop %v8260
  %v8286 = vtanh.pop %v8261
  %v8287 = vtanh.pop %v8262
  %v8288 = vtanh.pop %v8263
  %v8289 = vtanh.pop %v8264
  %v8290 = vtanh.pop %v8265
  %v8291 = vtanh.pop %v8266
  %v8292 = vtanh.pop %v8267
  %v8293 = vtanh.pop %v8268
  %8319 = vrot.lane.b32.xlu0 %v8269, 32
  %v8320 = vpop.permute.xlu0 %8319
  %8321 = vrot.lane.b32.xlu0 %v8270, 32
  %v8322 = vpop.permute.xlu0 %8321
  %8323 = vrot.lane.b32.xlu0 %v8271, 32
  %v8324 = vpop.permute.xlu0 %8323
  %8325 = vrot.lane.b32.xlu0 %v8272, 32
  %v8326 = vpop.permute.xlu0 %8325
  %8327 = vrot.lane.b32.xlu0 %v8273, 32
  %v8328 = vpop.permute.xlu0 %8327
  %8329 = vrot.lane.b32.xlu0 %v8274, 32
  %v8330 = vpop.permute.xlu0 %8329
  %8331 = vrot.lane.b32.xlu0 %v8275, 32
  %v8332 = vpop.permute.xlu0 %8331
  %8333 = vrot.lane.b32.xlu0 %v8276, 32
  %v8334 = vpop.permute.xlu0 %8333
  %8335 = vrot.lane.b32.xlu0 %v8277, 32
  %v8336 = vpop.permute.xlu0 %8335
  %8337 = vrot.lane.b32.xlu0 %v8278, 32
  %v8338 = vpop.permute.xlu0 %8337
  %8339 = vrot.lane.b32.xlu0 %v8279, 32
  %v8340 = vpop.permute.xlu0 %8339
  %8341 = vrot.lane.b32.xlu0 %v8280, 32
  %v8342 = vpop.permute.xlu0 %8341
  %8343 = vrot.lane.b32.xlu0 %v8281, 32
  %v8344 = vpop.permute.xlu0 %8343
  %8345 = vrot.lane.b32.xlu0 %v8282, 32
  %v8346 = vpop.permute.xlu0 %8345
  %8347 = vrot.lane.b32.xlu0 %v8283, 32
  %v8348 = vpop.permute.xlu0 %8347
  %8349 = vrot.lane.b32.xlu0 %v8284, 32
  %v8350 = vpop.permute.xlu0 %8349
  %8351 = vrot.lane.b32.xlu0 %v8285, 32
  %v8352 = vpop.permute.xlu0 %8351
  %8353 = vrot.lane.b32.xlu0 %v8286, 32
  %v8354 = vpop.permute.xlu0 %8353
  %8355 = vrot.lane.b32.xlu0 %v8287, 32
  %v8356 = vpop.permute.xlu0 %8355
  %8357 = vrot.lane.b32.xlu0 %v8288, 32
  %v8358 = vpop.permute.xlu0 %8357
  %8359 = vrot.lane.b32.xlu0 %v8289, 32
  %v8360 = vpop.permute.xlu0 %8359
  %8361 = vrot.lane.b32.xlu0 %v8290, 32
  %v8362 = vpop.permute.xlu0 %8361
  %8363 = vrot.lane.b32.xlu0 %v8291, 32
  %v8364 = vpop.permute.xlu0 %8363
  %8365 = vrot.lane.b32.xlu0 %v8292, 32
  %v8366 = vpop.permute.xlu0 %8365
  %8367 = vrot.lane.b32.xlu0 %v8293, 32
  %v8368 = vpop.permute.xlu0 %8367
  %v8394 = vmul.f32 %v7583, %v8320
  %v8395 = vmul.f32 %v7598, %v8322
  %v8396 = vmul.f32 %v7613, %v8324
  %v8397 = vmul.f32 %v7628, %v8326
  %v8398 = vmul.f32 %v7643, %v8328
  %v8399 = vmul.f32 %v7658, %v8330
  %v8400 = vmul.f32 %v7673, %v8332
  %v8401 = vmul.f32 %v7688, %v8334
  %v8402 = vmul.f32 %v7703, %v8336
  %v8403 = vmul.f32 %v7718, %v8338
  %v8404 = vmul.f32 %v7733, %v8340
  %v8405 = vmul.f32 %v7748, %v8342
  %v8406 = vmul.f32 %v7763, %v8344
  %v8407 = vmul.f32 %v7778, %v8346
  %v8408 = vmul.f32 %v7793, %v8348
  %v8409 = vmul.f32 %v7808, %v8350
  %v8410 = vmul.f32 %v7823, %v8352
  %v8411 = vmul.f32 %v7838, %v8354
  %v8412 = vmul.f32 %v7853, %v8356
  %v8413 = vmul.f32 %v7868, %v8358
  %v8414 = vmul.f32 %v7883, %v8360
  %v8415 = vmul.f32 %v7898, %v8362
  %v8416 = vmul.f32 %v7913, %v8364
  %v8417 = vmul.f32 %v7928, %v8366
  %v8418 = vmul.f32 %v7943, %v8368
  %s8419 = scalar_lea.vmem %s0, 1400
  %v8420 = vld [vmem:[%s8419] sm:$0xff]
  %v8421 = vld [vmem:[%s8419 + $0x8] sm:$0xff]
  %v8422 = vld [vmem:[%s8419 + $0x10] sm:$0xff]
  %v8423 = vld [vmem:[%s8419 + $0x18] sm:$0xff]
  %v8424 = vld [vmem:[%s8419 + $0x20] sm:$0xff]
  %v8425 = vld [vmem:[%s8419 + $0x28] sm:$0xff]
  %v8426 = vld [vmem:[%s8419 + $0x30] sm:$0xff]
  %v8427 = vld [vmem:[%s8419 + $0x38] sm:$0xff]
  %v8428 = vld [vmem:[%s8419 + $0x40] sm:$0xff]
  %v8429 = vld [vmem:[%s8419 + $0x48] sm:$0xff]
  %v8430 = vld [vmem:[%s8419 + $0x50] sm:$0xff]
  %v8431 = vld [vmem:[%s8419 + $0x58] sm:$0xff]
  %v8432 = vld [vmem:[%s8419 + $0x60] sm:$0xff]
  %v8433 = vld [vmem:[%s8419 + $0x68] sm:$0xff]
  %v8434 = vld [vmem:[%s8419 + $0x70] sm:$0xff]
  %v8435 = vld [vmem:[%s8419 + $0x78] sm:$0xff]
  %v8436 = vld [vmem:[%s8419 + $0x80] sm:$0xff]
  %v8437 = vld [vmem:[%s8419 + $0x88] sm:$0xff]
  %v8438 = vld [vmem:[%s8419 + $0x90] sm:$0xff]
  %v8439 = vld [vmem:[%s8419 + $0x98] sm:$0xff]
  %v8440 = vld [vmem:[%s8419 + $0xa0] sm:$0xff]
  %v8441 = vld [vmem:[%s8419 + $0xa8] sm:$0xff]
  %v8442 = vld [vmem:[%s8419 + $0xb0] sm:$0xff]
  %v8443 = vld [vmem:[%s8419 + $0xb8] sm:$0xff]
  %v8444 = vld [vmem:[%s8419 + $0xc0] sm:$0xff]
  %8470 = vrot.lane.b32.xlu0 %v8394, 64
  %v8471 = vpop.permute.xlu0 %8470
  %8472 = vrot.lane.b32.xlu0 %v8395, 64
  %v8473 = vpop.permute.xlu0 %8472
  %8474 = vrot.lane.b32.xlu0 %v8396, 64
  %v8475 = vpop.permute.xlu0 %8474
  %8476 = vrot.lane.b32.xlu0 %v8397, 64
  %v8477 = vpop.permute.xlu0 %8476
  %8478 = vrot.lane.b32.xlu0 %v8398, 64
  %v8479 = vpop.permute.xlu0 %8478
  %8480 = vrot.lane.b32.xlu0 %v8399, 64
  %v8481 = vpop.permute.xlu0 %8480
  %8482 = vrot.lane.b32.xlu0 %v8400, 64
  %v8483 = vpop.permute.xlu0 %8482
  %8484 = vrot.lane.b32.xlu0 %v8401, 64
  %v8485 = vpop.permute.xlu0 %8484
  %8486 = vrot.lane.b32.xlu0 %v8402, 64
  %v8487 = vpop.permute.xlu0 %8486
  %8488 = vrot.lane.b32.xlu0 %v8403, 64
  %v8489 = vpop.permute.xlu0 %8488
  %8490 = vrot.lane.b32.xlu0 %v8404, 64
  %v8491 = vpop.permute.xlu0 %8490
  %8492 = vrot.lane.b32.xlu0 %v8405, 64
  %v8493 = vpop.permute.xlu0 %8492
  %8494 = vrot.lane.b32.xlu0 %v8406, 64
  %v8495 = vpop.permute.xlu0 %8494
  %8496 = vrot.lane.b32.xlu0 %v8407, 64
  %v8497 = vpop.permute.xlu0 %8496
  %8498 = vrot.lane.b32.xlu0 %v8408, 64
  %v8499 = vpop.permute.xlu0 %8498
  %8500 = vrot.lane.b32.xlu0 %v8409, 64
  %v8501 = vpop.permute.xlu0 %8500
  %8502 = vrot.lane.b32.xlu0 %v8410, 64
  %v8503 = vpop.permute.xlu0 %8502
  %8504 = vrot.lane.b32.xlu0 %v8411, 64
  %v8505 = vpop.permute.xlu0 %8504
  %8506 = vrot.lane.b32.xlu0 %v8412, 64
  %v8507 = vpop.permute.xlu0 %8506
  %8508 = vrot.lane.b32.xlu0 %v8413, 64
  %v8509 = vpop.permute.xlu0 %8508
  %8510 = vrot.lane.b32.xlu0 %v8414, 64
  %v8511 = vpop.permute.xlu0 %8510
  %8512 = vrot.lane.b32.xlu0 %v8415, 64
  %v8513 = vpop.permute.xlu0 %8512
  %8514 = vrot.lane.b32.xlu0 %v8416, 64
  %v8515 = vpop.permute.xlu0 %8514
  %8516 = vrot.lane.b32.xlu0 %v8417, 64
  %v8517 = vpop.permute.xlu0 %8516
  %8518 = vrot.lane.b32.xlu0 %v8418, 64
  %v8519 = vpop.permute.xlu0 %8518
  %v8520 = vsel %vm40, %v8471, 0
  %v8522 = vsel %vm40, %v8473, 0
  %v8524 = vsel %vm40, %v8475, 0
  %v8526 = vsel %vm40, %v8477, 0
  %v8528 = vsel %vm40, %v8479, 0
  %v8530 = vsel %vm40, %v8481, 0
  %v8532 = vsel %vm40, %v8483, 0
  %v8534 = vsel %vm40, %v8485, 0
  %v8536 = vsel %vm40, %v8487, 0
  %v8538 = vsel %vm40, %v8489, 0
  %v8540 = vsel %vm40, %v8491, 0
  %v8542 = vsel %vm40, %v8493, 0
  %v8544 = vsel %vm40, %v8495, 0
  %v8546 = vsel %vm40, %v8497, 0
  %v8548 = vsel %vm40, %v8499, 0
  %v8550 = vsel %vm40, %v8501, 0
  %v8552 = vsel %vm40, %v8503, 0
  %v8554 = vsel %vm40, %v8505, 0
  %v8556 = vsel %vm40, %v8507, 0
  %v8558 = vsel %vm40, %v8509, 0
  %v8560 = vsel %vm40, %v8511, 0
  %v8562 = vsel %vm40, %v8513, 0
  %v8564 = vsel %vm40, %v8515, 0
  %v8566 = vsel %vm40, %v8517, 0
  %v8568 = vsel %vm40, %v8519, 0
  %8570 = vmatpush.msra.mxu0 0.0
  %8571 = vmatpush.msra.mxu0 0.0
  %8572 = vmatpush.msra.mxu0 0.0
  %8573 = vmatpush.msra.mxu0 0.0
  %8574 = vmatpush.msra.mxu0 0.0
  %8575 = vmatpush.msra.mxu0 0.0
  %8576 = vmatpush.msra.mxu0 0.0
  %8577 = vmatpush.msra.mxu0 0.0
  %8578 = vmatpush.msra.mxu0 0.0
  %8579 = vmatpush.msra.mxu0 0.0
  %8580 = vmatpush.msra.mxu0 0.0
  %8581 = vmatpush.msra.mxu0 0.0
  %8582 = vmatpush.msra.mxu0 %v39
  %8583 = vmatpush.msra.mxu0 %v38
  %8584 = vmatpush.msra.mxu0 %v37
  %8585 = vmatpush.msra.mxu0 %v36
  %8586 = vmatmul.f32.gmra.mxu0 %v8520
  %v8587 = vpop.f32.mrf.mxu0
  %v8588 = vadd.f32 0.0, %v8587
  %8589 = vmatmul.f32.gmra.mxu0 %v8522
  %v8590 = vpop.f32.mrf.mxu0
  %v8591 = vadd.f32 0.0, %v8590
  %8592 = vmatmul.f32.gmra.mxu0 %v8524
  %v8593 = vpop.f32.mrf.mxu0
  %v8594 = vadd.f32 0.0, %v8593
  %8595 = vmatmul.f32.gmra.mxu0 %v8526
  %v8596 = vpop.f32.mrf.mxu0
  %v8597 = vadd.f32 0.0, %v8596
  %8598 = vmatmul.f32.gmra.mxu0 %v8528
  %v8599 = vpop.f32.mrf.mxu0
  %v8600 = vadd.f32 0.0, %v8599
  %8601 = vmatmul.f32.gmra.mxu0 %v8530
  %v8602 = vpop.f32.mrf.mxu0
  %v8603 = vadd.f32 0.0, %v8602
  %8604 = vmatmul.f32.gmra.mxu0 %v8532
  %v8605 = vpop.f32.mrf.mxu0
  %v8606 = vadd.f32 0.0, %v8605
  %8607 = vmatmul.f32.gmra.mxu0 %v8534
  %v8608 = vpop.f32.mrf.mxu0
  %v8609 = vadd.f32 0.0, %v8608
  %8610 = vmatmul.f32.gmra.mxu0 %v8536
  %v8611 = vpop.f32.mrf.mxu0
  %v8612 = vadd.f32 0.0, %v8611
  %8613 = vmatmul.f32.gmra.mxu0 %v8538
  %v8614 = vpop.f32.mrf.mxu0
  %v8615 = vadd.f32 0.0, %v8614
  %8616 = vmatmul.f32.gmra.mxu0 %v8540
  %v8617 = vpop.f32.mrf.mxu0
  %v8618 = vadd.f32 0.0, %v8617
  %8619 = vmatmul.f32.gmra.mxu0 %v8542
  %v8620 = vpop.f32.mrf.mxu0
  %v8621 = vadd.f32 0.0, %v8620
  %8622 = vmatmul.f32.gmra.mxu0 %v8544
  %v8623 = vpop.f32.mrf.mxu0
  %v8624 = vadd.f32 0.0, %v8623
  %8625 = vmatmul.f32.gmra.mxu0 %v8546
  %v8626 = vpop.f32.mrf.mxu0
  %v8627 = vadd.f32 0.0, %v8626
  %8628 = vmatmul.f32.gmra.mxu0 %v8548
  %v8629 = vpop.f32.mrf.mxu0
  %v8630 = vadd.f32 0.0, %v8629
  %8631 = vmatmul.f32.gmra.mxu0 %v8550
  %v8632 = vpop.f32.mrf.mxu0
  %v8633 = vadd.f32 0.0, %v8632
  %8634 = vmatmul.f32.gmra.mxu0 %v8552
  %v8635 = vpop.f32.mrf.mxu0
  %v8636 = vadd.f32 0.0, %v8635
  %8637 = vmatmul.f32.gmra.mxu0 %v8554
  %v8638 = vpop.f32.mrf.mxu0
  %v8639 = vadd.f32 0.0, %v8638
  %8640 = vmatmul.f32.gmra.mxu0 %v8556
  %v8641 = vpop.f32.mrf.mxu0
  %v8642 = vadd.f32 0.0, %v8641
  %8643 = vmatmul.f32.gmra.mxu0 %v8558
  %v8644 = vpop.f32.mrf.mxu0
  %v8645 = vadd.f32 0.0, %v8644
  %8646 = vmatmul.f32.gmra.mxu0 %v8560
  %v8647 = vpop.f32.mrf.mxu0
  %v8648 = vadd.f32 0.0, %v8647
  %8649 = vmatmul.f32.gmra.mxu0 %v8562
  %v8650 = vpop.f32.mrf.mxu0
  %v8651 = vadd.f32 0.0, %v8650
  %8652 = vmatmul.f32.gmra.mxu0 %v8564
  %v8653 = vpop.f32.mrf.mxu0
  %v8654 = vadd.f32 0.0, %v8653
  %8655 = vmatmul.f32.gmra.mxu0 %v8566
  %v8656 = vpop.f32.mrf.mxu0
  %v8657 = vadd.f32 0.0, %v8656
  %8658 = vmatmul.f32.gmra.mxu0 %v8568
  %v8659 = vpop.f32.mrf.mxu0
  %v8660 = vadd.f32 0.0, %v8659
  %8661 = vdwg.mxu0
  %v8662 = vadd.f32 %v8420, %v8588
  %v8663 = vadd.f32 %v8421, %v8591
  %v8664 = vadd.f32 %v8422, %v8594
  %v8665 = vadd.f32 %v8423, %v8597
  %v8666 = vadd.f32 %v8424, %v8600
  %v8667 = vadd.f32 %v8425, %v8603
  %v8668 = vadd.f32 %v8426, %v8606
  %v8669 = vadd.f32 %v8427, %v8609
  %v8670 = vadd.f32 %v8428, %v8612
  %v8671 = vadd.f32 %v8429, %v8615
  %v8672 = vadd.f32 %v8430, %v8618
  %v8673 = vadd.f32 %v8431, %v8621
  %v8674 = vadd.f32 %v8432, %v8624
  %v8675 = vadd.f32 %v8433, %v8627
  %v8676 = vadd.f32 %v8434, %v8630
  %v8677 = vadd.f32 %v8435, %v8633
  %v8678 = vadd.f32 %v8436, %v8636
  %v8679 = vadd.f32 %v8437, %v8639
  %v8680 = vadd.f32 %v8438, %v8642
  %v8681 = vadd.f32 %v8439, %v8645
  %v8682 = vadd.f32 %v8440, %v8648
  %v8683 = vadd.f32 %v8441, %v8651
  %v8684 = vadd.f32 %v8442, %v8654
  %v8685 = vadd.f32 %v8443, %v8657
  %v8686 = vadd.f32 %v8444, %v8660
  %v8687 = vxor.u32 %v8662, 2147483648
  %v8688 = vxor.u32 %v8663, 2147483648
  %v8689 = vxor.u32 %v8664, 2147483648
  %v8690 = vxor.u32 %v8665, 2147483648
  %v8691 = vxor.u32 %v8666, 2147483648
  %v8692 = vxor.u32 %v8667, 2147483648
  %v8693 = vxor.u32 %v8668, 2147483648
  %v8694 = vxor.u32 %v8669, 2147483648
  %v8695 = vxor.u32 %v8670, 2147483648
  %v8696 = vxor.u32 %v8671, 2147483648
  %v8697 = vxor.u32 %v8672, 2147483648
  %v8698 = vxor.u32 %v8673, 2147483648
  %v8699 = vxor.u32 %v8674, 2147483648
  %v8700 = vxor.u32 %v8675, 2147483648
  %v8701 = vxor.u32 %v8676, 2147483648
  %v8702 = vxor.u32 %v8677, 2147483648
  %v8703 = vxor.u32 %v8678, 2147483648
  %v8704 = vxor.u32 %v8679, 2147483648
  %v8705 = vxor.u32 %v8680, 2147483648
  %v8706 = vxor.u32 %v8681, 2147483648
  %v8707 = vxor.u32 %v8682, 2147483648
  %v8708 = vxor.u32 %v8683, 2147483648
  %v8709 = vxor.u32 %v8684, 2147483648
  %v8710 = vxor.u32 %v8685, 2147483648
  %v8711 = vxor.u32 %v8686, 2147483648
  %v8712 = vmul.f32 %v8687, 1.442695
  %v8713 = vpow.pop %v8712
  %v8714 = vmul.f32 %v8688, 1.442695
  %v8715 = vpow.pop %v8714
  %v8716 = vmul.f32 %v8689, 1.442695
  %v8717 = vpow.pop %v8716
  %v8718 = vmul.f32 %v8690, 1.442695
  %v8719 = vpow.pop %v8718
  %v8720 = vmul.f32 %v8691, 1.442695
  %v8721 = vpow.pop %v8720
  %v8722 = vmul.f32 %v8692, 1.442695
  %v8723 = vpow.pop %v8722
  %v8724 = vmul.f32 %v8693, 1.442695
  %v8725 = vpow.pop %v8724
  %v8726 = vmul.f32 %v8694, 1.442695
  %v8727 = vpow.pop %v8726
  %v8728 = vmul.f32 %v8695, 1.442695
  %v8729 = vpow.pop %v8728
  %v8730 = vmul.f32 %v8696, 1.442695
  %v8731 = vpow.pop %v8730
  %v8732 = vmul.f32 %v8697, 1.442695
  %v8733 = vpow.pop %v8732
  %v8734 = vmul.f32 %v8698, 1.442695
  %v8735 = vpow.pop %v8734
  %v8736 = vmul.f32 %v8699, 1.442695
  %v8737 = vpow.pop %v8736
  %v8738 = vmul.f32 %v8700, 1.442695
  %v8739 = vpow.pop %v8738
  %v8740 = vmul.f32 %v8701, 1.442695
  %v8741 = vpow.pop %v8740
  %v8742 = vmul.f32 %v8702, 1.442695
  %v8743 = vpow.pop %v8742
  %v8744 = vmul.f32 %v8703, 1.442695
  %v8745 = vpow.pop %v8744
  %v8746 = vmul.f32 %v8704, 1.442695
  %v8747 = vpow.pop %v8746
  %v8748 = vmul.f32 %v8705, 1.442695
  %v8749 = vpow.pop %v8748
  %v8750 = vmul.f32 %v8706, 1.442695
  %v8751 = vpow.pop %v8750
  %v8752 = vmul.f32 %v8707, 1.442695
  %v8753 = vpow.pop %v8752
  %v8754 = vmul.f32 %v8708, 1.442695
  %v8755 = vpow.pop %v8754
  %v8756 = vmul.f32 %v8709, 1.442695
  %v8757 = vpow.pop %v8756
  %v8758 = vmul.f32 %v8710, 1.442695
  %v8759 = vpow.pop %v8758
  %v8760 = vmul.f32 %v8711, 1.442695
  %v8761 = vpow.pop %v8760
  %v8762 = vadd.f32 %v8713, 1.0
  %v8763 = vadd.f32 %v8715, 1.0
  %v8764 = vadd.f32 %v8717, 1.0
  %v8765 = vadd.f32 %v8719, 1.0
  %v8766 = vadd.f32 %v8721, 1.0
  %v8767 = vadd.f32 %v8723, 1.0
  %v8768 = vadd.f32 %v8725, 1.0
  %v8769 = vadd.f32 %v8727, 1.0
  %v8770 = vadd.f32 %v8729, 1.0
  %v8771 = vadd.f32 %v8731, 1.0
  %v8772 = vadd.f32 %v8733, 1.0
  %v8773 = vadd.f32 %v8735, 1.0
  %v8774 = vadd.f32 %v8737, 1.0
  %v8775 = vadd.f32 %v8739, 1.0
  %v8776 = vadd.f32 %v8741, 1.0
  %v8777 = vadd.f32 %v8743, 1.0
  %v8778 = vadd.f32 %v8745, 1.0
  %v8779 = vadd.f32 %v8747, 1.0
  %v8780 = vadd.f32 %v8749, 1.0
  %v8781 = vadd.f32 %v8751, 1.0
  %v8782 = vadd.f32 %v8753, 1.0
  %v8783 = vadd.f32 %v8755, 1.0
  %v8784 = vadd.f32 %v8757, 1.0
  %v8785 = vadd.f32 %v8759, 1.0
  %v8786 = vadd.f32 %v8761, 1.0
  %v8787 = vrcp.pop %v8762
  %v8788 = vmul.f32 %v8762, %v8787
  %v8789 = vsub.f32 1.0, %v8788
  %v8790 = vmul.f32 %v8787, %v8789
  %v8791 = vadd.f32 %v8787, %v8790
  %vm8792 = vweird.f32 %v8762
  %vm8793 = vweird.f32 %v8787
  %vm8794 = vmor %vm8792, %vm8793
  %v8795 = vsel %vm8794, %v8787, %v8791
  %v8796 = vand.u32 2147483647, %v8762
  %vm8797 = vcmp.eq.f32.partialorder %v8796, 8.507059e+37
  %v8798 = vand.u32 %v8762, 2147483648
  %v8799 = vor.u32 1.1754944e-38, %v8798
  %v8800 = vsel %vm8797, %v8799, %v8795
  %v8801 = vmul.f32 1.0, %v8800
  %v8802 = vrcp.pop %v8763
  %v8803 = vmul.f32 %v8763, %v8802
  %v8804 = vsub.f32 1.0, %v8803
  %v8805 = vmul.f32 %v8802, %v8804
  %v8806 = vadd.f32 %v8802, %v8805
  %vm8807 = vweird.f32 %v8763
  %vm8808 = vweird.f32 %v8802
  %vm8809 = vmor %vm8807, %vm8808
  %v8810 = vsel %vm8809, %v8802, %v8806
  %v8811 = vand.u32 2147483647, %v8763
  %vm8812 = vcmp.eq.f32.partialorder %v8811, 8.507059e+37
  %v8813 = vand.u32 %v8763, 2147483648
  %v8814 = vor.u32 1.1754944e-38, %v8813
  %v8815 = vsel %vm8812, %v8814, %v8810
  %v8816 = vmul.f32 1.0, %v8815
  %v8817 = vrcp.pop %v8764
  %v8818 = vmul.f32 %v8764, %v8817
  %v8819 = vsub.f32 1.0, %v8818
  %v8820 = vmul.f32 %v8817, %v8819
  %v8821 = vadd.f32 %v8817, %v8820
  %vm8822 = vweird.f32 %v8764
  %vm8823 = vweird.f32 %v8817
  %vm8824 = vmor %vm8822, %vm8823
  %v8825 = vsel %vm8824, %v8817, %v8821
  %v8826 = vand.u32 2147483647, %v8764
  %vm8827 = vcmp.eq.f32.partialorder %v8826, 8.507059e+37
  %v8828 = vand.u32 %v8764, 2147483648
  %v8829 = vor.u32 1.1754944e-38, %v8828
  %v8830 = vsel %vm8827, %v8829, %v8825
  %v8831 = vmul.f32 1.0, %v8830
  %v8832 = vrcp.pop %v8765
  %v8833 = vmul.f32 %v8765, %v8832
  %v8834 = vsub.f32 1.0, %v8833
  %v8835 = vmul.f32 %v8832, %v8834
  %v8836 = vadd.f32 %v8832, %v8835
  %vm8837 = vweird.f32 %v8765
  %vm8838 = vweird.f32 %v8832
  %vm8839 = vmor %vm8837, %vm8838
  %v8840 = vsel %vm8839, %v8832, %v8836
  %v8841 = vand.u32 2147483647, %v8765
  %vm8842 = vcmp.eq.f32.partialorder %v8841, 8.507059e+37
  %v8843 = vand.u32 %v8765, 2147483648
  %v8844 = vor.u32 1.1754944e-38, %v8843
  %v8845 = vsel %vm8842, %v8844, %v8840
  %v8846 = vmul.f32 1.0, %v8845
  %v8847 = vrcp.pop %v8766
  %v8848 = vmul.f32 %v8766, %v8847
  %v8849 = vsub.f32 1.0, %v8848
  %v8850 = vmul.f32 %v8847, %v8849
  %v8851 = vadd.f32 %v8847, %v8850
  %vm8852 = vweird.f32 %v8766
  %vm8853 = vweird.f32 %v8847
  %vm8854 = vmor %vm8852, %vm8853
  %v8855 = vsel %vm8854, %v8847, %v8851
  %v8856 = vand.u32 2147483647, %v8766
  %vm8857 = vcmp.eq.f32.partialorder %v8856, 8.507059e+37
  %v8858 = vand.u32 %v8766, 2147483648
  %v8859 = vor.u32 1.1754944e-38, %v8858
  %v8860 = vsel %vm8857, %v8859, %v8855
  %v8861 = vmul.f32 1.0, %v8860
  %v8862 = vrcp.pop %v8767
  %v8863 = vmul.f32 %v8767, %v8862
  %v8864 = vsub.f32 1.0, %v8863
  %v8865 = vmul.f32 %v8862, %v8864
  %v8866 = vadd.f32 %v8862, %v8865
  %vm8867 = vweird.f32 %v8767
  %vm8868 = vweird.f32 %v8862
  %vm8869 = vmor %vm8867, %vm8868
  %v8870 = vsel %vm8869, %v8862, %v8866
  %v8871 = vand.u32 2147483647, %v8767
  %vm8872 = vcmp.eq.f32.partialorder %v8871, 8.507059e+37
  %v8873 = vand.u32 %v8767, 2147483648
  %v8874 = vor.u32 1.1754944e-38, %v8873
  %v8875 = vsel %vm8872, %v8874, %v8870
  %v8876 = vmul.f32 1.0, %v8875
  %v8877 = vrcp.pop %v8768
  %v8878 = vmul.f32 %v8768, %v8877
  %v8879 = vsub.f32 1.0, %v8878
  %v8880 = vmul.f32 %v8877, %v8879
  %v8881 = vadd.f32 %v8877, %v8880
  %vm8882 = vweird.f32 %v8768
  %vm8883 = vweird.f32 %v8877
  %vm8884 = vmor %vm8882, %vm8883
  %v8885 = vsel %vm8884, %v8877, %v8881
  %v8886 = vand.u32 2147483647, %v8768
  %vm8887 = vcmp.eq.f32.partialorder %v8886, 8.507059e+37
  %v8888 = vand.u32 %v8768, 2147483648
  %v8889 = vor.u32 1.1754944e-38, %v8888
  %v8890 = vsel %vm8887, %v8889, %v8885
  %v8891 = vmul.f32 1.0, %v8890
  %v8892 = vrcp.pop %v8769
  %v8893 = vmul.f32 %v8769, %v8892
  %v8894 = vsub.f32 1.0, %v8893
  %v8895 = vmul.f32 %v8892, %v8894
  %v8896 = vadd.f32 %v8892, %v8895
  %vm8897 = vweird.f32 %v8769
  %vm8898 = vweird.f32 %v8892
  %vm8899 = vmor %vm8897, %vm8898
  %v8900 = vsel %vm8899, %v8892, %v8896
  %v8901 = vand.u32 2147483647, %v8769
  %vm8902 = vcmp.eq.f32.partialorder %v8901, 8.507059e+37
  %v8903 = vand.u32 %v8769, 2147483648
  %v8904 = vor.u32 1.1754944e-38, %v8903
  %v8905 = vsel %vm8902, %v8904, %v8900
  %v8906 = vmul.f32 1.0, %v8905
  %v8907 = vrcp.pop %v8770
  %v8908 = vmul.f32 %v8770, %v8907
  %v8909 = vsub.f32 1.0, %v8908
  %v8910 = vmul.f32 %v8907, %v8909
  %v8911 = vadd.f32 %v8907, %v8910
  %vm8912 = vweird.f32 %v8770
  %vm8913 = vweird.f32 %v8907
  %vm8914 = vmor %vm8912, %vm8913
  %v8915 = vsel %vm8914, %v8907, %v8911
  %v8916 = vand.u32 2147483647, %v8770
  %vm8917 = vcmp.eq.f32.partialorder %v8916, 8.507059e+37
  %v8918 = vand.u32 %v8770, 2147483648
  %v8919 = vor.u32 1.1754944e-38, %v8918
  %v8920 = vsel %vm8917, %v8919, %v8915
  %v8921 = vmul.f32 1.0, %v8920
  %v8922 = vrcp.pop %v8771
  %v8923 = vmul.f32 %v8771, %v8922
  %v8924 = vsub.f32 1.0, %v8923
  %v8925 = vmul.f32 %v8922, %v8924
  %v8926 = vadd.f32 %v8922, %v8925
  %vm8927 = vweird.f32 %v8771
  %vm8928 = vweird.f32 %v8922
  %vm8929 = vmor %vm8927, %vm8928
  %v8930 = vsel %vm8929, %v8922, %v8926
  %v8931 = vand.u32 2147483647, %v8771
  %vm8932 = vcmp.eq.f32.partialorder %v8931, 8.507059e+37
  %v8933 = vand.u32 %v8771, 2147483648
  %v8934 = vor.u32 1.1754944e-38, %v8933
  %v8935 = vsel %vm8932, %v8934, %v8930
  %v8936 = vmul.f32 1.0, %v8935
  %v8937 = vrcp.pop %v8772
  %v8938 = vmul.f32 %v8772, %v8937
  %v8939 = vsub.f32 1.0, %v8938
  %v8940 = vmul.f32 %v8937, %v8939
  %v8941 = vadd.f32 %v8937, %v8940
  %vm8942 = vweird.f32 %v8772
  %vm8943 = vweird.f32 %v8937
  %vm8944 = vmor %vm8942, %vm8943
  %v8945 = vsel %vm8944, %v8937, %v8941
  %v8946 = vand.u32 2147483647, %v8772
  %vm8947 = vcmp.eq.f32.partialorder %v8946, 8.507059e+37
  %v8948 = vand.u32 %v8772, 2147483648
  %v8949 = vor.u32 1.1754944e-38, %v8948
  %v8950 = vsel %vm8947, %v8949, %v8945
  %v8951 = vmul.f32 1.0, %v8950
  %v8952 = vrcp.pop %v8773
  %v8953 = vmul.f32 %v8773, %v8952
  %v8954 = vsub.f32 1.0, %v8953
  %v8955 = vmul.f32 %v8952, %v8954
  %v8956 = vadd.f32 %v8952, %v8955
  %vm8957 = vweird.f32 %v8773
  %vm8958 = vweird.f32 %v8952
  %vm8959 = vmor %vm8957, %vm8958
  %v8960 = vsel %vm8959, %v8952, %v8956
  %v8961 = vand.u32 2147483647, %v8773
  %vm8962 = vcmp.eq.f32.partialorder %v8961, 8.507059e+37
  %v8963 = vand.u32 %v8773, 2147483648
  %v8964 = vor.u32 1.1754944e-38, %v8963
  %v8965 = vsel %vm8962, %v8964, %v8960
  %v8966 = vmul.f32 1.0, %v8965
  %v8967 = vrcp.pop %v8774
  %v8968 = vmul.f32 %v8774, %v8967
  %v8969 = vsub.f32 1.0, %v8968
  %v8970 = vmul.f32 %v8967, %v8969
  %v8971 = vadd.f32 %v8967, %v8970
  %vm8972 = vweird.f32 %v8774
  %vm8973 = vweird.f32 %v8967
  %vm8974 = vmor %vm8972, %vm8973
  %v8975 = vsel %vm8974, %v8967, %v8971
  %v8976 = vand.u32 2147483647, %v8774
  %vm8977 = vcmp.eq.f32.partialorder %v8976, 8.507059e+37
  %v8978 = vand.u32 %v8774, 2147483648
  %v8979 = vor.u32 1.1754944e-38, %v8978
  %v8980 = vsel %vm8977, %v8979, %v8975
  %v8981 = vmul.f32 1.0, %v8980
  %v8982 = vrcp.pop %v8775
  %v8983 = vmul.f32 %v8775, %v8982
  %v8984 = vsub.f32 1.0, %v8983
  %v8985 = vmul.f32 %v8982, %v8984
  %v8986 = vadd.f32 %v8982, %v8985
  %vm8987 = vweird.f32 %v8775
  %vm8988 = vweird.f32 %v8982
  %vm8989 = vmor %vm8987, %vm8988
  %v8990 = vsel %vm8989, %v8982, %v8986
  %v8991 = vand.u32 2147483647, %v8775
  %vm8992 = vcmp.eq.f32.partialorder %v8991, 8.507059e+37
  %v8993 = vand.u32 %v8775, 2147483648
  %v8994 = vor.u32 1.1754944e-38, %v8993
  %v8995 = vsel %vm8992, %v8994, %v8990
  %v8996 = vmul.f32 1.0, %v8995
  %v8997 = vrcp.pop %v8776
  %v8998 = vmul.f32 %v8776, %v8997
  %v8999 = vsub.f32 1.0, %v8998
  %v9000 = vmul.f32 %v8997, %v8999
  %v9001 = vadd.f32 %v8997, %v9000
  %vm9002 = vweird.f32 %v8776
  %vm9003 = vweird.f32 %v8997
  %vm9004 = vmor %vm9002, %vm9003
  %v9005 = vsel %vm9004, %v8997, %v9001
  %v9006 = vand.u32 2147483647, %v8776
  %vm9007 = vcmp.eq.f32.partialorder %v9006, 8.507059e+37
  %v9008 = vand.u32 %v8776, 2147483648
  %v9009 = vor.u32 1.1754944e-38, %v9008
  %v9010 = vsel %vm9007, %v9009, %v9005
  %v9011 = vmul.f32 1.0, %v9010
  %v9012 = vrcp.pop %v8777
  %v9013 = vmul.f32 %v8777, %v9012
  %v9014 = vsub.f32 1.0, %v9013
  %v9015 = vmul.f32 %v9012, %v9014
  %v9016 = vadd.f32 %v9012, %v9015
  %vm9017 = vweird.f32 %v8777
  %vm9018 = vweird.f32 %v9012
  %vm9019 = vmor %vm9017, %vm9018
  %v9020 = vsel %vm9019, %v9012, %v9016
  %v9021 = vand.u32 2147483647, %v8777
  %vm9022 = vcmp.eq.f32.partialorder %v9021, 8.507059e+37
  %v9023 = vand.u32 %v8777, 2147483648
  %v9024 = vor.u32 1.1754944e-38, %v9023
  %v9025 = vsel %vm9022, %v9024, %v9020
  %v9026 = vmul.f32 1.0, %v9025
  %v9027 = vrcp.pop %v8778
  %v9028 = vmul.f32 %v8778, %v9027
  %v9029 = vsub.f32 1.0, %v9028
  %v9030 = vmul.f32 %v9027, %v9029
  %v9031 = vadd.f32 %v9027, %v9030
  %vm9032 = vweird.f32 %v8778
  %vm9033 = vweird.f32 %v9027
  %vm9034 = vmor %vm9032, %vm9033
  %v9035 = vsel %vm9034, %v9027, %v9031
  %v9036 = vand.u32 2147483647, %v8778
  %vm9037 = vcmp.eq.f32.partialorder %v9036, 8.507059e+37
  %v9038 = vand.u32 %v8778, 2147483648
  %v9039 = vor.u32 1.1754944e-38, %v9038
  %v9040 = vsel %vm9037, %v9039, %v9035
  %v9041 = vmul.f32 1.0, %v9040
  %v9042 = vrcp.pop %v8779
  %v9043 = vmul.f32 %v8779, %v9042
  %v9044 = vsub.f32 1.0, %v9043
  %v9045 = vmul.f32 %v9042, %v9044
  %v9046 = vadd.f32 %v9042, %v9045
  %vm9047 = vweird.f32 %v8779
  %vm9048 = vweird.f32 %v9042
  %vm9049 = vmor %vm9047, %vm9048
  %v9050 = vsel %vm9049, %v9042, %v9046
  %v9051 = vand.u32 2147483647, %v8779
  %vm9052 = vcmp.eq.f32.partialorder %v9051, 8.507059e+37
  %v9053 = vand.u32 %v8779, 2147483648
  %v9054 = vor.u32 1.1754944e-38, %v9053
  %v9055 = vsel %vm9052, %v9054, %v9050
  %v9056 = vmul.f32 1.0, %v9055
  %v9057 = vrcp.pop %v8780
  %v9058 = vmul.f32 %v8780, %v9057
  %v9059 = vsub.f32 1.0, %v9058
  %v9060 = vmul.f32 %v9057, %v9059
  %v9061 = vadd.f32 %v9057, %v9060
  %vm9062 = vweird.f32 %v8780
  %vm9063 = vweird.f32 %v9057
  %vm9064 = vmor %vm9062, %vm9063
  %v9065 = vsel %vm9064, %v9057, %v9061
  %v9066 = vand.u32 2147483647, %v8780
  %vm9067 = vcmp.eq.f32.partialorder %v9066, 8.507059e+37
  %v9068 = vand.u32 %v8780, 2147483648
  %v9069 = vor.u32 1.1754944e-38, %v9068
  %v9070 = vsel %vm9067, %v9069, %v9065
  %v9071 = vmul.f32 1.0, %v9070
  %v9072 = vrcp.pop %v8781
  %v9073 = vmul.f32 %v8781, %v9072
  %v9074 = vsub.f32 1.0, %v9073
  %v9075 = vmul.f32 %v9072, %v9074
  %v9076 = vadd.f32 %v9072, %v9075
  %vm9077 = vweird.f32 %v8781
  %vm9078 = vweird.f32 %v9072
  %vm9079 = vmor %vm9077, %vm9078
  %v9080 = vsel %vm9079, %v9072, %v9076
  %v9081 = vand.u32 2147483647, %v8781
  %vm9082 = vcmp.eq.f32.partialorder %v9081, 8.507059e+37
  %v9083 = vand.u32 %v8781, 2147483648
  %v9084 = vor.u32 1.1754944e-38, %v9083
  %v9085 = vsel %vm9082, %v9084, %v9080
  %v9086 = vmul.f32 1.0, %v9085
  %v9087 = vrcp.pop %v8782
  %v9088 = vmul.f32 %v8782, %v9087
  %v9089 = vsub.f32 1.0, %v9088
  %v9090 = vmul.f32 %v9087, %v9089
  %v9091 = vadd.f32 %v9087, %v9090
  %vm9092 = vweird.f32 %v8782
  %vm9093 = vweird.f32 %v9087
  %vm9094 = vmor %vm9092, %vm9093
  %v9095 = vsel %vm9094, %v9087, %v9091
  %v9096 = vand.u32 2147483647, %v8782
  %vm9097 = vcmp.eq.f32.partialorder %v9096, 8.507059e+37
  %v9098 = vand.u32 %v8782, 2147483648
  %v9099 = vor.u32 1.1754944e-38, %v9098
  %v9100 = vsel %vm9097, %v9099, %v9095
  %v9101 = vmul.f32 1.0, %v9100
  %v9102 = vrcp.pop %v8783
  %v9103 = vmul.f32 %v8783, %v9102
  %v9104 = vsub.f32 1.0, %v9103
  %v9105 = vmul.f32 %v9102, %v9104
  %v9106 = vadd.f32 %v9102, %v9105
  %vm9107 = vweird.f32 %v8783
  %vm9108 = vweird.f32 %v9102
  %vm9109 = vmor %vm9107, %vm9108
  %v9110 = vsel %vm9109, %v9102, %v9106
  %v9111 = vand.u32 2147483647, %v8783
  %vm9112 = vcmp.eq.f32.partialorder %v9111, 8.507059e+37
  %v9113 = vand.u32 %v8783, 2147483648
  %v9114 = vor.u32 1.1754944e-38, %v9113
  %v9115 = vsel %vm9112, %v9114, %v9110
  %v9116 = vmul.f32 1.0, %v9115
  %v9117 = vrcp.pop %v8784
  %v9118 = vmul.f32 %v8784, %v9117
  %v9119 = vsub.f32 1.0, %v9118
  %v9120 = vmul.f32 %v9117, %v9119
  %v9121 = vadd.f32 %v9117, %v9120
  %vm9122 = vweird.f32 %v8784
  %vm9123 = vweird.f32 %v9117
  %vm9124 = vmor %vm9122, %vm9123
  %v9125 = vsel %vm9124, %v9117, %v9121
  %v9126 = vand.u32 2147483647, %v8784
  %vm9127 = vcmp.eq.f32.partialorder %v9126, 8.507059e+37
  %v9128 = vand.u32 %v8784, 2147483648
  %v9129 = vor.u32 1.1754944e-38, %v9128
  %v9130 = vsel %vm9127, %v9129, %v9125
  %v9131 = vmul.f32 1.0, %v9130
  %v9132 = vrcp.pop %v8785
  %v9133 = vmul.f32 %v8785, %v9132
  %v9134 = vsub.f32 1.0, %v9133
  %v9135 = vmul.f32 %v9132, %v9134
  %v9136 = vadd.f32 %v9132, %v9135
  %vm9137 = vweird.f32 %v8785
  %vm9138 = vweird.f32 %v9132
  %vm9139 = vmor %vm9137, %vm9138
  %v9140 = vsel %vm9139, %v9132, %v9136
  %v9141 = vand.u32 2147483647, %v8785
  %vm9142 = vcmp.eq.f32.partialorder %v9141, 8.507059e+37
  %v9143 = vand.u32 %v8785, 2147483648
  %v9144 = vor.u32 1.1754944e-38, %v9143
  %v9145 = vsel %vm9142, %v9144, %v9140
  %v9146 = vmul.f32 1.0, %v9145
  %v9147 = vrcp.pop %v8786
  %v9148 = vmul.f32 %v8786, %v9147
  %v9149 = vsub.f32 1.0, %v9148
  %v9150 = vmul.f32 %v9147, %v9149
  %v9151 = vadd.f32 %v9147, %v9150
  %vm9152 = vweird.f32 %v8786
  %vm9153 = vweird.f32 %v9147
  %vm9154 = vmor %vm9152, %vm9153
  %v9155 = vsel %vm9154, %v9147, %v9151
  %v9156 = vand.u32 2147483647, %v8786
  %vm9157 = vcmp.eq.f32.partialorder %v9156, 8.507059e+37
  %v9158 = vand.u32 %v8786, 2147483648
  %v9159 = vor.u32 1.1754944e-38, %v9158
  %v9160 = vsel %vm9157, %v9159, %v9155
  %v9161 = vmul.f32 1.0, %v9160
  %v9162 = vmul.f32 %v8801, 2.0
  %v9163 = vmul.f32 %v8816, 2.0
  %v9164 = vmul.f32 %v8831, 2.0
  %v9165 = vmul.f32 %v8846, 2.0
  %v9166 = vmul.f32 %v8861, 2.0
  %v9167 = vmul.f32 %v8876, 2.0
  %v9168 = vmul.f32 %v8891, 2.0
  %v9169 = vmul.f32 %v8906, 2.0
  %v9170 = vmul.f32 %v8921, 2.0
  %v9171 = vmul.f32 %v8936, 2.0
  %v9172 = vmul.f32 %v8951, 2.0
  %v9173 = vmul.f32 %v8966, 2.0
  %v9174 = vmul.f32 %v8981, 2.0
  %v9175 = vmul.f32 %v8996, 2.0
  %v9176 = vmul.f32 %v9011, 2.0
  %v9177 = vmul.f32 %v9026, 2.0
  %v9178 = vmul.f32 %v9041, 2.0
  %v9179 = vmul.f32 %v9056, 2.0
  %v9180 = vmul.f32 %v9071, 2.0
  %v9181 = vmul.f32 %v9086, 2.0
  %v9182 = vmul.f32 %v9101, 2.0
  %v9183 = vmul.f32 %v9116, 2.0
  %v9184 = vmul.f32 %v9131, 2.0
  %v9185 = vmul.f32 %v9146, 2.0
  %v9186 = vmul.f32 %v9161, 2.0
  %v9187 = vsub.f32 %v9162, 1.0
  %v9188 = vsub.f32 %v9163, 1.0
  %v9189 = vsub.f32 %v9164, 1.0
  %v9190 = vsub.f32 %v9165, 1.0
  %v9191 = vsub.f32 %v9166, 1.0
  %v9192 = vsub.f32 %v9167, 1.0
  %v9193 = vsub.f32 %v9168, 1.0
  %v9194 = vsub.f32 %v9169, 1.0
  %v9195 = vsub.f32 %v9170, 1.0
  %v9196 = vsub.f32 %v9171, 1.0
  %v9197 = vsub.f32 %v9172, 1.0
  %v9198 = vsub.f32 %v9173, 1.0
  %v9199 = vsub.f32 %v9174, 1.0
  %v9200 = vsub.f32 %v9175, 1.0
  %v9201 = vsub.f32 %v9176, 1.0
  %v9202 = vsub.f32 %v9177, 1.0
  %v9203 = vsub.f32 %v9178, 1.0
  %v9204 = vsub.f32 %v9179, 1.0
  %v9205 = vsub.f32 %v9180, 1.0
  %v9206 = vsub.f32 %v9181, 1.0
  %v9207 = vsub.f32 %v9182, 1.0
  %v9208 = vsub.f32 %v9183, 1.0
  %v9209 = vsub.f32 %v9184, 1.0
  %v9210 = vsub.f32 %v9185, 1.0
  %v9211 = vsub.f32 %v9186, 1.0
  %v9212 = vmul.f32 %v8801, %v8244
  %v9213 = vmul.f32 %v8816, %v8245
  %v9214 = vmul.f32 %v8831, %v8246
  %v9215 = vmul.f32 %v8846, %v8247
  %v9216 = vmul.f32 %v8861, %v8248
  %v9217 = vmul.f32 %v8876, %v8249
  %v9218 = vmul.f32 %v8891, %v8250
  %v9219 = vmul.f32 %v8906, %v8251
  %v9220 = vmul.f32 %v8921, %v8252
  %v9221 = vmul.f32 %v8936, %v8253
  %v9222 = vmul.f32 %v8951, %v8254
  %v9223 = vmul.f32 %v8966, %v8255
  %v9224 = vmul.f32 %v8981, %v8256
  %v9225 = vmul.f32 %v8996, %v8257
  %v9226 = vmul.f32 %v9011, %v8258
  %v9227 = vmul.f32 %v9026, %v8259
  %v9228 = vmul.f32 %v9041, %v8260
  %v9229 = vmul.f32 %v9056, %v8261
  %v9230 = vmul.f32 %v9071, %v8262
  %v9231 = vmul.f32 %v9086, %v8263
  %v9232 = vmul.f32 %v9101, %v8264
  %v9233 = vmul.f32 %v9116, %v8265
  %v9234 = vmul.f32 %v9131, %v8266
  %v9235 = vmul.f32 %v9146, %v8267
  %v9236 = vmul.f32 %v9161, %v8268
  %9262 = vrot.lane.b32.xlu0 %v9187, 32
  %v9263 = vpop.permute.xlu0 %9262
  %9264 = vrot.lane.b32.xlu0 %v9188, 32
  %v9265 = vpop.permute.xlu0 %9264
  %9266 = vrot.lane.b32.xlu0 %v9189, 32
  %v9267 = vpop.permute.xlu0 %9266
  %9268 = vrot.lane.b32.xlu0 %v9190, 32
  %v9269 = vpop.permute.xlu0 %9268
  %9270 = vrot.lane.b32.xlu0 %v9191, 32
  %v9271 = vpop.permute.xlu0 %9270
  %9272 = vrot.lane.b32.xlu0 %v9192, 32
  %v9273 = vpop.permute.xlu0 %9272
  %9274 = vrot.lane.b32.xlu0 %v9193, 32
  %v9275 = vpop.permute.xlu0 %9274
  %9276 = vrot.lane.b32.xlu0 %v9194, 32
  %v9277 = vpop.permute.xlu0 %9276
  %9278 = vrot.lane.b32.xlu0 %v9195, 32
  %v9279 = vpop.permute.xlu0 %9278
  %9280 = vrot.lane.b32.xlu0 %v9196, 32
  %v9281 = vpop.permute.xlu0 %9280
  %9282 = vrot.lane.b32.xlu0 %v9197, 32
  %v9283 = vpop.permute.xlu0 %9282
  %9284 = vrot.lane.b32.xlu0 %v9198, 32
  %v9285 = vpop.permute.xlu0 %9284
  %9286 = vrot.lane.b32.xlu0 %v9199, 32
  %v9287 = vpop.permute.xlu0 %9286
  %9288 = vrot.lane.b32.xlu0 %v9200, 32
  %v9289 = vpop.permute.xlu0 %9288
  %9290 = vrot.lane.b32.xlu0 %v9201, 32
  %v9291 = vpop.permute.xlu0 %9290
  %9292 = vrot.lane.b32.xlu0 %v9202, 32
  %v9293 = vpop.permute.xlu0 %9292
  %9294 = vrot.lane.b32.xlu0 %v9203, 32
  %v9295 = vpop.permute.xlu0 %9294
  %9296 = vrot.lane.b32.xlu0 %v9204, 32
  %v9297 = vpop.permute.xlu0 %9296
  %9298 = vrot.lane.b32.xlu0 %v9205, 32
  %v9299 = vpop.permute.xlu0 %9298
  %9300 = vrot.lane.b32.xlu0 %v9206, 32
  %v9301 = vpop.permute.xlu0 %9300
  %9302 = vrot.lane.b32.xlu0 %v9207, 32
  %v9303 = vpop.permute.xlu0 %9302
  %9304 = vrot.lane.b32.xlu0 %v9208, 32
  %v9305 = vpop.permute.xlu0 %9304
  %9306 = vrot.lane.b32.xlu0 %v9209, 32
  %v9307 = vpop.permute.xlu0 %9306
  %9308 = vrot.lane.b32.xlu0 %v9210, 32
  %v9309 = vpop.permute.xlu0 %9308
  %9310 = vrot.lane.b32.xlu0 %v9211, 32
  %v9311 = vpop.permute.xlu0 %9310
  %v9337 = vmul.f32 %v8801, %v9263
  %v9338 = vmul.f32 %v8816, %v9265
  %v9339 = vmul.f32 %v8831, %v9267
  %v9340 = vmul.f32 %v8846, %v9269
  %v9341 = vmul.f32 %v8861, %v9271
  %v9342 = vmul.f32 %v8876, %v9273
  %v9343 = vmul.f32 %v8891, %v9275
  %v9344 = vmul.f32 %v8906, %v9277
  %v9345 = vmul.f32 %v8921, %v9279
  %v9346 = vmul.f32 %v8936, %v9281
  %v9347 = vmul.f32 %v8951, %v9283
  %v9348 = vmul.f32 %v8966, %v9285
  %v9349 = vmul.f32 %v8981, %v9287
  %v9350 = vmul.f32 %v8996, %v9289
  %v9351 = vmul.f32 %v9011, %v9291
  %v9352 = vmul.f32 %v9026, %v9293
  %v9353 = vmul.f32 %v9041, %v9295
  %v9354 = vmul.f32 %v9056, %v9297
  %v9355 = vmul.f32 %v9071, %v9299
  %v9356 = vmul.f32 %v9086, %v9301
  %v9357 = vmul.f32 %v9101, %v9303
  %v9358 = vmul.f32 %v9116, %v9305
  %v9359 = vmul.f32 %v9131, %v9307
  %v9360 = vmul.f32 %v9146, %v9309
  %v9361 = vmul.f32 %v9161, %v9311
  %9387 = vrot.lane.b32.xlu0 %v9337, 32
  %v9388 = vpop.permute.xlu0 %9387
  %9389 = vrot.lane.b32.xlu0 %v9338, 32
  %v9390 = vpop.permute.xlu0 %9389
  %9391 = vrot.lane.b32.xlu0 %v9339, 32
  %v9392 = vpop.permute.xlu0 %9391
  %9393 = vrot.lane.b32.xlu0 %v9340, 32
  %v9394 = vpop.permute.xlu0 %9393
  %9395 = vrot.lane.b32.xlu0 %v9341, 32
  %v9396 = vpop.permute.xlu0 %9395
  %9397 = vrot.lane.b32.xlu0 %v9342, 32
  %v9398 = vpop.permute.xlu0 %9397
  %9399 = vrot.lane.b32.xlu0 %v9343, 32
  %v9400 = vpop.permute.xlu0 %9399
  %9401 = vrot.lane.b32.xlu0 %v9344, 32
  %v9402 = vpop.permute.xlu0 %9401
  %9403 = vrot.lane.b32.xlu0 %v9345, 32
  %v9404 = vpop.permute.xlu0 %9403
  %9405 = vrot.lane.b32.xlu0 %v9346, 32
  %v9406 = vpop.permute.xlu0 %9405
  %9407 = vrot.lane.b32.xlu0 %v9347, 32
  %v9408 = vpop.permute.xlu0 %9407
  %9409 = vrot.lane.b32.xlu0 %v9348, 32
  %v9410 = vpop.permute.xlu0 %9409
  %9411 = vrot.lane.b32.xlu0 %v9349, 32
  %v9412 = vpop.permute.xlu0 %9411
  %9413 = vrot.lane.b32.xlu0 %v9350, 32
  %v9414 = vpop.permute.xlu0 %9413
  %9415 = vrot.lane.b32.xlu0 %v9351, 32
  %v9416 = vpop.permute.xlu0 %9415
  %9417 = vrot.lane.b32.xlu0 %v9352, 32
  %v9418 = vpop.permute.xlu0 %9417
  %9419 = vrot.lane.b32.xlu0 %v9353, 32
  %v9420 = vpop.permute.xlu0 %9419
  %9421 = vrot.lane.b32.xlu0 %v9354, 32
  %v9422 = vpop.permute.xlu0 %9421
  %9423 = vrot.lane.b32.xlu0 %v9355, 32
  %v9424 = vpop.permute.xlu0 %9423
  %9425 = vrot.lane.b32.xlu0 %v9356, 32
  %v9426 = vpop.permute.xlu0 %9425
  %9427 = vrot.lane.b32.xlu0 %v9357, 32
  %v9428 = vpop.permute.xlu0 %9427
  %9429 = vrot.lane.b32.xlu0 %v9358, 32
  %v9430 = vpop.permute.xlu0 %9429
  %9431 = vrot.lane.b32.xlu0 %v9359, 32
  %v9432 = vpop.permute.xlu0 %9431
  %9433 = vrot.lane.b32.xlu0 %v9360, 32
  %v9434 = vpop.permute.xlu0 %9433
  %9435 = vrot.lane.b32.xlu0 %v9361, 32
  %v9436 = vpop.permute.xlu0 %9435
  %v9462 = vadd.f32 %v9212, %v9388
  %v9463 = vadd.f32 %v9213, %v9390
  %v9464 = vadd.f32 %v9214, %v9392
  %v9465 = vadd.f32 %v9215, %v9394
  %v9466 = vadd.f32 %v9216, %v9396
  %v9467 = vadd.f32 %v9217, %v9398
  %v9468 = vadd.f32 %v9218, %v9400
  %v9469 = vadd.f32 %v9219, %v9402
  %v9470 = vadd.f32 %v9220, %v9404
  %v9471 = vadd.f32 %v9221, %v9406
  %v9472 = vadd.f32 %v9222, %v9408
  %v9473 = vadd.f32 %v9223, %v9410
  %v9474 = vadd.f32 %v9224, %v9412
  %v9475 = vadd.f32 %v9225, %v9414
  %v9476 = vadd.f32 %v9226, %v9416
  %v9477 = vadd.f32 %v9227, %v9418
  %v9478 = vadd.f32 %v9228, %v9420
  %v9479 = vadd.f32 %v9229, %v9422
  %v9480 = vadd.f32 %v9230, %v9424
  %v9481 = vadd.f32 %v9231, %v9426
  %v9482 = vadd.f32 %v9232, %v9428
  %v9483 = vadd.f32 %v9233, %v9430
  %v9484 = vadd.f32 %v9234, %v9432
  %v9485 = vadd.f32 %v9235, %v9434
  %v9486 = vadd.f32 %v9236, %v9436
  %v9487 = vtanh.pop %v9462
  %v9488 = vtanh.pop %v9463
  %v9489 = vtanh.pop %v9464
  %v9490 = vtanh.pop %v9465
  %v9491 = vtanh.pop %v9466
  %v9492 = vtanh.pop %v9467
  %v9493 = vtanh.pop %v9468
  %v9494 = vtanh.pop %v9469
  %v9495 = vtanh.pop %v9470
  %v9496 = vtanh.pop %v9471
  %v9497 = vtanh.pop %v9472
  %v9498 = vtanh.pop %v9473
  %v9499 = vtanh.pop %v9474
  %v9500 = vtanh.pop %v9475
  %v9501 = vtanh.pop %v9476
  %v9502 = vtanh.pop %v9477
  %v9503 = vtanh.pop %v9478
  %v9504 = vtanh.pop %v9479
  %v9505 = vtanh.pop %v9480
  %v9506 = vtanh.pop %v9481
  %v9507 = vtanh.pop %v9482
  %v9508 = vtanh.pop %v9483
  %v9509 = vtanh.pop %v9484
  %v9510 = vtanh.pop %v9485
  %v9511 = vtanh.pop %v9486
  %9537 = vrot.lane.b32.xlu0 %v9487, 32
  %v9538 = vpop.permute.xlu0 %9537
  %9539 = vrot.lane.b32.xlu0 %v9488, 32
  %v9540 = vpop.permute.xlu0 %9539
  %9541 = vrot.lane.b32.xlu0 %v9489, 32
  %v9542 = vpop.permute.xlu0 %9541
  %9543 = vrot.lane.b32.xlu0 %v9490, 32
  %v9544 = vpop.permute.xlu0 %9543
  %9545 = vrot.lane.b32.xlu0 %v9491, 32
  %v9546 = vpop.permute.xlu0 %9545
  %9547 = vrot.lane.b32.xlu0 %v9492, 32
  %v9548 = vpop.permute.xlu0 %9547
  %9549 = vrot.lane.b32.xlu0 %v9493, 32
  %v9550 = vpop.permute.xlu0 %9549
  %9551 = vrot.lane.b32.xlu0 %v9494, 32
  %v9552 = vpop.permute.xlu0 %9551
  %9553 = vrot.lane.b32.xlu0 %v9495, 32
  %v9554 = vpop.permute.xlu0 %9553
  %9555 = vrot.lane.b32.xlu0 %v9496, 32
  %v9556 = vpop.permute.xlu0 %9555
  %9557 = vrot.lane.b32.xlu0 %v9497, 32
  %v9558 = vpop.permute.xlu0 %9557
  %9559 = vrot.lane.b32.xlu0 %v9498, 32
  %v9560 = vpop.permute.xlu0 %9559
  %9561 = vrot.lane.b32.xlu0 %v9499, 32
  %v9562 = vpop.permute.xlu0 %9561
  %9563 = vrot.lane.b32.xlu0 %v9500, 32
  %v9564 = vpop.permute.xlu0 %9563
  %9565 = vrot.lane.b32.xlu0 %v9501, 32
  %v9566 = vpop.permute.xlu0 %9565
  %9567 = vrot.lane.b32.xlu0 %v9502, 32
  %v9568 = vpop.permute.xlu0 %9567
  %9569 = vrot.lane.b32.xlu0 %v9503, 32
  %v9570 = vpop.permute.xlu0 %9569
  %9571 = vrot.lane.b32.xlu0 %v9504, 32
  %v9572 = vpop.permute.xlu0 %9571
  %9573 = vrot.lane.b32.xlu0 %v9505, 32
  %v9574 = vpop.permute.xlu0 %9573
  %9575 = vrot.lane.b32.xlu0 %v9506, 32
  %v9576 = vpop.permute.xlu0 %9575
  %9577 = vrot.lane.b32.xlu0 %v9507, 32
  %v9578 = vpop.permute.xlu0 %9577
  %9579 = vrot.lane.b32.xlu0 %v9508, 32
  %v9580 = vpop.permute.xlu0 %9579
  %9581 = vrot.lane.b32.xlu0 %v9509, 32
  %v9582 = vpop.permute.xlu0 %9581
  %9583 = vrot.lane.b32.xlu0 %v9510, 32
  %v9584 = vpop.permute.xlu0 %9583
  %9585 = vrot.lane.b32.xlu0 %v9511, 32
  %v9586 = vpop.permute.xlu0 %9585
  %v9612 = vmul.f32 %v8801, %v9538
  %v9613 = vmul.f32 %v8816, %v9540
  %v9614 = vmul.f32 %v8831, %v9542
  %v9615 = vmul.f32 %v8846, %v9544
  %v9616 = vmul.f32 %v8861, %v9546
  %v9617 = vmul.f32 %v8876, %v9548
  %v9618 = vmul.f32 %v8891, %v9550
  %v9619 = vmul.f32 %v8906, %v9552
  %v9620 = vmul.f32 %v8921, %v9554
  %v9621 = vmul.f32 %v8936, %v9556
  %v9622 = vmul.f32 %v8951, %v9558
  %v9623 = vmul.f32 %v8966, %v9560
  %v9624 = vmul.f32 %v8981, %v9562
  %v9625 = vmul.f32 %v8996, %v9564
  %v9626 = vmul.f32 %v9011, %v9566
  %v9627 = vmul.f32 %v9026, %v9568
  %v9628 = vmul.f32 %v9041, %v9570
  %v9629 = vmul.f32 %v9056, %v9572
  %v9630 = vmul.f32 %v9071, %v9574
  %v9631 = vmul.f32 %v9086, %v9576
  %v9632 = vmul.f32 %v9101, %v9578
  %v9633 = vmul.f32 %v9116, %v9580
  %v9634 = vmul.f32 %v9131, %v9582
  %v9635 = vmul.f32 %v9146, %v9584
  %v9636 = vmul.f32 %v9161, %v9586
  %9662 = vrot.lane.b32.xlu0 %v9612, 64
  %v9663 = vpop.permute.xlu0 %9662
  %9664 = vrot.lane.b32.xlu0 %v9613, 64
  %v9665 = vpop.permute.xlu0 %9664
  %9666 = vrot.lane.b32.xlu0 %v9614, 64
  %v9667 = vpop.permute.xlu0 %9666
  %9668 = vrot.lane.b32.xlu0 %v9615, 64
  %v9669 = vpop.permute.xlu0 %9668
  %9670 = vrot.lane.b32.xlu0 %v9616, 64
  %v9671 = vpop.permute.xlu0 %9670
  %9672 = vrot.lane.b32.xlu0 %v9617, 64
  %v9673 = vpop.permute.xlu0 %9672
  %9674 = vrot.lane.b32.xlu0 %v9618, 64
  %v9675 = vpop.permute.xlu0 %9674
  %9676 = vrot.lane.b32.xlu0 %v9619, 64
  %v9677 = vpop.permute.xlu0 %9676
  %9678 = vrot.lane.b32.xlu0 %v9620, 64
  %v9679 = vpop.permute.xlu0 %9678
  %9680 = vrot.lane.b32.xlu0 %v9621, 64
  %v9681 = vpop.permute.xlu0 %9680
  %9682 = vrot.lane.b32.xlu0 %v9622, 64
  %v9683 = vpop.permute.xlu0 %9682
  %9684 = vrot.lane.b32.xlu0 %v9623, 64
  %v9685 = vpop.permute.xlu0 %9684
  %9686 = vrot.lane.b32.xlu0 %v9624, 64
  %v9687 = vpop.permute.xlu0 %9686
  %9688 = vrot.lane.b32.xlu0 %v9625, 64
  %v9689 = vpop.permute.xlu0 %9688
  %9690 = vrot.lane.b32.xlu0 %v9626, 64
  %v9691 = vpop.permute.xlu0 %9690
  %9692 = vrot.lane.b32.xlu0 %v9627, 64
  %v9693 = vpop.permute.xlu0 %9692
  %9694 = vrot.lane.b32.xlu0 %v9628, 64
  %v9695 = vpop.permute.xlu0 %9694
  %9696 = vrot.lane.b32.xlu0 %v9629, 64
  %v9697 = vpop.permute.xlu0 %9696
  %9698 = vrot.lane.b32.xlu0 %v9630, 64
  %v9699 = vpop.permute.xlu0 %9698
  %9700 = vrot.lane.b32.xlu0 %v9631, 64
  %v9701 = vpop.permute.xlu0 %9700
  %9702 = vrot.lane.b32.xlu0 %v9632, 64
  %v9703 = vpop.permute.xlu0 %9702
  %9704 = vrot.lane.b32.xlu0 %v9633, 64
  %v9705 = vpop.permute.xlu0 %9704
  %9706 = vrot.lane.b32.xlu0 %v9634, 64
  %v9707 = vpop.permute.xlu0 %9706
  %9708 = vrot.lane.b32.xlu0 %v9635, 64
  %v9709 = vpop.permute.xlu0 %9708
  %9710 = vrot.lane.b32.xlu0 %v9636, 64
  %v9711 = vpop.permute.xlu0 %9710
  %9737 = vst.msk [vmem:[%s2] sm:$0xff] %vm40, %v9663
  %9738 = vst.msk [vmem:[%s2 + $0x8] sm:$0xff] %vm40, %v9665
  %9739 = vst.msk [vmem:[%s2 + $0x10] sm:$0xff] %vm40, %v9667
  %9740 = vst.msk [vmem:[%s2 + $0x18] sm:$0xff] %vm40, %v9669
  %9741 = vst.msk [vmem:[%s2 + $0x20] sm:$0xff] %vm40, %v9671
  %9742 = vst.msk [vmem:[%s2 + $0x28] sm:$0xff] %vm40, %v9673
  %9743 = vst.msk [vmem:[%s2 + $0x30] sm:$0xff] %vm40, %v9675
  %9744 = vst.msk [vmem:[%s2 + $0x38] sm:$0xff] %vm40, %v9677
  %9745 = vst.msk [vmem:[%s2 + $0x40] sm:$0xff] %vm40, %v9679
  %9746 = vst.msk [vmem:[%s2 + $0x48] sm:$0xff] %vm40, %v9681
  %9747 = vst.msk [vmem:[%s2 + $0x50] sm:$0xff] %vm40, %v9683
  %9748 = vst.msk [vmem:[%s2 + $0x58] sm:$0xff] %vm40, %v9685
  %9749 = vst.msk [vmem:[%s2 + $0x60] sm:$0xff] %vm40, %v9687
  %9750 = vst.msk [vmem:[%s2 + $0x68] sm:$0xff] %vm40, %v9689
  %9751 = vst.msk [vmem:[%s2 + $0x70] sm:$0xff] %vm40, %v9691
  %9752 = vst.msk [vmem:[%s2 + $0x78] sm:$0xff] %vm40, %v9693
  %9753 = vst.msk [vmem:[%s2 + $0x80] sm:$0xff] %vm40, %v9695
  %9754 = vst.msk [vmem:[%s2 + $0x88] sm:$0xff] %vm40, %v9697
  %9755 = vst.msk [vmem:[%s2 + $0x90] sm:$0xff] %vm40, %v9699
  %9756 = vst.msk [vmem:[%s2 + $0x98] sm:$0xff] %vm40, %v9701
  %9757 = vst.msk [vmem:[%s2 + $0xa0] sm:$0xff] %vm40, %v9703
  %9758 = vst.msk [vmem:[%s2 + $0xa8] sm:$0xff] %vm40, %v9705
  %9759 = vst.msk [vmem:[%s2 + $0xb0] sm:$0xff] %vm40, %v9707
  %9760 = vst.msk [vmem:[%s2 + $0xb8] sm:$0xff] %vm40, %v9709
  %9761 = vst.msk [vmem:[%s2 + $0xc0] sm:$0xff] %vm40, %v9711
  // Predicated region
  $region10: #{rera_forward.2} parent=0 // pred_check
    _
  $region11: #{rera_forward.2} parent=0 // pred_check_branch
    %9763 = sbr.rel (0) target = $region13
  $region12: #{rera_forward.2} parent=0 // pred_region
    _
  $region13: #{rera_forward.2} parent=0 // pred_fallthru
    _
  // Predicated region
  $region14: #{rera_forward.2} parent=0 // pred_check
    _
  $region15: #{rera_forward.2} parent=0 // pred_check_branch
    %9765 = sbr.rel (0) target = $region17
  $region16: #{rera_forward.2} parent=0 // pred_region
    _
  $region17: #{rera_forward.2} parent=0 // pred_fallthru
    _

</llo_original>
